<compile_context>
chip_gen: v7x
topology: tpu7x:2x2x1
jax: 0.10.0
libtpu: 0.0.40
codegen_flags: <defaults>
</compile_context>

<pallas_src>
import numpy as np
import jax
import jax.numpy as jnp
from jax.experimental import pallas as pl
from jax.experimental.pallas import tpu as pltpu

BN_EPS = 1e-5
LRELU_SLOPE = 0.2


def _round_up(x, m):
    return ((x + m - 1) // m) * m


# ----------------------------------------------------------------------------
# Plain-JAX glue (pose differences + bilinear resize), kept outside the kernel.
# ----------------------------------------------------------------------------
def poses_diff(x):
    """Frame difference + bilinear resize back to H frames
    (F.interpolate bilinear, align_corners=False; width dim unchanged)."""
    B, H, W, D = x.shape
    d = x[:, 1:] - x[:, :-1]                       # (B, H-1, W, D)
    Hin = H - 1
    i = jnp.arange(H, dtype=jnp.float32)
    src = jnp.maximum((i + 0.5) * (Hin / H) - 0.5, 0.0)
    i0 = jnp.floor(src).astype(jnp.int32)
    frac = src - i0.astype(jnp.float32)
    i0 = jnp.clip(i0, 0, Hin - 1)
    i1 = jnp.clip(i0 + 1, 0, Hin - 1)
    out = (d[:, i0] * (1.0 - frac)[None, :, None, None]
           + d[:, i1] * frac[None, :, None, None])
    return out                                      # (B, H, W, D)


def poses_motion(P):
    B, H, W, D = P.shape
    slow = poses_diff(P).reshape(B, H, W * D)
    fast = poses_diff(P[:, ::2]).reshape(B, H // 2, W * D)
    return slow, fast


# ----------------------------------------------------------------------------
# Parameter construction (deterministic, PyTorch-default eval BN statistics)
# ----------------------------------------------------------------------------
def _key_iter(key):
    i = 0
    while True:
        yield jax.random.fold_in(key, i)
        i += 1


def conv_params(key, K, Cin, Cout, L):
    w = jax.random.normal(key, (K, Cin, Cout), jnp.float32) / np.sqrt(K * Cin)
    bn_scale = jnp.full((L,), 1.0 / np.sqrt(1.0 + BN_EPS), jnp.float32)
    bn_shift = jnp.zeros((L,), jnp.float32)
    return (w, bn_scale, bn_shift)


def d1d_params(key, D, F):
    k1, k2 = jax.random.split(key)
    w = jax.random.normal(k1, (D, F), jnp.float32) / np.sqrt(D)
    b = jax.random.normal(k2, (F,), jnp.float32) * 0.01
    s = jnp.full((F,), 1.0 / np.sqrt(1.0 + BN_EPS), jnp.float32)
    sh = jnp.zeros((F,), jnp.float32)
    return (w, b, s, sh)


def linear_params(key, D, F):
    k1, k2 = jax.random.split(key)
    w = jax.random.normal(k1, (D, F), jnp.float32) / np.sqrt(D)
    b = jax.random.normal(k2, (F,), jnp.float32) * 0.01
    return (w, b)


def fe_params(ki, half, F):
    T1, T2, T3 = half, half // 2, half // 4
    return [
        conv_params(next(ki), 3, 3 * F, 2 * F, T1),
        conv_params(next(ki), 3, 2 * F, 2 * F, T1),
        conv_params(next(ki), 3, 2 * F, 4 * F, T2),
        conv_params(next(ki), 3, 4 * F, 4 * F, T2),
        conv_params(next(ki), 3, 4 * F, 8 * F, T3),
        conv_params(next(ki), 3, 8 * F, 8 * F, T3),
    ]


def head_params(ki, in_dim, out_dim):
    return [d1d_params(next(ki), in_dim, 128),
            d1d_params(next(ki), 128, 128),
            linear_params(next(ki), 128, out_dim)]


def init_dmvmt_params(key, frame_l, joint_n, joint_d, feat_d, filters,
                      class_num):
    ki = _key_iter(key)
    F = filters
    half = frame_l // 2
    p = {}
    p['jcd1'] = conv_params(next(ki), 1, feat_d, 2 * F, frame_l)
    p['jcd2'] = conv_params(next(ki), 3, 2 * F, F, frame_l)
    p['jcd3'] = conv_params(next(ki), 1, F, F, frame_l)
    p['slow1'] = conv_params(next(ki), 1, joint_n * joint_d, 2 * F, frame_l)
    p['slow2'] = conv_params(next(ki), 3, 2 * F, F, frame_l)
    p['slow3'] = conv_params(next(ki), 1, F, F, frame_l)
    p['fast1'] = conv_params(next(ki), 1, joint_n * joint_d, 2 * F, half)
    p['fast2'] = conv_params(next(ki), 3, 2 * F, F, half)
    p['fast3'] = conv_params(next(ki), 1, F, F, half)
    for name in ('class', 'sdn', 'gs', 'ge'):
        p['fe_' + name] = fe_params(ki, half, F)
    p['head_class'] = head_params(ki, 8 * F, class_num)
    p['head_sdn'] = head_params(ki, 8 * F, 3)
    p['head_gs'] = head_params(ki, 8 * F, 1)
    p['head_ge'] = head_params(ki, 8 * F, 1)
    return p


# ----------------------------------------------------------------------------
# Packing: stack branches along channels (block-diagonal weights) and expand
# the per-frame BN affine to (L, C) so the kernel is pure matmul + elementwise.
# ----------------------------------------------------------------------------
def _block_diag(mats):
    rows = sum(m.shape[0] for m in mats)
    cols = sum(m.shape[1] for m in mats)
    out = jnp.zeros((rows, cols), jnp.float32)
    r = c = 0
    for m in mats:
        out = out.at[r:r + m.shape[0], c:c + m.shape[1]].set(m)
        r += m.shape[0]
        c += m.shape[1]
    return out


def _expand_bn(vec, cout):
    L = vec.shape[0]
    return jnp.broadcast_to(vec.reshape(L, 1), (L, cout)).astype(jnp.float32)


def _pack_single_conv(layer):
    w, s, sh = layer
    cout = w.shape[2]
    return [w, _expand_bn(s, cout), _expand_bn(sh, cout)]


def _pack_stacked_conv(layers, block_diagonal):
    ws = [l[0] for l in layers]
    K = ws[0].shape[0]
    if block_diagonal:
        w = jnp.stack([_block_diag([wi[k] for wi in ws]) for k in range(K)], 0)
    else:  # all branches read the same input channels -> concat along Cout
        w = jnp.concatenate(ws, axis=2)
    s = jnp.concatenate([_expand_bn(l[1], l[0].shape[2]) for l in layers], 1)
    sh = jnp.concatenate([_expand_bn(l[2], l[0].shape[2]) for l in layers], 1)
    return [w, s, sh]


def _pack_heads(heads, feat_per_branch):
    nb = len(heads)
    D = nb * feat_per_branch
    hidden = heads[0][0][0].shape[1]                     # 128
    w_out_max = max(h[2][0].shape[1] for h in heads)
    W3P = _round_up(max(w_out_max, 8), 8)                # padded output width

    w1 = jnp.zeros((nb, D, hidden), jnp.float32)
    for i, h in enumerate(heads):
        w1 = w1.at[i, i * feat_per_branch:(i + 1) * feat_per_branch, :].set(
            h[0][0])
    b1 = jnp.stack([h[0][1].reshape(1, hidden) for h in heads], 0)
    s1 = jnp.stack([h[0][2].reshape(1, hidden) for h in heads], 0)
    sh1 = jnp.stack([h[0][3].reshape(1, hidden) for h in heads], 0)

    w2 = jnp.stack([h[1][0] for h in heads], 0)
    b2 = jnp.stack([h[1][1].reshape(1, hidden) for h in heads], 0)
    s2 = jnp.stack([h[1][2].reshape(1, hidden) for h in heads], 0)
    sh2 = jnp.stack([h[1][3].reshape(1, hidden) for h in heads], 0)

    w3 = jnp.zeros((nb, hidden, W3P), jnp.float32)
    b3 = jnp.zeros((nb, 1, W3P), jnp.float32)
    for i, h in enumerate(heads):
        wo = h[2][0].shape[1]
        w3 = w3.at[i, :, :wo].set(h[2][0])
        b3 = b3.at[i, 0, :wo].set(h[2][1])
    return [w1, b1, s1, sh1, w2, b2, s2, sh2, w3, b3]


def pack_params(p, filters):
    flat = []
    flat += _pack_single_conv(p['fast1'])
    flat += _pack_single_conv(p['fast2'])
    flat += _pack_single_conv(p['fast3'])
    flat += _pack_single_conv(p['jcd1'])
    flat += _pack_single_conv(p['slow1'])
    flat += _pack_stacked_conv([p['jcd2'], p['slow2']], True)
    flat += _pack_stacked_conv([p['jcd3'], p['slow3']], True)
    fes = [p['fe_class'], p['fe_sdn'], p['fe_gs'], p['fe_ge']]
    flat += _pack_stacked_conv([fe[0] for fe in fes], False)
    for li in range(1, 6):
        flat += _pack_stacked_conv([fe[li] for fe in fes], True)
    heads = [p['head_class'], p['head_sdn'], p['head_gs'], p['head_ge']]
    flat += _pack_heads(heads, 8 * filters)
    return flat


# ----------------------------------------------------------------------------
# The single fused Pallas kernel
# ----------------------------------------------------------------------------
def fused_dmvmt_call(flat, M, diff_slow, diff_fast, filters):
    """Runs the whole dMVMT forward in one pallas_call.

    Returns (B, 4, W3P) padded head outputs:
      row 0 = classifier, 1 = sdn, 2 = GS, 3 = GE (valid columns first).
    """
    B, L, feat_d = M.shape
    H, Q, E = L // 2, L // 4, L // 8
    assert L % 8 == 0 and diff_fast.shape[1] == H
    JD = diff_slow.shape[2]
    F = filters
    nW = len(flat)
    NB = flat[-1].shape[0]            # number of task branches (4)
    W3P = flat[-1].shape[-1]          # padded head-output width

    C_f1 = 2 * F                      # fast conv1 output channels
    C_js = 2 * F                      # pooled jcd|slow channels
    C_h1 = 4 * F                      # staged (jcd1|slow1) channels
    C_ens = 3 * F                     # ensemble channels
    C_g1 = NB * 2 * F                 # 64
    C_g3 = NB * 4 * F                 # 128
    C_g5 = NB * 8 * F                 # 256

    pad_rows = _round_up(8 + L + 1, 8)
    pad_cols = _round_up(max(C_g5, C_h1, C_ens), 128)
    tmp_rows = _round_up(L, 8)
    tmp_cols = _round_up(max(C_js, C_g1, C_g3), 128)

    def kernel(*refs):
        mref, sref, fref = refs[0], refs[1], refs[2]
        W = refs[3:3 + nW]
        o_ref = refs[3 + nW]
        pad = refs[4 + nW]            # padded staging buffer (conv halo rows)
        tmp = refs[5 + nW]            # scratch used by the time max-pools

        pos = [0]

        def take(n):
            r = W[pos[0]:pos[0] + n]
            pos[0] += n
            return r

        def act(y, s_ref, sh_ref):
            # eval BatchNorm (per-frame affine) + LeakyReLU(0.2)
            y = y * s_ref[...] + sh_ref[...]
            return jnp.where(y >= 0.0, y, LRELU_SLOPE * y)

        def conv1(x, w_ref, s_ref, sh_ref):
            y = jnp.dot(x, w_ref[0], preferred_element_type=jnp.float32)
            return act(y, s_ref, sh_ref)

        def stage(x, l, c):
            # place x (l, c) at pad rows [8, 8+l), cols [0, c); zero halo rows
            pad[7:8, 0:c] = jnp.zeros((1, c), jnp.float32)
            pad[8 + l:9 + l, 0:c] = jnp.zeros((1, c), jnp.float32)
            pad[8:8 + l, 0:c] = x

        def conv3_from_pad(l, cin, w_ref, s_ref, sh_ref):
            # 'same' conv (k=3) over the staged, zero-padded activation
            y = jnp.dot(pad[7:7 + l, 0:cin], w_ref[0],
                        preferred_element_type=jnp.float32)
            y = y + jnp.dot(pad[8:8 + l, 0:cin], w_ref[1],
                            preferred_element_type=jnp.float32)
            y = y + jnp.dot(pad[9:9 + l, 0:cin], w_ref[2],
                            preferred_element_type=jnp.float32)
            return act(y, s_ref, sh_ref)

        def pool_into_pad(x, l, c):
            # MaxPool1d(kernel=2, stride=2) over frames, staged back into pad
            lp = l // 2
            tmp[0:l, 0:c] = x
            pad[7:8, 0:c] = jnp.zeros((1, c), jnp.float32)
            pad[8 + lp:9 + lp, 0:c] = jnp.zeros((1, c), jnp.float32)
            for i in range(lp):
                pad[8 + i:9 + i, 0:c] = jnp.max(
                    tmp[2 * i:2 * i + 2, 0:c], axis=0, keepdims=True)

        Mv = mref[0]                                   # (L, feat_d)
        Sv = sref[0]                                   # (L, JD)
        Fv = fref[0]                                   # (H, JD)

        # ------------------ fast motion branch (length H) ------------------
        w, s, sh = take(3)
        f1 = conv1(Fv, w, s, sh)                       # (H, 2F)
        stage(f1, H, C_f1)
        w, s, sh = take(3)
        f2 = conv3_from_pad(H, C_f1, w, s, sh)         # (H, F)
        w, s, sh = take(3)
        xf = conv1(f2, w, s, sh)                       # (H, F)

        # ------------- jcd + slow branches stacked (length L) --------------
        w, s, sh = take(3)
        h1a = conv1(Mv, w, s, sh)                      # (L, 2F) jcd
        w, s, sh = take(3)
        h1b = conv1(Sv, w, s, sh)                      # (L, 2F) slow
        pad[7:8, 0:C_h1] = jnp.zeros((1, C_h1), jnp.float32)
        pad[8 + L:9 + L, 0:C_h1] = jnp.zeros((1, C_h1), jnp.float32)
        pad[8:8 + L, 0:2 * F] = h1a
        pad[8:8 + L, 2 * F:C_h1] = h1b
        w, s, sh = take(3)
        h2 = conv3_from_pad(L, C_h1, w, s, sh)         # (L, 2F) block-diag
        w, s, sh = take(3)
        h3 = conv1(h2, w, s, sh)                       # (L, 2F)

        # --------- ensemble = [jcd_pool | slow_pool | fast], staged ---------
        pool_into_pad(h3, L, C_js)                     # cols [0, 2F)
        pad[7:8, C_js:C_ens] = jnp.zeros((1, F), jnp.float32)
        pad[8 + H:9 + H, C_js:C_ens] = jnp.zeros((1, F), jnp.float32)
        pad[8:8 + H, C_js:C_ens] = xf                  # cols [2F, 3F)

        # ------ feature extractor: 4 task branches stacked on channels ------
        w, s, sh = take(3)
        g = conv3_from_pad(H, C_ens, w, s, sh)         # (H, 4*2F)
        stage(g, H, C_g1)
        w, s, sh = take(3)
        g = conv3_from_pad(H, C_g1, w, s, sh)          # (H, 4*2F)
        pool_into_pad(g, H, C_g1)                      # (Q, 4*2F)
        w, s, sh = take(3)
        g = conv3_from_pad(Q, C_g1, w, s, sh)          # (Q, 4*4F)
        stage(g, Q, C_g3)
        w, s, sh = take(3)
        g = conv3_from_pad(Q, C_g3, w, s, sh)          # (Q, 4*4F)
        pool_into_pad(g, Q, C_g3)                      # (E, 4*4F)
        w, s, sh = take(3)
        g = conv3_from_pad(E, C_g3, w, s, sh)          # (E, 4*8F)
        stage(g, E, C_g5)
        w, s, sh = take(3)
        g = conv3_from_pad(E, C_g5, w, s, sh)          # (E, 4*8F)

        feat = jnp.max(g, axis=0, keepdims=True)       # (1, 4*8F) max over time

        # --------------------- heads: 4 task branches ----------------------
        w1, b1, s1, sh1 = take(4)
        w2, b2, s2, sh2 = take(4)
        w3, b3 = take(2)
        for i in range(NB):
            z = jnp.dot(feat, w1[i],
                        preferred_element_type=jnp.float32) + b1[i]
            z = z * s1[i] + sh1[i]
            z = jnp.where(z >= 0.0, z, LRELU_SLOPE * z)
            z = jnp.dot(z, w2[i],
                        preferred_element_type=jnp.float32) + b2[i]
            z = z * s2[i] + sh2[i]
            z = jnp.where(z >= 0.0, z, LRELU_SLOPE * z)
            out = jnp.dot(z, w3[i],
                          preferred_element_type=jnp.float32) + b3[i]
            o_ref[0, i:i + 1, :] = out                 # (1, W3P)

    data_specs = [
        pl.BlockSpec((1, L, feat_d), lambda b: (b, 0, 0)),
        pl.BlockSpec((1, L, JD), lambda b: (b, 0, 0)),
        pl.BlockSpec((1, H, JD), lambda b: (b, 0, 0)),
    ]
    w_specs = [pl.BlockSpec(a.shape, lambda b, _n=a.ndim: (0,) * _n)
               for a in flat]

    return pl.pallas_call(
        kernel,
        out_shape=jax.ShapeDtypeStruct((B, NB, W3P), jnp.float32),
        grid=(B,),
        in_specs=data_specs + w_specs,
        out_specs=pl.BlockSpec((1, NB, W3P), lambda b: (b, 0, 0)),
        scratch_shapes=[pltpu.VMEM((pad_rows, pad_cols), jnp.float32),
                        pltpu.VMEM((tmp_rows, tmp_cols), jnp.float32)],
        compiler_params=pltpu.CompilerParams(
            dimension_semantics=("parallel",)),
    )(M, diff_slow, diff_fast, *flat)


# ----------------------------------------------------------------------------
# Model forward (eval-mode; Dropout layers are identity)
# ----------------------------------------------------------------------------
def dmvmt_forward(flat, P, M, class_num):
    diff_slow, diff_fast = poses_motion(P)
    filters = flat[0].shape[2] // 2                    # fast1: (1, JD, 2F)
    out = fused_dmvmt_call(flat, M, diff_slow, diff_fast, filters)
    out_class = out[:, 0, :class_num]
    sdn = out[:, 1, :3]
    gs = out[:, 2, :1]
    ge = out[:, 3, :1]
    return sdn, out_class, (gs, ge)


# ----------------------------------------------------------------------------
if __name__ == "__main__":
    B = 2
    frame_l, joint_n, joint_d = 16, 4, 3
    feat_d = joint_n * (joint_n - 1) // 2   # 6 (JCD features)
    filters, class_num = 8, 5

    key = jax.random.PRNGKey(0)
    kP, kM, kW = jax.random.split(key, 3)
    P = jax.random.normal(kP, (B, frame_l, joint_n, joint_d), jnp.float32)
    # TODO(synk): get_CG (JCD feature computation) is not defined in the source
    # module; M is supplied explicitly, matching the forward(P, M) path.
    M = jax.random.normal(kM, (B, frame_l, feat_d), jnp.float32)

    params = init_dmvmt_params(kW, frame_l, joint_n, joint_d, feat_d,
                               filters, class_num)
    flat = pack_params(params, filters)      # packed once, outside jit

    fwd = jax.jit(lambda fl, p, m: dmvmt_forward(fl, p, m, class_num))
    sdn, out_class, (gs, ge) = fwd(flat, P, M)
    jax.block_until_ready((sdn, out_class, gs, ge))

    assert sdn.shape == (B, 3)
    assert out_class.shape == (B, class_num)
    assert gs.shape == (B, 1) and ge.shape == (B, 1)
    print("KERNEL_OK")
</pallas_src>

<mosaic_0001>
module attributes {stable_mosaic.version = 11 : i64} {
  func.func @kernel(%arg0: i32, %arg1: memref<1x16x6xf32, #tpu.memory_space<vmem>>, %arg2: memref<1x16x12xf32, #tpu.memory_space<vmem>>, %arg3: memref<1x8x12xf32, #tpu.memory_space<vmem>>, %arg4: memref<1x12x16xf32, #tpu.memory_space<vmem>>, %arg5: memref<8x16xf32, #tpu.memory_space<vmem>>, %arg6: memref<8x16xf32, #tpu.memory_space<vmem>>, %arg7: memref<3x16x8xf32, #tpu.memory_space<vmem>>, %arg8: memref<8x8xf32, #tpu.memory_space<vmem>>, %arg9: memref<8x8xf32, #tpu.memory_space<vmem>>, %arg10: memref<1x8x8xf32, #tpu.memory_space<vmem>>, %arg11: memref<8x8xf32, #tpu.memory_space<vmem>>, %arg12: memref<8x8xf32, #tpu.memory_space<vmem>>, %arg13: memref<1x6x16xf32, #tpu.memory_space<vmem>>, %arg14: memref<16x16xf32, #tpu.memory_space<vmem>>, %arg15: memref<16x16xf32, #tpu.memory_space<vmem>>, %arg16: memref<1x12x16xf32, #tpu.memory_space<vmem>>, %arg17: memref<16x16xf32, #tpu.memory_space<vmem>>, %arg18: memref<16x16xf32, #tpu.memory_space<vmem>>, %arg19: memref<3x32x16xf32, #tpu.memory_space<vmem>>, %arg20: memref<16x16xf32, #tpu.memory_space<vmem>>, %arg21: memref<16x16xf32, #tpu.memory_space<vmem>>, %arg22: memref<1x16x16xf32, #tpu.memory_space<vmem>>, %arg23: memref<16x16xf32, #tpu.memory_space<vmem>>, %arg24: memref<16x16xf32, #tpu.memory_space<vmem>>, %arg25: memref<3x24x64xf32, #tpu.memory_space<vmem>>, %arg26: memref<8x64xf32, #tpu.memory_space<vmem>>, %arg27: memref<8x64xf32, #tpu.memory_space<vmem>>, %arg28: memref<3x64x64xf32, #tpu.memory_space<vmem>>, %arg29: memref<8x64xf32, #tpu.memory_space<vmem>>, %arg30: memref<8x64xf32, #tpu.memory_space<vmem>>, %arg31: memref<3x64x128xf32, #tpu.memory_space<vmem>>, %arg32: memref<4x128xf32, #tpu.memory_space<vmem>>, %arg33: memref<4x128xf32, #tpu.memory_space<vmem>>, %arg34: memref<3x128x128xf32, #tpu.memory_space<vmem>>, %arg35: memref<4x128xf32, #tpu.memory_space<vmem>>, %arg36: memref<4x128xf32, #tpu.memory_space<vmem>>, %arg37: memref<3x128x256xf32, #tpu.memory_space<vmem>>, %arg38: memref<2x256xf32, #tpu.memory_space<vmem>>, %arg39: memref<2x256xf32, #tpu.memory_space<vmem>>, %arg40: memref<3x256x256xf32, #tpu.memory_space<vmem>>, %arg41: memref<2x256xf32, #tpu.memory_space<vmem>>, %arg42: memref<2x256xf32, #tpu.memory_space<vmem>>, %arg43: memref<4x256x128xf32, #tpu.memory_space<vmem>>, %arg44: memref<4x1x128xf32, #tpu.memory_space<vmem>>, %arg45: memref<4x1x128xf32, #tpu.memory_space<vmem>>, %arg46: memref<4x1x128xf32, #tpu.memory_space<vmem>>, %arg47: memref<4x128x128xf32, #tpu.memory_space<vmem>>, %arg48: memref<4x1x128xf32, #tpu.memory_space<vmem>>, %arg49: memref<4x1x128xf32, #tpu.memory_space<vmem>>, %arg50: memref<4x1x128xf32, #tpu.memory_space<vmem>>, %arg51: memref<4x128x8xf32, #tpu.memory_space<vmem>>, %arg52: memref<4x1x8xf32, #tpu.memory_space<vmem>>, %arg53: memref<1x4x8xf32, #tpu.memory_space<vmem>>, %arg54: memref<32x256xf32, #tpu.memory_space<vmem>>, %arg55: memref<16x128xf32, #tpu.memory_space<vmem>>) attributes {dimension_semantics = [#tpu.dimension_semantics<parallel>], iteration_bounds = array<i64: 2>, scalar_prefetch = 0 : i64, scratch_operands = 2 : i64, tpu.core_type = #tpu.core_type<tc>, window_params = [{transform_indices = @transform_0, window_bounds = array<i64: 1, 16, 6>}, {transform_indices = @transform_1, window_bounds = array<i64: 1, 16, 12>}, {transform_indices = @transform_2, window_bounds = array<i64: 1, 8, 12>}, {pipeline_mode = #tpu.pipeline_mode<synchronous>, transform_indices = @transform_3, window_bounds = array<i64: 1, 12, 16>}, {pipeline_mode = #tpu.pipeline_mode<synchronous>, transform_indices = @transform_4, window_bounds = array<i64: 8, 16>}, {pipeline_mode = #tpu.pipeline_mode<synchronous>, transform_indices = @transform_5, window_bounds = array<i64: 8, 16>}, {pipeline_mode = #tpu.pipeline_mode<synchronous>, transform_indices = @transform_6, window_bounds = array<i64: 3, 16, 8>}, {pipeline_mode = #tpu.pipeline_mode<synchronous>, transform_indices = @transform_7, window_bounds = array<i64: 8, 8>}, {pipeline_mode = #tpu.pipeline_mode<synchronous>, transform_indices = @transform_8, window_bounds = array<i64: 8, 8>}, {pipeline_mode = #tpu.pipeline_mode<synchronous>, transform_indices = @transform_9, window_bounds = array<i64: 1, 8, 8>}, {pipeline_mode = #tpu.pipeline_mode<synchronous>, transform_indices = @transform_10, window_bounds = array<i64: 8, 8>}, {pipeline_mode = #tpu.pipeline_mode<synchronous>, transform_indices = @transform_11, window_bounds = array<i64: 8, 8>}, {pipeline_mode = #tpu.pipeline_mode<synchronous>, transform_indices = @transform_12, window_bounds = array<i64: 1, 6, 16>}, {pipeline_mode = #tpu.pipeline_mode<synchronous>, transform_indices = @transform_13, window_bounds = array<i64: 16, 16>}, {pipeline_mode = #tpu.pipeline_mode<synchronous>, transform_indices = @transform_14, window_bounds = array<i64: 16, 16>}, {pipeline_mode = #tpu.pipeline_mode<synchronous>, transform_indices = @transform_15, window_bounds = array<i64: 1, 12, 16>}, {pipeline_mode = #tpu.pipeline_mode<synchronous>, transform_indices = @transform_16, window_bounds = array<i64: 16, 16>}, {pipeline_mode = #tpu.pipeline_mode<synchronous>, transform_indices = @transform_17, window_bounds = array<i64: 16, 16>}, {pipeline_mode = #tpu.pipeline_mode<synchronous>, transform_indices = @transform_18, window_bounds = array<i64: 3, 32, 16>}, {pipeline_mode = #tpu.pipeline_mode<synchronous>, transform_indices = @transform_19, window_bounds = array<i64: 16, 16>}, {pipeline_mode = #tpu.pipeline_mode<synchronous>, transform_indices = @transform_20, window_bounds = array<i64: 16, 16>}, {pipeline_mode = #tpu.pipeline_mode<synchronous>, transform_indices = @transform_21, window_bounds = array<i64: 1, 16, 16>}, {pipeline_mode = #tpu.pipeline_mode<synchronous>, transform_indices = @transform_22, window_bounds = array<i64: 16, 16>}, {pipeline_mode = #tpu.pipeline_mode<synchronous>, transform_indices = @transform_23, window_bounds = array<i64: 16, 16>}, {pipeline_mode = #tpu.pipeline_mode<synchronous>, transform_indices = @transform_24, window_bounds = array<i64: 3, 24, 64>}, {pipeline_mode = #tpu.pipeline_mode<synchronous>, transform_indices = @transform_25, window_bounds = array<i64: 8, 64>}, {pipeline_mode = #tpu.pipeline_mode<synchronous>, transform_indices = @transform_26, window_bounds = array<i64: 8, 64>}, {pipeline_mode = #tpu.pipeline_mode<synchronous>, transform_indices = @transform_27, window_bounds = array<i64: 3, 64, 64>}, {pipeline_mode = #tpu.pipeline_mode<synchronous>, transform_indices = @transform_28, window_bounds = array<i64: 8, 64>}, {pipeline_mode = #tpu.pipeline_mode<synchronous>, transform_indices = @transform_29, window_bounds = array<i64: 8, 64>}, {pipeline_mode = #tpu.pipeline_mode<synchronous>, transform_indices = @transform_30, window_bounds = array<i64: 3, 64, 128>}, {pipeline_mode = #tpu.pipeline_mode<synchronous>, transform_indices = @transform_31, window_bounds = array<i64: 4, 128>}, {pipeline_mode = #tpu.pipeline_mode<synchronous>, transform_indices = @transform_32, window_bounds = array<i64: 4, 128>}, {pipeline_mode = #tpu.pipeline_mode<synchronous>, transform_indices = @transform_33, window_bounds = array<i64: 3, 128, 128>}, {pipeline_mode = #tpu.pipeline_mode<synchronous>, transform_indices = @transform_34, window_bounds = array<i64: 4, 128>}, {pipeline_mode = #tpu.pipeline_mode<synchronous>, transform_indices = @transform_35, window_bounds = array<i64: 4, 128>}, {pipeline_mode = #tpu.pipeline_mode<synchronous>, transform_indices = @transform_36, window_bounds = array<i64: 3, 128, 256>}, {pipeline_mode = #tpu.pipeline_mode<synchronous>, transform_indices = @transform_37, window_bounds = array<i64: 2, 256>}, {pipeline_mode = #tpu.pipeline_mode<synchronous>, transform_indices = @transform_38, window_bounds = array<i64: 2, 256>}, {pipeline_mode = #tpu.pipeline_mode<synchronous>, transform_indices = @transform_39, window_bounds = array<i64: 3, 256, 256>}, {pipeline_mode = #tpu.pipeline_mode<synchronous>, transform_indices = @transform_40, window_bounds = array<i64: 2, 256>}, {pipeline_mode = #tpu.pipeline_mode<synchronous>, transform_indices = @transform_41, window_bounds = array<i64: 2, 256>}, {pipeline_mode = #tpu.pipeline_mode<synchronous>, transform_indices = @transform_42, window_bounds = array<i64: 4, 256, 128>}, {pipeline_mode = #tpu.pipeline_mode<synchronous>, transform_indices = @transform_43, window_bounds = array<i64: 4, 1, 128>}, {pipeline_mode = #tpu.pipeline_mode<synchronous>, transform_indices = @transform_44, window_bounds = array<i64: 4, 1, 128>}, {pipeline_mode = #tpu.pipeline_mode<synchronous>, transform_indices = @transform_45, window_bounds = array<i64: 4, 1, 128>}, {pipeline_mode = #tpu.pipeline_mode<synchronous>, transform_indices = @transform_46, window_bounds = array<i64: 4, 128, 128>}, {pipeline_mode = #tpu.pipeline_mode<synchronous>, transform_indices = @transform_47, window_bounds = array<i64: 4, 1, 128>}, {pipeline_mode = #tpu.pipeline_mode<synchronous>, transform_indices = @transform_48, window_bounds = array<i64: 4, 1, 128>}, {pipeline_mode = #tpu.pipeline_mode<synchronous>, transform_indices = @transform_49, window_bounds = array<i64: 4, 1, 128>}, {pipeline_mode = #tpu.pipeline_mode<synchronous>, transform_indices = @transform_50, window_bounds = array<i64: 4, 128, 8>}, {pipeline_mode = #tpu.pipeline_mode<synchronous>, transform_indices = @transform_51, window_bounds = array<i64: 4, 1, 8>}, {transform_indices = @transform_52, window_bounds = array<i64: 1, 4, 8>}]} {
    %c0 = arith.constant 0 : index
    %c0_0 = arith.constant 0 : index
    %c0_1 = arith.constant 0 : index
    %0 = vector.load %arg1[%c0, %c0_0, %c0_1] : memref<1x16x6xf32, #tpu.memory_space<vmem>>, vector<1x16x6xf32>
    %1 = vector.shape_cast %0 : vector<1x16x6xf32> to vector<16x6xf32>
    %c0_2 = arith.constant 0 : index
    %c0_3 = arith.constant 0 : index
    %c0_4 = arith.constant 0 : index
    %2 = vector.load %arg2[%c0_2, %c0_3, %c0_4] : memref<1x16x12xf32, #tpu.memory_space<vmem>>, vector<1x16x12xf32>
    %3 = vector.shape_cast %2 : vector<1x16x12xf32> to vector<16x12xf32>
    %c0_5 = arith.constant 0 : index
    %c0_6 = arith.constant 0 : index
    %c0_7 = arith.constant 0 : index
    %4 = vector.load %arg3[%c0_5, %c0_6, %c0_7] : memref<1x8x12xf32, #tpu.memory_space<vmem>>, vector<1x8x12xf32>
    %5 = vector.shape_cast %4 : vector<1x8x12xf32> to vector<8x12xf32>
    %c0_8 = arith.constant 0 : index
    %c0_9 = arith.constant 0 : index
    %c0_10 = arith.constant 0 : index
    %6 = vector.load %arg4[%c0_8, %c0_9, %c0_10] : memref<1x12x16xf32, #tpu.memory_space<vmem>>, vector<1x12x16xf32>
    %7 = vector.shape_cast %6 : vector<1x12x16xf32> to vector<12x16xf32>
    %cst = arith.constant dense<0.000000e+00> : vector<8x16xf32>
    %8 = tpu.matmul %5, %7, %cst {dimension_numbers = #tpu.dot_dimension_numbers<[1], [0], [0], [1], [0, 0, 1, 1], [], []>} : vector<8x12xf32>, vector<12x16xf32>, vector<8x16xf32> -> vector<8x16xf32>
    %c0_11 = arith.constant 0 : index
    %c0_12 = arith.constant 0 : index
    %9 = vector.load %arg5[%c0_11, %c0_12] : memref<8x16xf32, #tpu.memory_space<vmem>>, vector<8x16xf32>
    %10 = arith.mulf %8, %9 : vector<8x16xf32>
    %c0_13 = arith.constant 0 : index
    %c0_14 = arith.constant 0 : index
    %11 = vector.load %arg6[%c0_13, %c0_14] : memref<8x16xf32, #tpu.memory_space<vmem>>, vector<8x16xf32>
    %12 = arith.addf %10, %11 : vector<8x16xf32>
    %cst_15 = arith.constant 0.000000e+00 : f32
    %13 = vector.broadcast %cst_15 : f32 to vector<8x16xf32>
    %14 = arith.cmpf oge, %12, %13 : vector<8x16xf32>
    %cst_16 = arith.constant 2.000000e-01 : f32
    %15 = vector.broadcast %cst_16 : f32 to vector<8x16xf32>
    %16 = arith.mulf %15, %12 : vector<8x16xf32>
    %17 = arith.select %14, %12, %16 : vector<8x16xi1>, vector<8x16xf32>
    %cst_17 = arith.constant 0.000000e+00 : f32
    %18 = vector.broadcast %cst_17 : f32 to vector<1x16xf32>
    %c7 = arith.constant 7 : index
    %c0_18 = arith.constant 0 : index
    %19 = vector.load %arg54[%c7, %c0_18] : memref<32x256xf32, #tpu.memory_space<vmem>>, vector<1x16xf32>
    tpu.vector_store %arg54[%c7, %c0_18], %18 {strides = array<i32>} : memref<32x256xf32, #tpu.memory_space<vmem>>, vector<1x16xf32>,
    %cst_19 = arith.constant 0.000000e+00 : f32
    %20 = vector.broadcast %cst_19 : f32 to vector<1x16xf32>
    %c16 = arith.constant 16 : index
    %c0_20 = arith.constant 0 : index
    %21 = vector.load %arg54[%c16, %c0_20] : memref<32x256xf32, #tpu.memory_space<vmem>>, vector<1x16xf32>
    tpu.vector_store %arg54[%c16, %c0_20], %20 {strides = array<i32>} : memref<32x256xf32, #tpu.memory_space<vmem>>, vector<1x16xf32>,
    %c8 = arith.constant 8 : index
    %c0_21 = arith.constant 0 : index
    %22 = vector.load %arg54[%c8, %c0_21] : memref<32x256xf32, #tpu.memory_space<vmem>>, vector<8x16xf32>
    tpu.vector_store %arg54[%c8, %c0_21], %17 {strides = array<i32>} : memref<32x256xf32, #tpu.memory_space<vmem>>, vector<8x16xf32>,
    %c7_22 = arith.constant 7 : index
    %c0_23 = arith.constant 0 : index
    %23 = vector.load %arg54[%c7_22, %c0_23] : memref<32x256xf32, #tpu.memory_space<vmem>>, vector<8x16xf32>
    %c0_24 = arith.constant 0 : index
    %c0_25 = arith.constant 0 : index
    %c0_26 = arith.constant 0 : index
    %24 = vector.load %arg7[%c0_24, %c0_25, %c0_26] : memref<3x16x8xf32, #tpu.memory_space<vmem>>, vector<1x16x8xf32>
    %25 = vector.shape_cast %24 : vector<1x16x8xf32> to vector<16x8xf32>
    %cst_27 = arith.constant dense<0.000000e+00> : vector<8x8xf32>
    %26 = tpu.matmul %23, %25, %cst_27 {dimension_numbers = #tpu.dot_dimension_numbers<[1], [0], [0], [1], [0, 0, 1, 1], [], []>} : vector<8x16xf32>, vector<16x8xf32>, vector<8x8xf32> -> vector<8x8xf32>
    %c8_28 = arith.constant 8 : index
    %c0_29 = arith.constant 0 : index
    %27 = vector.load %arg54[%c8_28, %c0_29] : memref<32x256xf32, #tpu.memory_space<vmem>>, vector<8x16xf32>
    %c1 = arith.constant 1 : index
    %c0_30 = arith.constant 0 : index
    %c0_31 = arith.constant 0 : index
    %28 = vector.load %arg7[%c1, %c0_30, %c0_31] : memref<3x16x8xf32, #tpu.memory_space<vmem>>, vector<1x16x8xf32>
    %29 = vector.shape_cast %28 : vector<1x16x8xf32> to vector<16x8xf32>
    %cst_32 = arith.constant dense<0.000000e+00> : vector<8x8xf32>
    %30 = tpu.matmul %27, %29, %cst_32 {dimension_numbers = #tpu.dot_dimension_numbers<[1], [0], [0], [1], [0, 0, 1, 1], [], []>} : vector<8x16xf32>, vector<16x8xf32>, vector<8x8xf32> -> vector<8x8xf32>
    %31 = arith.addf %26, %30 : vector<8x8xf32>
    %c9 = arith.constant 9 : index
    %c0_33 = arith.constant 0 : index
    %32 = vector.load %arg54[%c9, %c0_33] : memref<32x256xf32, #tpu.memory_space<vmem>>, vector<8x16xf32>
    %c2 = arith.constant 2 : index
    %c0_34 = arith.constant 0 : index
    %c0_35 = arith.constant 0 : index
    %33 = vector.load %arg7[%c2, %c0_34, %c0_35] : memref<3x16x8xf32, #tpu.memory_space<vmem>>, vector<1x16x8xf32>
    %34 = vector.shape_cast %33 : vector<1x16x8xf32> to vector<16x8xf32>
    %cst_36 = arith.constant dense<0.000000e+00> : vector<8x8xf32>
    %35 = tpu.matmul %32, %34, %cst_36 {dimension_numbers = #tpu.dot_dimension_numbers<[1], [0], [0], [1], [0, 0, 1, 1], [], []>} : vector<8x16xf32>, vector<16x8xf32>, vector<8x8xf32> -> vector<8x8xf32>
    %36 = arith.addf %31, %35 : vector<8x8xf32>
    %c0_37 = arith.constant 0 : index
    %c0_38 = arith.constant 0 : index
    %37 = vector.load %arg8[%c0_37, %c0_38] : memref<8x8xf32, #tpu.memory_space<vmem>>, vector<8x8xf32>
    %38 = arith.mulf %36, %37 : vector<8x8xf32>
    %c0_39 = arith.constant 0 : index
    %c0_40 = arith.constant 0 : index
    %39 = vector.load %arg9[%c0_39, %c0_40] : memref<8x8xf32, #tpu.memory_space<vmem>>, vector<8x8xf32>
    %40 = arith.addf %38, %39 : vector<8x8xf32>
    %cst_41 = arith.constant 0.000000e+00 : f32
    %41 = vector.broadcast %cst_41 : f32 to vector<8x8xf32>
    %42 = arith.cmpf oge, %40, %41 : vector<8x8xf32>
    %cst_42 = arith.constant 2.000000e-01 : f32
    %43 = vector.broadcast %cst_42 : f32 to vector<8x8xf32>
    %44 = arith.mulf %43, %40 : vector<8x8xf32>
    %45 = arith.select %42, %40, %44 : vector<8x8xi1>, vector<8x8xf32>
    %c0_43 = arith.constant 0 : index
    %c0_44 = arith.constant 0 : index
    %c0_45 = arith.constant 0 : index
    %46 = vector.load %arg10[%c0_43, %c0_44, %c0_45] : memref<1x8x8xf32, #tpu.memory_space<vmem>>, vector<1x8x8xf32>
    %47 = vector.shape_cast %46 : vector<1x8x8xf32> to vector<8x8xf32>
    %cst_46 = arith.constant dense<0.000000e+00> : vector<8x8xf32>
    %48 = tpu.matmul %45, %47, %cst_46 {dimension_numbers = #tpu.dot_dimension_numbers<[1], [0], [0], [1], [0, 0, 1, 1], [], []>} : vector<8x8xf32>, vector<8x8xf32>, vector<8x8xf32> -> vector<8x8xf32>
    %c0_47 = arith.constant 0 : index
    %c0_48 = arith.constant 0 : index
    %49 = vector.load %arg11[%c0_47, %c0_48] : memref<8x8xf32, #tpu.memory_space<vmem>>, vector<8x8xf32>
    %50 = arith.mulf %48, %49 : vector<8x8xf32>
    %c0_49 = arith.constant 0 : index
    %c0_50 = arith.constant 0 : index
    %51 = vector.load %arg12[%c0_49, %c0_50] : memref<8x8xf32, #tpu.memory_space<vmem>>, vector<8x8xf32>
    %52 = arith.addf %50, %51 : vector<8x8xf32>
    %cst_51 = arith.constant 0.000000e+00 : f32
    %53 = vector.broadcast %cst_51 : f32 to vector<8x8xf32>
    %54 = arith.cmpf oge, %52, %53 : vector<8x8xf32>
    %cst_52 = arith.constant 2.000000e-01 : f32
    %55 = vector.broadcast %cst_52 : f32 to vector<8x8xf32>
    %56 = arith.mulf %55, %52 : vector<8x8xf32>
    %57 = arith.select %54, %52, %56 : vector<8x8xi1>, vector<8x8xf32>
    %c0_53 = arith.constant 0 : index
    %c0_54 = arith.constant 0 : index
    %c0_55 = arith.constant 0 : index
    %58 = vector.load %arg13[%c0_53, %c0_54, %c0_55] : memref<1x6x16xf32, #tpu.memory_space<vmem>>, vector<1x6x16xf32>
    %59 = vector.shape_cast %58 : vector<1x6x16xf32> to vector<6x16xf32>
    %cst_56 = arith.constant dense<0.000000e+00> : vector<16x16xf32>
    %60 = tpu.matmul %1, %59, %cst_56 {dimension_numbers = #tpu.dot_dimension_numbers<[1], [0], [0], [1], [0, 0, 1, 1], [], []>} : vector<16x6xf32>, vector<6x16xf32>, vector<16x16xf32> -> vector<16x16xf32>
    %c0_57 = arith.constant 0 : index
    %c0_58 = arith.constant 0 : index
    %61 = vector.load %arg14[%c0_57, %c0_58] : memref<16x16xf32, #tpu.memory_space<vmem>>, vector<16x16xf32>
    %62 = arith.mulf %60, %61 : vector<16x16xf32>
    %c0_59 = arith.constant 0 : index
    %c0_60 = arith.constant 0 : index
    %63 = vector.load %arg15[%c0_59, %c0_60] : memref<16x16xf32, #tpu.memory_space<vmem>>, vector<16x16xf32>
    %64 = arith.addf %62, %63 : vector<16x16xf32>
    %cst_61 = arith.constant 0.000000e+00 : f32
    %65 = vector.broadcast %cst_61 : f32 to vector<16x16xf32>
    %66 = arith.cmpf oge, %64, %65 : vector<16x16xf32>
    %cst_62 = arith.constant 2.000000e-01 : f32
    %67 = vector.broadcast %cst_62 : f32 to vector<16x16xf32>
    %68 = arith.mulf %67, %64 : vector<16x16xf32>
    %69 = arith.select %66, %64, %68 : vector<16x16xi1>, vector<16x16xf32>
    %c0_63 = arith.constant 0 : index
    %c0_64 = arith.constant 0 : index
    %c0_65 = arith.constant 0 : index
    %70 = vector.load %arg16[%c0_63, %c0_64, %c0_65] : memref<1x12x16xf32, #tpu.memory_space<vmem>>, vector<1x12x16xf32>
    %71 = vector.shape_cast %70 : vector<1x12x16xf32> to vector<12x16xf32>
    %cst_66 = arith.constant dense<0.000000e+00> : vector<16x16xf32>
    %72 = tpu.matmul %3, %71, %cst_66 {dimension_numbers = #tpu.dot_dimension_numbers<[1], [0], [0], [1], [0, 0, 1, 1], [], []>} : vector<16x12xf32>, vector<12x16xf32>, vector<16x16xf32> -> vector<16x16xf32>
    %c0_67 = arith.constant 0 : index
    %c0_68 = arith.constant 0 : index
    %73 = vector.load %arg17[%c0_67, %c0_68] : memref<16x16xf32, #tpu.memory_space<vmem>>, vector<16x16xf32>
    %74 = arith.mulf %72, %73 : vector<16x16xf32>
    %c0_69 = arith.constant 0 : index
    %c0_70 = arith.constant 0 : index
    %75 = vector.load %arg18[%c0_69, %c0_70] : memref<16x16xf32, #tpu.memory_space<vmem>>, vector<16x16xf32>
    %76 = arith.addf %74, %75 : vector<16x16xf32>
    %cst_71 = arith.constant 0.000000e+00 : f32
    %77 = vector.broadcast %cst_71 : f32 to vector<16x16xf32>
    %78 = arith.cmpf oge, %76, %77 : vector<16x16xf32>
    %cst_72 = arith.constant 2.000000e-01 : f32
    %79 = vector.broadcast %cst_72 : f32 to vector<16x16xf32>
    %80 = arith.mulf %79, %76 : vector<16x16xf32>
    %81 = arith.select %78, %76, %80 : vector<16x16xi1>, vector<16x16xf32>
    %cst_73 = arith.constant 0.000000e+00 : f32
    %82 = vector.broadcast %cst_73 : f32 to vector<1x32xf32>
    %c7_74 = arith.constant 7 : index
    %c0_75 = arith.constant 0 : index
    %83 = vector.load %arg54[%c7_74, %c0_75] : memref<32x256xf32, #tpu.memory_space<vmem>>, vector<1x32xf32>
    tpu.vector_store %arg54[%c7_74, %c0_75], %82 {strides = array<i32>} : memref<32x256xf32, #tpu.memory_space<vmem>>, vector<1x32xf32>,
    %cst_76 = arith.constant 0.000000e+00 : f32
    %84 = vector.broadcast %cst_76 : f32 to vector<1x32xf32>
    %c24 = arith.constant 24 : index
    %c0_77 = arith.constant 0 : index
    %85 = vector.load %arg54[%c24, %c0_77] : memref<32x256xf32, #tpu.memory_space<vmem>>, vector<1x32xf32>
    tpu.vector_store %arg54[%c24, %c0_77], %84 {strides = array<i32>} : memref<32x256xf32, #tpu.memory_space<vmem>>, vector<1x32xf32>,
    %c8_78 = arith.constant 8 : index
    %c0_79 = arith.constant 0 : index
    %86 = vector.load %arg54[%c8_78, %c0_79] : memref<32x256xf32, #tpu.memory_space<vmem>>, vector<16x16xf32>
    tpu.vector_store %arg54[%c8_78, %c0_79], %69 {strides = array<i32>} : memref<32x256xf32, #tpu.memory_space<vmem>>, vector<16x16xf32>,
    %c8_80 = arith.constant 8 : index
    %c16_81 = arith.constant 16 : index
    %87 = vector.load %arg54[%c8_80, %c16_81] : memref<32x256xf32, #tpu.memory_space<vmem>>, vector<16x16xf32>
    tpu.vector_store %arg54[%c8_80, %c16_81], %81 {strides = array<i32>} : memref<32x256xf32, #tpu.memory_space<vmem>>, vector<16x16xf32>,
    %c7_82 = arith.constant 7 : index
    %c0_83 = arith.constant 0 : index
    %88 = vector.load %arg54[%c7_82, %c0_83] : memref<32x256xf32, #tpu.memory_space<vmem>>, vector<16x32xf32>
    %c0_84 = arith.constant 0 : index
    %c0_85 = arith.constant 0 : index
    %c0_86 = arith.constant 0 : index
    %89 = vector.load %arg19[%c0_84, %c0_85, %c0_86] : memref<3x32x16xf32, #tpu.memory_space<vmem>>, vector<1x32x16xf32>
    %90 = vector.shape_cast %89 : vector<1x32x16xf32> to vector<32x16xf32>
    %cst_87 = arith.constant dense<0.000000e+00> : vector<16x16xf32>
    %91 = tpu.matmul %88, %90, %cst_87 {dimension_numbers = #tpu.dot_dimension_numbers<[1], [0], [0], [1], [0, 0, 1, 1], [], []>} : vector<16x32xf32>, vector<32x16xf32>, vector<16x16xf32> -> vector<16x16xf32>
    %c8_88 = arith.constant 8 : index
    %c0_89 = arith.constant 0 : index
    %92 = vector.load %arg54[%c8_88, %c0_89] : memref<32x256xf32, #tpu.memory_space<vmem>>, vector<16x32xf32>
    %c1_90 = arith.constant 1 : index
    %c0_91 = arith.constant 0 : index
    %c0_92 = arith.constant 0 : index
    %93 = vector.load %arg19[%c1_90, %c0_91, %c0_92] : memref<3x32x16xf32, #tpu.memory_space<vmem>>, vector<1x32x16xf32>
    %94 = vector.shape_cast %93 : vector<1x32x16xf32> to vector<32x16xf32>
    %cst_93 = arith.constant dense<0.000000e+00> : vector<16x16xf32>
    %95 = tpu.matmul %92, %94, %cst_93 {dimension_numbers = #tpu.dot_dimension_numbers<[1], [0], [0], [1], [0, 0, 1, 1], [], []>} : vector<16x32xf32>, vector<32x16xf32>, vector<16x16xf32> -> vector<16x16xf32>
    %96 = arith.addf %91, %95 : vector<16x16xf32>
    %c9_94 = arith.constant 9 : index
    %c0_95 = arith.constant 0 : index
    %97 = vector.load %arg54[%c9_94, %c0_95] : memref<32x256xf32, #tpu.memory_space<vmem>>, vector<16x32xf32>
    %c2_96 = arith.constant 2 : index
    %c0_97 = arith.constant 0 : index
    %c0_98 = arith.constant 0 : index
    %98 = vector.load %arg19[%c2_96, %c0_97, %c0_98] : memref<3x32x16xf32, #tpu.memory_space<vmem>>, vector<1x32x16xf32>
    %99 = vector.shape_cast %98 : vector<1x32x16xf32> to vector<32x16xf32>
    %cst_99 = arith.constant dense<0.000000e+00> : vector<16x16xf32>
    %100 = tpu.matmul %97, %99, %cst_99 {dimension_numbers = #tpu.dot_dimension_numbers<[1], [0], [0], [1], [0, 0, 1, 1], [], []>} : vector<16x32xf32>, vector<32x16xf32>, vector<16x16xf32> -> vector<16x16xf32>
    %101 = arith.addf %96, %100 : vector<16x16xf32>
    %c0_100 = arith.constant 0 : index
    %c0_101 = arith.constant 0 : index
    %102 = vector.load %arg20[%c0_100, %c0_101] : memref<16x16xf32, #tpu.memory_space<vmem>>, vector<16x16xf32>
    %103 = arith.mulf %101, %102 : vector<16x16xf32>
    %c0_102 = arith.constant 0 : index
    %c0_103 = arith.constant 0 : index
    %104 = vector.load %arg21[%c0_102, %c0_103] : memref<16x16xf32, #tpu.memory_space<vmem>>, vector<16x16xf32>
    %105 = arith.addf %103, %104 : vector<16x16xf32>
    %cst_104 = arith.constant 0.000000e+00 : f32
    %106 = vector.broadcast %cst_104 : f32 to vector<16x16xf32>
    %107 = arith.cmpf oge, %105, %106 : vector<16x16xf32>
    %cst_105 = arith.constant 2.000000e-01 : f32
    %108 = vector.broadcast %cst_105 : f32 to vector<16x16xf32>
    %109 = arith.mulf %108, %105 : vector<16x16xf32>
    %110 = arith.select %107, %105, %109 : vector<16x16xi1>, vector<16x16xf32>
    %c0_106 = arith.constant 0 : index
    %c0_107 = arith.constant 0 : index
    %c0_108 = arith.constant 0 : index
    %111 = vector.load %arg22[%c0_106, %c0_107, %c0_108] : memref<1x16x16xf32, #tpu.memory_space<vmem>>, vector<1x16x16xf32>
    %112 = vector.shape_cast %111 : vector<1x16x16xf32> to vector<16x16xf32>
    %cst_109 = arith.constant dense<0.000000e+00> : vector<16x16xf32>
    %113 = tpu.matmul %110, %112, %cst_109 {dimension_numbers = #tpu.dot_dimension_numbers<[1], [0], [0], [1], [0, 0, 1, 1], [], []>} : vector<16x16xf32>, vector<16x16xf32>, vector<16x16xf32> -> vector<16x16xf32>
    %c0_110 = arith.constant 0 : index
    %c0_111 = arith.constant 0 : index
    %114 = vector.load %arg23[%c0_110, %c0_111] : memref<16x16xf32, #tpu.memory_space<vmem>>, vector<16x16xf32>
    %115 = arith.mulf %113, %114 : vector<16x16xf32>
    %c0_112 = arith.constant 0 : index
    %c0_113 = arith.constant 0 : index
    %116 = vector.load %arg24[%c0_112, %c0_113] : memref<16x16xf32, #tpu.memory_space<vmem>>, vector<16x16xf32>
    %117 = arith.addf %115, %116 : vector<16x16xf32>
    %cst_114 = arith.constant 0.000000e+00 : f32
    %118 = vector.broadcast %cst_114 : f32 to vector<16x16xf32>
    %119 = arith.cmpf oge, %117, %118 : vector<16x16xf32>
    %cst_115 = arith.constant 2.000000e-01 : f32
    %120 = vector.broadcast %cst_115 : f32 to vector<16x16xf32>
    %121 = arith.mulf %120, %117 : vector<16x16xf32>
    %122 = arith.select %119, %117, %121 : vector<16x16xi1>, vector<16x16xf32>
    %c0_116 = arith.constant 0 : index
    %c0_117 = arith.constant 0 : index
    %123 = vector.load %arg55[%c0_116, %c0_117] : memref<16x128xf32, #tpu.memory_space<vmem>>, vector<16x16xf32>
    tpu.vector_store %arg55[%c0_116, %c0_117], %122 {strides = array<i32>} : memref<16x128xf32, #tpu.memory_space<vmem>>, vector<16x16xf32>,
    %cst_118 = arith.constant 0.000000e+00 : f32
    %124 = vector.broadcast %cst_118 : f32 to vector<1x16xf32>
    %c7_119 = arith.constant 7 : index
    %c0_120 = arith.constant 0 : index
    %125 = vector.load %arg54[%c7_119, %c0_120] : memref<32x256xf32, #tpu.memory_space<vmem>>, vector<1x16xf32>
    tpu.vector_store %arg54[%c7_119, %c0_120], %124 {strides = array<i32>} : memref<32x256xf32, #tpu.memory_space<vmem>>, vector<1x16xf32>,
    %cst_121 = arith.constant 0.000000e+00 : f32
    %126 = vector.broadcast %cst_121 : f32 to vector<1x16xf32>
    %c16_122 = arith.constant 16 : index
    %c0_123 = arith.constant 0 : index
    %127 = vector.load %arg54[%c16_122, %c0_123] : memref<32x256xf32, #tpu.memory_space<vmem>>, vector<1x16xf32>
    tpu.vector_store %arg54[%c16_122, %c0_123], %126 {strides = array<i32>} : memref<32x256xf32, #tpu.memory_space<vmem>>, vector<1x16xf32>,
    %c0_124 = arith.constant 0 : index
    %c0_125 = arith.constant 0 : index
    %128 = vector.load %arg55[%c0_124, %c0_125] : memref<16x128xf32, #tpu.memory_space<vmem>>, vector<2x16xf32>
    %cst_126 = arith.constant dense<0xFF800000> : vector<16xf32>
    %129 = vector.multi_reduction <maximumf>, %128, %cst_126 [0] : vector<2x16xf32> to vector<16xf32>
    %130 = vector.shape_cast %129 : vector<16xf32> to vector<1x16xf32>
    %c8_127 = arith.constant 8 : index
    %c0_128 = arith.constant 0 : index
    %131 = vector.load %arg54[%c8_127, %c0_128] : memref<32x256xf32, #tpu.memory_space<vmem>>, vector<1x16xf32>
    tpu.vector_store %arg54[%c8_127, %c0_128], %130 {strides = array<i32>} : memref<32x256xf32, #tpu.memory_space<vmem>>, vector<1x16xf32>,
    %c2_129 = arith.constant 2 : index
    %c0_130 = arith.constant 0 : index
    %132 = vector.load %arg55[%c2_129, %c0_130] : memref<16x128xf32, #tpu.memory_space<vmem>>, vector<2x16xf32>
    %cst_131 = arith.constant dense<0xFF800000> : vector<16xf32>
    %133 = vector.multi_reduction <maximumf>, %132, %cst_131 [0] : vector<2x16xf32> to vector<16xf32>
    %134 = vector.shape_cast %133 : vector<16xf32> to vector<1x16xf32>
    %c9_132 = arith.constant 9 : index
    %c0_133 = arith.constant 0 : index
    %135 = vector.load %arg54[%c9_132, %c0_133] : memref<32x256xf32, #tpu.memory_space<vmem>>, vector<1x16xf32>
    tpu.vector_store %arg54[%c9_132, %c0_133], %134 {strides = array<i32>} : memref<32x256xf32, #tpu.memory_space<vmem>>, vector<1x16xf32>,
    %c4 = arith.constant 4 : index
    %c0_134 = arith.constant 0 : index
    %136 = vector.load %arg55[%c4, %c0_134] : memref<16x128xf32, #tpu.memory_space<vmem>>, vector<2x16xf32>
    %cst_135 = arith.constant dense<0xFF800000> : vector<16xf32>
    %137 = vector.multi_reduction <maximumf>, %136, %cst_135 [0] : vector<2x16xf32> to vector<16xf32>
    %138 = vector.shape_cast %137 : vector<16xf32> to vector<1x16xf32>
    %c10 = arith.constant 10 : index
    %c0_136 = arith.constant 0 : index
    %139 = vector.load %arg54[%c10, %c0_136] : memref<32x256xf32, #tpu.memory_space<vmem>>, vector<1x16xf32>
    tpu.vector_store %arg54[%c10, %c0_136], %138 {strides = array<i32>} : memref<32x256xf32, #tpu.memory_space<vmem>>, vector<1x16xf32>,
    %c6 = arith.constant 6 : index
    %c0_137 = arith.constant 0 : index
    %140 = vector.load %arg55[%c6, %c0_137] : memref<16x128xf32, #tpu.memory_space<vmem>>, vector<2x16xf32>
    %cst_138 = arith.constant dense<0xFF800000> : vector<16xf32>
    %141 = vector.multi_reduction <maximumf>, %140, %cst_138 [0] : vector<2x16xf32> to vector<16xf32>
    %142 = vector.shape_cast %141 : vector<16xf32> to vector<1x16xf32>
    %c11 = arith.constant 11 : index
    %c0_139 = arith.constant 0 : index
    %143 = vector.load %arg54[%c11, %c0_139] : memref<32x256xf32, #tpu.memory_space<vmem>>, vector<1x16xf32>
    tpu.vector_store %arg54[%c11, %c0_139], %142 {strides = array<i32>} : memref<32x256xf32, #tpu.memory_space<vmem>>, vector<1x16xf32>,
    %c8_140 = arith.constant 8 : index
    %c0_141 = arith.constant 0 : index
    %144 = vector.load %arg55[%c8_140, %c0_141] : memref<16x128xf32, #tpu.memory_space<vmem>>, vector<2x16xf32>
    %cst_142 = arith.constant dense<0xFF800000> : vector<16xf32>
    %145 = vector.multi_reduction <maximumf>, %144, %cst_142 [0] : vector<2x16xf32> to vector<16xf32>
    %146 = vector.shape_cast %145 : vector<16xf32> to vector<1x16xf32>
    %c12 = arith.constant 12 : index
    %c0_143 = arith.constant 0 : index
    %147 = vector.load %arg54[%c12, %c0_143] : memref<32x256xf32, #tpu.memory_space<vmem>>, vector<1x16xf32>
    tpu.vector_store %arg54[%c12, %c0_143], %146 {strides = array<i32>} : memref<32x256xf32, #tpu.memory_space<vmem>>, vector<1x16xf32>,
    %c10_144 = arith.constant 10 : index
    %c0_145 = arith.constant 0 : index
    %148 = vector.load %arg55[%c10_144, %c0_145] : memref<16x128xf32, #tpu.memory_space<vmem>>, vector<2x16xf32>
    %cst_146 = arith.constant dense<0xFF800000> : vector<16xf32>
    %149 = vector.multi_reduction <maximumf>, %148, %cst_146 [0] : vector<2x16xf32> to vector<16xf32>
    %150 = vector.shape_cast %149 : vector<16xf32> to vector<1x16xf32>
    %c13 = arith.constant 13 : index
    %c0_147 = arith.constant 0 : index
    %151 = vector.load %arg54[%c13, %c0_147] : memref<32x256xf32, #tpu.memory_space<vmem>>, vector<1x16xf32>
    tpu.vector_store %arg54[%c13, %c0_147], %150 {strides = array<i32>} : memref<32x256xf32, #tpu.memory_space<vmem>>, vector<1x16xf32>,
    %c12_148 = arith.constant 12 : index
    %c0_149 = arith.constant 0 : index
    %152 = vector.load %arg55[%c12_148, %c0_149] : memref<16x128xf32, #tpu.memory_space<vmem>>, vector<2x16xf32>
    %cst_150 = arith.constant dense<0xFF800000> : vector<16xf32>
    %153 = vector.multi_reduction <maximumf>, %152, %cst_150 [0] : vector<2x16xf32> to vector<16xf32>
    %154 = vector.shape_cast %153 : vector<16xf32> to vector<1x16xf32>
    %c14 = arith.constant 14 : index
    %c0_151 = arith.constant 0 : index
    %155 = vector.load %arg54[%c14, %c0_151] : memref<32x256xf32, #tpu.memory_space<vmem>>, vector<1x16xf32>
    tpu.vector_store %arg54[%c14, %c0_151], %154 {strides = array<i32>} : memref<32x256xf32, #tpu.memory_space<vmem>>, vector<1x16xf32>,
    %c14_152 = arith.constant 14 : index
    %c0_153 = arith.constant 0 : index
    %156 = vector.load %arg55[%c14_152, %c0_153] : memref<16x128xf32, #tpu.memory_space<vmem>>, vector<2x16xf32>
    %cst_154 = arith.constant dense<0xFF800000> : vector<16xf32>
    %157 = vector.multi_reduction <maximumf>, %156, %cst_154 [0] : vector<2x16xf32> to vector<16xf32>
    %158 = vector.shape_cast %157 : vector<16xf32> to vector<1x16xf32>
    %c15 = arith.constant 15 : index
    %c0_155 = arith.constant 0 : index
    %159 = vector.load %arg54[%c15, %c0_155] : memref<32x256xf32, #tpu.memory_space<vmem>>, vector<1x16xf32>
    tpu.vector_store %arg54[%c15, %c0_155], %158 {strides = array<i32>} : memref<32x256xf32, #tpu.memory_space<vmem>>, vector<1x16xf32>,
    %cst_156 = arith.constant 0.000000e+00 : f32
    %160 = vector.broadcast %cst_156 : f32 to vector<1x8xf32>
    %c7_157 = arith.constant 7 : index
    %c16_158 = arith.constant 16 : index
    %161 = vector.load %arg54[%c7_157, %c16_158] : memref<32x256xf32, #tpu.memory_space<vmem>>, vector<1x8xf32>
    tpu.vector_store %arg54[%c7_157, %c16_158], %160 {strides = array<i32>} : memref<32x256xf32, #tpu.memory_space<vmem>>, vector<1x8xf32>,
    %cst_159 = arith.constant 0.000000e+00 : f32
    %162 = vector.broadcast %cst_159 : f32 to vector<1x8xf32>
    %c16_160 = arith.constant 16 : index
    %c16_161 = arith.constant 16 : index
    %163 = vector.load %arg54[%c16_160, %c16_161] : memref<32x256xf32, #tpu.memory_space<vmem>>, vector<1x8xf32>
    tpu.vector_store %arg54[%c16_160, %c16_161], %162 {strides = array<i32>} : memref<32x256xf32, #tpu.memory_space<vmem>>, vector<1x8xf32>,
    %c8_162 = arith.constant 8 : index
    %c16_163 = arith.constant 16 : index
    %164 = vector.load %arg54[%c8_162, %c16_163] : memref<32x256xf32, #tpu.memory_space<vmem>>, vector<8x8xf32>
    tpu.vector_store %arg54[%c8_162, %c16_163], %57 {strides = array<i32>} : memref<32x256xf32, #tpu.memory_space<vmem>>, vector<8x8xf32>,
    %c7_164 = arith.constant 7 : index
    %c0_165 = arith.constant 0 : index
    %165 = vector.load %arg54[%c7_164, %c0_165] : memref<32x256xf32, #tpu.memory_space<vmem>>, vector<8x24xf32>
    %c0_166 = arith.constant 0 : index
    %c0_167 = arith.constant 0 : index
    %c0_168 = arith.constant 0 : index
    %166 = vector.load %arg25[%c0_166, %c0_167, %c0_168] : memref<3x24x64xf32, #tpu.memory_space<vmem>>, vector<1x24x64xf32>
    %167 = vector.shape_cast %166 : vector<1x24x64xf32> to vector<24x64xf32>
    %cst_169 = arith.constant dense<0.000000e+00> : vector<8x64xf32>
    %168 = tpu.matmul %165, %167, %cst_169 {dimension_numbers = #tpu.dot_dimension_numbers<[1], [0], [0], [1], [0, 0, 1, 1], [], []>} : vector<8x24xf32>, vector<24x64xf32>, vector<8x64xf32> -> vector<8x64xf32>
    %c8_170 = arith.constant 8 : index
    %c0_171 = arith.constant 0 : index
    %169 = vector.load %arg54[%c8_170, %c0_171] : memref<32x256xf32, #tpu.memory_space<vmem>>, vector<8x24xf32>
    %c1_172 = arith.constant 1 : index
    %c0_173 = arith.constant 0 : index
    %c0_174 = arith.constant 0 : index
    %170 = vector.load %arg25[%c1_172, %c0_173, %c0_174] : memref<3x24x64xf32, #tpu.memory_space<vmem>>, vector<1x24x64xf32>
    %171 = vector.shape_cast %170 : vector<1x24x64xf32> to vector<24x64xf32>
    %cst_175 = arith.constant dense<0.000000e+00> : vector<8x64xf32>
    %172 = tpu.matmul %169, %171, %cst_175 {dimension_numbers = #tpu.dot_dimension_numbers<[1], [0], [0], [1], [0, 0, 1, 1], [], []>} : vector<8x24xf32>, vector<24x64xf32>, vector<8x64xf32> -> vector<8x64xf32>
    %173 = arith.addf %168, %172 : vector<8x64xf32>
    %c9_176 = arith.constant 9 : index
    %c0_177 = arith.constant 0 : index
    %174 = vector.load %arg54[%c9_176, %c0_177] : memref<32x256xf32, #tpu.memory_space<vmem>>, vector<8x24xf32>
    %c2_178 = arith.constant 2 : index
    %c0_179 = arith.constant 0 : index
    %c0_180 = arith.constant 0 : index
    %175 = vector.load %arg25[%c2_178, %c0_179, %c0_180] : memref<3x24x64xf32, #tpu.memory_space<vmem>>, vector<1x24x64xf32>
    %176 = vector.shape_cast %175 : vector<1x24x64xf32> to vector<24x64xf32>
    %cst_181 = arith.constant dense<0.000000e+00> : vector<8x64xf32>
    %177 = tpu.matmul %174, %176, %cst_181 {dimension_numbers = #tpu.dot_dimension_numbers<[1], [0], [0], [1], [0, 0, 1, 1], [], []>} : vector<8x24xf32>, vector<24x64xf32>, vector<8x64xf32> -> vector<8x64xf32>
    %178 = arith.addf %173, %177 : vector<8x64xf32>
    %c0_182 = arith.constant 0 : index
    %c0_183 = arith.constant 0 : index
    %179 = vector.load %arg26[%c0_182, %c0_183] : memref<8x64xf32, #tpu.memory_space<vmem>>, vector<8x64xf32>
    %180 = arith.mulf %178, %179 : vector<8x64xf32>
    %c0_184 = arith.constant 0 : index
    %c0_185 = arith.constant 0 : index
    %181 = vector.load %arg27[%c0_184, %c0_185] : memref<8x64xf32, #tpu.memory_space<vmem>>, vector<8x64xf32>
    %182 = arith.addf %180, %181 : vector<8x64xf32>
    %cst_186 = arith.constant 0.000000e+00 : f32
    %183 = vector.broadcast %cst_186 : f32 to vector<8x64xf32>
    %184 = arith.cmpf oge, %182, %183 : vector<8x64xf32>
    %cst_187 = arith.constant 2.000000e-01 : f32
    %185 = vector.broadcast %cst_187 : f32 to vector<8x64xf32>
    %186 = arith.mulf %185, %182 : vector<8x64xf32>
    %187 = arith.select %184, %182, %186 : vector<8x64xi1>, vector<8x64xf32>
    %cst_188 = arith.constant 0.000000e+00 : f32
    %188 = vector.broadcast %cst_188 : f32 to vector<1x64xf32>
    %c7_189 = arith.constant 7 : index
    %c0_190 = arith.constant 0 : index
    %189 = vector.load %arg54[%c7_189, %c0_190] : memref<32x256xf32, #tpu.memory_space<vmem>>, vector<1x64xf32>
    tpu.vector_store %arg54[%c7_189, %c0_190], %188 {strides = array<i32>} : memref<32x256xf32, #tpu.memory_space<vmem>>, vector<1x64xf32>,
    %cst_191 = arith.constant 0.000000e+00 : f32
    %190 = vector.broadcast %cst_191 : f32 to vector<1x64xf32>
    %c16_192 = arith.constant 16 : index
    %c0_193 = arith.constant 0 : index
    %191 = vector.load %arg54[%c16_192, %c0_193] : memref<32x256xf32, #tpu.memory_space<vmem>>, vector<1x64xf32>
    tpu.vector_store %arg54[%c16_192, %c0_193], %190 {strides = array<i32>} : memref<32x256xf32, #tpu.memory_space<vmem>>, vector<1x64xf32>,
    %c8_194 = arith.constant 8 : index
    %c0_195 = arith.constant 0 : index
    %192 = vector.load %arg54[%c8_194, %c0_195] : memref<32x256xf32, #tpu.memory_space<vmem>>, vector<8x64xf32>
    tpu.vector_store %arg54[%c8_194, %c0_195], %187 {strides = array<i32>} : memref<32x256xf32, #tpu.memory_space<vmem>>, vector<8x64xf32>,
    %c7_196 = arith.constant 7 : index
    %c0_197 = arith.constant 0 : index
    %193 = vector.load %arg54[%c7_196, %c0_197] : memref<32x256xf32, #tpu.memory_space<vmem>>, vector<8x64xf32>
    %c0_198 = arith.constant 0 : index
    %c0_199 = arith.constant 0 : index
    %c0_200 = arith.constant 0 : index
    %194 = vector.load %arg28[%c0_198, %c0_199, %c0_200] : memref<3x64x64xf32, #tpu.memory_space<vmem>>, vector<1x64x64xf32>
    %195 = vector.shape_cast %194 : vector<1x64x64xf32> to vector<64x64xf32>
    %cst_201 = arith.constant dense<0.000000e+00> : vector<8x64xf32>
    %196 = tpu.matmul %193, %195, %cst_201 {dimension_numbers = #tpu.dot_dimension_numbers<[1], [0], [0], [1], [0, 0, 1, 1], [], []>} : vector<8x64xf32>, vector<64x64xf32>, vector<8x64xf32> -> vector<8x64xf32>
    %c8_202 = arith.constant 8 : index
    %c0_203 = arith.constant 0 : index
    %197 = vector.load %arg54[%c8_202, %c0_203] : memref<32x256xf32, #tpu.memory_space<vmem>>, vector<8x64xf32>
    %c1_204 = arith.constant 1 : index
    %c0_205 = arith.constant 0 : index
    %c0_206 = arith.constant 0 : index
    %198 = vector.load %arg28[%c1_204, %c0_205, %c0_206] : memref<3x64x64xf32, #tpu.memory_space<vmem>>, vector<1x64x64xf32>
    %199 = vector.shape_cast %198 : vector<1x64x64xf32> to vector<64x64xf32>
    %cst_207 = arith.constant dense<0.000000e+00> : vector<8x64xf32>
    %200 = tpu.matmul %197, %199, %cst_207 {dimension_numbers = #tpu.dot_dimension_numbers<[1], [0], [0], [1], [0, 0, 1, 1], [], []>} : vector<8x64xf32>, vector<64x64xf32>, vector<8x64xf32> -> vector<8x64xf32>
    %201 = arith.addf %196, %200 : vector<8x64xf32>
    %c9_208 = arith.constant 9 : index
    %c0_209 = arith.constant 0 : index
    %202 = vector.load %arg54[%c9_208, %c0_209] : memref<32x256xf32, #tpu.memory_space<vmem>>, vector<8x64xf32>
    %c2_210 = arith.constant 2 : index
    %c0_211 = arith.constant 0 : index
    %c0_212 = arith.constant 0 : index
    %203 = vector.load %arg28[%c2_210, %c0_211, %c0_212] : memref<3x64x64xf32, #tpu.memory_space<vmem>>, vector<1x64x64xf32>
    %204 = vector.shape_cast %203 : vector<1x64x64xf32> to vector<64x64xf32>
    %cst_213 = arith.constant dense<0.000000e+00> : vector<8x64xf32>
    %205 = tpu.matmul %202, %204, %cst_213 {dimension_numbers = #tpu.dot_dimension_numbers<[1], [0], [0], [1], [0, 0, 1, 1], [], []>} : vector<8x64xf32>, vector<64x64xf32>, vector<8x64xf32> -> vector<8x64xf32>
    %206 = arith.addf %201, %205 : vector<8x64xf32>
    %c0_214 = arith.constant 0 : index
    %c0_215 = arith.constant 0 : index
    %207 = vector.load %arg29[%c0_214, %c0_215] : memref<8x64xf32, #tpu.memory_space<vmem>>, vector<8x64xf32>
    %208 = arith.mulf %206, %207 : vector<8x64xf32>
    %c0_216 = arith.constant 0 : index
    %c0_217 = arith.constant 0 : index
    %209 = vector.load %arg30[%c0_216, %c0_217] : memref<8x64xf32, #tpu.memory_space<vmem>>, vector<8x64xf32>
    %210 = arith.addf %208, %209 : vector<8x64xf32>
    %cst_218 = arith.constant 0.000000e+00 : f32
    %211 = vector.broadcast %cst_218 : f32 to vector<8x64xf32>
    %212 = arith.cmpf oge, %210, %211 : vector<8x64xf32>
    %cst_219 = arith.constant 2.000000e-01 : f32
    %213 = vector.broadcast %cst_219 : f32 to vector<8x64xf32>
    %214 = arith.mulf %213, %210 : vector<8x64xf32>
    %215 = arith.select %212, %210, %214 : vector<8x64xi1>, vector<8x64xf32>
    %c0_220 = arith.constant 0 : index
    %c0_221 = arith.constant 0 : index
    %216 = vector.load %arg55[%c0_220, %c0_221] : memref<16x128xf32, #tpu.memory_space<vmem>>, vector<8x64xf32>
    tpu.vector_store %arg55[%c0_220, %c0_221], %215 {strides = array<i32>} : memref<16x128xf32, #tpu.memory_space<vmem>>, vector<8x64xf32>,
    %cst_222 = arith.constant 0.000000e+00 : f32
    %217 = vector.broadcast %cst_222 : f32 to vector<1x64xf32>
    %c7_223 = arith.constant 7 : index
    %c0_224 = arith.constant 0 : index
    %218 = vector.load %arg54[%c7_223, %c0_224] : memref<32x256xf32, #tpu.memory_space<vmem>>, vector<1x64xf32>
    tpu.vector_store %arg54[%c7_223, %c0_224], %217 {strides = array<i32>} : memref<32x256xf32, #tpu.memory_space<vmem>>, vector<1x64xf32>,
    %cst_225 = arith.constant 0.000000e+00 : f32
    %219 = vector.broadcast %cst_225 : f32 to vector<1x64xf32>
    %c12_226 = arith.constant 12 : index
    %c0_227 = arith.constant 0 : index
    %220 = vector.load %arg54[%c12_226, %c0_227] : memref<32x256xf32, #tpu.memory_space<vmem>>, vector<1x64xf32>
    tpu.vector_store %arg54[%c12_226, %c0_227], %219 {strides = array<i32>} : memref<32x256xf32, #tpu.memory_space<vmem>>, vector<1x64xf32>,
    %c0_228 = arith.constant 0 : index
    %c0_229 = arith.constant 0 : index
    %221 = vector.load %arg55[%c0_228, %c0_229] : memref<16x128xf32, #tpu.memory_space<vmem>>, vector<2x64xf32>
    %cst_230 = arith.constant dense<0xFF800000> : vector<64xf32>
    %222 = vector.multi_reduction <maximumf>, %221, %cst_230 [0] : vector<2x64xf32> to vector<64xf32>
    %223 = vector.shape_cast %222 : vector<64xf32> to vector<1x64xf32>
    %c8_231 = arith.constant 8 : index
    %c0_232 = arith.constant 0 : index
    %224 = vector.load %arg54[%c8_231, %c0_232] : memref<32x256xf32, #tpu.memory_space<vmem>>, vector<1x64xf32>
    tpu.vector_store %arg54[%c8_231, %c0_232], %223 {strides = array<i32>} : memref<32x256xf32, #tpu.memory_space<vmem>>, vector<1x64xf32>,
    %c2_233 = arith.constant 2 : index
    %c0_234 = arith.constant 0 : index
    %225 = vector.load %arg55[%c2_233, %c0_234] : memref<16x128xf32, #tpu.memory_space<vmem>>, vector<2x64xf32>
    %cst_235 = arith.constant dense<0xFF800000> : vector<64xf32>
    %226 = vector.multi_reduction <maximumf>, %225, %cst_235 [0] : vector<2x64xf32> to vector<64xf32>
    %227 = vector.shape_cast %226 : vector<64xf32> to vector<1x64xf32>
    %c9_236 = arith.constant 9 : index
    %c0_237 = arith.constant 0 : index
    %228 = vector.load %arg54[%c9_236, %c0_237] : memref<32x256xf32, #tpu.memory_space<vmem>>, vector<1x64xf32>
    tpu.vector_store %arg54[%c9_236, %c0_237], %227 {strides = array<i32>} : memref<32x256xf32, #tpu.memory_space<vmem>>, vector<1x64xf32>,
    %c4_238 = arith.constant 4 : index
    %c0_239 = arith.constant 0 : index
    %229 = vector.load %arg55[%c4_238, %c0_239] : memref<16x128xf32, #tpu.memory_space<vmem>>, vector<2x64xf32>
    %cst_240 = arith.constant dense<0xFF800000> : vector<64xf32>
    %230 = vector.multi_reduction <maximumf>, %229, %cst_240 [0] : vector<2x64xf32> to vector<64xf32>
    %231 = vector.shape_cast %230 : vector<64xf32> to vector<1x64xf32>
    %c10_241 = arith.constant 10 : index
    %c0_242 = arith.constant 0 : index
    %232 = vector.load %arg54[%c10_241, %c0_242] : memref<32x256xf32, #tpu.memory_space<vmem>>, vector<1x64xf32>
    tpu.vector_store %arg54[%c10_241, %c0_242], %231 {strides = array<i32>} : memref<32x256xf32, #tpu.memory_space<vmem>>, vector<1x64xf32>,
    %c6_243 = arith.constant 6 : index
    %c0_244 = arith.constant 0 : index
    %233 = vector.load %arg55[%c6_243, %c0_244] : memref<16x128xf32, #tpu.memory_space<vmem>>, vector<2x64xf32>
    %cst_245 = arith.constant dense<0xFF800000> : vector<64xf32>
    %234 = vector.multi_reduction <maximumf>, %233, %cst_245 [0] : vector<2x64xf32> to vector<64xf32>
    %235 = vector.shape_cast %234 : vector<64xf32> to vector<1x64xf32>
    %c11_246 = arith.constant 11 : index
    %c0_247 = arith.constant 0 : index
    %236 = vector.load %arg54[%c11_246, %c0_247] : memref<32x256xf32, #tpu.memory_space<vmem>>, vector<1x64xf32>
    tpu.vector_store %arg54[%c11_246, %c0_247], %235 {strides = array<i32>} : memref<32x256xf32, #tpu.memory_space<vmem>>, vector<1x64xf32>,
    %c7_248 = arith.constant 7 : index
    %c0_249 = arith.constant 0 : index
    %237 = vector.load %arg54[%c7_248, %c0_249] : memref<32x256xf32, #tpu.memory_space<vmem>>, vector<4x64xf32>
    %c0_250 = arith.constant 0 : index
    %c0_251 = arith.constant 0 : index
    %c0_252 = arith.constant 0 : index
    %238 = vector.load %arg31[%c0_250, %c0_251, %c0_252] : memref<3x64x128xf32, #tpu.memory_space<vmem>>, vector<1x64x128xf32>
    %239 = vector.shape_cast %238 : vector<1x64x128xf32> to vector<64x128xf32>
    %cst_253 = arith.constant dense<0.000000e+00> : vector<4x128xf32>
    %240 = tpu.matmul %237, %239, %cst_253 {dimension_numbers = #tpu.dot_dimension_numbers<[1], [0], [0], [1], [0, 0, 1, 1], [], []>} : vector<4x64xf32>, vector<64x128xf32>, vector<4x128xf32> -> vector<4x128xf32>
    %c8_254 = arith.constant 8 : index
    %c0_255 = arith.constant 0 : index
    %241 = vector.load %arg54[%c8_254, %c0_255] : memref<32x256xf32, #tpu.memory_space<vmem>>, vector<4x64xf32>
    %c1_256 = arith.constant 1 : index
    %c0_257 = arith.constant 0 : index
    %c0_258 = arith.constant 0 : index
    %242 = vector.load %arg31[%c1_256, %c0_257, %c0_258] : memref<3x64x128xf32, #tpu.memory_space<vmem>>, vector<1x64x128xf32>
    %243 = vector.shape_cast %242 : vector<1x64x128xf32> to vector<64x128xf32>
    %cst_259 = arith.constant dense<0.000000e+00> : vector<4x128xf32>
    %244 = tpu.matmul %241, %243, %cst_259 {dimension_numbers = #tpu.dot_dimension_numbers<[1], [0], [0], [1], [0, 0, 1, 1], [], []>} : vector<4x64xf32>, vector<64x128xf32>, vector<4x128xf32> -> vector<4x128xf32>
    %245 = arith.addf %240, %244 : vector<4x128xf32>
    %c9_260 = arith.constant 9 : index
    %c0_261 = arith.constant 0 : index
    %246 = vector.load %arg54[%c9_260, %c0_261] : memref<32x256xf32, #tpu.memory_space<vmem>>, vector<4x64xf32>
    %c2_262 = arith.constant 2 : index
    %c0_263 = arith.constant 0 : index
    %c0_264 = arith.constant 0 : index
    %247 = vector.load %arg31[%c2_262, %c0_263, %c0_264] : memref<3x64x128xf32, #tpu.memory_space<vmem>>, vector<1x64x128xf32>
    %248 = vector.shape_cast %247 : vector<1x64x128xf32> to vector<64x128xf32>
    %cst_265 = arith.constant dense<0.000000e+00> : vector<4x128xf32>
    %249 = tpu.matmul %246, %248, %cst_265 {dimension_numbers = #tpu.dot_dimension_numbers<[1], [0], [0], [1], [0, 0, 1, 1], [], []>} : vector<4x64xf32>, vector<64x128xf32>, vector<4x128xf32> -> vector<4x128xf32>
    %250 = arith.addf %245, %249 : vector<4x128xf32>
    %c0_266 = arith.constant 0 : index
    %c0_267 = arith.constant 0 : index
    %251 = vector.load %arg32[%c0_266, %c0_267] : memref<4x128xf32, #tpu.memory_space<vmem>>, vector<4x128xf32>
    %252 = arith.mulf %250, %251 : vector<4x128xf32>
    %c0_268 = arith.constant 0 : index
    %c0_269 = arith.constant 0 : index
    %253 = vector.load %arg33[%c0_268, %c0_269] : memref<4x128xf32, #tpu.memory_space<vmem>>, vector<4x128xf32>
    %254 = arith.addf %252, %253 : vector<4x128xf32>
    %cst_270 = arith.constant 0.000000e+00 : f32
    %255 = vector.broadcast %cst_270 : f32 to vector<4x128xf32>
    %256 = arith.cmpf oge, %254, %255 : vector<4x128xf32>
    %cst_271 = arith.constant 2.000000e-01 : f32
    %257 = vector.broadcast %cst_271 : f32 to vector<4x128xf32>
    %258 = arith.mulf %257, %254 : vector<4x128xf32>
    %259 = arith.select %256, %254, %258 : vector<4x128xi1>, vector<4x128xf32>
    %cst_272 = arith.constant 0.000000e+00 : f32
    %260 = vector.broadcast %cst_272 : f32 to vector<1x128xf32>
    %c7_273 = arith.constant 7 : index
    %c0_274 = arith.constant 0 : index
    %261 = vector.load %arg54[%c7_273, %c0_274] : memref<32x256xf32, #tpu.memory_space<vmem>>, vector<1x128xf32>
    tpu.vector_store %arg54[%c7_273, %c0_274], %260 {strides = array<i32>} : memref<32x256xf32, #tpu.memory_space<vmem>>, vector<1x128xf32>,
    %cst_275 = arith.constant 0.000000e+00 : f32
    %262 = vector.broadcast %cst_275 : f32 to vector<1x128xf32>
    %c12_276 = arith.constant 12 : index
    %c0_277 = arith.constant 0 : index
    %263 = vector.load %arg54[%c12_276, %c0_277] : memref<32x256xf32, #tpu.memory_space<vmem>>, vector<1x128xf32>
    tpu.vector_store %arg54[%c12_276, %c0_277], %262 {strides = array<i32>} : memref<32x256xf32, #tpu.memory_space<vmem>>, vector<1x128xf32>,
    %c8_278 = arith.constant 8 : index
    %c0_279 = arith.constant 0 : index
    %264 = vector.load %arg54[%c8_278, %c0_279] : memref<32x256xf32, #tpu.memory_space<vmem>>, vector<4x128xf32>
    tpu.vector_store %arg54[%c8_278, %c0_279], %259 {strides = array<i32>} : memref<32x256xf32, #tpu.memory_space<vmem>>, vector<4x128xf32>,
    %c7_280 = arith.constant 7 : index
    %c0_281 = arith.constant 0 : index
    %265 = vector.load %arg54[%c7_280, %c0_281] : memref<32x256xf32, #tpu.memory_space<vmem>>, vector<4x128xf32>
    %c0_282 = arith.constant 0 : index
    %c0_283 = arith.constant 0 : index
    %c0_284 = arith.constant 0 : index
    %266 = vector.load %arg34[%c0_282, %c0_283, %c0_284] : memref<3x128x128xf32, #tpu.memory_space<vmem>>, vector<1x128x128xf32>
    %267 = vector.shape_cast %266 : vector<1x128x128xf32> to vector<128x128xf32>
    %cst_285 = arith.constant dense<0.000000e+00> : vector<4x128xf32>
    %268 = tpu.matmul %265, %267, %cst_285 {dimension_numbers = #tpu.dot_dimension_numbers<[1], [0], [0], [1], [0, 0, 1, 1], [], []>} : vector<4x128xf32>, vector<128x128xf32>, vector<4x128xf32> -> vector<4x128xf32>
    %c8_286 = arith.constant 8 : index
    %c0_287 = arith.constant 0 : index
    %269 = vector.load %arg54[%c8_286, %c0_287] : memref<32x256xf32, #tpu.memory_space<vmem>>, vector<4x128xf32>
    %c1_288 = arith.constant 1 : index
    %c0_289 = arith.constant 0 : index
    %c0_290 = arith.constant 0 : index
    %270 = vector.load %arg34[%c1_288, %c0_289, %c0_290] : memref<3x128x128xf32, #tpu.memory_space<vmem>>, vector<1x128x128xf32>
    %271 = vector.shape_cast %270 : vector<1x128x128xf32> to vector<128x128xf32>
    %cst_291 = arith.constant dense<0.000000e+00> : vector<4x128xf32>
    %272 = tpu.matmul %269, %271, %cst_291 {dimension_numbers = #tpu.dot_dimension_numbers<[1], [0], [0], [1], [0, 0, 1, 1], [], []>} : vector<4x128xf32>, vector<128x128xf32>, vector<4x128xf32> -> vector<4x128xf32>
    %273 = arith.addf %268, %272 : vector<4x128xf32>
    %c9_292 = arith.constant 9 : index
    %c0_293 = arith.constant 0 : index
    %274 = vector.load %arg54[%c9_292, %c0_293] : memref<32x256xf32, #tpu.memory_space<vmem>>, vector<4x128xf32>
    %c2_294 = arith.constant 2 : index
    %c0_295 = arith.constant 0 : index
    %c0_296 = arith.constant 0 : index
    %275 = vector.load %arg34[%c2_294, %c0_295, %c0_296] : memref<3x128x128xf32, #tpu.memory_space<vmem>>, vector<1x128x128xf32>
    %276 = vector.shape_cast %275 : vector<1x128x128xf32> to vector<128x128xf32>
    %cst_297 = arith.constant dense<0.000000e+00> : vector<4x128xf32>
    %277 = tpu.matmul %274, %276, %cst_297 {dimension_numbers = #tpu.dot_dimension_numbers<[1], [0], [0], [1], [0, 0, 1, 1], [], []>} : vector<4x128xf32>, vector<128x128xf32>, vector<4x128xf32> -> vector<4x128xf32>
    %278 = arith.addf %273, %277 : vector<4x128xf32>
    %c0_298 = arith.constant 0 : index
    %c0_299 = arith.constant 0 : index
    %279 = vector.load %arg35[%c0_298, %c0_299] : memref<4x128xf32, #tpu.memory_space<vmem>>, vector<4x128xf32>
    %280 = arith.mulf %278, %279 : vector<4x128xf32>
    %c0_300 = arith.constant 0 : index
    %c0_301 = arith.constant 0 : index
    %281 = vector.load %arg36[%c0_300, %c0_301] : memref<4x128xf32, #tpu.memory_space<vmem>>, vector<4x128xf32>
    %282 = arith.addf %280, %281 : vector<4x128xf32>
    %cst_302 = arith.constant 0.000000e+00 : f32
    %283 = vector.broadcast %cst_302 : f32 to vector<4x128xf32>
    %284 = arith.cmpf oge, %282, %283 : vector<4x128xf32>
    %cst_303 = arith.constant 2.000000e-01 : f32
    %285 = vector.broadcast %cst_303 : f32 to vector<4x128xf32>
    %286 = arith.mulf %285, %282 : vector<4x128xf32>
    %287 = arith.select %284, %282, %286 : vector<4x128xi1>, vector<4x128xf32>
    %c0_304 = arith.constant 0 : index
    %c0_305 = arith.constant 0 : index
    %288 = vector.load %arg55[%c0_304, %c0_305] : memref<16x128xf32, #tpu.memory_space<vmem>>, vector<4x128xf32>
    tpu.vector_store %arg55[%c0_304, %c0_305], %287 {strides = array<i32>} : memref<16x128xf32, #tpu.memory_space<vmem>>, vector<4x128xf32>,
    %cst_306 = arith.constant 0.000000e+00 : f32
    %289 = vector.broadcast %cst_306 : f32 to vector<1x128xf32>
    %c7_307 = arith.constant 7 : index
    %c0_308 = arith.constant 0 : index
    %290 = vector.load %arg54[%c7_307, %c0_308] : memref<32x256xf32, #tpu.memory_space<vmem>>, vector<1x128xf32>
    tpu.vector_store %arg54[%c7_307, %c0_308], %289 {strides = array<i32>} : memref<32x256xf32, #tpu.memory_space<vmem>>, vector<1x128xf32>,
    %cst_309 = arith.constant 0.000000e+00 : f32
    %291 = vector.broadcast %cst_309 : f32 to vector<1x128xf32>
    %c10_310 = arith.constant 10 : index
    %c0_311 = arith.constant 0 : index
    %292 = vector.load %arg54[%c10_310, %c0_311] : memref<32x256xf32, #tpu.memory_space<vmem>>, vector<1x128xf32>
    tpu.vector_store %arg54[%c10_310, %c0_311], %291 {strides = array<i32>} : memref<32x256xf32, #tpu.memory_space<vmem>>, vector<1x128xf32>,
    %c0_312 = arith.constant 0 : index
    %c0_313 = arith.constant 0 : index
    %293 = vector.load %arg55[%c0_312, %c0_313] : memref<16x128xf32, #tpu.memory_space<vmem>>, vector<2x128xf32>
    %cst_314 = arith.constant dense<0xFF800000> : vector<128xf32>
    %294 = vector.multi_reduction <maximumf>, %293, %cst_314 [0] : vector<2x128xf32> to vector<128xf32>
    %295 = vector.shape_cast %294 : vector<128xf32> to vector<1x128xf32>
    %c8_315 = arith.constant 8 : index
    %c0_316 = arith.constant 0 : index
    %296 = vector.load %arg54[%c8_315, %c0_316] : memref<32x256xf32, #tpu.memory_space<vmem>>, vector<1x128xf32>
    tpu.vector_store %arg54[%c8_315, %c0_316], %295 {strides = array<i32>} : memref<32x256xf32, #tpu.memory_space<vmem>>, vector<1x128xf32>,
    %c2_317 = arith.constant 2 : index
    %c0_318 = arith.constant 0 : index
    %297 = vector.load %arg55[%c2_317, %c0_318] : memref<16x128xf32, #tpu.memory_space<vmem>>, vector<2x128xf32>
    %cst_319 = arith.constant dense<0xFF800000> : vector<128xf32>
    %298 = vector.multi_reduction <maximumf>, %297, %cst_319 [0] : vector<2x128xf32> to vector<128xf32>
    %299 = vector.shape_cast %298 : vector<128xf32> to vector<1x128xf32>
    %c9_320 = arith.constant 9 : index
    %c0_321 = arith.constant 0 : index
    %300 = vector.load %arg54[%c9_320, %c0_321] : memref<32x256xf32, #tpu.memory_space<vmem>>, vector<1x128xf32>
    tpu.vector_store %arg54[%c9_320, %c0_321], %299 {strides = array<i32>} : memref<32x256xf32, #tpu.memory_space<vmem>>, vector<1x128xf32>,
    %c7_322 = arith.constant 7 : index
    %c0_323 = arith.constant 0 : index
    %301 = vector.load %arg54[%c7_322, %c0_323] : memref<32x256xf32, #tpu.memory_space<vmem>>, vector<2x128xf32>
    %c0_324 = arith.constant 0 : index
    %c0_325 = arith.constant 0 : index
    %c0_326 = arith.constant 0 : index
    %302 = vector.load %arg37[%c0_324, %c0_325, %c0_326] : memref<3x128x256xf32, #tpu.memory_space<vmem>>, vector<1x128x256xf32>
    %303 = vector.shape_cast %302 : vector<1x128x256xf32> to vector<128x256xf32>
    %cst_327 = arith.constant dense<0.000000e+00> : vector<2x256xf32>
    %304 = tpu.matmul %301, %303, %cst_327 {dimension_numbers = #tpu.dot_dimension_numbers<[1], [0], [0], [1], [0, 0, 1, 1], [], []>} : vector<2x128xf32>, vector<128x256xf32>, vector<2x256xf32> -> vector<2x256xf32>
    %c8_328 = arith.constant 8 : index
    %c0_329 = arith.constant 0 : index
    %305 = vector.load %arg54[%c8_328, %c0_329] : memref<32x256xf32, #tpu.memory_space<vmem>>, vector<2x128xf32>
    %c1_330 = arith.constant 1 : index
    %c0_331 = arith.constant 0 : index
    %c0_332 = arith.constant 0 : index
    %306 = vector.load %arg37[%c1_330, %c0_331, %c0_332] : memref<3x128x256xf32, #tpu.memory_space<vmem>>, vector<1x128x256xf32>
    %307 = vector.shape_cast %306 : vector<1x128x256xf32> to vector<128x256xf32>
    %cst_333 = arith.constant dense<0.000000e+00> : vector<2x256xf32>
    %308 = tpu.matmul %305, %307, %cst_333 {dimension_numbers = #tpu.dot_dimension_numbers<[1], [0], [0], [1], [0, 0, 1, 1], [], []>} : vector<2x128xf32>, vector<128x256xf32>, vector<2x256xf32> -> vector<2x256xf32>
    %309 = arith.addf %304, %308 : vector<2x256xf32>
    %c9_334 = arith.constant 9 : index
    %c0_335 = arith.constant 0 : index
    %310 = vector.load %arg54[%c9_334, %c0_335] : memref<32x256xf32, #tpu.memory_space<vmem>>, vector<2x128xf32>
    %c2_336 = arith.constant 2 : index
    %c0_337 = arith.constant 0 : index
    %c0_338 = arith.constant 0 : index
    %311 = vector.load %arg37[%c2_336, %c0_337, %c0_338] : memref<3x128x256xf32, #tpu.memory_space<vmem>>, vector<1x128x256xf32>
    %312 = vector.shape_cast %311 : vector<1x128x256xf32> to vector<128x256xf32>
    %cst_339 = arith.constant dense<0.000000e+00> : vector<2x256xf32>
    %313 = tpu.matmul %310, %312, %cst_339 {dimension_numbers = #tpu.dot_dimension_numbers<[1], [0], [0], [1], [0, 0, 1, 1], [], []>} : vector<2x128xf32>, vector<128x256xf32>, vector<2x256xf32> -> vector<2x256xf32>
    %314 = arith.addf %309, %313 : vector<2x256xf32>
    %c0_340 = arith.constant 0 : index
    %c0_341 = arith.constant 0 : index
    %315 = vector.load %arg38[%c0_340, %c0_341] : memref<2x256xf32, #tpu.memory_space<vmem>>, vector<2x256xf32>
    %316 = arith.mulf %314, %315 : vector<2x256xf32>
    %c0_342 = arith.constant 0 : index
    %c0_343 = arith.constant 0 : index
    %317 = vector.load %arg39[%c0_342, %c0_343] : memref<2x256xf32, #tpu.memory_space<vmem>>, vector<2x256xf32>
    %318 = arith.addf %316, %317 : vector<2x256xf32>
    %cst_344 = arith.constant 0.000000e+00 : f32
    %319 = vector.broadcast %cst_344 : f32 to vector<2x256xf32>
    %320 = arith.cmpf oge, %318, %319 : vector<2x256xf32>
    %cst_345 = arith.constant 2.000000e-01 : f32
    %321 = vector.broadcast %cst_345 : f32 to vector<2x256xf32>
    %322 = arith.mulf %321, %318 : vector<2x256xf32>
    %323 = arith.select %320, %318, %322 : vector<2x256xi1>, vector<2x256xf32>
    %cst_346 = arith.constant 0.000000e+00 : f32
    %324 = vector.broadcast %cst_346 : f32 to vector<1x256xf32>
    %c7_347 = arith.constant 7 : index
    %c0_348 = arith.constant 0 : index
    %325 = vector.load %arg54[%c7_347, %c0_348] : memref<32x256xf32, #tpu.memory_space<vmem>>, vector<1x256xf32>
    tpu.vector_store %arg54[%c7_347, %c0_348], %324 {strides = array<i32>} : memref<32x256xf32, #tpu.memory_space<vmem>>, vector<1x256xf32>,
    %cst_349 = arith.constant 0.000000e+00 : f32
    %326 = vector.broadcast %cst_349 : f32 to vector<1x256xf32>
    %c10_350 = arith.constant 10 : index
    %c0_351 = arith.constant 0 : index
    %327 = vector.load %arg54[%c10_350, %c0_351] : memref<32x256xf32, #tpu.memory_space<vmem>>, vector<1x256xf32>
    tpu.vector_store %arg54[%c10_350, %c0_351], %326 {strides = array<i32>} : memref<32x256xf32, #tpu.memory_space<vmem>>, vector<1x256xf32>,
    %c8_352 = arith.constant 8 : index
    %c0_353 = arith.constant 0 : index
    %328 = vector.load %arg54[%c8_352, %c0_353] : memref<32x256xf32, #tpu.memory_space<vmem>>, vector<2x256xf32>
    tpu.vector_store %arg54[%c8_352, %c0_353], %323 {strides = array<i32>} : memref<32x256xf32, #tpu.memory_space<vmem>>, vector<2x256xf32>,
    %c7_354 = arith.constant 7 : index
    %c0_355 = arith.constant 0 : index
    %329 = vector.load %arg54[%c7_354, %c0_355] : memref<32x256xf32, #tpu.memory_space<vmem>>, vector<2x256xf32>
    %c0_356 = arith.constant 0 : index
    %c0_357 = arith.constant 0 : index
    %c0_358 = arith.constant 0 : index
    %330 = vector.load %arg40[%c0_356, %c0_357, %c0_358] : memref<3x256x256xf32, #tpu.memory_space<vmem>>, vector<1x256x256xf32>
    %331 = vector.shape_cast %330 : vector<1x256x256xf32> to vector<256x256xf32>
    %cst_359 = arith.constant dense<0.000000e+00> : vector<2x256xf32>
    %332 = tpu.matmul %329, %331, %cst_359 {dimension_numbers = #tpu.dot_dimension_numbers<[1], [0], [0], [1], [0, 0, 1, 1], [], []>} : vector<2x256xf32>, vector<256x256xf32>, vector<2x256xf32> -> vector<2x256xf32>
    %c8_360 = arith.constant 8 : index
    %c0_361 = arith.constant 0 : index
    %333 = vector.load %arg54[%c8_360, %c0_361] : memref<32x256xf32, #tpu.memory_space<vmem>>, vector<2x256xf32>
    %c1_362 = arith.constant 1 : index
    %c0_363 = arith.constant 0 : index
    %c0_364 = arith.constant 0 : index
    %334 = vector.load %arg40[%c1_362, %c0_363, %c0_364] : memref<3x256x256xf32, #tpu.memory_space<vmem>>, vector<1x256x256xf32>
    %335 = vector.shape_cast %334 : vector<1x256x256xf32> to vector<256x256xf32>
    %cst_365 = arith.constant dense<0.000000e+00> : vector<2x256xf32>
    %336 = tpu.matmul %333, %335, %cst_365 {dimension_numbers = #tpu.dot_dimension_numbers<[1], [0], [0], [1], [0, 0, 1, 1], [], []>} : vector<2x256xf32>, vector<256x256xf32>, vector<2x256xf32> -> vector<2x256xf32>
    %337 = arith.addf %332, %336 : vector<2x256xf32>
    %c9_366 = arith.constant 9 : index
    %c0_367 = arith.constant 0 : index
    %338 = vector.load %arg54[%c9_366, %c0_367] : memref<32x256xf32, #tpu.memory_space<vmem>>, vector<2x256xf32>
    %c2_368 = arith.constant 2 : index
    %c0_369 = arith.constant 0 : index
    %c0_370 = arith.constant 0 : index
    %339 = vector.load %arg40[%c2_368, %c0_369, %c0_370] : memref<3x256x256xf32, #tpu.memory_space<vmem>>, vector<1x256x256xf32>
    %340 = vector.shape_cast %339 : vector<1x256x256xf32> to vector<256x256xf32>
    %cst_371 = arith.constant dense<0.000000e+00> : vector<2x256xf32>
    %341 = tpu.matmul %338, %340, %cst_371 {dimension_numbers = #tpu.dot_dimension_numbers<[1], [0], [0], [1], [0, 0, 1, 1], [], []>} : vector<2x256xf32>, vector<256x256xf32>, vector<2x256xf32> -> vector<2x256xf32>
    %342 = arith.addf %337, %341 : vector<2x256xf32>
    %c0_372 = arith.constant 0 : index
    %c0_373 = arith.constant 0 : index
    %343 = vector.load %arg41[%c0_372, %c0_373] : memref<2x256xf32, #tpu.memory_space<vmem>>, vector<2x256xf32>
    %344 = arith.mulf %342, %343 : vector<2x256xf32>
    %c0_374 = arith.constant 0 : index
    %c0_375 = arith.constant 0 : index
    %345 = vector.load %arg42[%c0_374, %c0_375] : memref<2x256xf32, #tpu.memory_space<vmem>>, vector<2x256xf32>
    %346 = arith.addf %344, %345 : vector<2x256xf32>
    %cst_376 = arith.constant 0.000000e+00 : f32
    %347 = vector.broadcast %cst_376 : f32 to vector<2x256xf32>
    %348 = arith.cmpf oge, %346, %347 : vector<2x256xf32>
    %cst_377 = arith.constant 2.000000e-01 : f32
    %349 = vector.broadcast %cst_377 : f32 to vector<2x256xf32>
    %350 = arith.mulf %349, %346 : vector<2x256xf32>
    %351 = arith.select %348, %346, %350 : vector<2x256xi1>, vector<2x256xf32>
    %cst_378 = arith.constant dense<0xFF800000> : vector<256xf32>
    %352 = vector.multi_reduction <maximumf>, %351, %cst_378 [0] : vector<2x256xf32> to vector<256xf32>
    %353 = vector.shape_cast %352 : vector<256xf32> to vector<1x256xf32>
    %c0_379 = arith.constant 0 : index
    %c0_380 = arith.constant 0 : index
    %c0_381 = arith.constant 0 : index
    %354 = vector.load %arg43[%c0_379, %c0_380, %c0_381] : memref<4x256x128xf32, #tpu.memory_space<vmem>>, vector<1x256x128xf32>
    %355 = vector.shape_cast %354 : vector<1x256x128xf32> to vector<256x128xf32>
    %cst_382 = arith.constant dense<0.000000e+00> : vector<1x128xf32>
    %356 = tpu.matmul %353, %355, %cst_382 {dimension_numbers = #tpu.dot_dimension_numbers<[1], [0], [0], [1], [0, 0, 1, 1], [], []>} : vector<1x256xf32>, vector<256x128xf32>, vector<1x128xf32> -> vector<1x128xf32>
    %c0_383 = arith.constant 0 : index
    %c0_384 = arith.constant 0 : index
    %c0_385 = arith.constant 0 : index
    %357 = vector.load %arg44[%c0_383, %c0_384, %c0_385] : memref<4x1x128xf32, #tpu.memory_space<vmem>>, vector<1x1x128xf32>
    %358 = vector.shape_cast %357 : vector<1x1x128xf32> to vector<1x128xf32>
    %359 = arith.addf %356, %358 : vector<1x128xf32>
    %c0_386 = arith.constant 0 : index
    %c0_387 = arith.constant 0 : index
    %c0_388 = arith.constant 0 : index
    %360 = vector.load %arg45[%c0_386, %c0_387, %c0_388] : memref<4x1x128xf32, #tpu.memory_space<vmem>>, vector<1x1x128xf32>
    %361 = vector.shape_cast %360 : vector<1x1x128xf32> to vector<1x128xf32>
    %362 = arith.mulf %359, %361 : vector<1x128xf32>
    %c0_389 = arith.constant 0 : index
    %c0_390 = arith.constant 0 : index
    %c0_391 = arith.constant 0 : index
    %363 = vector.load %arg46[%c0_389, %c0_390, %c0_391] : memref<4x1x128xf32, #tpu.memory_space<vmem>>, vector<1x1x128xf32>
    %364 = vector.shape_cast %363 : vector<1x1x128xf32> to vector<1x128xf32>
    %365 = arith.addf %362, %364 : vector<1x128xf32>
    %cst_392 = arith.constant 0.000000e+00 : f32
    %366 = vector.broadcast %cst_392 : f32 to vector<1x128xf32>
    %367 = arith.cmpf oge, %365, %366 : vector<1x128xf32>
    %cst_393 = arith.constant 2.000000e-01 : f32
    %368 = vector.broadcast %cst_393 : f32 to vector<1x128xf32>
    %369 = arith.mulf %368, %365 : vector<1x128xf32>
    %370 = arith.select %367, %365, %369 : vector<1x128xi1>, vector<1x128xf32>
    %c0_394 = arith.constant 0 : index
    %c0_395 = arith.constant 0 : index
    %c0_396 = arith.constant 0 : index
    %371 = vector.load %arg47[%c0_394, %c0_395, %c0_396] : memref<4x128x128xf32, #tpu.memory_space<vmem>>, vector<1x128x128xf32>
    %372 = vector.shape_cast %371 : vector<1x128x128xf32> to vector<128x128xf32>
    %cst_397 = arith.constant dense<0.000000e+00> : vector<1x128xf32>
    %373 = tpu.matmul %370, %372, %cst_397 {dimension_numbers = #tpu.dot_dimension_numbers<[1], [0], [0], [1], [0, 0, 1, 1], [], []>} : vector<1x128xf32>, vector<128x128xf32>, vector<1x128xf32> -> vector<1x128xf32>
    %c0_398 = arith.constant 0 : index
    %c0_399 = arith.constant 0 : index
    %c0_400 = arith.constant 0 : index
    %374 = vector.load %arg48[%c0_398, %c0_399, %c0_400] : memref<4x1x128xf32, #tpu.memory_space<vmem>>, vector<1x1x128xf32>
    %375 = vector.shape_cast %374 : vector<1x1x128xf32> to vector<1x128xf32>
    %376 = arith.addf %373, %375 : vector<1x128xf32>
    %c0_401 = arith.constant 0 : index
    %c0_402 = arith.constant 0 : index
    %c0_403 = arith.constant 0 : index
    %377 = vector.load %arg49[%c0_401, %c0_402, %c0_403] : memref<4x1x128xf32, #tpu.memory_space<vmem>>, vector<1x1x128xf32>
    %378 = vector.shape_cast %377 : vector<1x1x128xf32> to vector<1x128xf32>
    %379 = arith.mulf %376, %378 : vector<1x128xf32>
    %c0_404 = arith.constant 0 : index
    %c0_405 = arith.constant 0 : index
    %c0_406 = arith.constant 0 : index
    %380 = vector.load %arg50[%c0_404, %c0_405, %c0_406] : memref<4x1x128xf32, #tpu.memory_space<vmem>>, vector<1x1x128xf32>
    %381 = vector.shape_cast %380 : vector<1x1x128xf32> to vector<1x128xf32>
    %382 = arith.addf %379, %381 : vector<1x128xf32>
    %cst_407 = arith.constant 0.000000e+00 : f32
    %383 = vector.broadcast %cst_407 : f32 to vector<1x128xf32>
    %384 = arith.cmpf oge, %382, %383 : vector<1x128xf32>
    %cst_408 = arith.constant 2.000000e-01 : f32
    %385 = vector.broadcast %cst_408 : f32 to vector<1x128xf32>
    %386 = arith.mulf %385, %382 : vector<1x128xf32>
    %387 = arith.select %384, %382, %386 : vector<1x128xi1>, vector<1x128xf32>
    %c0_409 = arith.constant 0 : index
    %c0_410 = arith.constant 0 : index
    %c0_411 = arith.constant 0 : index
    %388 = vector.load %arg51[%c0_409, %c0_410, %c0_411] : memref<4x128x8xf32, #tpu.memory_space<vmem>>, vector<1x128x8xf32>
    %389 = vector.shape_cast %388 : vector<1x128x8xf32> to vector<128x8xf32>
    %cst_412 = arith.constant dense<0.000000e+00> : vector<1x8xf32>
    %390 = tpu.matmul %387, %389, %cst_412 {dimension_numbers = #tpu.dot_dimension_numbers<[1], [0], [0], [1], [0, 0, 1, 1], [], []>} : vector<1x128xf32>, vector<128x8xf32>, vector<1x8xf32> -> vector<1x8xf32>
    %c0_413 = arith.constant 0 : index
    %c0_414 = arith.constant 0 : index
    %c0_415 = arith.constant 0 : index
    %391 = vector.load %arg52[%c0_413, %c0_414, %c0_415] : memref<4x1x8xf32, #tpu.memory_space<vmem>>, vector<1x1x8xf32>
    %392 = vector.shape_cast %391 : vector<1x1x8xf32> to vector<1x8xf32>
    %393 = arith.addf %390, %392 : vector<1x8xf32>
    %c0_416 = arith.constant 0 : index
    %c0_417 = arith.constant 0 : index
    %c0_418 = arith.constant 0 : index
    %394 = vector.load %arg53[%c0_416, %c0_417, %c0_418] : memref<1x4x8xf32, #tpu.memory_space<vmem>>, vector<1x1x8xf32>
    %395 = vector.shape_cast %394 : vector<1x1x8xf32> to vector<1x8xf32>
    %396 = vector.shape_cast %393 : vector<1x8xf32> to vector<1x1x8xf32>
    tpu.vector_store %arg53[%c0_416, %c0_417, %c0_418], %396 {strides = array<i32>} : memref<1x4x8xf32, #tpu.memory_space<vmem>>, vector<1x1x8xf32>,
    %c1_419 = arith.constant 1 : index
    %c0_420 = arith.constant 0 : index
    %c0_421 = arith.constant 0 : index
    %397 = vector.load %arg43[%c1_419, %c0_420, %c0_421] : memref<4x256x128xf32, #tpu.memory_space<vmem>>, vector<1x256x128xf32>
    %398 = vector.shape_cast %397 : vector<1x256x128xf32> to vector<256x128xf32>
    %cst_422 = arith.constant dense<0.000000e+00> : vector<1x128xf32>
    %399 = tpu.matmul %353, %398, %cst_422 {dimension_numbers = #tpu.dot_dimension_numbers<[1], [0], [0], [1], [0, 0, 1, 1], [], []>} : vector<1x256xf32>, vector<256x128xf32>, vector<1x128xf32> -> vector<1x128xf32>
    %c1_423 = arith.constant 1 : index
    %c0_424 = arith.constant 0 : index
    %c0_425 = arith.constant 0 : index
    %400 = vector.load %arg44[%c1_423, %c0_424, %c0_425] : memref<4x1x128xf32, #tpu.memory_space<vmem>>, vector<1x1x128xf32>
    %401 = vector.shape_cast %400 : vector<1x1x128xf32> to vector<1x128xf32>
    %402 = arith.addf %399, %401 : vector<1x128xf32>
    %c1_426 = arith.constant 1 : index
    %c0_427 = arith.constant 0 : index
    %c0_428 = arith.constant 0 : index
    %403 = vector.load %arg45[%c1_426, %c0_427, %c0_428] : memref<4x1x128xf32, #tpu.memory_space<vmem>>, vector<1x1x128xf32>
    %404 = vector.shape_cast %403 : vector<1x1x128xf32> to vector<1x128xf32>
    %405 = arith.mulf %402, %404 : vector<1x128xf32>
    %c1_429 = arith.constant 1 : index
    %c0_430 = arith.constant 0 : index
    %c0_431 = arith.constant 0 : index
    %406 = vector.load %arg46[%c1_429, %c0_430, %c0_431] : memref<4x1x128xf32, #tpu.memory_space<vmem>>, vector<1x1x128xf32>
    %407 = vector.shape_cast %406 : vector<1x1x128xf32> to vector<1x128xf32>
    %408 = arith.addf %405, %407 : vector<1x128xf32>
    %cst_432 = arith.constant 0.000000e+00 : f32
    %409 = vector.broadcast %cst_432 : f32 to vector<1x128xf32>
    %410 = arith.cmpf oge, %408, %409 : vector<1x128xf32>
    %cst_433 = arith.constant 2.000000e-01 : f32
    %411 = vector.broadcast %cst_433 : f32 to vector<1x128xf32>
    %412 = arith.mulf %411, %408 : vector<1x128xf32>
    %413 = arith.select %410, %408, %412 : vector<1x128xi1>, vector<1x128xf32>
    %c1_434 = arith.constant 1 : index
    %c0_435 = arith.constant 0 : index
    %c0_436 = arith.constant 0 : index
    %414 = vector.load %arg47[%c1_434, %c0_435, %c0_436] : memref<4x128x128xf32, #tpu.memory_space<vmem>>, vector<1x128x128xf32>
    %415 = vector.shape_cast %414 : vector<1x128x128xf32> to vector<128x128xf32>
    %cst_437 = arith.constant dense<0.000000e+00> : vector<1x128xf32>
    %416 = tpu.matmul %413, %415, %cst_437 {dimension_numbers = #tpu.dot_dimension_numbers<[1], [0], [0], [1], [0, 0, 1, 1], [], []>} : vector<1x128xf32>, vector<128x128xf32>, vector<1x128xf32> -> vector<1x128xf32>
    %c1_438 = arith.constant 1 : index
    %c0_439 = arith.constant 0 : index
    %c0_440 = arith.constant 0 : index
    %417 = vector.load %arg48[%c1_438, %c0_439, %c0_440] : memref<4x1x128xf32, #tpu.memory_space<vmem>>, vector<1x1x128xf32>
    %418 = vector.shape_cast %417 : vector<1x1x128xf32> to vector<1x128xf32>
    %419 = arith.addf %416, %418 : vector<1x128xf32>
    %c1_441 = arith.constant 1 : index
    %c0_442 = arith.constant 0 : index
    %c0_443 = arith.constant 0 : index
    %420 = vector.load %arg49[%c1_441, %c0_442, %c0_443] : memref<4x1x128xf32, #tpu.memory_space<vmem>>, vector<1x1x128xf32>
    %421 = vector.shape_cast %420 : vector<1x1x128xf32> to vector<1x128xf32>
    %422 = arith.mulf %419, %421 : vector<1x128xf32>
    %c1_444 = arith.constant 1 : index
    %c0_445 = arith.constant 0 : index
    %c0_446 = arith.constant 0 : index
    %423 = vector.load %arg50[%c1_444, %c0_445, %c0_446] : memref<4x1x128xf32, #tpu.memory_space<vmem>>, vector<1x1x128xf32>
    %424 = vector.shape_cast %423 : vector<1x1x128xf32> to vector<1x128xf32>
    %425 = arith.addf %422, %424 : vector<1x128xf32>
    %cst_447 = arith.constant 0.000000e+00 : f32
    %426 = vector.broadcast %cst_447 : f32 to vector<1x128xf32>
    %427 = arith.cmpf oge, %425, %426 : vector<1x128xf32>
    %cst_448 = arith.constant 2.000000e-01 : f32
    %428 = vector.broadcast %cst_448 : f32 to vector<1x128xf32>
    %429 = arith.mulf %428, %425 : vector<1x128xf32>
    %430 = arith.select %427, %425, %429 : vector<1x128xi1>, vector<1x128xf32>
    %c1_449 = arith.constant 1 : index
    %c0_450 = arith.constant 0 : index
    %c0_451 = arith.constant 0 : index
    %431 = vector.load %arg51[%c1_449, %c0_450, %c0_451] : memref<4x128x8xf32, #tpu.memory_space<vmem>>, vector<1x128x8xf32>
    %432 = vector.shape_cast %431 : vector<1x128x8xf32> to vector<128x8xf32>
    %cst_452 = arith.constant dense<0.000000e+00> : vector<1x8xf32>
    %433 = tpu.matmul %430, %432, %cst_452 {dimension_numbers = #tpu.dot_dimension_numbers<[1], [0], [0], [1], [0, 0, 1, 1], [], []>} : vector<1x128xf32>, vector<128x8xf32>, vector<1x8xf32> -> vector<1x8xf32>
    %c1_453 = arith.constant 1 : index
    %c0_454 = arith.constant 0 : index
    %c0_455 = arith.constant 0 : index
    %434 = vector.load %arg52[%c1_453, %c0_454, %c0_455] : memref<4x1x8xf32, #tpu.memory_space<vmem>>, vector<1x1x8xf32>
    %435 = vector.shape_cast %434 : vector<1x1x8xf32> to vector<1x8xf32>
    %436 = arith.addf %433, %435 : vector<1x8xf32>
    %c0_456 = arith.constant 0 : index
    %c1_457 = arith.constant 1 : index
    %c0_458 = arith.constant 0 : index
    %437 = vector.load %arg53[%c0_456, %c1_457, %c0_458] : memref<1x4x8xf32, #tpu.memory_space<vmem>>, vector<1x1x8xf32>
    %438 = vector.shape_cast %437 : vector<1x1x8xf32> to vector<1x8xf32>
    %439 = vector.shape_cast %436 : vector<1x8xf32> to vector<1x1x8xf32>
    tpu.vector_store %arg53[%c0_456, %c1_457, %c0_458], %439 {strides = array<i32>} : memref<1x4x8xf32, #tpu.memory_space<vmem>>, vector<1x1x8xf32>,
    %c2_459 = arith.constant 2 : index
    %c0_460 = arith.constant 0 : index
    %c0_461 = arith.constant 0 : index
    %440 = vector.load %arg43[%c2_459, %c0_460, %c0_461] : memref<4x256x128xf32, #tpu.memory_space<vmem>>, vector<1x256x128xf32>
    %441 = vector.shape_cast %440 : vector<1x256x128xf32> to vector<256x128xf32>
    %cst_462 = arith.constant dense<0.000000e+00> : vector<1x128xf32>
    %442 = tpu.matmul %353, %441, %cst_462 {dimension_numbers = #tpu.dot_dimension_numbers<[1], [0], [0], [1], [0, 0, 1, 1], [], []>} : vector<1x256xf32>, vector<256x128xf32>, vector<1x128xf32> -> vector<1x128xf32>
    %c2_463 = arith.constant 2 : index
    %c0_464 = arith.constant 0 : index
    %c0_465 = arith.constant 0 : index
    %443 = vector.load %arg44[%c2_463, %c0_464, %c0_465] : memref<4x1x128xf32, #tpu.memory_space<vmem>>, vector<1x1x128xf32>
    %444 = vector.shape_cast %443 : vector<1x1x128xf32> to vector<1x128xf32>
    %445 = arith.addf %442, %444 : vector<1x128xf32>
    %c2_466 = arith.constant 2 : index
    %c0_467 = arith.constant 0 : index
    %c0_468 = arith.constant 0 : index
    %446 = vector.load %arg45[%c2_466, %c0_467, %c0_468] : memref<4x1x128xf32, #tpu.memory_space<vmem>>, vector<1x1x128xf32>
    %447 = vector.shape_cast %446 : vector<1x1x128xf32> to vector<1x128xf32>
    %448 = arith.mulf %445, %447 : vector<1x128xf32>
    %c2_469 = arith.constant 2 : index
    %c0_470 = arith.constant 0 : index
    %c0_471 = arith.constant 0 : index
    %449 = vector.load %arg46[%c2_469, %c0_470, %c0_471] : memref<4x1x128xf32, #tpu.memory_space<vmem>>, vector<1x1x128xf32>
    %450 = vector.shape_cast %449 : vector<1x1x128xf32> to vector<1x128xf32>
    %451 = arith.addf %448, %450 : vector<1x128xf32>
    %cst_472 = arith.constant 0.000000e+00 : f32
    %452 = vector.broadcast %cst_472 : f32 to vector<1x128xf32>
    %453 = arith.cmpf oge, %451, %452 : vector<1x128xf32>
    %cst_473 = arith.constant 2.000000e-01 : f32
    %454 = vector.broadcast %cst_473 : f32 to vector<1x128xf32>
    %455 = arith.mulf %454, %451 : vector<1x128xf32>
    %456 = arith.select %453, %451, %455 : vector<1x128xi1>, vector<1x128xf32>
    %c2_474 = arith.constant 2 : index
    %c0_475 = arith.constant 0 : index
    %c0_476 = arith.constant 0 : index
    %457 = vector.load %arg47[%c2_474, %c0_475, %c0_476] : memref<4x128x128xf32, #tpu.memory_space<vmem>>, vector<1x128x128xf32>
    %458 = vector.shape_cast %457 : vector<1x128x128xf32> to vector<128x128xf32>
    %cst_477 = arith.constant dense<0.000000e+00> : vector<1x128xf32>
    %459 = tpu.matmul %456, %458, %cst_477 {dimension_numbers = #tpu.dot_dimension_numbers<[1], [0], [0], [1], [0, 0, 1, 1], [], []>} : vector<1x128xf32>, vector<128x128xf32>, vector<1x128xf32> -> vector<1x128xf32>
    %c2_478 = arith.constant 2 : index
    %c0_479 = arith.constant 0 : index
    %c0_480 = arith.constant 0 : index
    %460 = vector.load %arg48[%c2_478, %c0_479, %c0_480] : memref<4x1x128xf32, #tpu.memory_space<vmem>>, vector<1x1x128xf32>
    %461 = vector.shape_cast %460 : vector<1x1x128xf32> to vector<1x128xf32>
    %462 = arith.addf %459, %461 : vector<1x128xf32>
    %c2_481 = arith.constant 2 : index
    %c0_482 = arith.constant 0 : index
    %c0_483 = arith.constant 0 : index
    %463 = vector.load %arg49[%c2_481, %c0_482, %c0_483] : memref<4x1x128xf32, #tpu.memory_space<vmem>>, vector<1x1x128xf32>
    %464 = vector.shape_cast %463 : vector<1x1x128xf32> to vector<1x128xf32>
    %465 = arith.mulf %462, %464 : vector<1x128xf32>
    %c2_484 = arith.constant 2 : index
    %c0_485 = arith.constant 0 : index
    %c0_486 = arith.constant 0 : index
    %466 = vector.load %arg50[%c2_484, %c0_485, %c0_486] : memref<4x1x128xf32, #tpu.memory_space<vmem>>, vector<1x1x128xf32>
    %467 = vector.shape_cast %466 : vector<1x1x128xf32> to vector<1x128xf32>
    %468 = arith.addf %465, %467 : vector<1x128xf32>
    %cst_487 = arith.constant 0.000000e+00 : f32
    %469 = vector.broadcast %cst_487 : f32 to vector<1x128xf32>
    %470 = arith.cmpf oge, %468, %469 : vector<1x128xf32>
    %cst_488 = arith.constant 2.000000e-01 : f32
    %471 = vector.broadcast %cst_488 : f32 to vector<1x128xf32>
    %472 = arith.mulf %471, %468 : vector<1x128xf32>
    %473 = arith.select %470, %468, %472 : vector<1x128xi1>, vector<1x128xf32>
    %c2_489 = arith.constant 2 : index
    %c0_490 = arith.constant 0 : index
    %c0_491 = arith.constant 0 : index
    %474 = vector.load %arg51[%c2_489, %c0_490, %c0_491] : memref<4x128x8xf32, #tpu.memory_space<vmem>>, vector<1x128x8xf32>
    %475 = vector.shape_cast %474 : vector<1x128x8xf32> to vector<128x8xf32>
    %cst_492 = arith.constant dense<0.000000e+00> : vector<1x8xf32>
    %476 = tpu.matmul %473, %475, %cst_492 {dimension_numbers = #tpu.dot_dimension_numbers<[1], [0], [0], [1], [0, 0, 1, 1], [], []>} : vector<1x128xf32>, vector<128x8xf32>, vector<1x8xf32> -> vector<1x8xf32>
    %c2_493 = arith.constant 2 : index
    %c0_494 = arith.constant 0 : index
    %c0_495 = arith.constant 0 : index
    %477 = vector.load %arg52[%c2_493, %c0_494, %c0_495] : memref<4x1x8xf32, #tpu.memory_space<vmem>>, vector<1x1x8xf32>
    %478 = vector.shape_cast %477 : vector<1x1x8xf32> to vector<1x8xf32>
    %479 = arith.addf %476, %478 : vector<1x8xf32>
    %c0_496 = arith.constant 0 : index
    %c2_497 = arith.constant 2 : index
    %c0_498 = arith.constant 0 : index
    %480 = vector.load %arg53[%c0_496, %c2_497, %c0_498] : memref<1x4x8xf32, #tpu.memory_space<vmem>>, vector<1x1x8xf32>
    %481 = vector.shape_cast %480 : vector<1x1x8xf32> to vector<1x8xf32>
    %482 = vector.shape_cast %479 : vector<1x8xf32> to vector<1x1x8xf32>
    tpu.vector_store %arg53[%c0_496, %c2_497, %c0_498], %482 {strides = array<i32>} : memref<1x4x8xf32, #tpu.memory_space<vmem>>, vector<1x1x8xf32>,
    %c3 = arith.constant 3 : index
    %c0_499 = arith.constant 0 : index
    %c0_500 = arith.constant 0 : index
    %483 = vector.load %arg43[%c3, %c0_499, %c0_500] : memref<4x256x128xf32, #tpu.memory_space<vmem>>, vector<1x256x128xf32>
    %484 = vector.shape_cast %483 : vector<1x256x128xf32> to vector<256x128xf32>
    %cst_501 = arith.constant dense<0.000000e+00> : vector<1x128xf32>
    %485 = tpu.matmul %353, %484, %cst_501 {dimension_numbers = #tpu.dot_dimension_numbers<[1], [0], [0], [1], [0, 0, 1, 1], [], []>} : vector<1x256xf32>, vector<256x128xf32>, vector<1x128xf32> -> vector<1x128xf32>
    %c3_502 = arith.constant 3 : index
    %c0_503 = arith.constant 0 : index
    %c0_504 = arith.constant 0 : index
    %486 = vector.load %arg44[%c3_502, %c0_503, %c0_504] : memref<4x1x128xf32, #tpu.memory_space<vmem>>, vector<1x1x128xf32>
    %487 = vector.shape_cast %486 : vector<1x1x128xf32> to vector<1x128xf32>
    %488 = arith.addf %485, %487 : vector<1x128xf32>
    %c3_505 = arith.constant 3 : index
    %c0_506 = arith.constant 0 : index
    %c0_507 = arith.constant 0 : index
    %489 = vector.load %arg45[%c3_505, %c0_506, %c0_507] : memref<4x1x128xf32, #tpu.memory_space<vmem>>, vector<1x1x128xf32>
    %490 = vector.shape_cast %489 : vector<1x1x128xf32> to vector<1x128xf32>
    %491 = arith.mulf %488, %490 : vector<1x128xf32>
    %c3_508 = arith.constant 3 : index
    %c0_509 = arith.constant 0 : index
    %c0_510 = arith.constant 0 : index
    %492 = vector.load %arg46[%c3_508, %c0_509, %c0_510] : memref<4x1x128xf32, #tpu.memory_space<vmem>>, vector<1x1x128xf32>
    %493 = vector.shape_cast %492 : vector<1x1x128xf32> to vector<1x128xf32>
    %494 = arith.addf %491, %493 : vector<1x128xf32>
    %cst_511 = arith.constant 0.000000e+00 : f32
    %495 = vector.broadcast %cst_511 : f32 to vector<1x128xf32>
    %496 = arith.cmpf oge, %494, %495 : vector<1x128xf32>
    %cst_512 = arith.constant 2.000000e-01 : f32
    %497 = vector.broadcast %cst_512 : f32 to vector<1x128xf32>
    %498 = arith.mulf %497, %494 : vector<1x128xf32>
    %499 = arith.select %496, %494, %498 : vector<1x128xi1>, vector<1x128xf32>
    %c3_513 = arith.constant 3 : index
    %c0_514 = arith.constant 0 : index
    %c0_515 = arith.constant 0 : index
    %500 = vector.load %arg47[%c3_513, %c0_514, %c0_515] : memref<4x128x128xf32, #tpu.memory_space<vmem>>, vector<1x128x128xf32>
    %501 = vector.shape_cast %500 : vector<1x128x128xf32> to vector<128x128xf32>
    %cst_516 = arith.constant dense<0.000000e+00> : vector<1x128xf32>
    %502 = tpu.matmul %499, %501, %cst_516 {dimension_numbers = #tpu.dot_dimension_numbers<[1], [0], [0], [1], [0, 0, 1, 1], [], []>} : vector<1x128xf32>, vector<128x128xf32>, vector<1x128xf32> -> vector<1x128xf32>
    %c3_517 = arith.constant 3 : index
    %c0_518 = arith.constant 0 : index
    %c0_519 = arith.constant 0 : index
    %503 = vector.load %arg48[%c3_517, %c0_518, %c0_519] : memref<4x1x128xf32, #tpu.memory_space<vmem>>, vector<1x1x128xf32>
    %504 = vector.shape_cast %503 : vector<1x1x128xf32> to vector<1x128xf32>
    %505 = arith.addf %502, %504 : vector<1x128xf32>
    %c3_520 = arith.constant 3 : index
    %c0_521 = arith.constant 0 : index
    %c0_522 = arith.constant 0 : index
    %506 = vector.load %arg49[%c3_520, %c0_521, %c0_522] : memref<4x1x128xf32, #tpu.memory_space<vmem>>, vector<1x1x128xf32>
    %507 = vector.shape_cast %506 : vector<1x1x128xf32> to vector<1x128xf32>
    %508 = arith.mulf %505, %507 : vector<1x128xf32>
    %c3_523 = arith.constant 3 : index
    %c0_524 = arith.constant 0 : index
    %c0_525 = arith.constant 0 : index
    %509 = vector.load %arg50[%c3_523, %c0_524, %c0_525] : memref<4x1x128xf32, #tpu.memory_space<vmem>>, vector<1x1x128xf32>
    %510 = vector.shape_cast %509 : vector<1x1x128xf32> to vector<1x128xf32>
    %511 = arith.addf %508, %510 : vector<1x128xf32>
    %cst_526 = arith.constant 0.000000e+00 : f32
    %512 = vector.broadcast %cst_526 : f32 to vector<1x128xf32>
    %513 = arith.cmpf oge, %511, %512 : vector<1x128xf32>
    %cst_527 = arith.constant 2.000000e-01 : f32
    %514 = vector.broadcast %cst_527 : f32 to vector<1x128xf32>
    %515 = arith.mulf %514, %511 : vector<1x128xf32>
    %516 = arith.select %513, %511, %515 : vector<1x128xi1>, vector<1x128xf32>
    %c3_528 = arith.constant 3 : index
    %c0_529 = arith.constant 0 : index
    %c0_530 = arith.constant 0 : index
    %517 = vector.load %arg51[%c3_528, %c0_529, %c0_530] : memref<4x128x8xf32, #tpu.memory_space<vmem>>, vector<1x128x8xf32>
    %518 = vector.shape_cast %517 : vector<1x128x8xf32> to vector<128x8xf32>
    %cst_531 = arith.constant dense<0.000000e+00> : vector<1x8xf32>
    %519 = tpu.matmul %516, %518, %cst_531 {dimension_numbers = #tpu.dot_dimension_numbers<[1], [0], [0], [1], [0, 0, 1, 1], [], []>} : vector<1x128xf32>, vector<128x8xf32>, vector<1x8xf32> -> vector<1x8xf32>
    %c3_532 = arith.constant 3 : index
    %c0_533 = arith.constant 0 : index
    %c0_534 = arith.constant 0 : index
    %520 = vector.load %arg52[%c3_532, %c0_533, %c0_534] : memref<4x1x8xf32, #tpu.memory_space<vmem>>, vector<1x1x8xf32>
    %521 = vector.shape_cast %520 : vector<1x1x8xf32> to vector<1x8xf32>
    %522 = arith.addf %519, %521 : vector<1x8xf32>
    %c0_535 = arith.constant 0 : index
    %c3_536 = arith.constant 3 : index
    %c0_537 = arith.constant 0 : index
    %523 = vector.load %arg53[%c0_535, %c3_536, %c0_537] : memref<1x4x8xf32, #tpu.memory_space<vmem>>, vector<1x1x8xf32>
    %524 = vector.shape_cast %523 : vector<1x1x8xf32> to vector<1x8xf32>
    %525 = vector.shape_cast %522 : vector<1x8xf32> to vector<1x1x8xf32>
    tpu.vector_store %arg53[%c0_535, %c3_536, %c0_537], %525 {strides = array<i32>} : memref<1x4x8xf32, #tpu.memory_space<vmem>>, vector<1x1x8xf32>,
    return
  }
  func.func @transform_0(%arg0: i32) -> (i32, i32, i32) {
    %c0_i32 = arith.constant 0 : i32
    %c0_i32_0 = arith.constant 0 : i32
    %c0_i32_1 = arith.constant 0 : i32
    return %arg0, %c0_i32, %c0_i32_0 : i32, i32, i32
  }
  func.func @transform_1(%arg0: i32) -> (i32, i32, i32) {
    %c0_i32 = arith.constant 0 : i32
    %c0_i32_0 = arith.constant 0 : i32
    %c0_i32_1 = arith.constant 0 : i32
    return %arg0, %c0_i32, %c0_i32_0 : i32, i32, i32
  }
  func.func @transform_2(%arg0: i32) -> (i32, i32, i32) {
    %c0_i32 = arith.constant 0 : i32
    %c0_i32_0 = arith.constant 0 : i32
    %c0_i32_1 = arith.constant 0 : i32
    return %arg0, %c0_i32, %c0_i32_0 : i32, i32, i32
  }
  func.func @transform_3(%arg0: i32) -> (i32, i32, i32) {
    %c0_i32 = arith.constant 0 : i32
    %c0_i32_0 = arith.constant 0 : i32
    %c0_i32_1 = arith.constant 0 : i32
    %c0_i32_2 = arith.constant 0 : i32
    return %c0_i32, %c0_i32_0, %c0_i32_1 : i32, i32, i32
  }
  func.func @transform_4(%arg0: i32) -> (i32, i32) {
    %c0_i32 = arith.constant 0 : i32
    %c0_i32_0 = arith.constant 0 : i32
    %c0_i32_1 = arith.constant 0 : i32
    return %c0_i32, %c0_i32_0 : i32, i32
  }
  func.func @transform_5(%arg0: i32) -> (i32, i32) {
    %c0_i32 = arith.constant 0 : i32
    %c0_i32_0 = arith.constant 0 : i32
    %c0_i32_1 = arith.constant 0 : i32
    return %c0_i32, %c0_i32_0 : i32, i32
  }
  func.func @transform_6(%arg0: i32) -> (i32, i32, i32) {
    %c0_i32 = arith.constant 0 : i32
    %c0_i32_0 = arith.constant 0 : i32
    %c0_i32_1 = arith.constant 0 : i32
    %c0_i32_2 = arith.constant 0 : i32
    return %c0_i32, %c0_i32_0, %c0_i32_1 : i32, i32, i32
  }
  func.func @transform_7(%arg0: i32) -> (i32, i32) {
    %c0_i32 = arith.constant 0 : i32
    %c0_i32_0 = arith.constant 0 : i32
    %c0_i32_1 = arith.constant 0 : i32
    return %c0_i32, %c0_i32_0 : i32, i32
  }
  func.func @transform_8(%arg0: i32) -> (i32, i32) {
    %c0_i32 = arith.constant 0 : i32
    %c0_i32_0 = arith.constant 0 : i32
    %c0_i32_1 = arith.constant 0 : i32
    return %c0_i32, %c0_i32_0 : i32, i32
  }
  func.func @transform_9(%arg0: i32) -> (i32, i32, i32) {
    %c0_i32 = arith.constant 0 : i32
    %c0_i32_0 = arith.constant 0 : i32
    %c0_i32_1 = arith.constant 0 : i32
    %c0_i32_2 = arith.constant 0 : i32
    return %c0_i32, %c0_i32_0, %c0_i32_1 : i32, i32, i32
  }
  func.func @transform_10(%arg0: i32) -> (i32, i32) {
    %c0_i32 = arith.constant 0 : i32
    %c0_i32_0 = arith.constant 0 : i32
    %c0_i32_1 = arith.constant 0 : i32
    return %c0_i32, %c0_i32_0 : i32, i32
  }
  func.func @transform_11(%arg0: i32) -> (i32, i32) {
    %c0_i32 = arith.constant 0 : i32
    %c0_i32_0 = arith.constant 0 : i32
    %c0_i32_1 = arith.constant 0 : i32
    return %c0_i32, %c0_i32_0 : i32, i32
  }
  func.func @transform_12(%arg0: i32) -> (i32, i32, i32) {
    %c0_i32 = arith.constant 0 : i32
    %c0_i32_0 = arith.constant 0 : i32
    %c0_i32_1 = arith.constant 0 : i32
    %c0_i32_2 = arith.constant 0 : i32
    return %c0_i32, %c0_i32_0, %c0_i32_1 : i32, i32, i32
  }
  func.func @transform_13(%arg0: i32) -> (i32, i32) {
    %c0_i32 = arith.constant 0 : i32
    %c0_i32_0 = arith.constant 0 : i32
    %c0_i32_1 = arith.constant 0 : i32
    return %c0_i32, %c0_i32_0 : i32, i32
  }
  func.func @transform_14(%arg0: i32) -> (i32, i32) {
    %c0_i32 = arith.constant 0 : i32
    %c0_i32_0 = arith.constant 0 : i32
    %c0_i32_1 = arith.constant 0 : i32
    return %c0_i32, %c0_i32_0 : i32, i32
  }
  func.func @transform_15(%arg0: i32) -> (i32, i32, i32) {
    %c0_i32 = arith.constant 0 : i32
    %c0_i32_0 = arith.constant 0 : i32
    %c0_i32_1 = arith.constant 0 : i32
    %c0_i32_2 = arith.constant 0 : i32
    return %c0_i32, %c0_i32_0, %c0_i32_1 : i32, i32, i32
  }
  func.func @transform_16(%arg0: i32) -> (i32, i32) {
    %c0_i32 = arith.constant 0 : i32
    %c0_i32_0 = arith.constant 0 : i32
    %c0_i32_1 = arith.constant 0 : i32
    return %c0_i32, %c0_i32_0 : i32, i32
  }
  func.func @transform_17(%arg0: i32) -> (i32, i32) {
    %c0_i32 = arith.constant 0 : i32
    %c0_i32_0 = arith.constant 0 : i32
    %c0_i32_1 = arith.constant 0 : i32
    return %c0_i32, %c0_i32_0 : i32, i32
  }
  func.func @transform_18(%arg0: i32) -> (i32, i32, i32) {
    %c0_i32 = arith.constant 0 : i32
    %c0_i32_0 = arith.constant 0 : i32
    %c0_i32_1 = arith.constant 0 : i32
    %c0_i32_2 = arith.constant 0 : i32
    return %c0_i32, %c0_i32_0, %c0_i32_1 : i32, i32, i32
  }
  func.func @transform_19(%arg0: i32) -> (i32, i32) {
    %c0_i32 = arith.constant 0 : i32
    %c0_i32_0 = arith.constant 0 : i32
    %c0_i32_1 = arith.constant 0 : i32
    return %c0_i32, %c0_i32_0 : i32, i32
  }
  func.func @transform_20(%arg0: i32) -> (i32, i32) {
    %c0_i32 = arith.constant 0 : i32
    %c0_i32_0 = arith.constant 0 : i32
    %c0_i32_1 = arith.constant 0 : i32
    return %c0_i32, %c0_i32_0 : i32, i32
  }
  func.func @transform_21(%arg0: i32) -> (i32, i32, i32) {
    %c0_i32 = arith.constant 0 : i32
    %c0_i32_0 = arith.constant 0 : i32
    %c0_i32_1 = arith.constant 0 : i32
    %c0_i32_2 = arith.constant 0 : i32
    return %c0_i32, %c0_i32_0, %c0_i32_1 : i32, i32, i32
  }
  func.func @transform_22(%arg0: i32) -> (i32, i32) {
    %c0_i32 = arith.constant 0 : i32
    %c0_i32_0 = arith.constant 0 : i32
    %c0_i32_1 = arith.constant 0 : i32
    return %c0_i32, %c0_i32_0 : i32, i32
  }
  func.func @transform_23(%arg0: i32) -> (i32, i32) {
    %c0_i32 = arith.constant 0 : i32
    %c0_i32_0 = arith.constant 0 : i32
    %c0_i32_1 = arith.constant 0 : i32
    return %c0_i32, %c0_i32_0 : i32, i32
  }
  func.func @transform_24(%arg0: i32) -> (i32, i32, i32) {
    %c0_i32 = arith.constant 0 : i32
    %c0_i32_0 = arith.constant 0 : i32
    %c0_i32_1 = arith.constant 0 : i32
    %c0_i32_2 = arith.constant 0 : i32
    return %c0_i32, %c0_i32_0, %c0_i32_1 : i32, i32, i32
  }
  func.func @transform_25(%arg0: i32) -> (i32, i32) {
    %c0_i32 = arith.constant 0 : i32
    %c0_i32_0 = arith.constant 0 : i32
    %c0_i32_1 = arith.constant 0 : i32
    return %c0_i32, %c0_i32_0 : i32, i32
  }
  func.func @transform_26(%arg0: i32) -> (i32, i32) {
    %c0_i32 = arith.constant 0 : i32
    %c0_i32_0 = arith.constant 0 : i32
    %c0_i32_1 = arith.constant 0 : i32
    return %c0_i32, %c0_i32_0 : i32, i32
  }
  func.func @transform_27(%arg0: i32) -> (i32, i32, i32) {
    %c0_i32 = arith.constant 0 : i32
    %c0_i32_0 = arith.constant 0 : i32
    %c0_i32_1 = arith.constant 0 : i32
    %c0_i32_2 = arith.constant 0 : i32
    return %c0_i32, %c0_i32_0, %c0_i32_1 : i32, i32, i32
  }
  func.func @transform_28(%arg0: i32) -> (i32, i32) {
    %c0_i32 = arith.constant 0 : i32
    %c0_i32_0 = arith.constant 0 : i32
    %c0_i32_1 = arith.constant 0 : i32
    return %c0_i32, %c0_i32_0 : i32, i32
  }
  func.func @transform_29(%arg0: i32) -> (i32, i32) {
    %c0_i32 = arith.constant 0 : i32
    %c0_i32_0 = arith.constant 0 : i32
    %c0_i32_1 = arith.constant 0 : i32
    return %c0_i32, %c0_i32_0 : i32, i32
  }
  func.func @transform_30(%arg0: i32) -> (i32, i32, i32) {
    %c0_i32 = arith.constant 0 : i32
    %c0_i32_0 = arith.constant 0 : i32
    %c0_i32_1 = arith.constant 0 : i32
    %c0_i32_2 = arith.constant 0 : i32
    return %c0_i32, %c0_i32_0, %c0_i32_1 : i32, i32, i32
  }
  func.func @transform_31(%arg0: i32) -> (i32, i32) {
    %c0_i32 = arith.constant 0 : i32
    %c0_i32_0 = arith.constant 0 : i32
    %c0_i32_1 = arith.constant 0 : i32
    return %c0_i32, %c0_i32_0 : i32, i32
  }
  func.func @transform_32(%arg0: i32) -> (i32, i32) {
    %c0_i32 = arith.constant 0 : i32
    %c0_i32_0 = arith.constant 0 : i32
    %c0_i32_1 = arith.constant 0 : i32
    return %c0_i32, %c0_i32_0 : i32, i32
  }
  func.func @transform_33(%arg0: i32) -> (i32, i32, i32) {
    %c0_i32 = arith.constant 0 : i32
    %c0_i32_0 = arith.constant 0 : i32
    %c0_i32_1 = arith.constant 0 : i32
    %c0_i32_2 = arith.constant 0 : i32
    return %c0_i32, %c0_i32_0, %c0_i32_1 : i32, i32, i32
  }
  func.func @transform_34(%arg0: i32) -> (i32, i32) {
    %c0_i32 = arith.constant 0 : i32
    %c0_i32_0 = arith.constant 0 : i32
    %c0_i32_1 = arith.constant 0 : i32
    return %c0_i32, %c0_i32_0 : i32, i32
  }
  func.func @transform_35(%arg0: i32) -> (i32, i32) {
    %c0_i32 = arith.constant 0 : i32
    %c0_i32_0 = arith.constant 0 : i32
    %c0_i32_1 = arith.constant 0 : i32
    return %c0_i32, %c0_i32_0 : i32, i32
  }
  func.func @transform_36(%arg0: i32) -> (i32, i32, i32) {
    %c0_i32 = arith.constant 0 : i32
    %c0_i32_0 = arith.constant 0 : i32
    %c0_i32_1 = arith.constant 0 : i32
    %c0_i32_2 = arith.constant 0 : i32
    return %c0_i32, %c0_i32_0, %c0_i32_1 : i32, i32, i32
  }
  func.func @transform_37(%arg0: i32) -> (i32, i32) {
    %c0_i32 = arith.constant 0 : i32
    %c0_i32_0 = arith.constant 0 : i32
    %c0_i32_1 = arith.constant 0 : i32
    return %c0_i32, %c0_i32_0 : i32, i32
  }
  func.func @transform_38(%arg0: i32) -> (i32, i32) {
    %c0_i32 = arith.constant 0 : i32
    %c0_i32_0 = arith.constant 0 : i32
    %c0_i32_1 = arith.constant 0 : i32
    return %c0_i32, %c0_i32_0 : i32, i32
  }
  func.func @transform_39(%arg0: i32) -> (i32, i32, i32) {
    %c0_i32 = arith.constant 0 : i32
    %c0_i32_0 = arith.constant 0 : i32
    %c0_i32_1 = arith.constant 0 : i32
    %c0_i32_2 = arith.constant 0 : i32
    return %c0_i32, %c0_i32_0, %c0_i32_1 : i32, i32, i32
  }
  func.func @transform_40(%arg0: i32) -> (i32, i32) {
    %c0_i32 = arith.constant 0 : i32
    %c0_i32_0 = arith.constant 0 : i32
    %c0_i32_1 = arith.constant 0 : i32
    return %c0_i32, %c0_i32_0 : i32, i32
  }
  func.func @transform_41(%arg0: i32) -> (i32, i32) {
    %c0_i32 = arith.constant 0 : i32
    %c0_i32_0 = arith.constant 0 : i32
    %c0_i32_1 = arith.constant 0 : i32
    return %c0_i32, %c0_i32_0 : i32, i32
  }
  func.func @transform_42(%arg0: i32) -> (i32, i32, i32) {
    %c0_i32 = arith.constant 0 : i32
    %c0_i32_0 = arith.constant 0 : i32
    %c0_i32_1 = arith.constant 0 : i32
    %c0_i32_2 = arith.constant 0 : i32
    return %c0_i32, %c0_i32_0, %c0_i32_1 : i32, i32, i32
  }
  func.func @transform_43(%arg0: i32) -> (i32, i32, i32) {
    %c0_i32 = arith.constant 0 : i32
    %c0_i32_0 = arith.constant 0 : i32
    %c0_i32_1 = arith.constant 0 : i32
    %c0_i32_2 = arith.constant 0 : i32
    return %c0_i32, %c0_i32_0, %c0_i32_1 : i32, i32, i32
  }
  func.func @transform_44(%arg0: i32) -> (i32, i32, i32) {
    %c0_i32 = arith.constant 0 : i32
    %c0_i32_0 = arith.constant 0 : i32
    %c0_i32_1 = arith.constant 0 : i32
    %c0_i32_2 = arith.constant 0 : i32
    return %c0_i32, %c0_i32_0, %c0_i32_1 : i32, i32, i32
  }
  func.func @transform_45(%arg0: i32) -> (i32, i32, i32) {
    %c0_i32 = arith.constant 0 : i32
    %c0_i32_0 = arith.constant 0 : i32
    %c0_i32_1 = arith.constant 0 : i32
    %c0_i32_2 = arith.constant 0 : i32
    return %c0_i32, %c0_i32_0, %c0_i32_1 : i32, i32, i32
  }
  func.func @transform_46(%arg0: i32) -> (i32, i32, i32) {
    %c0_i32 = arith.constant 0 : i32
    %c0_i32_0 = arith.constant 0 : i32
    %c0_i32_1 = arith.constant 0 : i32
    %c0_i32_2 = arith.constant 0 : i32
    return %c0_i32, %c0_i32_0, %c0_i32_1 : i32, i32, i32
  }
  func.func @transform_47(%arg0: i32) -> (i32, i32, i32) {
    %c0_i32 = arith.constant 0 : i32
    %c0_i32_0 = arith.constant 0 : i32
    %c0_i32_1 = arith.constant 0 : i32
    %c0_i32_2 = arith.constant 0 : i32
    return %c0_i32, %c0_i32_0, %c0_i32_1 : i32, i32, i32
  }
  func.func @transform_48(%arg0: i32) -> (i32, i32, i32) {
    %c0_i32 = arith.constant 0 : i32
    %c0_i32_0 = arith.constant 0 : i32
    %c0_i32_1 = arith.constant 0 : i32
    %c0_i32_2 = arith.constant 0 : i32
    return %c0_i32, %c0_i32_0, %c0_i32_1 : i32, i32, i32
  }
  func.func @transform_49(%arg0: i32) -> (i32, i32, i32) {
    %c0_i32 = arith.constant 0 : i32
    %c0_i32_0 = arith.constant 0 : i32
    %c0_i32_1 = arith.constant 0 : i32
    %c0_i32_2 = arith.constant 0 : i32
    return %c0_i32, %c0_i32_0, %c0_i32_1 : i32, i32, i32
  }
  func.func @transform_50(%arg0: i32) -> (i32, i32, i32) {
    %c0_i32 = arith.constant 0 : i32
    %c0_i32_0 = arith.constant 0 : i32
    %c0_i32_1 = arith.constant 0 : i32
    %c0_i32_2 = arith.constant 0 : i32
    return %c0_i32, %c0_i32_0, %c0_i32_1 : i32, i32, i32
  }
  func.func @transform_51(%arg0: i32) -> (i32, i32, i32) {
    %c0_i32 = arith.constant 0 : i32
    %c0_i32_0 = arith.constant 0 : i32
    %c0_i32_1 = arith.constant 0 : i32
    %c0_i32_2 = arith.constant 0 : i32
    return %c0_i32, %c0_i32_0, %c0_i32_1 : i32, i32, i32
  }
  func.func @transform_52(%arg0: i32) -> (i32, i32, i32) {
    %c0_i32 = arith.constant 0 : i32
    %c0_i32_0 = arith.constant 0 : i32
    %c0_i32_1 = arith.constant 0 : i32
    return %arg0, %c0_i32, %c0_i32_0 : i32, i32, i32
  }
}

</mosaic_0001>

<llo_original>
// kernel: sub.12
$region0: #{sub.12}
  #allocation0 [shape = 's32[1]{0}', space=sflag, size = 0x4, scoped, tag = 'scoped memory for sub.12']
  %s0 = inlined_call_operand.vmem [shape: f32[2,7,4,3], index: 0, kind: input, shape index: {}]
  %s1 = inlined_call_operand.vmem [shape: f32[2,7,4,3], index: 1, kind: input, shape index: {}]
  %s2 = inlined_call_operand.vmem [shape: f32[2,7,4,3], index: 2, kind: output, shape index: {}]
  %v3 = vld [vmem:[%s0] sm:$0x3]
  %v4 = vld [vmem:[%s1] sm:$0x3]
  %5 = xla_tuple %v3, %v4
  %6 = xla_tuple %5
  %v7 = vsub.f32 %v3, %v4
  %8 = xla_tuple %v7
  %9 = vst [vmem:[%s2] sm:$0x3] %v7
  %s10 = scalar_lea.vmem %s0, 6
  %v11 = vld [vmem:[%s10] sm:$0x3]
  %s12 = scalar_lea.vmem %s1, 6
  %v13 = vld [vmem:[%s12] sm:$0x3]
  %14 = xla_tuple %v11, %v13
  %15 = xla_tuple %14
  %v16 = vsub.f32 %v11, %v13
  %17 = xla_tuple %v16
  %s18 = scalar_lea.vmem %s2, 6
  %19 = vst [vmem:[%s18] sm:$0x3] %v16
  %s20 = scalar_lea.vmem %s0, 12
  %v21 = vld [vmem:[%s20] sm:$0x3]
  %s22 = scalar_lea.vmem %s1, 12
  %v23 = vld [vmem:[%s22] sm:$0x3]
  %24 = xla_tuple %v21, %v23
  %25 = xla_tuple %24
  %v26 = vsub.f32 %v21, %v23
  %27 = xla_tuple %v26
  %s28 = scalar_lea.vmem %s2, 12
  %29 = vst [vmem:[%s28] sm:$0x3] %v26
  %s30 = scalar_lea.vmem %s0, 18
  %v31 = vld [vmem:[%s30] sm:$0x3]
  %s32 = scalar_lea.vmem %s1, 18
  %v33 = vld [vmem:[%s32] sm:$0x3]
  %34 = xla_tuple %v31, %v33
  %35 = xla_tuple %34
  %v36 = vsub.f32 %v31, %v33
  %37 = xla_tuple %v36
  %s38 = scalar_lea.vmem %s2, 18
  %39 = vst [vmem:[%s38] sm:$0x3] %v36
  %s40 = scalar_lea.vmem %s0, 24
  %v41 = vld [vmem:[%s40] sm:$0x3]
  %s42 = scalar_lea.vmem %s1, 24
  %v43 = vld [vmem:[%s42] sm:$0x3]
  %44 = xla_tuple %v41, %v43
  %45 = xla_tuple %44
  %v46 = vsub.f32 %v41, %v43
  %47 = xla_tuple %v46
  %s48 = scalar_lea.vmem %s2, 24
  %49 = vst [vmem:[%s48] sm:$0x3] %v46
  %s50 = scalar_lea.vmem %s0, 30
  %v51 = vld [vmem:[%s50] sm:$0x3]
  %s52 = scalar_lea.vmem %s1, 30
  %v53 = vld [vmem:[%s52] sm:$0x3]
  %54 = xla_tuple %v51, %v53
  %55 = xla_tuple %54
  %v56 = vsub.f32 %v51, %v53
  %57 = xla_tuple %v56
  %s58 = scalar_lea.vmem %s2, 30
  %59 = vst [vmem:[%s58] sm:$0x3] %v56
  %s60 = scalar_lea.vmem %s0, 36
  %v61 = vld [vmem:[%s60] sm:$0x3]
  %s62 = scalar_lea.vmem %s1, 36
  %v63 = vld [vmem:[%s62] sm:$0x3]
  %64 = xla_tuple %v61, %v63
  %65 = xla_tuple %64
  %v66 = vsub.f32 %v61, %v63
  %67 = xla_tuple %v66
  %s68 = scalar_lea.vmem %s2, 36
  %69 = vst [vmem:[%s68] sm:$0x3] %v66
  %s70 = scalar_lea.vmem %s0, 2
  %v71 = vld [vmem:[%s70] sm:$0x3]
  %s72 = scalar_lea.vmem %s1, 2
  %v73 = vld [vmem:[%s72] sm:$0x3]
  %74 = xla_tuple %v71, %v73
  %75 = xla_tuple %74
  %v76 = vsub.f32 %v71, %v73
  %77 = xla_tuple %v76
  %s78 = scalar_lea.vmem %s2, 2
  %79 = vst [vmem:[%s78] sm:$0x3] %v76
  %s80 = scalar_lea.vmem %s0, 8
  %v81 = vld [vmem:[%s80] sm:$0x3]
  %s82 = scalar_lea.vmem %s1, 8
  %v83 = vld [vmem:[%s82] sm:$0x3]
  %84 = xla_tuple %v81, %v83
  %85 = xla_tuple %84
  %v86 = vsub.f32 %v81, %v83
  %87 = xla_tuple %v86
  %s88 = scalar_lea.vmem %s2, 8
  %89 = vst [vmem:[%s88] sm:$0x3] %v86
  %s90 = scalar_lea.vmem %s0, 14
  %v91 = vld [vmem:[%s90] sm:$0x3]
  %s92 = scalar_lea.vmem %s1, 14
  %v93 = vld [vmem:[%s92] sm:$0x3]
  %94 = xla_tuple %v91, %v93
  %95 = xla_tuple %94
  %v96 = vsub.f32 %v91, %v93
  %97 = xla_tuple %v96
  %s98 = scalar_lea.vmem %s2, 14
  %99 = vst [vmem:[%s98] sm:$0x3] %v96
  %s100 = scalar_lea.vmem %s0, 20
  %v101 = vld [vmem:[%s100] sm:$0x3]
  %s102 = scalar_lea.vmem %s1, 20
  %v103 = vld [vmem:[%s102] sm:$0x3]
  %104 = xla_tuple %v101, %v103
  %105 = xla_tuple %104
  %v106 = vsub.f32 %v101, %v103
  %107 = xla_tuple %v106
  %s108 = scalar_lea.vmem %s2, 20
  %109 = vst [vmem:[%s108] sm:$0x3] %v106
  %s110 = scalar_lea.vmem %s0, 26
  %v111 = vld [vmem:[%s110] sm:$0x3]
  %s112 = scalar_lea.vmem %s1, 26
  %v113 = vld [vmem:[%s112] sm:$0x3]
  %114 = xla_tuple %v111, %v113
  %115 = xla_tuple %114
  %v116 = vsub.f32 %v111, %v113
  %117 = xla_tuple %v116
  %s118 = scalar_lea.vmem %s2, 26
  %119 = vst [vmem:[%s118] sm:$0x3] %v116
  %s120 = scalar_lea.vmem %s0, 32
  %v121 = vld [vmem:[%s120] sm:$0x3]
  %s122 = scalar_lea.vmem %s1, 32
  %v123 = vld [vmem:[%s122] sm:$0x3]
  %124 = xla_tuple %v121, %v123
  %125 = xla_tuple %124
  %v126 = vsub.f32 %v121, %v123
  %127 = xla_tuple %v126
  %s128 = scalar_lea.vmem %s2, 32
  %129 = vst [vmem:[%s128] sm:$0x3] %v126
  %s130 = scalar_lea.vmem %s0, 38
  %v131 = vld [vmem:[%s130] sm:$0x3]
  %s132 = scalar_lea.vmem %s1, 38
  %v133 = vld [vmem:[%s132] sm:$0x3]
  %134 = xla_tuple %v131, %v133
  %135 = xla_tuple %134
  %v136 = vsub.f32 %v131, %v133
  %137 = xla_tuple %v136
  %s138 = scalar_lea.vmem %s2, 38
  %139 = vst [vmem:[%s138] sm:$0x3] %v136
  %s140 = scalar_lea.vmem %s0, 4
  %v141 = vld [vmem:[%s140] sm:$0x3]
  %s142 = scalar_lea.vmem %s1, 4
  %v143 = vld [vmem:[%s142] sm:$0x3]
  %144 = xla_tuple %v141, %v143
  %145 = xla_tuple %144
  %v146 = vsub.f32 %v141, %v143
  %147 = xla_tuple %v146
  %s148 = scalar_lea.vmem %s2, 4
  %149 = vst [vmem:[%s148] sm:$0x3] %v146
  %s150 = scalar_lea.vmem %s0, 10
  %v151 = vld [vmem:[%s150] sm:$0x3]
  %s152 = scalar_lea.vmem %s1, 10
  %v153 = vld [vmem:[%s152] sm:$0x3]
  %154 = xla_tuple %v151, %v153
  %155 = xla_tuple %154
  %v156 = vsub.f32 %v151, %v153
  %157 = xla_tuple %v156
  %s158 = scalar_lea.vmem %s2, 10
  %159 = vst [vmem:[%s158] sm:$0x3] %v156
  %s160 = scalar_lea.vmem %s0, 16
  %v161 = vld [vmem:[%s160] sm:$0x3]
  %s162 = scalar_lea.vmem %s1, 16
  %v163 = vld [vmem:[%s162] sm:$0x3]
  %164 = xla_tuple %v161, %v163
  %165 = xla_tuple %164
  %v166 = vsub.f32 %v161, %v163
  %167 = xla_tuple %v166
  %s168 = scalar_lea.vmem %s2, 16
  %169 = vst [vmem:[%s168] sm:$0x3] %v166
  %s170 = scalar_lea.vmem %s0, 22
  %v171 = vld [vmem:[%s170] sm:$0x3]
  %s172 = scalar_lea.vmem %s1, 22
  %v173 = vld [vmem:[%s172] sm:$0x3]
  %174 = xla_tuple %v171, %v173
  %175 = xla_tuple %174
  %v176 = vsub.f32 %v171, %v173
  %177 = xla_tuple %v176
  %s178 = scalar_lea.vmem %s2, 22
  %179 = vst [vmem:[%s178] sm:$0x3] %v176
  %s180 = scalar_lea.vmem %s0, 28
  %v181 = vld [vmem:[%s180] sm:$0x3]
  %s182 = scalar_lea.vmem %s1, 28
  %v183 = vld [vmem:[%s182] sm:$0x3]
  %184 = xla_tuple %v181, %v183
  %185 = xla_tuple %184
  %v186 = vsub.f32 %v181, %v183
  %187 = xla_tuple %v186
  %s188 = scalar_lea.vmem %s2, 28
  %189 = vst [vmem:[%s188] sm:$0x3] %v186
  %s190 = scalar_lea.vmem %s0, 34
  %v191 = vld [vmem:[%s190] sm:$0x3]
  %s192 = scalar_lea.vmem %s1, 34
  %v193 = vld [vmem:[%s192] sm:$0x3]
  %194 = xla_tuple %v191, %v193
  %195 = xla_tuple %194
  %v196 = vsub.f32 %v191, %v193
  %197 = xla_tuple %v196
  %s198 = scalar_lea.vmem %s2, 34
  %199 = vst [vmem:[%s198] sm:$0x3] %v196
  %s200 = scalar_lea.vmem %s0, 40
  %v201 = vld [vmem:[%s200] sm:$0x3]
  %s202 = scalar_lea.vmem %s1, 40
  %v203 = vld [vmem:[%s202] sm:$0x3]
  %204 = xla_tuple %v201, %v203
  %205 = xla_tuple %204
  %v206 = vsub.f32 %v201, %v203
  %207 = xla_tuple %v206
  %s208 = scalar_lea.vmem %s2, 40
  %209 = vst [vmem:[%s208] sm:$0x3] %v206

// kernel: _lambda_.1
$region0: #{_lambda_.1}
  #allocation0 [shape = 'u32[]', space=smem, size = 0x4, offset = 0x4, fixed_abs, tag = 'smem constant byte address 0x4 - core index']
  #allocation1 [shape = 'u32[144,128]{1,0:T(1,128)}', space=vmem, size = 0x12000, scoped, tag = 'internal scratch']
  #allocation2 [shape = 'f32[32,256]{1,0:T(8,128)}', space=vmem, size = 0x8000, scoped, tag = 'scratch operand']
  #allocation3 [shape = 'f32[16,128]{1,0:T(8,128)}', space=vmem, size = 0x2000, scoped, tag = 'scratch operand']
  %s0 = inlined_call_operand.smem [shape: u32[53], index: -1, kind: input, shape index: {}]
  %s1 = sld [smem:[%s0]]
  %s2 = scalar_lea.smem %s0, 1
  %s3 = sld [smem:[%s2]]
  %s4 = scalar_lea.smem %s0, 2
  %s5 = sld [smem:[%s4]]
  %s6 = scalar_lea.smem %s0, 3
  %s7 = sld [smem:[%s6]]
  %s8 = scalar_lea.smem %s0, 4
  %s9 = sld [smem:[%s8]]
  %s10 = scalar_lea.smem %s0, 5
  %s11 = sld [smem:[%s10]]
  %s12 = scalar_lea.smem %s0, 6
  %s13 = sld [smem:[%s12]]
  %s14 = scalar_lea.smem %s0, 7
  %s15 = sld [smem:[%s14]]
  %s16 = scalar_lea.smem %s0, 8
  %s17 = sld [smem:[%s16]]
  %s18 = scalar_lea.smem %s0, 9
  %s19 = sld [smem:[%s18]]
  %s20 = scalar_lea.smem %s0, 10
  %s21 = sld [smem:[%s20]]
  %s22 = scalar_lea.smem %s0, 11
  %s23 = sld [smem:[%s22]]
  %s24 = scalar_lea.smem %s0, 12
  %s25 = sld [smem:[%s24]]
  %s26 = scalar_lea.smem %s0, 13
  %s27 = sld [smem:[%s26]]
  %s28 = scalar_lea.smem %s0, 14
  %s29 = sld [smem:[%s28]]
  %s30 = scalar_lea.smem %s0, 15
  %s31 = sld [smem:[%s30]]
  %s32 = scalar_lea.smem %s0, 16
  %s33 = sld [smem:[%s32]]
  %s34 = scalar_lea.smem %s0, 17
  %s35 = sld [smem:[%s34]]
  %s36 = scalar_lea.smem %s0, 18
  %s37 = sld [smem:[%s36]]
  %s38 = scalar_lea.smem %s0, 19
  %s39 = sld [smem:[%s38]]
  %s40 = scalar_lea.smem %s0, 20
  %s41 = sld [smem:[%s40]]
  %s42 = scalar_lea.smem %s0, 21
  %s43 = sld [smem:[%s42]]
  %s44 = scalar_lea.smem %s0, 22
  %s45 = sld [smem:[%s44]]
  %s46 = scalar_lea.smem %s0, 23
  %s47 = sld [smem:[%s46]]
  %s48 = scalar_lea.smem %s0, 24
  %s49 = sld [smem:[%s48]]
  %s50 = scalar_lea.smem %s0, 25
  %s51 = sld [smem:[%s50]]
  %s52 = scalar_lea.smem %s0, 26
  %s53 = sld [smem:[%s52]]
  %s54 = scalar_lea.smem %s0, 27
  %s55 = sld [smem:[%s54]]
  %s56 = scalar_lea.smem %s0, 28
  %s57 = sld [smem:[%s56]]
  %s58 = scalar_lea.smem %s0, 29
  %s59 = sld [smem:[%s58]]
  %s60 = scalar_lea.smem %s0, 30
  %s61 = sld [smem:[%s60]]
  %s62 = scalar_lea.smem %s0, 31
  %s63 = sld [smem:[%s62]]
  %s64 = scalar_lea.smem %s0, 32
  %s65 = sld [smem:[%s64]]
  %s66 = scalar_lea.smem %s0, 33
  %s67 = sld [smem:[%s66]]
  %s68 = scalar_lea.smem %s0, 34
  %s69 = sld [smem:[%s68]]
  %s70 = scalar_lea.smem %s0, 35
  %s71 = sld [smem:[%s70]]
  %s72 = scalar_lea.smem %s0, 36
  %s73 = sld [smem:[%s72]]
  %s74 = scalar_lea.smem %s0, 37
  %s75 = sld [smem:[%s74]]
  %s76 = scalar_lea.smem %s0, 38
  %s77 = sld [smem:[%s76]]
  %s78 = scalar_lea.smem %s0, 39
  %s79 = sld [smem:[%s78]]
  %s80 = scalar_lea.smem %s0, 40
  %s81 = sld [smem:[%s80]]
  %s82 = scalar_lea.smem %s0, 41
  %s83 = sld [smem:[%s82]]
  %s84 = scalar_lea.smem %s0, 42
  %s85 = sld [smem:[%s84]]
  %s86 = scalar_lea.smem %s0, 43
  %s87 = sld [smem:[%s86]]
  %s88 = scalar_lea.smem %s0, 44
  %s89 = sld [smem:[%s88]]
  %s90 = scalar_lea.smem %s0, 45
  %s91 = sld [smem:[%s90]]
  %s92 = scalar_lea.smem %s0, 46
  %s93 = sld [smem:[%s92]]
  %s94 = scalar_lea.smem %s0, 47
  %s95 = sld [smem:[%s94]]
  %s96 = scalar_lea.smem %s0, 48
  %s97 = sld [smem:[%s96]]
  %s98 = scalar_lea.smem %s0, 49
  %s99 = sld [smem:[%s98]]
  %s100 = scalar_lea.smem %s0, 50
  %s101 = sld [smem:[%s100]]
  %s102 = scalar_lea.smem %s0, 51
  %s103 = sld [smem:[%s102]]
  %s104 = scalar_lea.smem %s0, 52
  %s105 = sld [smem:[%s104]]
  %s106 = sld [smem:[#allocation0]]
  $region345: #{_lambda_.1} parent=0
    _
  %s108 = ssub.s32 1, %s106
  %s109 = scalar_select 0, %s108, %s106
  $region1: #{_lambda_.1} parent=0
    #allocation4 [shape = 'u8[4096]{0}', space=vmem, size = 0x1000, scoped, tag = 'input window, operand 4, single buffered']
    #allocation5 [shape = 's32[2]{0}', space=sflag, size = 0x8, scoped, tag = 'scoped memory for _lambda_.1']
    #allocation6 [shape = 'u8[4096]{0}', space=vmem, size = 0x1000, scoped, tag = 'input window, operand 5, single buffered']
    #allocation7 [shape = 's32[1]{0}', space=sflag, size = 0x4, scoped, tag = 'scoped memory for _lambda_.1']
    #allocation8 [shape = 'u8[4096]{0}', space=vmem, size = 0x1000, scoped, tag = 'input window, operand 7, single buffered']
    #allocation9 [shape = 'u8[4096]{0}', space=vmem, size = 0x1000, scoped, tag = 'input window, operand 8, single buffered']
    #allocation10 [shape = 's32[1]{0}', space=sflag, size = 0x4, scoped, tag = 'scoped memory for _lambda_.1']
    #allocation11 [shape = 'u8[4096]{0}', space=vmem, size = 0x1000, scoped, tag = 'input window, operand 9, single buffered']
    #allocation12 [shape = 'u8[4096]{0}', space=vmem, size = 0x1000, scoped, tag = 'input window, operand 10, single buffered']
    #allocation13 [shape = 's32[1]{0}', space=sflag, size = 0x4, scoped, tag = 'scoped memory for _lambda_.1']
    #allocation14 [shape = 'u8[4096]{0}', space=vmem, size = 0x1000, scoped, tag = 'input window, operand 11, single buffered']
    #allocation15 [shape = 'u8[8192]{0}', space=vmem, size = 0x2000, scoped, tag = 'input window, operand 13, single buffered']
    #allocation16 [shape = 's32[1]{0}', space=sflag, size = 0x4, scoped, tag = 'scoped memory for _lambda_.1']
    #allocation17 [shape = 'u8[8192]{0}', space=vmem, size = 0x2000, scoped, tag = 'input window, operand 14, single buffered']
    #allocation18 [shape = 'u8[8192]{0}', space=vmem, size = 0x2000, scoped, tag = 'input window, operand 16, single buffered']
    #allocation19 [shape = 's32[1]{0}', space=sflag, size = 0x4, scoped, tag = 'scoped memory for _lambda_.1']
    #allocation20 [shape = 'u8[8192]{0}', space=vmem, size = 0x2000, scoped, tag = 'input window, operand 17, single buffered']
    #allocation21 [shape = 'u8[8192]{0}', space=vmem, size = 0x2000, scoped, tag = 'input window, operand 19, single buffered']
    #allocation22 [shape = 's32[1]{0}', space=sflag, size = 0x4, scoped, tag = 'scoped memory for _lambda_.1']
    #allocation23 [shape = 'u8[8192]{0}', space=vmem, size = 0x2000, scoped, tag = 'input window, operand 20, single buffered']
    #allocation24 [shape = 'u8[8192]{0}', space=vmem, size = 0x2000, scoped, tag = 'input window, operand 21, single buffered']
    #allocation25 [shape = 's32[1]{0}', space=sflag, size = 0x4, scoped, tag = 'scoped memory for _lambda_.1']
    #allocation26 [shape = 'u8[8192]{0}', space=vmem, size = 0x2000, scoped, tag = 'input window, operand 22, single buffered']
    #allocation27 [shape = 'u8[8192]{0}', space=vmem, size = 0x2000, scoped, tag = 'input window, operand 23, single buffered']
    #allocation28 [shape = 's32[1]{0}', space=sflag, size = 0x4, scoped, tag = 'scoped memory for _lambda_.1']
    #allocation29 [shape = 'u8[36864]{0}', space=vmem, size = 0x9000, scoped, tag = 'input window, operand 24, single buffered']
    #allocation30 [shape = 'u8[4096]{0}', space=vmem, size = 0x1000, scoped, tag = 'input window, operand 26, single buffered']
    #allocation31 [shape = 's32[1]{0}', space=sflag, size = 0x4, scoped, tag = 'scoped memory for _lambda_.1']
    #allocation32 [shape = 'u8[98304]{0}', space=vmem, size = 0x18000, scoped, tag = 'input window, operand 27, single buffered']
    #allocation33 [shape = 'u8[4096]{0}', space=vmem, size = 0x1000, scoped, tag = 'input window, operand 28, single buffered']
    #allocation34 [shape = 's32[1]{0}', space=sflag, size = 0x4, scoped, tag = 'scoped memory for _lambda_.1']
    #allocation35 [shape = 'u8[4096]{0}', space=vmem, size = 0x1000, scoped, tag = 'input window, operand 29, single buffered']
    #allocation36 [shape = 'u8[98304]{0}', space=vmem, size = 0x18000, scoped, tag = 'input window, operand 30, single buffered']
    #allocation37 [shape = 's32[1]{0}', space=sflag, size = 0x4, scoped, tag = 'scoped memory for _lambda_.1']
    #allocation38 [shape = 'u8[2048]{0}', space=vmem, size = 0x800, scoped, tag = 'input window, operand 31, single buffered']
    #allocation39 [shape = 'u8[2048]{0}', space=vmem, size = 0x800, scoped, tag = 'input window, operand 32, single buffered']
    #allocation40 [shape = 's32[1]{0}', space=sflag, size = 0x4, scoped, tag = 'scoped memory for _lambda_.1']
    #allocation41 [shape = 'u8[196608]{0}', space=vmem, size = 0x30000, scoped, tag = 'input window, operand 33, single buffered']
    #allocation42 [shape = 'u8[393216]{0}', space=vmem, size = 0x60000, scoped, tag = 'input window, operand 36, single buffered']
    #allocation43 [shape = 's32[1]{0}', space=sflag, size = 0x4, scoped, tag = 'scoped memory for _lambda_.1']
    %110 = vsyncpa [#allocation5], 0
    %111 = vsyncpa [#allocation7], 0
    %112 = vsyncpa [#allocation10], 0
    %113 = vsyncpa [#allocation13], 0
    %114 = vsyncpa [#allocation16], 0
    %115 = vsyncpa [#allocation19], 0
    %116 = vsyncpa [#allocation22], 0
    %117 = vsyncpa [#allocation25], 0
    %118 = vsyncpa [#allocation28], 0
    %119 = vsyncpa [#allocation31], 0
    %120 = vsyncpa [#allocation34], 0
    %121 = vsyncpa [#allocation37], 0
    %122 = vsyncpa [#allocation40], 0
    %123 = vsyncpa [#allocation43], 0
    loop: start=0, step=1, limit=4
    $region2: #{_lambda_.1} parent=1 // loop_pre_header
      _
    $region3: #{_lambda_.1} parent=1 // loop_header
      %s125 = sphi 0, %s129
      %p126 = scmp.ge.s32.totalorder %s125, 4
      %s135 = sphi 0, %s137
      %s138 = sphi 0, %s135
      %s139 = sphi 0, %s138
      %s155 = sphi 0, %s139
      %s161 = sphi 0, %s163
      %s164 = sphi 0, %s161
      %s165 = sphi 0, %s164
      %s181 = sphi 0, %s165
      %s187 = sphi 0, %s189
      %s190 = sphi 0, %s187
      %s191 = sphi 0, %s190
      %s207 = sphi 0, %s191
      %s211 = sphi 0, %s211
      %s213 = sphi 0, %s211
      %s214 = sphi 0, %s213
      %s228 = sphi 0, %s214
      %s232 = sphi 0, %s232
      %s234 = sphi 0, %s232
      %s235 = sphi 0, %s234
      %s249 = sphi 0, %s235
      %s253 = sphi 0, %s253
      %s255 = sphi 0, %s253
      %s256 = sphi 0, %s255
      %s270 = sphi 0, %s256
      %s274 = sphi 0, %s274
      %s276 = sphi 0, %s274
      %s277 = sphi 0, %s276
      %s291 = sphi 0, %s277
      %s295 = sphi 0, %s295
      %s297 = sphi 0, %s295
      %s298 = sphi 0, %s297
      %s312 = sphi 0, %s298
      %s316 = sphi 0, %s316
      %s318 = sphi 0, %s316
      %s319 = sphi 0, %s318
      %s333 = sphi 0, %s319
      %s337 = sphi 0, %s337
      %s339 = sphi 0, %s337
      %s340 = sphi 0, %s339
      %s354 = sphi 0, %s340
      %s358 = sphi 0, %s358
      %s360 = sphi 0, %s358
      %s361 = sphi 0, %s360
      %s375 = sphi 0, %s361
      %s379 = sphi 0, %s379
      %s381 = sphi 0, %s379
      %s382 = sphi 0, %s381
      %s396 = sphi 0, %s382
      %s400 = sphi 0, %s400
      %s402 = sphi 0, %s400
      %s403 = sphi 0, %s402
      %s417 = sphi 0, %s403
      %s421 = sphi 0, %s421
      %s423 = sphi 0, %s421
      %s424 = sphi 0, %s423
      %s438 = sphi 0, %s424
      %s442 = sphi 0, %s442
      %s444 = sphi 0, %s442
      %s445 = sphi 0, %s444
      %s459 = sphi 0, %s445
      %s463 = sphi 0, %s463
      %s465 = sphi 0, %s463
      %s466 = sphi 0, %s465
      %s480 = sphi 0, %s466
      %s484 = sphi 0, %s484
      %s486 = sphi 0, %s484
      %s487 = sphi 0, %s486
      %s501 = sphi 0, %s487
      %s505 = sphi 0, %s505
      %s507 = sphi 0, %s505
      %s508 = sphi 0, %s507
      %s522 = sphi 0, %s508
      %s526 = sphi 0, %s526
      %s528 = sphi 0, %s526
      %s529 = sphi 0, %s528
      %s543 = sphi 0, %s529
      %s547 = sphi 0, %s547
      %s549 = sphi 0, %s547
      %s550 = sphi 0, %s549
      %s564 = sphi 0, %s550
      %s568 = sphi 0, %s568
      %s570 = sphi 0, %s568
      %s571 = sphi 0, %s570
      %s585 = sphi 0, %s571
      %s589 = sphi 0, %s589
      %s591 = sphi 0, %s589
      %s592 = sphi 0, %s591
      %s606 = sphi 0, %s592
      %s610 = sphi 0, %s610
      %s612 = sphi 0, %s610
      %s613 = sphi 0, %s612
      %s627 = sphi 0, %s613
      %s631 = sphi 0, %s631
      %s633 = sphi 0, %s631
      %s634 = sphi 0, %s633
      %s648 = sphi 0, %s634
      %s652 = sphi 0, %s652
      %s654 = sphi 0, %s652
      %s655 = sphi 0, %s654
      %s669 = sphi 0, %s655
      %s673 = sphi 0, %s673
      %s675 = sphi 0, %s673
      %s676 = sphi 0, %s675
      %s690 = sphi 0, %s676
      %s694 = sphi 0, %s694
      %s696 = sphi 0, %s694
      %s697 = sphi 0, %s696
      %s711 = sphi 0, %s697
      %s715 = sphi 0, %s715
      %s717 = sphi 0, %s715
      %s718 = sphi 0, %s717
      %s732 = sphi 0, %s718
      %s736 = sphi 0, %s736
      %s738 = sphi 0, %s736
      %s739 = sphi 0, %s738
      %s753 = sphi 0, %s739
      %s757 = sphi 0, %s757
      %s759 = sphi 0, %s757
      %s760 = sphi 0, %s759
      %s774 = sphi 0, %s760
      %s778 = sphi 0, %s778
      %s780 = sphi 0, %s778
      %s781 = sphi 0, %s780
      %s795 = sphi 0, %s781
      %s799 = sphi 0, %s799
      %s801 = sphi 0, %s799
      %s802 = sphi 0, %s801
      %s816 = sphi 0, %s802
      %s820 = sphi 0, %s820
      %s822 = sphi 0, %s820
      %s823 = sphi 0, %s822
      %s837 = sphi 0, %s823
      %s841 = sphi 0, %s841
      %s843 = sphi 0, %s841
      %s844 = sphi 0, %s843
      %s858 = sphi 0, %s844
      %s862 = sphi 0, %s862
      %s864 = sphi 0, %s862
      %s865 = sphi 0, %s864
      %s879 = sphi 0, %s865
      %s883 = sphi 0, %s883
      %s885 = sphi 0, %s883
      %s886 = sphi 0, %s885
      %s900 = sphi 0, %s886
      %s904 = sphi 0, %s904
      %s906 = sphi 0, %s904
      %s907 = sphi 0, %s906
      %s921 = sphi 0, %s907
      %s925 = sphi 0, %s925
      %s927 = sphi 0, %s925
      %s928 = sphi 0, %s927
      %s942 = sphi 0, %s928
      %s946 = sphi 0, %s946
      %s948 = sphi 0, %s946
      %s949 = sphi 0, %s948
      %s963 = sphi 0, %s949
      %s967 = sphi 0, %s967
      %s969 = sphi 0, %s967
      %s970 = sphi 0, %s969
      %s984 = sphi 0, %s970
      %s988 = sphi 0, %s988
      %s990 = sphi 0, %s988
      %s991 = sphi 0, %s990
      %s1005 = sphi 0, %s991
      %s1009 = sphi 0, %s1009
      %s1011 = sphi 0, %s1009
      %s1012 = sphi 0, %s1011
      %s1026 = sphi 0, %s1012
      %s1030 = sphi 0, %s1030
      %s1032 = sphi 0, %s1030
      %s1033 = sphi 0, %s1032
      %s1047 = sphi 0, %s1033
      %s1051 = sphi 0, %s1051
      %s1053 = sphi 0, %s1051
      %s1054 = sphi 0, %s1053
      %s1068 = sphi 0, %s1054
      %s1072 = sphi 0, %s1072
      %s1074 = sphi 0, %s1072
      %s1075 = sphi 0, %s1074
      %s1089 = sphi 0, %s1075
      %s1093 = sphi 0, %s1093
      %s1095 = sphi 0, %s1093
      %s1096 = sphi 0, %s1095
      %s1110 = sphi 0, %s1096
      %s1114 = sphi 0, %s1114
      %s1116 = sphi 0, %s1114
      %s1117 = sphi 0, %s1116
      %s1131 = sphi 0, %s1117
      %s1135 = sphi 0, %s1135
      %s1137 = sphi 0, %s1135
      %s1138 = sphi 0, %s1137
      %s1152 = sphi 0, %s1138
      %s1156 = sphi 0, %s1156
      %s1158 = sphi 0, %s1156
      %s1159 = sphi 0, %s1158
      %s1173 = sphi 0, %s1159
      %s1177 = sphi 0, %s1177
      %s1179 = sphi 0, %s1177
      %s1180 = sphi 0, %s1179
      %s1194 = sphi 0, %s1180
      %s1198 = sphi 0, %s1198
      %s1200 = sphi 0, %s1198
      %s1201 = sphi 0, %s1200
      %s1215 = sphi 0, %s1201
      %s1219 = sphi 0, %s1219
      %s1221 = sphi 0, %s1219
      %s1222 = sphi 0, %s1221
      %s1236 = sphi 0, %s1222
      %s1242 = sphi 0, %s1244
      %s1245 = sphi 0, %s1242
      %s1246 = sphi 0, %s1245
      %s1262 = sphi 0, %s1246
    $region4: #{_lambda_.1} parent=1 // loop_header_branch
      %128 = sbr.rel (%p126) target = $region8
    $region5: #{_lambda_.1} parent=1 // loop_body
      %s130 = ssub.s32 %s125, 1
      %s131 = ssub.s32 %s125, 2
      %s132 = sadd.s32 %s125, 1
      %s133 = ssub.s32 %s125, %s132
      %p134 = scmp.eq.s32.totalorder %s133, 0
      %s136 = sadd.s32 %s135, 1
      %s137 = scalar_select %p134, %s135, %s136
      %p140 = pneg %p134
      %p141 = scmp.eq.s32.totalorder %s125, 1
      %p142 = por %p140, %p141
      %p143 = scmp.ne.s32.totalorder %s135, %s138
      %p144 = scmp.eq.s32.totalorder %s125, 0
      %p145 = por %p143, %p144
      %p146 = scmp.ne.s32.totalorder %s135, %s138
      %p147 = scmp.eq.s32.totalorder %s130, 1
      %p148 = por %p146, %p147
      %p149 = scmp.ne.s32.totalorder %s138, %s139
      %p150 = scmp.eq.s32.totalorder %s130, 0
      %p151 = por %p149, %p150
      %p152 = scmp.ne.s32.totalorder %s138, %s139
      %p153 = scmp.eq.s32.totalorder %s131, 1
      %p154 = por %p152, %p153
      %p156 = scmp.ne.s32.totalorder %s139, %s155
      %p157 = scmp.eq.s32.totalorder %s131, 0
      %p158 = por %p156, %p157
      %s159 = ssub.s32 %s125, %s132
      %p160 = scmp.eq.s32.totalorder %s159, 0
      %s162 = sadd.s32 %s161, 1
      %s163 = scalar_select %p160, %s161, %s162
      %p166 = pneg %p160
      %p167 = scmp.eq.s32.totalorder %s125, 1
      %p168 = por %p166, %p167
      %p169 = scmp.ne.s32.totalorder %s161, %s164
      %p170 = scmp.eq.s32.totalorder %s125, 0
      %p171 = por %p169, %p170
      %p172 = scmp.ne.s32.totalorder %s161, %s164
      %p173 = scmp.eq.s32.totalorder %s130, 1
      %p174 = por %p172, %p173
      %p175 = scmp.ne.s32.totalorder %s164, %s165
      %p176 = scmp.eq.s32.totalorder %s130, 0
      %p177 = por %p175, %p176
      %p178 = scmp.ne.s32.totalorder %s164, %s165
      %p179 = scmp.eq.s32.totalorder %s131, 1
      %p180 = por %p178, %p179
      %p182 = scmp.ne.s32.totalorder %s165, %s181
      %p183 = scmp.eq.s32.totalorder %s131, 0
      %p184 = por %p182, %p183
      %s185 = ssub.s32 %s125, %s132
      %p186 = scmp.eq.s32.totalorder %s185, 0
      %s188 = sadd.s32 %s187, 1
      %s189 = scalar_select %p186, %s187, %s188
      %p192 = pneg %p186
      %p193 = scmp.eq.s32.totalorder %s125, 1
      %p194 = por %p192, %p193
      %p195 = scmp.ne.s32.totalorder %s187, %s190
      %p196 = scmp.eq.s32.totalorder %s125, 0
      %p197 = por %p195, %p196
      %p198 = scmp.ne.s32.totalorder %s187, %s190
      %p199 = scmp.eq.s32.totalorder %s130, 1
      %p200 = por %p198, %p199
      %p201 = scmp.ne.s32.totalorder %s190, %s191
      %p202 = scmp.eq.s32.totalorder %s130, 0
      %p203 = por %p201, %p202
      %p204 = scmp.ne.s32.totalorder %s190, %s191
      %p205 = scmp.eq.s32.totalorder %s131, 1
      %p206 = por %p204, %p205
      %p208 = scmp.ne.s32.totalorder %s191, %s207
      %p209 = scmp.eq.s32.totalorder %s131, 0
      %p210 = por %p208, %p209
      %s212 = sadd.s32 %s211, 1
      %p215 = scmp.eq.s32.totalorder %s125, 1
      %p216 = scmp.ne.s32.totalorder %s211, %s213
      %p217 = scmp.eq.s32.totalorder %s125, 0
      %p218 = por %p216, %p217
      %p219 = scmp.ne.s32.totalorder %s211, %s213
      %p220 = scmp.eq.s32.totalorder %s130, 1
      %p221 = por %p219, %p220
      %p222 = scmp.ne.s32.totalorder %s213, %s214
      %p223 = scmp.eq.s32.totalorder %s130, 0
      %p224 = por %p222, %p223
      %p225 = scmp.ne.s32.totalorder %s213, %s214
      %p226 = scmp.eq.s32.totalorder %s131, 1
      %p227 = por %p225, %p226
      %p229 = scmp.ne.s32.totalorder %s214, %s228
      %p230 = scmp.eq.s32.totalorder %s131, 0
      %p231 = por %p229, %p230
      %s233 = sadd.s32 %s232, 1
      %p236 = scmp.eq.s32.totalorder %s125, 1
      %p237 = scmp.ne.s32.totalorder %s232, %s234
      %p238 = scmp.eq.s32.totalorder %s125, 0
      %p239 = por %p237, %p238
      %p240 = scmp.ne.s32.totalorder %s232, %s234
      %p241 = scmp.eq.s32.totalorder %s130, 1
      %p242 = por %p240, %p241
      %p243 = scmp.ne.s32.totalorder %s234, %s235
      %p244 = scmp.eq.s32.totalorder %s130, 0
      %p245 = por %p243, %p244
      %p246 = scmp.ne.s32.totalorder %s234, %s235
      %p247 = scmp.eq.s32.totalorder %s131, 1
      %p248 = por %p246, %p247
      %p250 = scmp.ne.s32.totalorder %s235, %s249
      %p251 = scmp.eq.s32.totalorder %s131, 0
      %p252 = por %p250, %p251
      %s254 = sadd.s32 %s253, 1
      %p257 = scmp.eq.s32.totalorder %s125, 1
      %p258 = scmp.ne.s32.totalorder %s253, %s255
      %p259 = scmp.eq.s32.totalorder %s125, 0
      %p260 = por %p258, %p259
      %p261 = scmp.ne.s32.totalorder %s253, %s255
      %p262 = scmp.eq.s32.totalorder %s130, 1
      %p263 = por %p261, %p262
      %p264 = scmp.ne.s32.totalorder %s255, %s256
      %p265 = scmp.eq.s32.totalorder %s130, 0
      %p266 = por %p264, %p265
      %p267 = scmp.ne.s32.totalorder %s255, %s256
      %p268 = scmp.eq.s32.totalorder %s131, 1
      %p269 = por %p267, %p268
      %p271 = scmp.ne.s32.totalorder %s256, %s270
      %p272 = scmp.eq.s32.totalorder %s131, 0
      %p273 = por %p271, %p272
      %s275 = sadd.s32 %s274, 1
      %p278 = scmp.eq.s32.totalorder %s125, 1
      %p279 = scmp.ne.s32.totalorder %s274, %s276
      %p280 = scmp.eq.s32.totalorder %s125, 0
      %p281 = por %p279, %p280
      %p282 = scmp.ne.s32.totalorder %s274, %s276
      %p283 = scmp.eq.s32.totalorder %s130, 1
      %p284 = por %p282, %p283
      %p285 = scmp.ne.s32.totalorder %s276, %s277
      %p286 = scmp.eq.s32.totalorder %s130, 0
      %p287 = por %p285, %p286
      %p288 = scmp.ne.s32.totalorder %s276, %s277
      %p289 = scmp.eq.s32.totalorder %s131, 1
      %p290 = por %p288, %p289
      %p292 = scmp.ne.s32.totalorder %s277, %s291
      %p293 = scmp.eq.s32.totalorder %s131, 0
      %p294 = por %p292, %p293
      %s296 = sadd.s32 %s295, 1
      %p299 = scmp.eq.s32.totalorder %s125, 1
      %p300 = scmp.ne.s32.totalorder %s295, %s297
      %p301 = scmp.eq.s32.totalorder %s125, 0
      %p302 = por %p300, %p301
      %p303 = scmp.ne.s32.totalorder %s295, %s297
      %p304 = scmp.eq.s32.totalorder %s130, 1
      %p305 = por %p303, %p304
      %p306 = scmp.ne.s32.totalorder %s297, %s298
      %p307 = scmp.eq.s32.totalorder %s130, 0
      %p308 = por %p306, %p307
      %p309 = scmp.ne.s32.totalorder %s297, %s298
      %p310 = scmp.eq.s32.totalorder %s131, 1
      %p311 = por %p309, %p310
      %p313 = scmp.ne.s32.totalorder %s298, %s312
      %p314 = scmp.eq.s32.totalorder %s131, 0
      %p315 = por %p313, %p314
      %s317 = sadd.s32 %s316, 1
      %p320 = scmp.eq.s32.totalorder %s125, 1
      %p321 = scmp.ne.s32.totalorder %s316, %s318
      %p322 = scmp.eq.s32.totalorder %s125, 0
      %p323 = por %p321, %p322
      %p324 = scmp.ne.s32.totalorder %s316, %s318
      %p325 = scmp.eq.s32.totalorder %s130, 1
      %p326 = por %p324, %p325
      %p327 = scmp.ne.s32.totalorder %s318, %s319
      %p328 = scmp.eq.s32.totalorder %s130, 0
      %p329 = por %p327, %p328
      %p330 = scmp.ne.s32.totalorder %s318, %s319
      %p331 = scmp.eq.s32.totalorder %s131, 1
      %p332 = por %p330, %p331
      %p334 = scmp.ne.s32.totalorder %s319, %s333
      %p335 = scmp.eq.s32.totalorder %s131, 0
      %p336 = por %p334, %p335
      %s338 = sadd.s32 %s337, 1
      %p341 = scmp.eq.s32.totalorder %s125, 1
      %p342 = scmp.ne.s32.totalorder %s337, %s339
      %p343 = scmp.eq.s32.totalorder %s125, 0
      %p344 = por %p342, %p343
      %p345 = scmp.ne.s32.totalorder %s337, %s339
      %p346 = scmp.eq.s32.totalorder %s130, 1
      %p347 = por %p345, %p346
      %p348 = scmp.ne.s32.totalorder %s339, %s340
      %p349 = scmp.eq.s32.totalorder %s130, 0
      %p350 = por %p348, %p349
      %p351 = scmp.ne.s32.totalorder %s339, %s340
      %p352 = scmp.eq.s32.totalorder %s131, 1
      %p353 = por %p351, %p352
      %p355 = scmp.ne.s32.totalorder %s340, %s354
      %p356 = scmp.eq.s32.totalorder %s131, 0
      %p357 = por %p355, %p356
      %s359 = sadd.s32 %s358, 1
      %p362 = scmp.eq.s32.totalorder %s125, 1
      %p363 = scmp.ne.s32.totalorder %s358, %s360
      %p364 = scmp.eq.s32.totalorder %s125, 0
      %p365 = por %p363, %p364
      %p366 = scmp.ne.s32.totalorder %s358, %s360
      %p367 = scmp.eq.s32.totalorder %s130, 1
      %p368 = por %p366, %p367
      %p369 = scmp.ne.s32.totalorder %s360, %s361
      %p370 = scmp.eq.s32.totalorder %s130, 0
      %p371 = por %p369, %p370
      %p372 = scmp.ne.s32.totalorder %s360, %s361
      %p373 = scmp.eq.s32.totalorder %s131, 1
      %p374 = por %p372, %p373
      %p376 = scmp.ne.s32.totalorder %s361, %s375
      %p377 = scmp.eq.s32.totalorder %s131, 0
      %p378 = por %p376, %p377
      %s380 = sadd.s32 %s379, 1
      %p383 = scmp.eq.s32.totalorder %s125, 1
      %p384 = scmp.ne.s32.totalorder %s379, %s381
      %p385 = scmp.eq.s32.totalorder %s125, 0
      %p386 = por %p384, %p385
      %p387 = scmp.ne.s32.totalorder %s379, %s381
      %p388 = scmp.eq.s32.totalorder %s130, 1
      %p389 = por %p387, %p388
      %p390 = scmp.ne.s32.totalorder %s381, %s382
      %p391 = scmp.eq.s32.totalorder %s130, 0
      %p392 = por %p390, %p391
      %p393 = scmp.ne.s32.totalorder %s381, %s382
      %p394 = scmp.eq.s32.totalorder %s131, 1
      %p395 = por %p393, %p394
      %p397 = scmp.ne.s32.totalorder %s382, %s396
      %p398 = scmp.eq.s32.totalorder %s131, 0
      %p399 = por %p397, %p398
      %s401 = sadd.s32 %s400, 1
      %p404 = scmp.eq.s32.totalorder %s125, 1
      %p405 = scmp.ne.s32.totalorder %s400, %s402
      %p406 = scmp.eq.s32.totalorder %s125, 0
      %p407 = por %p405, %p406
      %p408 = scmp.ne.s32.totalorder %s400, %s402
      %p409 = scmp.eq.s32.totalorder %s130, 1
      %p410 = por %p408, %p409
      %p411 = scmp.ne.s32.totalorder %s402, %s403
      %p412 = scmp.eq.s32.totalorder %s130, 0
      %p413 = por %p411, %p412
      %p414 = scmp.ne.s32.totalorder %s402, %s403
      %p415 = scmp.eq.s32.totalorder %s131, 1
      %p416 = por %p414, %p415
      %p418 = scmp.ne.s32.totalorder %s403, %s417
      %p419 = scmp.eq.s32.totalorder %s131, 0
      %p420 = por %p418, %p419
      %s422 = sadd.s32 %s421, 1
      %p425 = scmp.eq.s32.totalorder %s125, 1
      %p426 = scmp.ne.s32.totalorder %s421, %s423
      %p427 = scmp.eq.s32.totalorder %s125, 0
      %p428 = por %p426, %p427
      %p429 = scmp.ne.s32.totalorder %s421, %s423
      %p430 = scmp.eq.s32.totalorder %s130, 1
      %p431 = por %p429, %p430
      %p432 = scmp.ne.s32.totalorder %s423, %s424
      %p433 = scmp.eq.s32.totalorder %s130, 0
      %p434 = por %p432, %p433
      %p435 = scmp.ne.s32.totalorder %s423, %s424
      %p436 = scmp.eq.s32.totalorder %s131, 1
      %p437 = por %p435, %p436
      %p439 = scmp.ne.s32.totalorder %s424, %s438
      %p440 = scmp.eq.s32.totalorder %s131, 0
      %p441 = por %p439, %p440
      %s443 = sadd.s32 %s442, 1
      %p446 = scmp.eq.s32.totalorder %s125, 1
      %p447 = scmp.ne.s32.totalorder %s442, %s444
      %p448 = scmp.eq.s32.totalorder %s125, 0
      %p449 = por %p447, %p448
      %p450 = scmp.ne.s32.totalorder %s442, %s444
      %p451 = scmp.eq.s32.totalorder %s130, 1
      %p452 = por %p450, %p451
      %p453 = scmp.ne.s32.totalorder %s444, %s445
      %p454 = scmp.eq.s32.totalorder %s130, 0
      %p455 = por %p453, %p454
      %p456 = scmp.ne.s32.totalorder %s444, %s445
      %p457 = scmp.eq.s32.totalorder %s131, 1
      %p458 = por %p456, %p457
      %p460 = scmp.ne.s32.totalorder %s445, %s459
      %p461 = scmp.eq.s32.totalorder %s131, 0
      %p462 = por %p460, %p461
      %s464 = sadd.s32 %s463, 1
      %p467 = scmp.eq.s32.totalorder %s125, 1
      %p468 = scmp.ne.s32.totalorder %s463, %s465
      %p469 = scmp.eq.s32.totalorder %s125, 0
      %p470 = por %p468, %p469
      %p471 = scmp.ne.s32.totalorder %s463, %s465
      %p472 = scmp.eq.s32.totalorder %s130, 1
      %p473 = por %p471, %p472
      %p474 = scmp.ne.s32.totalorder %s465, %s466
      %p475 = scmp.eq.s32.totalorder %s130, 0
      %p476 = por %p474, %p475
      %p477 = scmp.ne.s32.totalorder %s465, %s466
      %p478 = scmp.eq.s32.totalorder %s131, 1
      %p479 = por %p477, %p478
      %p481 = scmp.ne.s32.totalorder %s466, %s480
      %p482 = scmp.eq.s32.totalorder %s131, 0
      %p483 = por %p481, %p482
      %s485 = sadd.s32 %s484, 1
      %p488 = scmp.eq.s32.totalorder %s125, 1
      %p489 = scmp.ne.s32.totalorder %s484, %s486
      %p490 = scmp.eq.s32.totalorder %s125, 0
      %p491 = por %p489, %p490
      %p492 = scmp.ne.s32.totalorder %s484, %s486
      %p493 = scmp.eq.s32.totalorder %s130, 1
      %p494 = por %p492, %p493
      %p495 = scmp.ne.s32.totalorder %s486, %s487
      %p496 = scmp.eq.s32.totalorder %s130, 0
      %p497 = por %p495, %p496
      %p498 = scmp.ne.s32.totalorder %s486, %s487
      %p499 = scmp.eq.s32.totalorder %s131, 1
      %p500 = por %p498, %p499
      %p502 = scmp.ne.s32.totalorder %s487, %s501
      %p503 = scmp.eq.s32.totalorder %s131, 0
      %p504 = por %p502, %p503
      %s506 = sadd.s32 %s505, 1
      %p509 = scmp.eq.s32.totalorder %s125, 1
      %p510 = scmp.ne.s32.totalorder %s505, %s507
      %p511 = scmp.eq.s32.totalorder %s125, 0
      %p512 = por %p510, %p511
      %p513 = scmp.ne.s32.totalorder %s505, %s507
      %p514 = scmp.eq.s32.totalorder %s130, 1
      %p515 = por %p513, %p514
      %p516 = scmp.ne.s32.totalorder %s507, %s508
      %p517 = scmp.eq.s32.totalorder %s130, 0
      %p518 = por %p516, %p517
      %p519 = scmp.ne.s32.totalorder %s507, %s508
      %p520 = scmp.eq.s32.totalorder %s131, 1
      %p521 = por %p519, %p520
      %p523 = scmp.ne.s32.totalorder %s508, %s522
      %p524 = scmp.eq.s32.totalorder %s131, 0
      %p525 = por %p523, %p524
      %s527 = sadd.s32 %s526, 1
      %p530 = scmp.eq.s32.totalorder %s125, 1
      %p531 = scmp.ne.s32.totalorder %s526, %s528
      %p532 = scmp.eq.s32.totalorder %s125, 0
      %p533 = por %p531, %p532
      %p534 = scmp.ne.s32.totalorder %s526, %s528
      %p535 = scmp.eq.s32.totalorder %s130, 1
      %p536 = por %p534, %p535
      %p537 = scmp.ne.s32.totalorder %s528, %s529
      %p538 = scmp.eq.s32.totalorder %s130, 0
      %p539 = por %p537, %p538
      %p540 = scmp.ne.s32.totalorder %s528, %s529
      %p541 = scmp.eq.s32.totalorder %s131, 1
      %p542 = por %p540, %p541
      %p544 = scmp.ne.s32.totalorder %s529, %s543
      %p545 = scmp.eq.s32.totalorder %s131, 0
      %p546 = por %p544, %p545
      %s548 = sadd.s32 %s547, 1
      %p551 = scmp.eq.s32.totalorder %s125, 1
      %p552 = scmp.ne.s32.totalorder %s547, %s549
      %p553 = scmp.eq.s32.totalorder %s125, 0
      %p554 = por %p552, %p553
      %p555 = scmp.ne.s32.totalorder %s547, %s549
      %p556 = scmp.eq.s32.totalorder %s130, 1
      %p557 = por %p555, %p556
      %p558 = scmp.ne.s32.totalorder %s549, %s550
      %p559 = scmp.eq.s32.totalorder %s130, 0
      %p560 = por %p558, %p559
      %p561 = scmp.ne.s32.totalorder %s549, %s550
      %p562 = scmp.eq.s32.totalorder %s131, 1
      %p563 = por %p561, %p562
      %p565 = scmp.ne.s32.totalorder %s550, %s564
      %p566 = scmp.eq.s32.totalorder %s131, 0
      %p567 = por %p565, %p566
      %s569 = sadd.s32 %s568, 1
      %p572 = scmp.eq.s32.totalorder %s125, 1
      %p573 = scmp.ne.s32.totalorder %s568, %s570
      %p574 = scmp.eq.s32.totalorder %s125, 0
      %p575 = por %p573, %p574
      %p576 = scmp.ne.s32.totalorder %s568, %s570
      %p577 = scmp.eq.s32.totalorder %s130, 1
      %p578 = por %p576, %p577
      %p579 = scmp.ne.s32.totalorder %s570, %s571
      %p580 = scmp.eq.s32.totalorder %s130, 0
      %p581 = por %p579, %p580
      %p582 = scmp.ne.s32.totalorder %s570, %s571
      %p583 = scmp.eq.s32.totalorder %s131, 1
      %p584 = por %p582, %p583
      %p586 = scmp.ne.s32.totalorder %s571, %s585
      %p587 = scmp.eq.s32.totalorder %s131, 0
      %p588 = por %p586, %p587
      %s590 = sadd.s32 %s589, 1
      %p593 = scmp.eq.s32.totalorder %s125, 1
      %p594 = scmp.ne.s32.totalorder %s589, %s591
      %p595 = scmp.eq.s32.totalorder %s125, 0
      %p596 = por %p594, %p595
      %p597 = scmp.ne.s32.totalorder %s589, %s591
      %p598 = scmp.eq.s32.totalorder %s130, 1
      %p599 = por %p597, %p598
      %p600 = scmp.ne.s32.totalorder %s591, %s592
      %p601 = scmp.eq.s32.totalorder %s130, 0
      %p602 = por %p600, %p601
      %p603 = scmp.ne.s32.totalorder %s591, %s592
      %p604 = scmp.eq.s32.totalorder %s131, 1
      %p605 = por %p603, %p604
      %p607 = scmp.ne.s32.totalorder %s592, %s606
      %p608 = scmp.eq.s32.totalorder %s131, 0
      %p609 = por %p607, %p608
      %s611 = sadd.s32 %s610, 1
      %p614 = scmp.eq.s32.totalorder %s125, 1
      %p615 = scmp.ne.s32.totalorder %s610, %s612
      %p616 = scmp.eq.s32.totalorder %s125, 0
      %p617 = por %p615, %p616
      %p618 = scmp.ne.s32.totalorder %s610, %s612
      %p619 = scmp.eq.s32.totalorder %s130, 1
      %p620 = por %p618, %p619
      %p621 = scmp.ne.s32.totalorder %s612, %s613
      %p622 = scmp.eq.s32.totalorder %s130, 0
      %p623 = por %p621, %p622
      %p624 = scmp.ne.s32.totalorder %s612, %s613
      %p625 = scmp.eq.s32.totalorder %s131, 1
      %p626 = por %p624, %p625
      %p628 = scmp.ne.s32.totalorder %s613, %s627
      %p629 = scmp.eq.s32.totalorder %s131, 0
      %p630 = por %p628, %p629
      %s632 = sadd.s32 %s631, 1
      %p635 = scmp.eq.s32.totalorder %s125, 1
      %p636 = scmp.ne.s32.totalorder %s631, %s633
      %p637 = scmp.eq.s32.totalorder %s125, 0
      %p638 = por %p636, %p637
      %p639 = scmp.ne.s32.totalorder %s631, %s633
      %p640 = scmp.eq.s32.totalorder %s130, 1
      %p641 = por %p639, %p640
      %p642 = scmp.ne.s32.totalorder %s633, %s634
      %p643 = scmp.eq.s32.totalorder %s130, 0
      %p644 = por %p642, %p643
      %p645 = scmp.ne.s32.totalorder %s633, %s634
      %p646 = scmp.eq.s32.totalorder %s131, 1
      %p647 = por %p645, %p646
      %p649 = scmp.ne.s32.totalorder %s634, %s648
      %p650 = scmp.eq.s32.totalorder %s131, 0
      %p651 = por %p649, %p650
      %s653 = sadd.s32 %s652, 1
      %p656 = scmp.eq.s32.totalorder %s125, 1
      %p657 = scmp.ne.s32.totalorder %s652, %s654
      %p658 = scmp.eq.s32.totalorder %s125, 0
      %p659 = por %p657, %p658
      %p660 = scmp.ne.s32.totalorder %s652, %s654
      %p661 = scmp.eq.s32.totalorder %s130, 1
      %p662 = por %p660, %p661
      %p663 = scmp.ne.s32.totalorder %s654, %s655
      %p664 = scmp.eq.s32.totalorder %s130, 0
      %p665 = por %p663, %p664
      %p666 = scmp.ne.s32.totalorder %s654, %s655
      %p667 = scmp.eq.s32.totalorder %s131, 1
      %p668 = por %p666, %p667
      %p670 = scmp.ne.s32.totalorder %s655, %s669
      %p671 = scmp.eq.s32.totalorder %s131, 0
      %p672 = por %p670, %p671
      %s674 = sadd.s32 %s673, 1
      %p677 = scmp.eq.s32.totalorder %s125, 1
      %p678 = scmp.ne.s32.totalorder %s673, %s675
      %p679 = scmp.eq.s32.totalorder %s125, 0
      %p680 = por %p678, %p679
      %p681 = scmp.ne.s32.totalorder %s673, %s675
      %p682 = scmp.eq.s32.totalorder %s130, 1
      %p683 = por %p681, %p682
      %p684 = scmp.ne.s32.totalorder %s675, %s676
      %p685 = scmp.eq.s32.totalorder %s130, 0
      %p686 = por %p684, %p685
      %p687 = scmp.ne.s32.totalorder %s675, %s676
      %p688 = scmp.eq.s32.totalorder %s131, 1
      %p689 = por %p687, %p688
      %p691 = scmp.ne.s32.totalorder %s676, %s690
      %p692 = scmp.eq.s32.totalorder %s131, 0
      %p693 = por %p691, %p692
      %s695 = sadd.s32 %s694, 1
      %p698 = scmp.eq.s32.totalorder %s125, 1
      %p699 = scmp.ne.s32.totalorder %s694, %s696
      %p700 = scmp.eq.s32.totalorder %s125, 0
      %p701 = por %p699, %p700
      %p702 = scmp.ne.s32.totalorder %s694, %s696
      %p703 = scmp.eq.s32.totalorder %s130, 1
      %p704 = por %p702, %p703
      %p705 = scmp.ne.s32.totalorder %s696, %s697
      %p706 = scmp.eq.s32.totalorder %s130, 0
      %p707 = por %p705, %p706
      %p708 = scmp.ne.s32.totalorder %s696, %s697
      %p709 = scmp.eq.s32.totalorder %s131, 1
      %p710 = por %p708, %p709
      %p712 = scmp.ne.s32.totalorder %s697, %s711
      %p713 = scmp.eq.s32.totalorder %s131, 0
      %p714 = por %p712, %p713
      %s716 = sadd.s32 %s715, 1
      %p719 = scmp.eq.s32.totalorder %s125, 1
      %p720 = scmp.ne.s32.totalorder %s715, %s717
      %p721 = scmp.eq.s32.totalorder %s125, 0
      %p722 = por %p720, %p721
      %p723 = scmp.ne.s32.totalorder %s715, %s717
      %p724 = scmp.eq.s32.totalorder %s130, 1
      %p725 = por %p723, %p724
      %p726 = scmp.ne.s32.totalorder %s717, %s718
      %p727 = scmp.eq.s32.totalorder %s130, 0
      %p728 = por %p726, %p727
      %p729 = scmp.ne.s32.totalorder %s717, %s718
      %p730 = scmp.eq.s32.totalorder %s131, 1
      %p731 = por %p729, %p730
      %p733 = scmp.ne.s32.totalorder %s718, %s732
      %p734 = scmp.eq.s32.totalorder %s131, 0
      %p735 = por %p733, %p734
      %s737 = sadd.s32 %s736, 1
      %p740 = scmp.eq.s32.totalorder %s125, 1
      %p741 = scmp.ne.s32.totalorder %s736, %s738
      %p742 = scmp.eq.s32.totalorder %s125, 0
      %p743 = por %p741, %p742
      %p744 = scmp.ne.s32.totalorder %s736, %s738
      %p745 = scmp.eq.s32.totalorder %s130, 1
      %p746 = por %p744, %p745
      %p747 = scmp.ne.s32.totalorder %s738, %s739
      %p748 = scmp.eq.s32.totalorder %s130, 0
      %p749 = por %p747, %p748
      %p750 = scmp.ne.s32.totalorder %s738, %s739
      %p751 = scmp.eq.s32.totalorder %s131, 1
      %p752 = por %p750, %p751
      %p754 = scmp.ne.s32.totalorder %s739, %s753
      %p755 = scmp.eq.s32.totalorder %s131, 0
      %p756 = por %p754, %p755
      %s758 = sadd.s32 %s757, 1
      %p761 = scmp.eq.s32.totalorder %s125, 1
      %p762 = scmp.ne.s32.totalorder %s757, %s759
      %p763 = scmp.eq.s32.totalorder %s125, 0
      %p764 = por %p762, %p763
      %p765 = scmp.ne.s32.totalorder %s757, %s759
      %p766 = scmp.eq.s32.totalorder %s130, 1
      %p767 = por %p765, %p766
      %p768 = scmp.ne.s32.totalorder %s759, %s760
      %p769 = scmp.eq.s32.totalorder %s130, 0
      %p770 = por %p768, %p769
      %p771 = scmp.ne.s32.totalorder %s759, %s760
      %p772 = scmp.eq.s32.totalorder %s131, 1
      %p773 = por %p771, %p772
      %p775 = scmp.ne.s32.totalorder %s760, %s774
      %p776 = scmp.eq.s32.totalorder %s131, 0
      %p777 = por %p775, %p776
      %s779 = sadd.s32 %s778, 1
      %p782 = scmp.eq.s32.totalorder %s125, 1
      %p783 = scmp.ne.s32.totalorder %s778, %s780
      %p784 = scmp.eq.s32.totalorder %s125, 0
      %p785 = por %p783, %p784
      %p786 = scmp.ne.s32.totalorder %s778, %s780
      %p787 = scmp.eq.s32.totalorder %s130, 1
      %p788 = por %p786, %p787
      %p789 = scmp.ne.s32.totalorder %s780, %s781
      %p790 = scmp.eq.s32.totalorder %s130, 0
      %p791 = por %p789, %p790
      %p792 = scmp.ne.s32.totalorder %s780, %s781
      %p793 = scmp.eq.s32.totalorder %s131, 1
      %p794 = por %p792, %p793
      %p796 = scmp.ne.s32.totalorder %s781, %s795
      %p797 = scmp.eq.s32.totalorder %s131, 0
      %p798 = por %p796, %p797
      %s800 = sadd.s32 %s799, 1
      %p803 = scmp.eq.s32.totalorder %s125, 1
      %p804 = scmp.ne.s32.totalorder %s799, %s801
      %p805 = scmp.eq.s32.totalorder %s125, 0
      %p806 = por %p804, %p805
      %p807 = scmp.ne.s32.totalorder %s799, %s801
      %p808 = scmp.eq.s32.totalorder %s130, 1
      %p809 = por %p807, %p808
      %p810 = scmp.ne.s32.totalorder %s801, %s802
      %p811 = scmp.eq.s32.totalorder %s130, 0
      %p812 = por %p810, %p811
      %p813 = scmp.ne.s32.totalorder %s801, %s802
      %p814 = scmp.eq.s32.totalorder %s131, 1
      %p815 = por %p813, %p814
      %p817 = scmp.ne.s32.totalorder %s802, %s816
      %p818 = scmp.eq.s32.totalorder %s131, 0
      %p819 = por %p817, %p818
      %s821 = sadd.s32 %s820, 1
      %p824 = scmp.eq.s32.totalorder %s125, 1
      %p825 = scmp.ne.s32.totalorder %s820, %s822
      %p826 = scmp.eq.s32.totalorder %s125, 0
      %p827 = por %p825, %p826
      %p828 = scmp.ne.s32.totalorder %s820, %s822
      %p829 = scmp.eq.s32.totalorder %s130, 1
      %p830 = por %p828, %p829
      %p831 = scmp.ne.s32.totalorder %s822, %s823
      %p832 = scmp.eq.s32.totalorder %s130, 0
      %p833 = por %p831, %p832
      %p834 = scmp.ne.s32.totalorder %s822, %s823
      %p835 = scmp.eq.s32.totalorder %s131, 1
      %p836 = por %p834, %p835
      %p838 = scmp.ne.s32.totalorder %s823, %s837
      %p839 = scmp.eq.s32.totalorder %s131, 0
      %p840 = por %p838, %p839
      %s842 = sadd.s32 %s841, 1
      %p845 = scmp.eq.s32.totalorder %s125, 1
      %p846 = scmp.ne.s32.totalorder %s841, %s843
      %p847 = scmp.eq.s32.totalorder %s125, 0
      %p848 = por %p846, %p847
      %p849 = scmp.ne.s32.totalorder %s841, %s843
      %p850 = scmp.eq.s32.totalorder %s130, 1
      %p851 = por %p849, %p850
      %p852 = scmp.ne.s32.totalorder %s843, %s844
      %p853 = scmp.eq.s32.totalorder %s130, 0
      %p854 = por %p852, %p853
      %p855 = scmp.ne.s32.totalorder %s843, %s844
      %p856 = scmp.eq.s32.totalorder %s131, 1
      %p857 = por %p855, %p856
      %p859 = scmp.ne.s32.totalorder %s844, %s858
      %p860 = scmp.eq.s32.totalorder %s131, 0
      %p861 = por %p859, %p860
      %s863 = sadd.s32 %s862, 1
      %p866 = scmp.eq.s32.totalorder %s125, 1
      %p867 = scmp.ne.s32.totalorder %s862, %s864
      %p868 = scmp.eq.s32.totalorder %s125, 0
      %p869 = por %p867, %p868
      %p870 = scmp.ne.s32.totalorder %s862, %s864
      %p871 = scmp.eq.s32.totalorder %s130, 1
      %p872 = por %p870, %p871
      %p873 = scmp.ne.s32.totalorder %s864, %s865
      %p874 = scmp.eq.s32.totalorder %s130, 0
      %p875 = por %p873, %p874
      %p876 = scmp.ne.s32.totalorder %s864, %s865
      %p877 = scmp.eq.s32.totalorder %s131, 1
      %p878 = por %p876, %p877
      %p880 = scmp.ne.s32.totalorder %s865, %s879
      %p881 = scmp.eq.s32.totalorder %s131, 0
      %p882 = por %p880, %p881
      %s884 = sadd.s32 %s883, 1
      %p887 = scmp.eq.s32.totalorder %s125, 1
      %p888 = scmp.ne.s32.totalorder %s883, %s885
      %p889 = scmp.eq.s32.totalorder %s125, 0
      %p890 = por %p888, %p889
      %p891 = scmp.ne.s32.totalorder %s883, %s885
      %p892 = scmp.eq.s32.totalorder %s130, 1
      %p893 = por %p891, %p892
      %p894 = scmp.ne.s32.totalorder %s885, %s886
      %p895 = scmp.eq.s32.totalorder %s130, 0
      %p896 = por %p894, %p895
      %p897 = scmp.ne.s32.totalorder %s885, %s886
      %p898 = scmp.eq.s32.totalorder %s131, 1
      %p899 = por %p897, %p898
      %p901 = scmp.ne.s32.totalorder %s886, %s900
      %p902 = scmp.eq.s32.totalorder %s131, 0
      %p903 = por %p901, %p902
      %s905 = sadd.s32 %s904, 1
      %p908 = scmp.eq.s32.totalorder %s125, 1
      %p909 = scmp.ne.s32.totalorder %s904, %s906
      %p910 = scmp.eq.s32.totalorder %s125, 0
      %p911 = por %p909, %p910
      %p912 = scmp.ne.s32.totalorder %s904, %s906
      %p913 = scmp.eq.s32.totalorder %s130, 1
      %p914 = por %p912, %p913
      %p915 = scmp.ne.s32.totalorder %s906, %s907
      %p916 = scmp.eq.s32.totalorder %s130, 0
      %p917 = por %p915, %p916
      %p918 = scmp.ne.s32.totalorder %s906, %s907
      %p919 = scmp.eq.s32.totalorder %s131, 1
      %p920 = por %p918, %p919
      %p922 = scmp.ne.s32.totalorder %s907, %s921
      %p923 = scmp.eq.s32.totalorder %s131, 0
      %p924 = por %p922, %p923
      %s926 = sadd.s32 %s925, 1
      %p929 = scmp.eq.s32.totalorder %s125, 1
      %p930 = scmp.ne.s32.totalorder %s925, %s927
      %p931 = scmp.eq.s32.totalorder %s125, 0
      %p932 = por %p930, %p931
      %p933 = scmp.ne.s32.totalorder %s925, %s927
      %p934 = scmp.eq.s32.totalorder %s130, 1
      %p935 = por %p933, %p934
      %p936 = scmp.ne.s32.totalorder %s927, %s928
      %p937 = scmp.eq.s32.totalorder %s130, 0
      %p938 = por %p936, %p937
      %p939 = scmp.ne.s32.totalorder %s927, %s928
      %p940 = scmp.eq.s32.totalorder %s131, 1
      %p941 = por %p939, %p940
      %p943 = scmp.ne.s32.totalorder %s928, %s942
      %p944 = scmp.eq.s32.totalorder %s131, 0
      %p945 = por %p943, %p944
      %s947 = sadd.s32 %s946, 1
      %p950 = scmp.eq.s32.totalorder %s125, 1
      %p951 = scmp.ne.s32.totalorder %s946, %s948
      %p952 = scmp.eq.s32.totalorder %s125, 0
      %p953 = por %p951, %p952
      %p954 = scmp.ne.s32.totalorder %s946, %s948
      %p955 = scmp.eq.s32.totalorder %s130, 1
      %p956 = por %p954, %p955
      %p957 = scmp.ne.s32.totalorder %s948, %s949
      %p958 = scmp.eq.s32.totalorder %s130, 0
      %p959 = por %p957, %p958
      %p960 = scmp.ne.s32.totalorder %s948, %s949
      %p961 = scmp.eq.s32.totalorder %s131, 1
      %p962 = por %p960, %p961
      %p964 = scmp.ne.s32.totalorder %s949, %s963
      %p965 = scmp.eq.s32.totalorder %s131, 0
      %p966 = por %p964, %p965
      %s968 = sadd.s32 %s967, 1
      %p971 = scmp.eq.s32.totalorder %s125, 1
      %p972 = scmp.ne.s32.totalorder %s967, %s969
      %p973 = scmp.eq.s32.totalorder %s125, 0
      %p974 = por %p972, %p973
      %p975 = scmp.ne.s32.totalorder %s967, %s969
      %p976 = scmp.eq.s32.totalorder %s130, 1
      %p977 = por %p975, %p976
      %p978 = scmp.ne.s32.totalorder %s969, %s970
      %p979 = scmp.eq.s32.totalorder %s130, 0
      %p980 = por %p978, %p979
      %p981 = scmp.ne.s32.totalorder %s969, %s970
      %p982 = scmp.eq.s32.totalorder %s131, 1
      %p983 = por %p981, %p982
      %p985 = scmp.ne.s32.totalorder %s970, %s984
      %p986 = scmp.eq.s32.totalorder %s131, 0
      %p987 = por %p985, %p986
      %s989 = sadd.s32 %s988, 1
      %p992 = scmp.eq.s32.totalorder %s125, 1
      %p993 = scmp.ne.s32.totalorder %s988, %s990
      %p994 = scmp.eq.s32.totalorder %s125, 0
      %p995 = por %p993, %p994
      %p996 = scmp.ne.s32.totalorder %s988, %s990
      %p997 = scmp.eq.s32.totalorder %s130, 1
      %p998 = por %p996, %p997
      %p999 = scmp.ne.s32.totalorder %s990, %s991
      %p1000 = scmp.eq.s32.totalorder %s130, 0
      %p1001 = por %p999, %p1000
      %p1002 = scmp.ne.s32.totalorder %s990, %s991
      %p1003 = scmp.eq.s32.totalorder %s131, 1
      %p1004 = por %p1002, %p1003
      %p1006 = scmp.ne.s32.totalorder %s991, %s1005
      %p1007 = scmp.eq.s32.totalorder %s131, 0
      %p1008 = por %p1006, %p1007
      %s1010 = sadd.s32 %s1009, 1
      %p1013 = scmp.eq.s32.totalorder %s125, 1
      %p1014 = scmp.ne.s32.totalorder %s1009, %s1011
      %p1015 = scmp.eq.s32.totalorder %s125, 0
      %p1016 = por %p1014, %p1015
      %p1017 = scmp.ne.s32.totalorder %s1009, %s1011
      %p1018 = scmp.eq.s32.totalorder %s130, 1
      %p1019 = por %p1017, %p1018
      %p1020 = scmp.ne.s32.totalorder %s1011, %s1012
      %p1021 = scmp.eq.s32.totalorder %s130, 0
      %p1022 = por %p1020, %p1021
      %p1023 = scmp.ne.s32.totalorder %s1011, %s1012
      %p1024 = scmp.eq.s32.totalorder %s131, 1
      %p1025 = por %p1023, %p1024
      %p1027 = scmp.ne.s32.totalorder %s1012, %s1026
      %p1028 = scmp.eq.s32.totalorder %s131, 0
      %p1029 = por %p1027, %p1028
      %s1031 = sadd.s32 %s1030, 1
      %p1034 = scmp.eq.s32.totalorder %s125, 1
      %p1035 = scmp.ne.s32.totalorder %s1030, %s1032
      %p1036 = scmp.eq.s32.totalorder %s125, 0
      %p1037 = por %p1035, %p1036
      %p1038 = scmp.ne.s32.totalorder %s1030, %s1032
      %p1039 = scmp.eq.s32.totalorder %s130, 1
      %p1040 = por %p1038, %p1039
      %p1041 = scmp.ne.s32.totalorder %s1032, %s1033
      %p1042 = scmp.eq.s32.totalorder %s130, 0
      %p1043 = por %p1041, %p1042
      %p1044 = scmp.ne.s32.totalorder %s1032, %s1033
      %p1045 = scmp.eq.s32.totalorder %s131, 1
      %p1046 = por %p1044, %p1045
      %p1048 = scmp.ne.s32.totalorder %s1033, %s1047
      %p1049 = scmp.eq.s32.totalorder %s131, 0
      %p1050 = por %p1048, %p1049
      %s1052 = sadd.s32 %s1051, 1
      %p1055 = scmp.eq.s32.totalorder %s125, 1
      %p1056 = scmp.ne.s32.totalorder %s1051, %s1053
      %p1057 = scmp.eq.s32.totalorder %s125, 0
      %p1058 = por %p1056, %p1057
      %p1059 = scmp.ne.s32.totalorder %s1051, %s1053
      %p1060 = scmp.eq.s32.totalorder %s130, 1
      %p1061 = por %p1059, %p1060
      %p1062 = scmp.ne.s32.totalorder %s1053, %s1054
      %p1063 = scmp.eq.s32.totalorder %s130, 0
      %p1064 = por %p1062, %p1063
      %p1065 = scmp.ne.s32.totalorder %s1053, %s1054
      %p1066 = scmp.eq.s32.totalorder %s131, 1
      %p1067 = por %p1065, %p1066
      %p1069 = scmp.ne.s32.totalorder %s1054, %s1068
      %p1070 = scmp.eq.s32.totalorder %s131, 0
      %p1071 = por %p1069, %p1070
      %s1073 = sadd.s32 %s1072, 1
      %p1076 = scmp.eq.s32.totalorder %s125, 1
      %p1077 = scmp.ne.s32.totalorder %s1072, %s1074
      %p1078 = scmp.eq.s32.totalorder %s125, 0
      %p1079 = por %p1077, %p1078
      %p1080 = scmp.ne.s32.totalorder %s1072, %s1074
      %p1081 = scmp.eq.s32.totalorder %s130, 1
      %p1082 = por %p1080, %p1081
      %p1083 = scmp.ne.s32.totalorder %s1074, %s1075
      %p1084 = scmp.eq.s32.totalorder %s130, 0
      %p1085 = por %p1083, %p1084
      %p1086 = scmp.ne.s32.totalorder %s1074, %s1075
      %p1087 = scmp.eq.s32.totalorder %s131, 1
      %p1088 = por %p1086, %p1087
      %p1090 = scmp.ne.s32.totalorder %s1075, %s1089
      %p1091 = scmp.eq.s32.totalorder %s131, 0
      %p1092 = por %p1090, %p1091
      %s1094 = sadd.s32 %s1093, 1
      %p1097 = scmp.eq.s32.totalorder %s125, 1
      %p1098 = scmp.ne.s32.totalorder %s1093, %s1095
      %p1099 = scmp.eq.s32.totalorder %s125, 0
      %p1100 = por %p1098, %p1099
      %p1101 = scmp.ne.s32.totalorder %s1093, %s1095
      %p1102 = scmp.eq.s32.totalorder %s130, 1
      %p1103 = por %p1101, %p1102
      %p1104 = scmp.ne.s32.totalorder %s1095, %s1096
      %p1105 = scmp.eq.s32.totalorder %s130, 0
      %p1106 = por %p1104, %p1105
      %p1107 = scmp.ne.s32.totalorder %s1095, %s1096
      %p1108 = scmp.eq.s32.totalorder %s131, 1
      %p1109 = por %p1107, %p1108
      %p1111 = scmp.ne.s32.totalorder %s1096, %s1110
      %p1112 = scmp.eq.s32.totalorder %s131, 0
      %p1113 = por %p1111, %p1112
      %s1115 = sadd.s32 %s1114, 1
      %p1118 = scmp.eq.s32.totalorder %s125, 1
      %p1119 = scmp.ne.s32.totalorder %s1114, %s1116
      %p1120 = scmp.eq.s32.totalorder %s125, 0
      %p1121 = por %p1119, %p1120
      %p1122 = scmp.ne.s32.totalorder %s1114, %s1116
      %p1123 = scmp.eq.s32.totalorder %s130, 1
      %p1124 = por %p1122, %p1123
      %p1125 = scmp.ne.s32.totalorder %s1116, %s1117
      %p1126 = scmp.eq.s32.totalorder %s130, 0
      %p1127 = por %p1125, %p1126
      %p1128 = scmp.ne.s32.totalorder %s1116, %s1117
      %p1129 = scmp.eq.s32.totalorder %s131, 1
      %p1130 = por %p1128, %p1129
      %p1132 = scmp.ne.s32.totalorder %s1117, %s1131
      %p1133 = scmp.eq.s32.totalorder %s131, 0
      %p1134 = por %p1132, %p1133
      %s1136 = sadd.s32 %s1135, 1
      %p1139 = scmp.eq.s32.totalorder %s125, 1
      %p1140 = scmp.ne.s32.totalorder %s1135, %s1137
      %p1141 = scmp.eq.s32.totalorder %s125, 0
      %p1142 = por %p1140, %p1141
      %p1143 = scmp.ne.s32.totalorder %s1135, %s1137
      %p1144 = scmp.eq.s32.totalorder %s130, 1
      %p1145 = por %p1143, %p1144
      %p1146 = scmp.ne.s32.totalorder %s1137, %s1138
      %p1147 = scmp.eq.s32.totalorder %s130, 0
      %p1148 = por %p1146, %p1147
      %p1149 = scmp.ne.s32.totalorder %s1137, %s1138
      %p1150 = scmp.eq.s32.totalorder %s131, 1
      %p1151 = por %p1149, %p1150
      %p1153 = scmp.ne.s32.totalorder %s1138, %s1152
      %p1154 = scmp.eq.s32.totalorder %s131, 0
      %p1155 = por %p1153, %p1154
      %s1157 = sadd.s32 %s1156, 1
      %p1160 = scmp.eq.s32.totalorder %s125, 1
      %p1161 = scmp.ne.s32.totalorder %s1156, %s1158
      %p1162 = scmp.eq.s32.totalorder %s125, 0
      %p1163 = por %p1161, %p1162
      %p1164 = scmp.ne.s32.totalorder %s1156, %s1158
      %p1165 = scmp.eq.s32.totalorder %s130, 1
      %p1166 = por %p1164, %p1165
      %p1167 = scmp.ne.s32.totalorder %s1158, %s1159
      %p1168 = scmp.eq.s32.totalorder %s130, 0
      %p1169 = por %p1167, %p1168
      %p1170 = scmp.ne.s32.totalorder %s1158, %s1159
      %p1171 = scmp.eq.s32.totalorder %s131, 1
      %p1172 = por %p1170, %p1171
      %p1174 = scmp.ne.s32.totalorder %s1159, %s1173
      %p1175 = scmp.eq.s32.totalorder %s131, 0
      %p1176 = por %p1174, %p1175
      %s1178 = sadd.s32 %s1177, 1
      %p1181 = scmp.eq.s32.totalorder %s125, 1
      %p1182 = scmp.ne.s32.totalorder %s1177, %s1179
      %p1183 = scmp.eq.s32.totalorder %s125, 0
      %p1184 = por %p1182, %p1183
      %p1185 = scmp.ne.s32.totalorder %s1177, %s1179
      %p1186 = scmp.eq.s32.totalorder %s130, 1
      %p1187 = por %p1185, %p1186
      %p1188 = scmp.ne.s32.totalorder %s1179, %s1180
      %p1189 = scmp.eq.s32.totalorder %s130, 0
      %p1190 = por %p1188, %p1189
      %p1191 = scmp.ne.s32.totalorder %s1179, %s1180
      %p1192 = scmp.eq.s32.totalorder %s131, 1
      %p1193 = por %p1191, %p1192
      %p1195 = scmp.ne.s32.totalorder %s1180, %s1194
      %p1196 = scmp.eq.s32.totalorder %s131, 0
      %p1197 = por %p1195, %p1196
      %s1199 = sadd.s32 %s1198, 1
      %p1202 = scmp.eq.s32.totalorder %s125, 1
      %p1203 = scmp.ne.s32.totalorder %s1198, %s1200
      %p1204 = scmp.eq.s32.totalorder %s125, 0
      %p1205 = por %p1203, %p1204
      %p1206 = scmp.ne.s32.totalorder %s1198, %s1200
      %p1207 = scmp.eq.s32.totalorder %s130, 1
      %p1208 = por %p1206, %p1207
      %p1209 = scmp.ne.s32.totalorder %s1200, %s1201
      %p1210 = scmp.eq.s32.totalorder %s130, 0
      %p1211 = por %p1209, %p1210
      %p1212 = scmp.ne.s32.totalorder %s1200, %s1201
      %p1213 = scmp.eq.s32.totalorder %s131, 1
      %p1214 = por %p1212, %p1213
      %p1216 = scmp.ne.s32.totalorder %s1201, %s1215
      %p1217 = scmp.eq.s32.totalorder %s131, 0
      %p1218 = por %p1216, %p1217
      %s1220 = sadd.s32 %s1219, 1
      %p1223 = scmp.eq.s32.totalorder %s125, 1
      %p1224 = scmp.ne.s32.totalorder %s1219, %s1221
      %p1225 = scmp.eq.s32.totalorder %s125, 0
      %p1226 = por %p1224, %p1225
      %p1227 = scmp.ne.s32.totalorder %s1219, %s1221
      %p1228 = scmp.eq.s32.totalorder %s130, 1
      %p1229 = por %p1227, %p1228
      %p1230 = scmp.ne.s32.totalorder %s1221, %s1222
      %p1231 = scmp.eq.s32.totalorder %s130, 0
      %p1232 = por %p1230, %p1231
      %p1233 = scmp.ne.s32.totalorder %s1221, %s1222
      %p1234 = scmp.eq.s32.totalorder %s131, 1
      %p1235 = por %p1233, %p1234
      %p1237 = scmp.ne.s32.totalorder %s1222, %s1236
      %p1238 = scmp.eq.s32.totalorder %s131, 0
      %p1239 = por %p1237, %p1238
      %s1240 = ssub.s32 %s125, %s132
      %p1241 = scmp.eq.s32.totalorder %s1240, 0
      %s1243 = sadd.s32 %s1242, 1
      %s1244 = scalar_select %p1241, %s1242, %s1243
      %p1247 = pneg %p1241
      %p1248 = scmp.eq.s32.totalorder %s125, 1
      %p1249 = por %p1247, %p1248
      %p1250 = scmp.ne.s32.totalorder %s1242, %s1245
      %p1251 = scmp.eq.s32.totalorder %s125, 0
      %p1252 = por %p1250, %p1251
      %p1253 = scmp.ne.s32.totalorder %s1242, %s1245
      %p1254 = scmp.eq.s32.totalorder %s130, 1
      %p1255 = por %p1253, %p1254
      %p1256 = scmp.ne.s32.totalorder %s1245, %s1246
      %p1257 = scmp.eq.s32.totalorder %s130, 0
      %p1258 = por %p1256, %p1257
      %p1259 = scmp.ne.s32.totalorder %s1245, %s1246
      %p1260 = scmp.eq.s32.totalorder %s131, 1
      %p1261 = por %p1259, %p1260
      %p1263 = scmp.ne.s32.totalorder %s1246, %s1262
      %p1264 = scmp.eq.s32.totalorder %s131, 0
      %p1265 = por %p1263, %p1264
      %p1266 = scmp.le.s32.totalorder 1, %s125
      %p1267 = scmp.lt.s32.totalorder %s125, 3
      %p1268 = pnand %p1266, %p1267
      %p1269 = pneg %p1268
      // Predicated region
      $region9: #{_lambda_.1} parent=5 // pred_check
        _
      $region10: #{_lambda_.1} parent=5 // pred_check_branch
        %1271 = sbr.rel (%p1268) target = $region12
      $region11: #{_lambda_.1} parent=5 // pred_region
        %s1272 = ssub.s32 %s125, 1
        // Predicated region
        $region13: #{_lambda_.1} parent=11 // pred_check
          %p1273 = pneg %p224
        $region14: #{_lambda_.1} parent=11 // pred_check_branch
          %1275 = sbr.rel (%p1273) target = $region16
        $region15: #{_lambda_.1} parent=11 // pred_region
          _
        $region16: #{_lambda_.1} parent=11 // pred_fallthru
          _
        // Predicated region
        $region17: #{_lambda_.1} parent=11 // pred_check
          %p1276 = pneg %p245
        $region18: #{_lambda_.1} parent=11 // pred_check_branch
          %1278 = sbr.rel (%p1276) target = $region20
        $region19: #{_lambda_.1} parent=11 // pred_region
          %s1280 = ssub.s32 128, 128
          %1281 = vsyncadd [#allocation5], %s1280
          %s1283 = sshll.u32 [#allocation4], 4
          %s1284 = int_to_ptr.vmem [resolvable:$true] %s1283
          %1286 = dma.hbm_to_vmem [thread:$0]  %s9, 128, %s1284, [#allocation5]
        $region20: #{_lambda_.1} parent=11 // pred_fallthru
          _
        // Predicated region
        $region21: #{_lambda_.1} parent=11 // pred_check
          %p1287 = pneg %p266
        $region22: #{_lambda_.1} parent=11 // pred_check_branch
          %1289 = sbr.rel (%p1287) target = $region24
        $region23: #{_lambda_.1} parent=11 // pred_region
          %s1291 = ssub.s32 128, 128
          %1292 = vsyncadd [#allocation7], %s1291
          %s1294 = sshll.u32 [#allocation6], 4
          %s1295 = int_to_ptr.vmem [resolvable:$true] %s1294
          %1297 = dma.hbm_to_vmem [thread:$0]  %s11, 128, %s1295, [#allocation7]
        $region24: #{_lambda_.1} parent=11 // pred_fallthru
          _
        // Predicated region
        $region25: #{_lambda_.1} parent=11 // pred_check
          %p1298 = pneg %p287
        $region26: #{_lambda_.1} parent=11 // pred_check_branch
          %1300 = sbr.rel (%p1298) target = $region28
        $region27: #{_lambda_.1} parent=11 // pred_region
          _
        $region28: #{_lambda_.1} parent=11 // pred_fallthru
          _
        // Predicated region
        $region29: #{_lambda_.1} parent=11 // pred_check
          %p1301 = pneg %p308
        $region30: #{_lambda_.1} parent=11 // pred_check_branch
          %1303 = sbr.rel (%p1301) target = $region32
        $region31: #{_lambda_.1} parent=11 // pred_region
          %s1305 = ssub.s32 128, 128
          %1306 = vsyncadd [#allocation7], %s1305
          %s1308 = sshll.u32 [#allocation8], 4
          %s1309 = int_to_ptr.vmem [resolvable:$true] %s1308
          %1311 = dma.hbm_to_vmem [thread:$0]  %s15, 128, %s1309, [#allocation7]
        $region32: #{_lambda_.1} parent=11 // pred_fallthru
          _
        // Predicated region
        $region33: #{_lambda_.1} parent=11 // pred_check
          %p1312 = pneg %p329
        $region34: #{_lambda_.1} parent=11 // pred_check_branch
          %1314 = sbr.rel (%p1312) target = $region36
        $region35: #{_lambda_.1} parent=11 // pred_region
          %s1316 = ssub.s32 128, 128
          %1317 = vsyncadd [#allocation10], %s1316
          %s1319 = sshll.u32 [#allocation9], 4
          %s1320 = int_to_ptr.vmem [resolvable:$true] %s1319
          %1322 = dma.hbm_to_vmem [thread:$0]  %s17, 128, %s1320, [#allocation10]
        $region36: #{_lambda_.1} parent=11 // pred_fallthru
          _
        // Predicated region
        $region37: #{_lambda_.1} parent=11 // pred_check
          %p1323 = pneg %p350
        $region38: #{_lambda_.1} parent=11 // pred_check_branch
          %1325 = sbr.rel (%p1323) target = $region40
        $region39: #{_lambda_.1} parent=11 // pred_region
          %s1327 = ssub.s32 128, 128
          %1328 = vsyncadd [#allocation10], %s1327
          %s1330 = sshll.u32 [#allocation11], 4
          %s1331 = int_to_ptr.vmem [resolvable:$true] %s1330
          %1333 = dma.hbm_to_vmem [thread:$0]  %s19, 128, %s1331, [#allocation10]
        $region40: #{_lambda_.1} parent=11 // pred_fallthru
          _
        // Predicated region
        $region41: #{_lambda_.1} parent=11 // pred_check
          %p1334 = pneg %p371
        $region42: #{_lambda_.1} parent=11 // pred_check_branch
          %1336 = sbr.rel (%p1334) target = $region44
        $region43: #{_lambda_.1} parent=11 // pred_region
          %s1338 = ssub.s32 128, 128
          %1339 = vsyncadd [#allocation13], %s1338
          %s1341 = sshll.u32 [#allocation12], 4
          %s1342 = int_to_ptr.vmem [resolvable:$true] %s1341
          %1344 = dma.hbm_to_vmem [thread:$0]  %s21, 128, %s1342, [#allocation13]
        $region44: #{_lambda_.1} parent=11 // pred_fallthru
          _
        // Predicated region
        $region45: #{_lambda_.1} parent=11 // pred_check
          %p1345 = pneg %p392
        $region46: #{_lambda_.1} parent=11 // pred_check_branch
          %1347 = sbr.rel (%p1345) target = $region48
        $region47: #{_lambda_.1} parent=11 // pred_region
          %s1349 = ssub.s32 128, 128
          %1350 = vsyncadd [#allocation13], %s1349
          %s1352 = sshll.u32 [#allocation14], 4
          %s1353 = int_to_ptr.vmem [resolvable:$true] %s1352
          %1355 = dma.hbm_to_vmem [thread:$0]  %s23, 128, %s1353, [#allocation13]
        $region48: #{_lambda_.1} parent=11 // pred_fallthru
          _
        // Predicated region
        $region49: #{_lambda_.1} parent=11 // pred_check
          %p1356 = pneg %p413
        $region50: #{_lambda_.1} parent=11 // pred_check_branch
          %1358 = sbr.rel (%p1356) target = $region52
        $region51: #{_lambda_.1} parent=11 // pred_region
          _
        $region52: #{_lambda_.1} parent=11 // pred_fallthru
          _
        // Predicated region
        $region53: #{_lambda_.1} parent=11 // pred_check
          %p1359 = pneg %p434
        $region54: #{_lambda_.1} parent=11 // pred_check_branch
          %1361 = sbr.rel (%p1359) target = $region56
        $region55: #{_lambda_.1} parent=11 // pred_region
          %s1363 = ssub.s32 256, 256
          %1364 = vsyncadd [#allocation16], %s1363
          %s1365 = sshll.u32 [#allocation15], 4
          %s1366 = int_to_ptr.vmem [resolvable:$true] %s1365
          %1371 = dma.hbm_to_vmem [thread:$0]  %s27, 256, %s1366, [#allocation16], 128, 128, 8
        $region56: #{_lambda_.1} parent=11 // pred_fallthru
          _
        // Predicated region
        $region57: #{_lambda_.1} parent=11 // pred_check
          %p1372 = pneg %p455
        $region58: #{_lambda_.1} parent=11 // pred_check_branch
          %1374 = sbr.rel (%p1372) target = $region60
        $region59: #{_lambda_.1} parent=11 // pred_region
          %s1376 = ssub.s32 256, 256
          %1377 = vsyncadd [#allocation16], %s1376
          %s1378 = sshll.u32 [#allocation17], 4
          %s1379 = int_to_ptr.vmem [resolvable:$true] %s1378
          %1384 = dma.hbm_to_vmem [thread:$0]  %s29, 256, %s1379, [#allocation16], 128, 128, 8
        $region60: #{_lambda_.1} parent=11 // pred_fallthru
          _
        // Predicated region
        $region61: #{_lambda_.1} parent=11 // pred_check
          %p1385 = pneg %p476
        $region62: #{_lambda_.1} parent=11 // pred_check_branch
          %1387 = sbr.rel (%p1385) target = $region64
        $region63: #{_lambda_.1} parent=11 // pred_region
          _
        $region64: #{_lambda_.1} parent=11 // pred_fallthru
          _
        // Predicated region
        $region65: #{_lambda_.1} parent=11 // pred_check
          %p1388 = pneg %p497
        $region66: #{_lambda_.1} parent=11 // pred_check_branch
          %1390 = sbr.rel (%p1388) target = $region68
        $region67: #{_lambda_.1} parent=11 // pred_region
          %s1392 = ssub.s32 256, 256
          %1393 = vsyncadd [#allocation19], %s1392
          %s1394 = sshll.u32 [#allocation18], 4
          %s1395 = int_to_ptr.vmem [resolvable:$true] %s1394
          %1400 = dma.hbm_to_vmem [thread:$0]  %s33, 256, %s1395, [#allocation19], 128, 128, 8
        $region68: #{_lambda_.1} parent=11 // pred_fallthru
          _
        // Predicated region
        $region69: #{_lambda_.1} parent=11 // pred_check
          %p1401 = pneg %p518
        $region70: #{_lambda_.1} parent=11 // pred_check_branch
          %1403 = sbr.rel (%p1401) target = $region72
        $region71: #{_lambda_.1} parent=11 // pred_region
          %s1405 = ssub.s32 256, 256
          %1406 = vsyncadd [#allocation19], %s1405
          %s1407 = sshll.u32 [#allocation20], 4
          %s1408 = int_to_ptr.vmem [resolvable:$true] %s1407
          %1413 = dma.hbm_to_vmem [thread:$0]  %s35, 256, %s1408, [#allocation19], 128, 128, 8
        $region72: #{_lambda_.1} parent=11 // pred_fallthru
          _
        // Predicated region
        $region73: #{_lambda_.1} parent=11 // pred_check
          %p1414 = pneg %p539
        $region74: #{_lambda_.1} parent=11 // pred_check_branch
          %1416 = sbr.rel (%p1414) target = $region76
        $region75: #{_lambda_.1} parent=11 // pred_region
          _
        $region76: #{_lambda_.1} parent=11 // pred_fallthru
          _
        // Predicated region
        $region77: #{_lambda_.1} parent=11 // pred_check
          %p1417 = pneg %p560
        $region78: #{_lambda_.1} parent=11 // pred_check_branch
          %1419 = sbr.rel (%p1417) target = $region80
        $region79: #{_lambda_.1} parent=11 // pred_region
          %s1421 = ssub.s32 256, 256
          %1422 = vsyncadd [#allocation22], %s1421
          %s1423 = sshll.u32 [#allocation21], 4
          %s1424 = int_to_ptr.vmem [resolvable:$true] %s1423
          %1429 = dma.hbm_to_vmem [thread:$0]  %s39, 256, %s1424, [#allocation22], 128, 128, 8
        $region80: #{_lambda_.1} parent=11 // pred_fallthru
          _
        // Predicated region
        $region81: #{_lambda_.1} parent=11 // pred_check
          %p1430 = pneg %p581
        $region82: #{_lambda_.1} parent=11 // pred_check_branch
          %1432 = sbr.rel (%p1430) target = $region84
        $region83: #{_lambda_.1} parent=11 // pred_region
          %s1434 = ssub.s32 256, 256
          %1435 = vsyncadd [#allocation22], %s1434
          %s1436 = sshll.u32 [#allocation23], 4
          %s1437 = int_to_ptr.vmem [resolvable:$true] %s1436
          %1442 = dma.hbm_to_vmem [thread:$0]  %s41, 256, %s1437, [#allocation22], 128, 128, 8
        $region84: #{_lambda_.1} parent=11 // pred_fallthru
          _
        // Predicated region
        $region85: #{_lambda_.1} parent=11 // pred_check
          %p1443 = pneg %p602
        $region86: #{_lambda_.1} parent=11 // pred_check_branch
          %1445 = sbr.rel (%p1443) target = $region88
        $region87: #{_lambda_.1} parent=11 // pred_region
          %s1447 = ssub.s32 256, 256
          %1448 = vsyncadd [#allocation25], %s1447
          %s1449 = sshll.u32 [#allocation24], 4
          %s1450 = int_to_ptr.vmem [resolvable:$true] %s1449
          %1455 = dma.hbm_to_vmem [thread:$0]  %s43, 256, %s1450, [#allocation25], 128, 128, 8
        $region88: #{_lambda_.1} parent=11 // pred_fallthru
          _
        // Predicated region
        $region89: #{_lambda_.1} parent=11 // pred_check
          %p1456 = pneg %p623
        $region90: #{_lambda_.1} parent=11 // pred_check_branch
          %1458 = sbr.rel (%p1456) target = $region92
        $region91: #{_lambda_.1} parent=11 // pred_region
          %s1460 = ssub.s32 256, 256
          %1461 = vsyncadd [#allocation25], %s1460
          %s1462 = sshll.u32 [#allocation26], 4
          %s1463 = int_to_ptr.vmem [resolvable:$true] %s1462
          %1468 = dma.hbm_to_vmem [thread:$0]  %s45, 256, %s1463, [#allocation25], 128, 128, 8
        $region92: #{_lambda_.1} parent=11 // pred_fallthru
          _
        // Predicated region
        $region93: #{_lambda_.1} parent=11 // pred_check
          %p1469 = pneg %p644
        $region94: #{_lambda_.1} parent=11 // pred_check_branch
          %1471 = sbr.rel (%p1469) target = $region96
        $region95: #{_lambda_.1} parent=11 // pred_region
          %s1473 = ssub.s32 256, 256
          %1474 = vsyncadd [#allocation28], %s1473
          %s1475 = sshll.u32 [#allocation27], 4
          %s1476 = int_to_ptr.vmem [resolvable:$true] %s1475
          %1481 = dma.hbm_to_vmem [thread:$0]  %s47, 256, %s1476, [#allocation28], 128, 128, 8
        $region96: #{_lambda_.1} parent=11 // pred_fallthru
          _
        // Predicated region
        $region97: #{_lambda_.1} parent=11 // pred_check
          %p1482 = pneg %p665
        $region98: #{_lambda_.1} parent=11 // pred_check_branch
          %1484 = sbr.rel (%p1482) target = $region100
        $region99: #{_lambda_.1} parent=11 // pred_region
          %s1486 = ssub.s32 1152, 1152
          %1487 = vsyncadd [#allocation28], %s1486
          %s1488 = sshll.u32 [#allocation29], 4
          %s1489 = int_to_ptr.vmem [resolvable:$true] %s1488
          %1494 = dma.hbm_to_vmem [thread:$0]  %s49, 1152, %s1489, [#allocation28], 128, 128, 8
        $region100: #{_lambda_.1} parent=11 // pred_fallthru
          _
        // Predicated region
        $region101: #{_lambda_.1} parent=11 // pred_check
          %p1495 = pneg %p686
        $region102: #{_lambda_.1} parent=11 // pred_check_branch
          %1497 = sbr.rel (%p1495) target = $region104
        $region103: #{_lambda_.1} parent=11 // pred_region
          _
        $region104: #{_lambda_.1} parent=11 // pred_fallthru
          _
        // Predicated region
        $region105: #{_lambda_.1} parent=11 // pred_check
          %p1498 = pneg %p707
        $region106: #{_lambda_.1} parent=11 // pred_check_branch
          %1500 = sbr.rel (%p1498) target = $region108
        $region107: #{_lambda_.1} parent=11 // pred_region
          %s1502 = ssub.s32 128, 128
          %1503 = vsyncadd [#allocation31], %s1502
          %s1505 = sshll.u32 [#allocation30], 4
          %s1506 = int_to_ptr.vmem [resolvable:$true] %s1505
          %1508 = dma.hbm_to_vmem [thread:$0]  %s53, 128, %s1506, [#allocation31]
        $region108: #{_lambda_.1} parent=11 // pred_fallthru
          _
        // Predicated region
        $region109: #{_lambda_.1} parent=11 // pred_check
          %p1509 = pneg %p728
        $region110: #{_lambda_.1} parent=11 // pred_check_branch
          %1511 = sbr.rel (%p1509) target = $region112
        $region111: #{_lambda_.1} parent=11 // pred_region
          %s1513 = ssub.s32 3072, 3072
          %1514 = vsyncadd [#allocation31], %s1513
          %s1515 = sshll.u32 [#allocation32], 4
          %s1516 = int_to_ptr.vmem [resolvable:$true] %s1515
          %1521 = dma.hbm_to_vmem [thread:$0]  %s55, 3072, %s1516, [#allocation31], 128, 128, 8
        $region112: #{_lambda_.1} parent=11 // pred_fallthru
          _
        // Predicated region
        $region113: #{_lambda_.1} parent=11 // pred_check
          %p1522 = pneg %p749
        $region114: #{_lambda_.1} parent=11 // pred_check_branch
          %1524 = sbr.rel (%p1522) target = $region116
        $region115: #{_lambda_.1} parent=11 // pred_region
          %s1526 = ssub.s32 128, 128
          %1527 = vsyncadd [#allocation34], %s1526
          %s1529 = sshll.u32 [#allocation33], 4
          %s1530 = int_to_ptr.vmem [resolvable:$true] %s1529
          %1532 = dma.hbm_to_vmem [thread:$0]  %s57, 128, %s1530, [#allocation34]
        $region116: #{_lambda_.1} parent=11 // pred_fallthru
          _
        // Predicated region
        $region117: #{_lambda_.1} parent=11 // pred_check
          %p1533 = pneg %p770
        $region118: #{_lambda_.1} parent=11 // pred_check_branch
          %1535 = sbr.rel (%p1533) target = $region120
        $region119: #{_lambda_.1} parent=11 // pred_region
          %s1537 = ssub.s32 128, 128
          %1538 = vsyncadd [#allocation34], %s1537
          %s1540 = sshll.u32 [#allocation35], 4
          %s1541 = int_to_ptr.vmem [resolvable:$true] %s1540
          %1543 = dma.hbm_to_vmem [thread:$0]  %s59, 128, %s1541, [#allocation34]
        $region120: #{_lambda_.1} parent=11 // pred_fallthru
          _
        // Predicated region
        $region121: #{_lambda_.1} parent=11 // pred_check
          %p1544 = pneg %p791
        $region122: #{_lambda_.1} parent=11 // pred_check_branch
          %1546 = sbr.rel (%p1544) target = $region124
        $region123: #{_lambda_.1} parent=11 // pred_region
          %s1548 = ssub.s32 3072, 3072
          %1549 = vsyncadd [#allocation37], %s1548
          %s1550 = sshll.u32 [#allocation36], 4
          %s1551 = int_to_ptr.vmem [resolvable:$true] %s1550
          %1556 = dma.hbm_to_vmem [thread:$0]  %s61, 3072, %s1551, [#allocation37], 128, 128, 8
        $region124: #{_lambda_.1} parent=11 // pred_fallthru
          _
        // Predicated region
        $region125: #{_lambda_.1} parent=11 // pred_check
          %p1557 = pneg %p812
        $region126: #{_lambda_.1} parent=11 // pred_check_branch
          %1559 = sbr.rel (%p1557) target = $region128
        $region127: #{_lambda_.1} parent=11 // pred_region
          %s1561 = ssub.s32 64, 64
          %1562 = vsyncadd [#allocation37], %s1561
          %s1564 = sshll.u32 [#allocation38], 4
          %s1565 = int_to_ptr.vmem [resolvable:$true] %s1564
          %1567 = dma.hbm_to_vmem [thread:$0]  %s63, 64, %s1565, [#allocation37]
        $region128: #{_lambda_.1} parent=11 // pred_fallthru
          _
        // Predicated region
        $region129: #{_lambda_.1} parent=11 // pred_check
          %p1568 = pneg %p833
        $region130: #{_lambda_.1} parent=11 // pred_check_branch
          %1570 = sbr.rel (%p1568) target = $region132
        $region131: #{_lambda_.1} parent=11 // pred_region
          %s1572 = ssub.s32 64, 64
          %1573 = vsyncadd [#allocation40], %s1572
          %s1575 = sshll.u32 [#allocation39], 4
          %s1576 = int_to_ptr.vmem [resolvable:$true] %s1575
          %1578 = dma.hbm_to_vmem [thread:$0]  %s65, 64, %s1576, [#allocation40]
        $region132: #{_lambda_.1} parent=11 // pred_fallthru
          _
        // Predicated region
        $region133: #{_lambda_.1} parent=11 // pred_check
          %p1579 = pneg %p854
        $region134: #{_lambda_.1} parent=11 // pred_check_branch
          %1581 = sbr.rel (%p1579) target = $region136
        $region135: #{_lambda_.1} parent=11 // pred_region
          %s1583 = ssub.s32 6144, 6144
          %1584 = vsyncadd [#allocation40], %s1583
          %s1585 = sshll.u32 [#allocation41], 4
          %s1586 = int_to_ptr.vmem [resolvable:$true] %s1585
          %1591 = dma.hbm_to_vmem [thread:$0]  %s67, 6144, %s1586, [#allocation40], 128, 128, 8
        $region136: #{_lambda_.1} parent=11 // pred_fallthru
          _
        // Predicated region
        $region137: #{_lambda_.1} parent=11 // pred_check
          %p1592 = pneg %p875
        $region138: #{_lambda_.1} parent=11 // pred_check_branch
          %1594 = sbr.rel (%p1592) target = $region140
        $region139: #{_lambda_.1} parent=11 // pred_region
          _
        $region140: #{_lambda_.1} parent=11 // pred_fallthru
          _
        // Predicated region
        $region141: #{_lambda_.1} parent=11 // pred_check
          %p1595 = pneg %p896
        $region142: #{_lambda_.1} parent=11 // pred_check_branch
          %1597 = sbr.rel (%p1595) target = $region144
        $region143: #{_lambda_.1} parent=11 // pred_region
          _
        $region144: #{_lambda_.1} parent=11 // pred_fallthru
          _
        // Predicated region
        $region145: #{_lambda_.1} parent=11 // pred_check
          %p1598 = pneg %p917
        $region146: #{_lambda_.1} parent=11 // pred_check_branch
          %1600 = sbr.rel (%p1598) target = $region148
        $region147: #{_lambda_.1} parent=11 // pred_region
          %s1602 = ssub.s32 12288, 12288
          %1603 = vsyncadd [#allocation43], %s1602
          %s1604 = sshll.u32 [#allocation42], 4
          %s1605 = int_to_ptr.vmem [resolvable:$true] %s1604
          %1610 = dma.hbm_to_vmem [thread:$0]  %s73, 12288, %s1605, [#allocation43], 256, 256, 16
        $region148: #{_lambda_.1} parent=11 // pred_fallthru
          _
        // Predicated region
        $region149: #{_lambda_.1} parent=11 // pred_check
          %p1611 = pneg %p938
        $region150: #{_lambda_.1} parent=11 // pred_check_branch
          %1613 = sbr.rel (%p1611) target = $region152
        $region151: #{_lambda_.1} parent=11 // pred_region
          _
        $region152: #{_lambda_.1} parent=11 // pred_fallthru
          _
        // Predicated region
        $region153: #{_lambda_.1} parent=11 // pred_check
          %p1614 = pneg %p959
        $region154: #{_lambda_.1} parent=11 // pred_check_branch
          %1616 = sbr.rel (%p1614) target = $region156
        $region155: #{_lambda_.1} parent=11 // pred_region
          _
        $region156: #{_lambda_.1} parent=11 // pred_fallthru
          _
        // Predicated region
        $region157: #{_lambda_.1} parent=11 // pred_check
          %p1617 = pneg %p980
        $region158: #{_lambda_.1} parent=11 // pred_check_branch
          %1619 = sbr.rel (%p1617) target = $region160
        $region159: #{_lambda_.1} parent=11 // pred_region
          _
        $region160: #{_lambda_.1} parent=11 // pred_fallthru
          _
        // Predicated region
        $region161: #{_lambda_.1} parent=11 // pred_check
          %p1620 = pneg %p1001
        $region162: #{_lambda_.1} parent=11 // pred_check_branch
          %1622 = sbr.rel (%p1620) target = $region164
        $region163: #{_lambda_.1} parent=11 // pred_region
          _
        $region164: #{_lambda_.1} parent=11 // pred_fallthru
          _
        // Predicated region
        $region165: #{_lambda_.1} parent=11 // pred_check
          %p1623 = pneg %p1022
        $region166: #{_lambda_.1} parent=11 // pred_check_branch
          %1625 = sbr.rel (%p1623) target = $region168
        $region167: #{_lambda_.1} parent=11 // pred_region
          _
        $region168: #{_lambda_.1} parent=11 // pred_fallthru
          _
        // Predicated region
        $region169: #{_lambda_.1} parent=11 // pred_check
          %p1626 = pneg %p1043
        $region170: #{_lambda_.1} parent=11 // pred_check_branch
          %1628 = sbr.rel (%p1626) target = $region172
        $region171: #{_lambda_.1} parent=11 // pred_region
          _
        $region172: #{_lambda_.1} parent=11 // pred_fallthru
          _
        // Predicated region
        $region173: #{_lambda_.1} parent=11 // pred_check
          %p1629 = pneg %p1064
        $region174: #{_lambda_.1} parent=11 // pred_check_branch
          %1631 = sbr.rel (%p1629) target = $region176
        $region175: #{_lambda_.1} parent=11 // pred_region
          _
        $region176: #{_lambda_.1} parent=11 // pred_fallthru
          _
        // Predicated region
        $region177: #{_lambda_.1} parent=11 // pred_check
          %p1632 = pneg %p1085
        $region178: #{_lambda_.1} parent=11 // pred_check_branch
          %1634 = sbr.rel (%p1632) target = $region180
        $region179: #{_lambda_.1} parent=11 // pred_region
          _
        $region180: #{_lambda_.1} parent=11 // pred_fallthru
          _
        // Predicated region
        $region181: #{_lambda_.1} parent=11 // pred_check
          %p1635 = pneg %p1106
        $region182: #{_lambda_.1} parent=11 // pred_check_branch
          %1637 = sbr.rel (%p1635) target = $region184
        $region183: #{_lambda_.1} parent=11 // pred_region
          _
        $region184: #{_lambda_.1} parent=11 // pred_fallthru
          _
        // Predicated region
        $region185: #{_lambda_.1} parent=11 // pred_check
          %p1638 = pneg %p1127
        $region186: #{_lambda_.1} parent=11 // pred_check_branch
          %1640 = sbr.rel (%p1638) target = $region188
        $region187: #{_lambda_.1} parent=11 // pred_region
          _
        $region188: #{_lambda_.1} parent=11 // pred_fallthru
          _
        // Predicated region
        $region189: #{_lambda_.1} parent=11 // pred_check
          %p1641 = pneg %p1148
        $region190: #{_lambda_.1} parent=11 // pred_check_branch
          %1643 = sbr.rel (%p1641) target = $region192
        $region191: #{_lambda_.1} parent=11 // pred_region
          _
        $region192: #{_lambda_.1} parent=11 // pred_fallthru
          _
        // Predicated region
        $region193: #{_lambda_.1} parent=11 // pred_check
          %p1644 = pneg %p1169
        $region194: #{_lambda_.1} parent=11 // pred_check_branch
          %1646 = sbr.rel (%p1644) target = $region196
        $region195: #{_lambda_.1} parent=11 // pred_region
          _
        $region196: #{_lambda_.1} parent=11 // pred_fallthru
          _
        // Predicated region
        $region197: #{_lambda_.1} parent=11 // pred_check
          %p1647 = pneg %p1190
        $region198: #{_lambda_.1} parent=11 // pred_check_branch
          %1649 = sbr.rel (%p1647) target = $region200
        $region199: #{_lambda_.1} parent=11 // pred_region
          _
        $region200: #{_lambda_.1} parent=11 // pred_fallthru
          _
        // Predicated region
        $region201: #{_lambda_.1} parent=11 // pred_check
          %p1650 = pneg %p1211
        $region202: #{_lambda_.1} parent=11 // pred_check_branch
          %1652 = sbr.rel (%p1650) target = $region204
        $region203: #{_lambda_.1} parent=11 // pred_region
          _
        $region204: #{_lambda_.1} parent=11 // pred_fallthru
          _
        // Predicated region
        $region205: #{_lambda_.1} parent=11 // pred_check
          %p1653 = pneg %p1232
        $region206: #{_lambda_.1} parent=11 // pred_check_branch
          %1655 = sbr.rel (%p1653) target = $region208
        $region207: #{_lambda_.1} parent=11 // pred_region
          _
        $region208: #{_lambda_.1} parent=11 // pred_fallthru
          _
      $region12: #{_lambda_.1} parent=5 // pred_fallthru
        _
      %p1656 = scmp.lt.s32.totalorder %s125, 2
      // Predicated region
      $region209: #{_lambda_.1} parent=5 // pred_check
        %p1657 = pneg %p1656
      $region210: #{_lambda_.1} parent=5 // pred_check_branch
        %1659 = sbr.rel (%p1657) target = $region212
      $region211: #{_lambda_.1} parent=5 // pred_region
        // Predicated region
        $region213: #{_lambda_.1} parent=211 // pred_check
          %p1660 = pneg %p145
        $region214: #{_lambda_.1} parent=211 // pred_check_branch
          %1662 = sbr.rel (%p1660) target = $region216
        $region215: #{_lambda_.1} parent=211 // pred_region
          %p1663 = scmp.lt.s32.totalorder %s125, 1
          %s1664 = scalar_select %p1663, %s125, 1
          %s1665 = smul.addr %s1664, 2
          %s1666 = smul.addr %s1665, 8
          %s1667 = scalar_lea.vmem %s1, %s1666
        $region216: #{_lambda_.1} parent=211 // pred_fallthru
          _
        // Predicated region
        $region217: #{_lambda_.1} parent=211 // pred_check
          %p1668 = pneg %p171
        $region218: #{_lambda_.1} parent=211 // pred_check_branch
          %1670 = sbr.rel (%p1668) target = $region220
        $region219: #{_lambda_.1} parent=211 // pred_region
          %p1671 = scmp.lt.s32.totalorder %s125, 1
          %s1672 = scalar_select %p1671, %s125, 1
          %s1673 = smul.addr %s1672, 2
          %s1674 = smul.addr %s1673, 8
          %s1675 = scalar_lea.vmem %s3, %s1674
        $region220: #{_lambda_.1} parent=211 // pred_fallthru
          _
        // Predicated region
        $region221: #{_lambda_.1} parent=211 // pred_check
          %p1676 = pneg %p197
        $region222: #{_lambda_.1} parent=211 // pred_check_branch
          %1678 = sbr.rel (%p1676) target = $region224
        $region223: #{_lambda_.1} parent=211 // pred_region
          %p1679 = scmp.lt.s32.totalorder %s125, 1
          %s1680 = scalar_select %p1679, %s125, 1
          %s1681 = smul.addr %s1680, 8
          %s1682 = scalar_lea.vmem %s5, %s1681
        $region224: #{_lambda_.1} parent=211 // pred_fallthru
          _
      $region212: #{_lambda_.1} parent=5 // pred_fallthru
        _
      %p1683 = scmp.le.s32.totalorder 1, %s125
      %p1684 = scmp.lt.s32.totalorder %s125, 3
      %p1685 = pnand %p1683, %p1684
      %p1686 = pneg %p1685
      // Predicated region
      $region225: #{_lambda_.1} parent=5 // pred_check
        _
      $region226: #{_lambda_.1} parent=5 // pred_check_branch
        %1688 = sbr.rel (%p1685) target = $region228
      $region227: #{_lambda_.1} parent=5 // pred_region
        %s1689 = ssub.s32 %s125, 1
        // Predicated region
        $region229: #{_lambda_.1} parent=227 // pred_check
          %p1690 = pneg %p245
        $region230: #{_lambda_.1} parent=227 // pred_check_branch
          %1692 = sbr.rel (%p1690) target = $region232
        $region231: #{_lambda_.1} parent=227 // pred_region
          %1693 = dma.done [#allocation5], 128
        $region232: #{_lambda_.1} parent=227 // pred_fallthru
          _
        // Predicated region
        $region233: #{_lambda_.1} parent=227 // pred_check
          %p1694 = pneg %p266
        $region234: #{_lambda_.1} parent=227 // pred_check_branch
          %1696 = sbr.rel (%p1694) target = $region236
        $region235: #{_lambda_.1} parent=227 // pred_region
          %1697 = dma.done [#allocation7], 128
        $region236: #{_lambda_.1} parent=227 // pred_fallthru
          _
        // Predicated region
        $region237: #{_lambda_.1} parent=227 // pred_check
          %p1698 = pneg %p308
        $region238: #{_lambda_.1} parent=227 // pred_check_branch
          %1700 = sbr.rel (%p1698) target = $region240
        $region239: #{_lambda_.1} parent=227 // pred_region
          %1701 = dma.done [#allocation7], 128
        $region240: #{_lambda_.1} parent=227 // pred_fallthru
          _
        // Predicated region
        $region241: #{_lambda_.1} parent=227 // pred_check
          %p1702 = pneg %p329
        $region242: #{_lambda_.1} parent=227 // pred_check_branch
          %1704 = sbr.rel (%p1702) target = $region244
        $region243: #{_lambda_.1} parent=227 // pred_region
          %1705 = dma.done [#allocation10], 128
        $region244: #{_lambda_.1} parent=227 // pred_fallthru
          _
        // Predicated region
        $region245: #{_lambda_.1} parent=227 // pred_check
          %p1706 = pneg %p350
        $region246: #{_lambda_.1} parent=227 // pred_check_branch
          %1708 = sbr.rel (%p1706) target = $region248
        $region247: #{_lambda_.1} parent=227 // pred_region
          %1709 = dma.done [#allocation10], 128
        $region248: #{_lambda_.1} parent=227 // pred_fallthru
          _
        // Predicated region
        $region249: #{_lambda_.1} parent=227 // pred_check
          %p1710 = pneg %p371
        $region250: #{_lambda_.1} parent=227 // pred_check_branch
          %1712 = sbr.rel (%p1710) target = $region252
        $region251: #{_lambda_.1} parent=227 // pred_region
          %1713 = dma.done [#allocation13], 128
        $region252: #{_lambda_.1} parent=227 // pred_fallthru
          _
        // Predicated region
        $region253: #{_lambda_.1} parent=227 // pred_check
          %p1714 = pneg %p392
        $region254: #{_lambda_.1} parent=227 // pred_check_branch
          %1716 = sbr.rel (%p1714) target = $region256
        $region255: #{_lambda_.1} parent=227 // pred_region
          %1717 = dma.done [#allocation13], 128
        $region256: #{_lambda_.1} parent=227 // pred_fallthru
          _
        // Predicated region
        $region257: #{_lambda_.1} parent=227 // pred_check
          %p1718 = pneg %p434
        $region258: #{_lambda_.1} parent=227 // pred_check_branch
          %1720 = sbr.rel (%p1718) target = $region260
        $region259: #{_lambda_.1} parent=227 // pred_region
          %1721 = dma.done [#allocation16], 256
        $region260: #{_lambda_.1} parent=227 // pred_fallthru
          _
        // Predicated region
        $region261: #{_lambda_.1} parent=227 // pred_check
          %p1722 = pneg %p455
        $region262: #{_lambda_.1} parent=227 // pred_check_branch
          %1724 = sbr.rel (%p1722) target = $region264
        $region263: #{_lambda_.1} parent=227 // pred_region
          %1725 = dma.done [#allocation16], 256
        $region264: #{_lambda_.1} parent=227 // pred_fallthru
          _
        // Predicated region
        $region265: #{_lambda_.1} parent=227 // pred_check
          %p1726 = pneg %p497
        $region266: #{_lambda_.1} parent=227 // pred_check_branch
          %1728 = sbr.rel (%p1726) target = $region268
        $region267: #{_lambda_.1} parent=227 // pred_region
          %1729 = dma.done [#allocation19], 256
        $region268: #{_lambda_.1} parent=227 // pred_fallthru
          _
        // Predicated region
        $region269: #{_lambda_.1} parent=227 // pred_check
          %p1730 = pneg %p518
        $region270: #{_lambda_.1} parent=227 // pred_check_branch
          %1732 = sbr.rel (%p1730) target = $region272
        $region271: #{_lambda_.1} parent=227 // pred_region
          %1733 = dma.done [#allocation19], 256
        $region272: #{_lambda_.1} parent=227 // pred_fallthru
          _
        // Predicated region
        $region273: #{_lambda_.1} parent=227 // pred_check
          %p1734 = pneg %p560
        $region274: #{_lambda_.1} parent=227 // pred_check_branch
          %1736 = sbr.rel (%p1734) target = $region276
        $region275: #{_lambda_.1} parent=227 // pred_region
          %1737 = dma.done [#allocation22], 256
        $region276: #{_lambda_.1} parent=227 // pred_fallthru
          _
        // Predicated region
        $region277: #{_lambda_.1} parent=227 // pred_check
          %p1738 = pneg %p581
        $region278: #{_lambda_.1} parent=227 // pred_check_branch
          %1740 = sbr.rel (%p1738) target = $region280
        $region279: #{_lambda_.1} parent=227 // pred_region
          %1741 = dma.done [#allocation22], 256
        $region280: #{_lambda_.1} parent=227 // pred_fallthru
          _
        // Predicated region
        $region281: #{_lambda_.1} parent=227 // pred_check
          %p1742 = pneg %p602
        $region282: #{_lambda_.1} parent=227 // pred_check_branch
          %1744 = sbr.rel (%p1742) target = $region284
        $region283: #{_lambda_.1} parent=227 // pred_region
          %1745 = dma.done [#allocation25], 256
        $region284: #{_lambda_.1} parent=227 // pred_fallthru
          _
        // Predicated region
        $region285: #{_lambda_.1} parent=227 // pred_check
          %p1746 = pneg %p623
        $region286: #{_lambda_.1} parent=227 // pred_check_branch
          %1748 = sbr.rel (%p1746) target = $region288
        $region287: #{_lambda_.1} parent=227 // pred_region
          %1749 = dma.done [#allocation25], 256
        $region288: #{_lambda_.1} parent=227 // pred_fallthru
          _
        // Predicated region
        $region289: #{_lambda_.1} parent=227 // pred_check
          %p1750 = pneg %p644
        $region290: #{_lambda_.1} parent=227 // pred_check_branch
          %1752 = sbr.rel (%p1750) target = $region292
        $region291: #{_lambda_.1} parent=227 // pred_region
          %1753 = dma.done [#allocation28], 256
        $region292: #{_lambda_.1} parent=227 // pred_fallthru
          _
        // Predicated region
        $region293: #{_lambda_.1} parent=227 // pred_check
          %p1754 = pneg %p665
        $region294: #{_lambda_.1} parent=227 // pred_check_branch
          %1756 = sbr.rel (%p1754) target = $region296
        $region295: #{_lambda_.1} parent=227 // pred_region
          %1757 = dma.done [#allocation28], 1152
        $region296: #{_lambda_.1} parent=227 // pred_fallthru
          _
        // Predicated region
        $region297: #{_lambda_.1} parent=227 // pred_check
          %p1758 = pneg %p707
        $region298: #{_lambda_.1} parent=227 // pred_check_branch
          %1760 = sbr.rel (%p1758) target = $region300
        $region299: #{_lambda_.1} parent=227 // pred_region
          %1761 = dma.done [#allocation31], 128
        $region300: #{_lambda_.1} parent=227 // pred_fallthru
          _
        // Predicated region
        $region301: #{_lambda_.1} parent=227 // pred_check
          %p1762 = pneg %p728
        $region302: #{_lambda_.1} parent=227 // pred_check_branch
          %1764 = sbr.rel (%p1762) target = $region304
        $region303: #{_lambda_.1} parent=227 // pred_region
          %1765 = dma.done [#allocation31], 3072
        $region304: #{_lambda_.1} parent=227 // pred_fallthru
          _
        // Predicated region
        $region305: #{_lambda_.1} parent=227 // pred_check
          %p1766 = pneg %p749
        $region306: #{_lambda_.1} parent=227 // pred_check_branch
          %1768 = sbr.rel (%p1766) target = $region308
        $region307: #{_lambda_.1} parent=227 // pred_region
          %1769 = dma.done [#allocation34], 128
        $region308: #{_lambda_.1} parent=227 // pred_fallthru
          _
        // Predicated region
        $region309: #{_lambda_.1} parent=227 // pred_check
          %p1770 = pneg %p770
        $region310: #{_lambda_.1} parent=227 // pred_check_branch
          %1772 = sbr.rel (%p1770) target = $region312
        $region311: #{_lambda_.1} parent=227 // pred_region
          %1773 = dma.done [#allocation34], 128
        $region312: #{_lambda_.1} parent=227 // pred_fallthru
          _
        // Predicated region
        $region313: #{_lambda_.1} parent=227 // pred_check
          %p1774 = pneg %p791
        $region314: #{_lambda_.1} parent=227 // pred_check_branch
          %1776 = sbr.rel (%p1774) target = $region316
        $region315: #{_lambda_.1} parent=227 // pred_region
          %1777 = dma.done [#allocation37], 3072
        $region316: #{_lambda_.1} parent=227 // pred_fallthru
          _
        // Predicated region
        $region317: #{_lambda_.1} parent=227 // pred_check
          %p1778 = pneg %p812
        $region318: #{_lambda_.1} parent=227 // pred_check_branch
          %1780 = sbr.rel (%p1778) target = $region320
        $region319: #{_lambda_.1} parent=227 // pred_region
          %1781 = dma.done [#allocation37], 64
        $region320: #{_lambda_.1} parent=227 // pred_fallthru
          _
        // Predicated region
        $region321: #{_lambda_.1} parent=227 // pred_check
          %p1782 = pneg %p833
        $region322: #{_lambda_.1} parent=227 // pred_check_branch
          %1784 = sbr.rel (%p1782) target = $region324
        $region323: #{_lambda_.1} parent=227 // pred_region
          %1785 = dma.done [#allocation40], 64
        $region324: #{_lambda_.1} parent=227 // pred_fallthru
          _
        // Predicated region
        $region325: #{_lambda_.1} parent=227 // pred_check
          %p1786 = pneg %p854
        $region326: #{_lambda_.1} parent=227 // pred_check_branch
          %1788 = sbr.rel (%p1786) target = $region328
        $region327: #{_lambda_.1} parent=227 // pred_region
          %1789 = dma.done [#allocation40], 6144
        $region328: #{_lambda_.1} parent=227 // pred_fallthru
          _
        // Predicated region
        $region329: #{_lambda_.1} parent=227 // pred_check
          %p1790 = pneg %p917
        $region330: #{_lambda_.1} parent=227 // pred_check_branch
          %1792 = sbr.rel (%p1790) target = $region332
        $region331: #{_lambda_.1} parent=227 // pred_region
          %1793 = dma.done [#allocation43], 12288
        $region332: #{_lambda_.1} parent=227 // pred_fallthru
          _
        %p1794 = scmp.lt.s32.totalorder %s130, 1
        %s1795 = scalar_select %p1794, %s130, 1
        %s1796 = smul.addr %s1795, 2
        %s1797 = smul.addr %s1796, 8
        %s1798 = scalar_lea.vmem %s1, %s1797
        %p1799 = pneg %p151
        %p1800 = pneg %p148
        %p1801 = scmp.lt.s32.totalorder %s130, 1
        %s1802 = scalar_select %p1801, %s130, 1
        %s1803 = smul.addr %s1802, 2
        %s1804 = smul.addr %s1803, 8
        %s1805 = scalar_lea.vmem %s3, %s1804
        %p1806 = pneg %p177
        %p1807 = pneg %p174
        %p1808 = scmp.lt.s32.totalorder %s130, 1
        %s1809 = scalar_select %p1808, %s130, 1
        %s1810 = smul.addr %s1809, 8
        %s1811 = scalar_lea.vmem %s5, %s1810
        %p1812 = pneg %p203
        %p1813 = pneg %p200
        %p1814 = pneg %p224
        %p1815 = pneg %p221
        %p1816 = pneg %p245
        %p1817 = pneg %p242
        %p1818 = pneg %p266
        %p1819 = pneg %p263
        %p1820 = pneg %p287
        %p1821 = pneg %p284
        %p1822 = pneg %p308
        %p1823 = pneg %p305
        %p1824 = pneg %p329
        %p1825 = pneg %p326
        %p1826 = pneg %p350
        %p1827 = pneg %p347
        %p1828 = pneg %p371
        %p1829 = pneg %p368
        %p1830 = pneg %p392
        %p1831 = pneg %p389
        %p1832 = pneg %p413
        %p1833 = pneg %p410
        %p1834 = pneg %p434
        %p1835 = pneg %p431
        %p1836 = pneg %p455
        %p1837 = pneg %p452
        %p1838 = pneg %p476
        %p1839 = pneg %p473
        %p1840 = pneg %p497
        %p1841 = pneg %p494
        %p1842 = pneg %p518
        %p1843 = pneg %p515
        %p1844 = pneg %p539
        %p1845 = pneg %p536
        %p1846 = pneg %p560
        %p1847 = pneg %p557
        %p1848 = pneg %p581
        %p1849 = pneg %p578
        %p1850 = pneg %p602
        %p1851 = pneg %p599
        %p1852 = pneg %p623
        %p1853 = pneg %p620
        %p1854 = pneg %p644
        %p1855 = pneg %p641
        %p1856 = pneg %p665
        %p1857 = pneg %p662
        %p1858 = pneg %p686
        %p1859 = pneg %p683
        %p1860 = pneg %p707
        %p1861 = pneg %p704
        %p1862 = pneg %p728
        %p1863 = pneg %p725
        %p1864 = pneg %p749
        %p1865 = pneg %p746
        %p1866 = pneg %p770
        %p1867 = pneg %p767
        %p1868 = pneg %p791
        %p1869 = pneg %p788
        %p1870 = pneg %p812
        %p1871 = pneg %p809
        %p1872 = pneg %p833
        %p1873 = pneg %p830
        %p1874 = pneg %p854
        %p1875 = pneg %p851
        %p1876 = pneg %p875
        %p1877 = pneg %p872
        %p1878 = pneg %p896
        %p1879 = pneg %p893
        %p1880 = pneg %p917
        %p1881 = pneg %p914
        %p1882 = pneg %p938
        %p1883 = pneg %p935
        %p1884 = pneg %p959
        %p1885 = pneg %p956
        %p1886 = pneg %p980
        %p1887 = pneg %p977
        %p1888 = pneg %p1001
        %p1889 = pneg %p998
        %p1890 = pneg %p1022
        %p1891 = pneg %p1019
        %p1892 = pneg %p1043
        %p1893 = pneg %p1040
        %p1894 = pneg %p1064
        %p1895 = pneg %p1061
        %p1896 = pneg %p1085
        %p1897 = pneg %p1082
        %p1898 = pneg %p1106
        %p1899 = pneg %p1103
        %p1900 = pneg %p1127
        %p1901 = pneg %p1124
        %p1902 = pneg %p1148
        %p1903 = pneg %p1145
        %p1904 = pneg %p1169
        %p1905 = pneg %p1166
        %p1906 = pneg %p1190
        %p1907 = pneg %p1187
        %p1908 = pneg %p1211
        %p1909 = pneg %p1208
        %p1910 = pneg %p1232
        %p1911 = pneg %p1229
        %p1912 = pneg %p1258
        %p1913 = pneg %p1255
        %p1914 = scmp.lt.s32.totalorder %s130, 1
        %s1915 = scalar_select %p1914, %s130, 1
        %s1916 = smul.addr %s1915, 4
        %s1917 = scalar_lea.vmem %s105, %s1916
        %p1918 = scmp.lt.s32.totalorder %s130, 1
        %s1919 = scalar_select %p1918, %s130, 1
        %s1920 = smul.addr %s1919, 2
        %s1921 = smul.addr %s1920, 8
        %s1922 = scalar_lea.vmem %s1, %s1921
        %p1923 = scmp.lt.s32.totalorder %s130, 1
        %s1924 = scalar_select %p1923, %s130, 1
        %s1925 = smul.addr %s1924, 2
        %s1926 = smul.addr %s1925, 8
        %s1927 = scalar_lea.vmem %s3, %s1926
        %p1928 = scmp.lt.s32.totalorder %s130, 1
        %s1929 = scalar_select %p1928, %s130, 1
        %s1930 = smul.addr %s1929, 8
        %s1931 = scalar_lea.vmem %s5, %s1930
        %p1932 = scmp.lt.s32.totalorder %s130, 1
        %s1933 = scalar_select %p1932, %s130, 1
        %s1934 = smul.addr %s1933, 4
        %s1935 = scalar_lea.vmem %s105, %s1934
        %v1936 = vld [vmem:[%s1922] sm:$0xff]
        %v1937 = vld [vmem:[%s1922 + $0x8] sm:$0xff]
        %v1938 = vld [vmem:[%s1927] sm:$0xff]
        %v1939 = vld [vmem:[%s1927 + $0x8] sm:$0xff]
        %v1940 = vld [vmem:[%s1931] sm:$0xff]
        %v1941 = vld [vmem:[%s7] sm:$0xff]
        %v1942 = vld [vmem:[%s7 + $0x8] sm:$0xf]
        %vm1943 = vcmask 97280
        %v1945 = vsel %vm1943, %v1940, 0
        %vm1947 = vcmask 1043456
        %v1949 = vsel %vm1947, %v1942, 0
        %1951 = vmatprep.subr.mxu0 0.0
        %1952 = vmatpush1.msra.mxu0 %v1941
        %1953 = vmatprep.subr.mxu0 0.0
        %1954 = vmatpush1.msra.mxu0 %v1949
        %1955 = vmatprep.subr.mxu0 0.0
        %1956 = vmatpush1.msra.mxu0 0.0
        %1957 = vmatprep.subr.mxu0 0.0
        %1958 = vmatpush1.msra.mxu0 0.0
        %1959 = vmatprep.subr.mxu0 0.0
        %1960 = vmatpush1.msra.mxu0 0.0
        %1961 = vmatprep.subr.mxu0 0.0
        %1962 = vmatpush1.msra.mxu0 0.0
        %1963 = vmatprep.subr.mxu0 0.0
        %1964 = vmatpush1.msra.mxu0 0.0
        %1965 = vmatprep.subr.mxu0 0.0
        %1966 = vmatpush1.msra.mxu0 0.0
        %1967 = vmatprep.subr.mxu0 0.0
        %1968 = vmatpush1.msra.mxu0 0.0
        %1969 = vmatprep.subr.mxu0 0.0
        %1970 = vmatpush1.msra.mxu0 0.0
        %1971 = vmatprep.subr.mxu0 0.0
        %1972 = vmatpush1.msra.mxu0 0.0
        %1973 = vmatprep.subr.mxu0 0.0
        %1974 = vmatpush1.msra.mxu0 0.0
        %1975 = vmatprep.subr.mxu0 0.0
        %1976 = vmatpush1.msra.mxu0 0.0
        %1977 = vmatprep.subr.mxu0 0.0
        %1978 = vmatpush1.msra.mxu0 0.0
        %1979 = vmatprep.subr.mxu0 0.0
        %1980 = vmatpush1.msra.mxu0 0.0
        %1981 = vmatprep.subr.mxu0 0.0
        %1982 = vmatpush1.msra.mxu0 0.0
        %1983 = vmatprep.subr.mxu0 0.0
        %1984 = vmatpush1.msra.mxu0 0.0
        %1985 = vmatprep.subr.mxu0 0.0
        %1986 = vmatpush1.msra.mxu0 0.0
        %1987 = vmatprep.subr.mxu0 0.0
        %1988 = vmatpush1.msra.mxu0 0.0
        %1989 = vmatprep.subr.mxu0 0.0
        %1990 = vmatpush1.msra.mxu0 0.0
        %1991 = vmatprep.subr.mxu0 0.0
        %1992 = vmatpush1.msra.mxu0 0.0
        %1993 = vmatprep.subr.mxu0 0.0
        %1994 = vmatpush1.msra.mxu0 0.0
        %1995 = vmatprep.subr.mxu0 0.0
        %1996 = vmatpush1.msra.mxu0 0.0
        %1997 = vmatprep.subr.mxu0 0.0
        %1998 = vmatpush1.msra.mxu0 0.0
        %1999 = vmatprep.subr.mxu0 0.0
        %2000 = vmatpush1.msra.mxu0 0.0
        %2001 = vmatprep.subr.mxu0 0.0
        %2002 = vmatpush1.msra.mxu0 0.0
        %2003 = vmatprep.subr.mxu0 0.0
        %2004 = vmatpush1.msra.mxu0 0.0
        %2005 = vmatprep.subr.mxu0 0.0
        %2006 = vmatpush1.msra.mxu0 0.0
        %2007 = vmatprep.subr.mxu0 0.0
        %2008 = vmatpush1.msra.mxu0 0.0
        %2009 = vmatprep.subr.mxu0 0.0
        %2010 = vmatpush1.msra.mxu0 0.0
        %2011 = vmatprep.subr.mxu0 0.0
        %2012 = vmatpush1.msra.mxu0 0.0
        %2013 = vmatprep.subr.mxu0 0.0
        %2014 = vmatpush1.msra.mxu0 0.0
        %2015 = vmatprep.mubr.f32.mxu0 0.0
        %2016 = vmatmul.mubr.f32.gmra.mrb[0].mxu0 %v1945
        %v2017 = vpop.f32.mrb[0].mxu0
        %v2018 = vadd.f32 0.0, %v2017
        %v2019 = vpop.f32.mrb[0].mxu0
        %2020 = vdwg.mxu0
        %v2021 = vld [vmem:[#allocation4] sm:$0xff]
        %v2022 = vmul.f32 %v2018, %v2021
        %v2023 = vld [vmem:[#allocation6] sm:$0xff]
        %v2024 = vadd.f32 %v2022, %v2023
        %vm2025 = vcmp.ge.f32.partialorder %v2024, 0.0
        %v2026 = vmul.f32 %v2024, 0.2
        %v2027 = vsel %vm2025, %v2024, %v2026
        %vm2028 = vcmask 122880
        %2029 = vst.msk [vmem:[#allocation2 + $0x7] sm:$0x1] %vm2028, 0.0
        %2030 = vst.msk [vmem:[#allocation2 + $0x20] sm:$0x1] %vm2028, 0.0
        %vm2031 = vcmask 130048
        %2032 = vst.msk [vmem:[#allocation2 + $0x10] sm:$0xff] %vm2031, %v2027
        %v2033 = vld [vmem:[#allocation2] sm:$0x80]
        %v2034 = vld [vmem:[#allocation2 + $0x10] sm:$0x7f]
        %v2035 = vld [vmem:[%s13] sm:$0xff]
        %v2036 = vld [vmem:[%s13 + $0x8] sm:$0xff]
        %v2037 = vld [vmem:[#allocation2 + $0x10] sm:$0xff]
        %s2038 = scalar_lea.vmem %s13, 16
        %v2039 = vld [vmem:[%s2038] sm:$0xff]
        %v2040 = vld [vmem:[%s2038 + $0x8] sm:$0xff]
        %v2042 = vsel %vm2031, %v2037, 0
        %2044 = vmatprep.subr.mxu0 0.0
        %2045 = vmatpush1.msra.mxu0 %v2039
        %2046 = vmatprep.subr.mxu0 0.0
        %2047 = vmatpush1.msra.mxu0 %v2040
        %2048 = vmatprep.subr.mxu0 0.0
        %2049 = vmatpush1.msra.mxu0 0.0
        %2050 = vmatprep.subr.mxu0 0.0
        %2051 = vmatpush1.msra.mxu0 0.0
        %2052 = vmatprep.subr.mxu0 0.0
        %2053 = vmatpush1.msra.mxu0 0.0
        %2054 = vmatprep.subr.mxu0 0.0
        %2055 = vmatpush1.msra.mxu0 0.0
        %2056 = vmatprep.subr.mxu0 0.0
        %2057 = vmatpush1.msra.mxu0 0.0
        %2058 = vmatprep.subr.mxu0 0.0
        %2059 = vmatpush1.msra.mxu0 0.0
        %2060 = vmatprep.subr.mxu0 0.0
        %2061 = vmatpush1.msra.mxu0 0.0
        %2062 = vmatprep.subr.mxu0 0.0
        %2063 = vmatpush1.msra.mxu0 0.0
        %2064 = vmatprep.subr.mxu0 0.0
        %2065 = vmatpush1.msra.mxu0 0.0
        %2066 = vmatprep.subr.mxu0 0.0
        %2067 = vmatpush1.msra.mxu0 0.0
        %2068 = vmatprep.subr.mxu0 0.0
        %2069 = vmatpush1.msra.mxu0 0.0
        %2070 = vmatprep.subr.mxu0 0.0
        %2071 = vmatpush1.msra.mxu0 0.0
        %2072 = vmatprep.subr.mxu0 0.0
        %2073 = vmatpush1.msra.mxu0 0.0
        %2074 = vmatprep.subr.mxu0 0.0
        %2075 = vmatpush1.msra.mxu0 0.0
        %2076 = vmatprep.subr.mxu0 0.0
        %2077 = vmatpush1.msra.mxu0 0.0
        %2078 = vmatprep.subr.mxu0 0.0
        %2079 = vmatpush1.msra.mxu0 0.0
        %2080 = vmatprep.subr.mxu0 0.0
        %2081 = vmatpush1.msra.mxu0 0.0
        %2082 = vmatprep.subr.mxu0 0.0
        %2083 = vmatpush1.msra.mxu0 0.0
        %2084 = vmatprep.subr.mxu0 0.0
        %2085 = vmatpush1.msra.mxu0 0.0
        %2086 = vmatprep.subr.mxu0 0.0
        %2087 = vmatpush1.msra.mxu0 0.0
        %2088 = vmatprep.subr.mxu0 0.0
        %2089 = vmatpush1.msra.mxu0 0.0
        %2090 = vmatprep.subr.mxu0 0.0
        %2091 = vmatpush1.msra.mxu0 0.0
        %2092 = vmatprep.subr.mxu0 0.0
        %2093 = vmatpush1.msra.mxu0 0.0
        %2094 = vmatprep.subr.mxu0 0.0
        %2095 = vmatpush1.msra.mxu0 0.0
        %2096 = vmatprep.subr.mxu0 0.0
        %2097 = vmatpush1.msra.mxu0 0.0
        %2098 = vmatprep.subr.mxu0 0.0
        %2099 = vmatpush1.msra.mxu0 0.0
        %2100 = vmatprep.subr.mxu0 0.0
        %2101 = vmatpush1.msra.mxu0 0.0
        %2102 = vmatprep.subr.mxu0 0.0
        %2103 = vmatpush1.msra.mxu0 0.0
        %2104 = vmatprep.subr.mxu0 0.0
        %2105 = vmatpush1.msra.mxu0 0.0
        %2106 = vmatprep.subr.mxu0 0.0
        %2107 = vmatpush1.msra.mxu0 0.0
        %2108 = vmatprep.mubr.f32.mxu0 0.0
        %2109 = vmatmul.mubr.f32.gmra.mrb[0].mxu0 %v2042
        %v2110 = vpop.f32.mrb[0].mxu0
        %v2111 = vadd.f32 0.0, %v2110
        %v2112 = vpop.f32.mrb[0].mxu0
        %2113 = vdwg.mxu0
        %vm2116 = vcmask 1040384
        %v2117 = vrot.slane %v2033, 7
        %v2118 = vrot.slane %v2034, 7
        %v2119 = vsel %vm2116, %v2117, %v2118
        %v2120 = vsel %vm2031, %v2119, 0
        %2122 = vmatprep.subr.mxu0 0.0
        %2123 = vmatpush1.msra.mxu0 %v2035
        %2124 = vmatprep.subr.mxu0 0.0
        %2125 = vmatpush1.msra.mxu0 %v2036
        %2126 = vmatprep.subr.mxu0 0.0
        %2127 = vmatpush1.msra.mxu0 0.0
        %2128 = vmatprep.subr.mxu0 0.0
        %2129 = vmatpush1.msra.mxu0 0.0
        %2130 = vmatprep.subr.mxu0 0.0
        %2131 = vmatpush1.msra.mxu0 0.0
        %2132 = vmatprep.subr.mxu0 0.0
        %2133 = vmatpush1.msra.mxu0 0.0
        %2134 = vmatprep.subr.mxu0 0.0
        %2135 = vmatpush1.msra.mxu0 0.0
        %2136 = vmatprep.subr.mxu0 0.0
        %2137 = vmatpush1.msra.mxu0 0.0
        %2138 = vmatprep.subr.mxu0 0.0
        %2139 = vmatpush1.msra.mxu0 0.0
        %2140 = vmatprep.subr.mxu0 0.0
        %2141 = vmatpush1.msra.mxu0 0.0
        %2142 = vmatprep.subr.mxu0 0.0
        %2143 = vmatpush1.msra.mxu0 0.0
        %2144 = vmatprep.subr.mxu0 0.0
        %2145 = vmatpush1.msra.mxu0 0.0
        %2146 = vmatprep.subr.mxu0 0.0
        %2147 = vmatpush1.msra.mxu0 0.0
        %2148 = vmatprep.subr.mxu0 0.0
        %2149 = vmatpush1.msra.mxu0 0.0
        %2150 = vmatprep.subr.mxu0 0.0
        %2151 = vmatpush1.msra.mxu0 0.0
        %2152 = vmatprep.subr.mxu0 0.0
        %2153 = vmatpush1.msra.mxu0 0.0
        %2154 = vmatprep.subr.mxu0 0.0
        %2155 = vmatpush1.msra.mxu0 0.0
        %2156 = vmatprep.subr.mxu0 0.0
        %2157 = vmatpush1.msra.mxu0 0.0
        %2158 = vmatprep.subr.mxu0 0.0
        %2159 = vmatpush1.msra.mxu0 0.0
        %2160 = vmatprep.subr.mxu0 0.0
        %2161 = vmatpush1.msra.mxu0 0.0
        %2162 = vmatprep.subr.mxu0 0.0
        %2163 = vmatpush1.msra.mxu0 0.0
        %2164 = vmatprep.subr.mxu0 0.0
        %2165 = vmatpush1.msra.mxu0 0.0
        %2166 = vmatprep.subr.mxu0 0.0
        %2167 = vmatpush1.msra.mxu0 0.0
        %2168 = vmatprep.subr.mxu0 0.0
        %2169 = vmatpush1.msra.mxu0 0.0
        %2170 = vmatprep.subr.mxu0 0.0
        %2171 = vmatpush1.msra.mxu0 0.0
        %2172 = vmatprep.subr.mxu0 0.0
        %2173 = vmatpush1.msra.mxu0 0.0
        %2174 = vmatprep.subr.mxu0 0.0
        %2175 = vmatpush1.msra.mxu0 0.0
        %2176 = vmatprep.subr.mxu0 0.0
        %2177 = vmatpush1.msra.mxu0 0.0
        %2178 = vmatprep.subr.mxu0 0.0
        %2179 = vmatpush1.msra.mxu0 0.0
        %2180 = vmatprep.subr.mxu0 0.0
        %2181 = vmatpush1.msra.mxu0 0.0
        %2182 = vmatprep.subr.mxu0 0.0
        %2183 = vmatpush1.msra.mxu0 0.0
        %2184 = vmatprep.subr.mxu0 0.0
        %2185 = vmatpush1.msra.mxu0 0.0
        %2186 = vmatprep.mubr.f32.mxu0 0.0
        %2187 = vmatmul.mubr.f32.gmra.mrb[0].mxu0 %v2120
        %v2188 = vpop.f32.mrb[0].mxu0
        %v2189 = vadd.f32 %v2111, %v2188
        %v2190 = vpop.f32.mrb[0].mxu0
        %2191 = vdwg.mxu0
        %v2192 = vld [vmem:[#allocation2 + $0x10] sm:$0xfe]
        %v2193 = vld [vmem:[#allocation2 + $0x20] sm:$0x1]
        %s2194 = scalar_lea.vmem %s13, 32
        %v2195 = vld [vmem:[%s2194] sm:$0xff]
        %v2196 = vld [vmem:[%s2194 + $0x8] sm:$0xff]
        %vm2199 = vcmask 1046528
        %v2200 = vrot.slane %v2192, 1
        %v2201 = vrot.slane %v2193, 1
        %v2202 = vsel %vm2199, %v2200, %v2201
        %v2203 = vsel %vm2031, %v2202, 0
        %2205 = vmatprep.subr.mxu0 0.0
        %2206 = vmatpush1.msra.mxu0 %v2195
        %2207 = vmatprep.subr.mxu0 0.0
        %2208 = vmatpush1.msra.mxu0 %v2196
        %2209 = vmatprep.subr.mxu0 0.0
        %2210 = vmatpush1.msra.mxu0 0.0
        %2211 = vmatprep.subr.mxu0 0.0
        %2212 = vmatpush1.msra.mxu0 0.0
        %2213 = vmatprep.subr.mxu0 0.0
        %2214 = vmatpush1.msra.mxu0 0.0
        %2215 = vmatprep.subr.mxu0 0.0
        %2216 = vmatpush1.msra.mxu0 0.0
        %2217 = vmatprep.subr.mxu0 0.0
        %2218 = vmatpush1.msra.mxu0 0.0
        %2219 = vmatprep.subr.mxu0 0.0
        %2220 = vmatpush1.msra.mxu0 0.0
        %2221 = vmatprep.subr.mxu0 0.0
        %2222 = vmatpush1.msra.mxu0 0.0
        %2223 = vmatprep.subr.mxu0 0.0
        %2224 = vmatpush1.msra.mxu0 0.0
        %2225 = vmatprep.subr.mxu0 0.0
        %2226 = vmatpush1.msra.mxu0 0.0
        %2227 = vmatprep.subr.mxu0 0.0
        %2228 = vmatpush1.msra.mxu0 0.0
        %2229 = vmatprep.subr.mxu0 0.0
        %2230 = vmatpush1.msra.mxu0 0.0
        %2231 = vmatprep.subr.mxu0 0.0
        %2232 = vmatpush1.msra.mxu0 0.0
        %2233 = vmatprep.subr.mxu0 0.0
        %2234 = vmatpush1.msra.mxu0 0.0
        %2235 = vmatprep.subr.mxu0 0.0
        %2236 = vmatpush1.msra.mxu0 0.0
        %2237 = vmatprep.subr.mxu0 0.0
        %2238 = vmatpush1.msra.mxu0 0.0
        %2239 = vmatprep.subr.mxu0 0.0
        %2240 = vmatpush1.msra.mxu0 0.0
        %2241 = vmatprep.subr.mxu0 0.0
        %2242 = vmatpush1.msra.mxu0 0.0
        %2243 = vmatprep.subr.mxu0 0.0
        %2244 = vmatpush1.msra.mxu0 0.0
        %2245 = vmatprep.subr.mxu0 0.0
        %2246 = vmatpush1.msra.mxu0 0.0
        %2247 = vmatprep.subr.mxu0 0.0
        %2248 = vmatpush1.msra.mxu0 0.0
        %2249 = vmatprep.subr.mxu0 0.0
        %2250 = vmatpush1.msra.mxu0 0.0
        %2251 = vmatprep.subr.mxu0 0.0
        %2252 = vmatpush1.msra.mxu0 0.0
        %2253 = vmatprep.subr.mxu0 0.0
        %2254 = vmatpush1.msra.mxu0 0.0
        %2255 = vmatprep.subr.mxu0 0.0
        %2256 = vmatpush1.msra.mxu0 0.0
        %2257 = vmatprep.subr.mxu0 0.0
        %2258 = vmatpush1.msra.mxu0 0.0
        %2259 = vmatprep.subr.mxu0 0.0
        %2260 = vmatpush1.msra.mxu0 0.0
        %2261 = vmatprep.subr.mxu0 0.0
        %2262 = vmatpush1.msra.mxu0 0.0
        %2263 = vmatprep.subr.mxu0 0.0
        %2264 = vmatpush1.msra.mxu0 0.0
        %2265 = vmatprep.subr.mxu0 0.0
        %2266 = vmatpush1.msra.mxu0 0.0
        %2267 = vmatprep.subr.mxu0 0.0
        %2268 = vmatpush1.msra.mxu0 0.0
        %2269 = vmatprep.mubr.f32.mxu0 0.0
        %2270 = vmatmul.mubr.f32.gmra.mrb[0].mxu0 %v2203
        %v2271 = vpop.f32.mrb[0].mxu0
        %v2272 = vadd.f32 0.0, %v2271
        %v2273 = vpop.f32.mrb[0].mxu0
        %2274 = vdwg.mxu0
        %v2275 = vadd.f32 %v2189, %v2272
        %v2276 = vld [vmem:[#allocation8] sm:$0xff]
        %v2277 = vmul.f32 %v2275, %v2276
        %v2278 = vld [vmem:[#allocation9] sm:$0xff]
        %v2279 = vadd.f32 %v2277, %v2278
        %vm2280 = vcmp.ge.f32.partialorder %v2279, 0.0
        %v2281 = vmul.f32 %v2279, 0.2
        %v2282 = vsel %vm2280, %v2279, %v2281
        %v2283 = vld [vmem:[#allocation11] sm:$0xff]
        %vm2284 = vcmask 64512
        %v2286 = vsel %vm2284, %v2282, 0
        %2288 = vmatprep.subr.mxu0 0.0
        %2289 = vmatpush1.msra.mxu0 %v2283
        %2290 = vmatprep.subr.mxu0 0.0
        %2291 = vmatpush1.msra.mxu0 0.0
        %2292 = vmatprep.subr.mxu0 0.0
        %2293 = vmatpush1.msra.mxu0 0.0
        %2294 = vmatprep.subr.mxu0 0.0
        %2295 = vmatpush1.msra.mxu0 0.0
        %2296 = vmatprep.subr.mxu0 0.0
        %2297 = vmatpush1.msra.mxu0 0.0
        %2298 = vmatprep.subr.mxu0 0.0
        %2299 = vmatpush1.msra.mxu0 0.0
        %2300 = vmatprep.subr.mxu0 0.0
        %2301 = vmatpush1.msra.mxu0 0.0
        %2302 = vmatprep.subr.mxu0 0.0
        %2303 = vmatpush1.msra.mxu0 0.0
        %2304 = vmatprep.subr.mxu0 0.0
        %2305 = vmatpush1.msra.mxu0 0.0
        %2306 = vmatprep.subr.mxu0 0.0
        %2307 = vmatpush1.msra.mxu0 0.0
        %2308 = vmatprep.subr.mxu0 0.0
        %2309 = vmatpush1.msra.mxu0 0.0
        %2310 = vmatprep.subr.mxu0 0.0
        %2311 = vmatpush1.msra.mxu0 0.0
        %2312 = vmatprep.subr.mxu0 0.0
        %2313 = vmatpush1.msra.mxu0 0.0
        %2314 = vmatprep.subr.mxu0 0.0
        %2315 = vmatpush1.msra.mxu0 0.0
        %2316 = vmatprep.subr.mxu0 0.0
        %2317 = vmatpush1.msra.mxu0 0.0
        %2318 = vmatprep.subr.mxu0 0.0
        %2319 = vmatpush1.msra.mxu0 0.0
        %2320 = vmatprep.subr.mxu0 0.0
        %2321 = vmatpush1.msra.mxu0 0.0
        %2322 = vmatprep.subr.mxu0 0.0
        %2323 = vmatpush1.msra.mxu0 0.0
        %2324 = vmatprep.subr.mxu0 0.0
        %2325 = vmatpush1.msra.mxu0 0.0
        %2326 = vmatprep.subr.mxu0 0.0
        %2327 = vmatpush1.msra.mxu0 0.0
        %2328 = vmatprep.subr.mxu0 0.0
        %2329 = vmatpush1.msra.mxu0 0.0
        %2330 = vmatprep.subr.mxu0 0.0
        %2331 = vmatpush1.msra.mxu0 0.0
        %2332 = vmatprep.subr.mxu0 0.0
        %2333 = vmatpush1.msra.mxu0 0.0
        %2334 = vmatprep.subr.mxu0 0.0
        %2335 = vmatpush1.msra.mxu0 0.0
        %2336 = vmatprep.subr.mxu0 0.0
        %2337 = vmatpush1.msra.mxu0 0.0
        %2338 = vmatprep.subr.mxu0 0.0
        %2339 = vmatpush1.msra.mxu0 0.0
        %2340 = vmatprep.subr.mxu0 0.0
        %2341 = vmatpush1.msra.mxu0 0.0
        %2342 = vmatprep.subr.mxu0 0.0
        %2343 = vmatpush1.msra.mxu0 0.0
        %2344 = vmatprep.subr.mxu0 0.0
        %2345 = vmatpush1.msra.mxu0 0.0
        %2346 = vmatprep.subr.mxu0 0.0
        %2347 = vmatpush1.msra.mxu0 0.0
        %2348 = vmatprep.subr.mxu0 0.0
        %2349 = vmatpush1.msra.mxu0 0.0
        %2350 = vmatprep.subr.mxu0 0.0
        %2351 = vmatpush1.msra.mxu0 0.0
        %2352 = vmatprep.mubr.f32.mxu0 0.0
        %2353 = vmatmul.mubr.f32.gmra.mrb[0].mxu0 %v2286
        %v2354 = vpop.f32.mrb[0].mxu0
        %v2355 = vadd.f32 0.0, %v2354
        %v2356 = vpop.f32.mrb[0].mxu0
        %2357 = vdwg.mxu0
        %v2358 = vld [vmem:[#allocation12] sm:$0xff]
        %v2359 = vmul.f32 %v2355, %v2358
        %v2360 = vld [vmem:[#allocation14] sm:$0xff]
        %v2361 = vadd.f32 %v2359, %v2360
        %vm2362 = vcmp.ge.f32.partialorder %v2361, 0.0
        %v2363 = vmul.f32 %v2361, 0.2
        %v2364 = vsel %vm2362, %v2361, %v2363
        %v2365 = vld [vmem:[%s25] sm:$0x3f]
        %vm2366 = vcmask 48128
        %v2368 = vsel %vm2366, %v1936, 0
        %v2371 = vsel %vm2366, %v1937, 0
        %vm2373 = vcmask 1045504
        %v2375 = vsel %vm2373, %v2365, 0
        %2377 = vmatprep.subr.mxu0 0.0
        %2378 = vmatpush1.msra.mxu0 %v2375
        %2379 = vmatprep.subr.mxu0 0.0
        %2380 = vmatpush1.msra.mxu0 0.0
        %2381 = vmatprep.subr.mxu0 0.0
        %2382 = vmatpush1.msra.mxu0 0.0
        %2383 = vmatprep.subr.mxu0 0.0
        %2384 = vmatpush1.msra.mxu0 0.0
        %2385 = vmatprep.subr.mxu0 0.0
        %2386 = vmatpush1.msra.mxu0 0.0
        %2387 = vmatprep.subr.mxu0 0.0
        %2388 = vmatpush1.msra.mxu0 0.0
        %2389 = vmatprep.subr.mxu0 0.0
        %2390 = vmatpush1.msra.mxu0 0.0
        %2391 = vmatprep.subr.mxu0 0.0
        %2392 = vmatpush1.msra.mxu0 0.0
        %2393 = vmatprep.subr.mxu0 0.0
        %2394 = vmatpush1.msra.mxu0 0.0
        %2395 = vmatprep.subr.mxu0 0.0
        %2396 = vmatpush1.msra.mxu0 0.0
        %2397 = vmatprep.subr.mxu0 0.0
        %2398 = vmatpush1.msra.mxu0 0.0
        %2399 = vmatprep.subr.mxu0 0.0
        %2400 = vmatpush1.msra.mxu0 0.0
        %2401 = vmatprep.subr.mxu0 0.0
        %2402 = vmatpush1.msra.mxu0 0.0
        %2403 = vmatprep.subr.mxu0 0.0
        %2404 = vmatpush1.msra.mxu0 0.0
        %2405 = vmatprep.subr.mxu0 0.0
        %2406 = vmatpush1.msra.mxu0 0.0
        %2407 = vmatprep.subr.mxu0 0.0
        %2408 = vmatpush1.msra.mxu0 0.0
        %2409 = vmatprep.subr.mxu0 0.0
        %2410 = vmatpush1.msra.mxu0 0.0
        %2411 = vmatprep.subr.mxu0 0.0
        %2412 = vmatpush1.msra.mxu0 0.0
        %2413 = vmatprep.subr.mxu0 0.0
        %2414 = vmatpush1.msra.mxu0 0.0
        %2415 = vmatprep.subr.mxu0 0.0
        %2416 = vmatpush1.msra.mxu0 0.0
        %2417 = vmatprep.subr.mxu0 0.0
        %2418 = vmatpush1.msra.mxu0 0.0
        %2419 = vmatprep.subr.mxu0 0.0
        %2420 = vmatpush1.msra.mxu0 0.0
        %2421 = vmatprep.subr.mxu0 0.0
        %2422 = vmatpush1.msra.mxu0 0.0
        %2423 = vmatprep.subr.mxu0 0.0
        %2424 = vmatpush1.msra.mxu0 0.0
        %2425 = vmatprep.subr.mxu0 0.0
        %2426 = vmatpush1.msra.mxu0 0.0
        %2427 = vmatprep.subr.mxu0 0.0
        %2428 = vmatpush1.msra.mxu0 0.0
        %2429 = vmatprep.subr.mxu0 0.0
        %2430 = vmatpush1.msra.mxu0 0.0
        %2431 = vmatprep.subr.mxu0 0.0
        %2432 = vmatpush1.msra.mxu0 0.0
        %2433 = vmatprep.subr.mxu0 0.0
        %2434 = vmatpush1.msra.mxu0 0.0
        %2435 = vmatprep.subr.mxu0 0.0
        %2436 = vmatpush1.msra.mxu0 0.0
        %2437 = vmatprep.subr.mxu0 0.0
        %2438 = vmatpush1.msra.mxu0 0.0
        %2439 = vmatprep.subr.mxu0 0.0
        %2440 = vmatpush1.msra.mxu0 0.0
        %2441 = vmatprep.mubr.f32.mxu0 0.0
        %2442 = vmatmul.mubr.f32.gmra.mrb[0].mxu0 %v2368
        %v2443 = vpop.f32.mrb[0].mxu0
        %v2444 = vadd.f32 0.0, %v2443
        %v2445 = vpop.f32.mrb[0].mxu0
        %2446 = vmatprep.mubr.f32.mxu0 0.0
        %2447 = vmatmul.mubr.f32.gmra.mrb[0].mxu0 %v2371
        %v2448 = vpop.f32.mrb[0].mxu0
        %v2449 = vadd.f32 0.0, %v2448
        %v2450 = vpop.f32.mrb[0].mxu0
        %2451 = vdwg.mxu0
        %v2452 = vld [vmem:[#allocation15] sm:$0xff]
        %v2453 = vld [vmem:[#allocation15 + $0x8] sm:$0xff]
        %v2454 = vmul.f32 %v2444, %v2452
        %v2455 = vmul.f32 %v2449, %v2453
        %v2456 = vld [vmem:[#allocation17] sm:$0xff]
        %v2457 = vld [vmem:[#allocation17 + $0x8] sm:$0xff]
        %v2458 = vadd.f32 %v2454, %v2456
        %v2459 = vadd.f32 %v2455, %v2457
        %vm2460 = vcmp.ge.f32.partialorder %v2458, 0.0
        %vm2461 = vcmp.ge.f32.partialorder %v2459, 0.0
        %v2462 = vmul.f32 %v2458, 0.2
        %v2463 = vmul.f32 %v2459, 0.2
        %v2464 = vsel %vm2460, %v2458, %v2462
        %v2465 = vsel %vm2461, %v2459, %v2463
        %v2466 = vld [vmem:[%s31] sm:$0xff]
        %v2467 = vld [vmem:[%s31 + $0x8] sm:$0xf]
        %v2469 = vsel %vm1943, %v1938, 0
        %v2472 = vsel %vm1943, %v1939, 0
        %v2475 = vsel %vm1947, %v2467, 0
        %2477 = vmatprep.subr.mxu0 0.0
        %2478 = vmatpush1.msra.mxu0 %v2466
        %2479 = vmatprep.subr.mxu0 0.0
        %2480 = vmatpush1.msra.mxu0 %v2475
        %2481 = vmatprep.subr.mxu0 0.0
        %2482 = vmatpush1.msra.mxu0 0.0
        %2483 = vmatprep.subr.mxu0 0.0
        %2484 = vmatpush1.msra.mxu0 0.0
        %2485 = vmatprep.subr.mxu0 0.0
        %2486 = vmatpush1.msra.mxu0 0.0
        %2487 = vmatprep.subr.mxu0 0.0
        %2488 = vmatpush1.msra.mxu0 0.0
        %2489 = vmatprep.subr.mxu0 0.0
        %2490 = vmatpush1.msra.mxu0 0.0
        %2491 = vmatprep.subr.mxu0 0.0
        %2492 = vmatpush1.msra.mxu0 0.0
        %2493 = vmatprep.subr.mxu0 0.0
        %2494 = vmatpush1.msra.mxu0 0.0
        %2495 = vmatprep.subr.mxu0 0.0
        %2496 = vmatpush1.msra.mxu0 0.0
        %2497 = vmatprep.subr.mxu0 0.0
        %2498 = vmatpush1.msra.mxu0 0.0
        %2499 = vmatprep.subr.mxu0 0.0
        %2500 = vmatpush1.msra.mxu0 0.0
        %2501 = vmatprep.subr.mxu0 0.0
        %2502 = vmatpush1.msra.mxu0 0.0
        %2503 = vmatprep.subr.mxu0 0.0
        %2504 = vmatpush1.msra.mxu0 0.0
        %2505 = vmatprep.subr.mxu0 0.0
        %2506 = vmatpush1.msra.mxu0 0.0
        %2507 = vmatprep.subr.mxu0 0.0
        %2508 = vmatpush1.msra.mxu0 0.0
        %2509 = vmatprep.subr.mxu0 0.0
        %2510 = vmatpush1.msra.mxu0 0.0
        %2511 = vmatprep.subr.mxu0 0.0
        %2512 = vmatpush1.msra.mxu0 0.0
        %2513 = vmatprep.subr.mxu0 0.0
        %2514 = vmatpush1.msra.mxu0 0.0
        %2515 = vmatprep.subr.mxu0 0.0
        %2516 = vmatpush1.msra.mxu0 0.0
        %2517 = vmatprep.subr.mxu0 0.0
        %2518 = vmatpush1.msra.mxu0 0.0
        %2519 = vmatprep.subr.mxu0 0.0
        %2520 = vmatpush1.msra.mxu0 0.0
        %2521 = vmatprep.subr.mxu0 0.0
        %2522 = vmatpush1.msra.mxu0 0.0
        %2523 = vmatprep.subr.mxu0 0.0
        %2524 = vmatpush1.msra.mxu0 0.0
        %2525 = vmatprep.subr.mxu0 0.0
        %2526 = vmatpush1.msra.mxu0 0.0
        %2527 = vmatprep.subr.mxu0 0.0
        %2528 = vmatpush1.msra.mxu0 0.0
        %2529 = vmatprep.subr.mxu0 0.0
        %2530 = vmatpush1.msra.mxu0 0.0
        %2531 = vmatprep.subr.mxu0 0.0
        %2532 = vmatpush1.msra.mxu0 0.0
        %2533 = vmatprep.subr.mxu0 0.0
        %2534 = vmatpush1.msra.mxu0 0.0
        %2535 = vmatprep.subr.mxu0 0.0
        %2536 = vmatpush1.msra.mxu0 0.0
        %2537 = vmatprep.subr.mxu0 0.0
        %2538 = vmatpush1.msra.mxu0 0.0
        %2539 = vmatprep.subr.mxu0 0.0
        %2540 = vmatpush1.msra.mxu0 0.0
        %2541 = vmatprep.mubr.f32.mxu0 0.0
        %2542 = vmatmul.mubr.f32.gmra.mrb[0].mxu0 %v2469
        %v2543 = vpop.f32.mrb[0].mxu0
        %v2544 = vadd.f32 0.0, %v2543
        %v2545 = vpop.f32.mrb[0].mxu0
        %2546 = vmatprep.mubr.f32.mxu0 0.0
        %2547 = vmatmul.mubr.f32.gmra.mrb[0].mxu0 %v2472
        %v2548 = vpop.f32.mrb[0].mxu0
        %v2549 = vadd.f32 0.0, %v2548
        %v2550 = vpop.f32.mrb[0].mxu0
        %2551 = vdwg.mxu0
        %v2552 = vld [vmem:[#allocation18] sm:$0xff]
        %v2553 = vld [vmem:[#allocation18 + $0x8] sm:$0xff]
        %v2554 = vmul.f32 %v2544, %v2552
        %v2555 = vmul.f32 %v2549, %v2553
        %v2556 = vld [vmem:[#allocation20] sm:$0xff]
        %v2557 = vld [vmem:[#allocation20 + $0x8] sm:$0xff]
        %v2558 = vadd.f32 %v2554, %v2556
        %v2559 = vadd.f32 %v2555, %v2557
        %vm2560 = vcmp.ge.f32.partialorder %v2558, 0.0
        %vm2561 = vcmp.ge.f32.partialorder %v2559, 0.0
        %v2562 = vmul.f32 %v2558, 0.2
        %v2563 = vmul.f32 %v2559, 0.2
        %v2564 = vsel %vm2560, %v2558, %v2562
        %v2565 = vsel %vm2561, %v2559, %v2563
        %vm2566 = vcmask 253952
        %2567 = vst.msk [vmem:[#allocation2 + $0x7] sm:$0x1] %vm2566, 0.0
        %2568 = vst.msk [vmem:[#allocation2 + $0x30] sm:$0x1] %vm2566, 0.0
        %2569 = vst.msk [vmem:[#allocation2 + $0x10] sm:$0xff] %vm2031, %v2464
        %2570 = vst.msk [vmem:[#allocation2 + $0x20] sm:$0xff] %vm2031, %v2465
        %2573 = vrot.lane.b32.xlu0 %v2564, 16
        %v2574 = vpop.permute.xlu0 %2573
        %2575 = vrot.lane.b32.xlu0 %v2565, 16
        %v2576 = vpop.permute.xlu0 %2575
        %vm2579 = vcmask 261248
        %2580 = vst.msk [vmem:[#allocation2 + $0x10] sm:$0xff] %vm2579, %v2574
        %2581 = vst.msk [vmem:[#allocation2 + $0x20] sm:$0xff] %vm2579, %v2576
        %v2582 = vld [vmem:[#allocation2] sm:$0x80]
        %v2583 = vld [vmem:[#allocation2 + $0x10] sm:$0xff]
        %v2584 = vld [vmem:[#allocation2 + $0x20] sm:$0x7f]
        %v2585 = vld [vmem:[%s37] sm:$0xff]
        %v2586 = vld [vmem:[%s37 + $0x8] sm:$0xff]
        %v2587 = vld [vmem:[%s37 + $0x10] sm:$0xff]
        %v2588 = vld [vmem:[%s37 + $0x18] sm:$0xff]
        %v2589 = vld [vmem:[#allocation2 + $0x20] sm:$0xff]
        %s2590 = scalar_lea.vmem %s37, 32
        %v2591 = vld [vmem:[%s2590] sm:$0xff]
        %v2592 = vld [vmem:[%s2590 + $0x8] sm:$0xff]
        %v2593 = vld [vmem:[%s2590 + $0x10] sm:$0xff]
        %v2594 = vld [vmem:[%s2590 + $0x18] sm:$0xff]
        %vm2595 = vcmask 261120
        %v2597 = vsel %vm2595, %v2583, 0
        %v2600 = vsel %vm2595, %v2589, 0
        %2602 = vmatprep.subr.mxu0 0.0
        %2603 = vmatpush1.msra.mxu0 %v2591
        %2604 = vmatprep.subr.mxu0 0.0
        %2605 = vmatpush1.msra.mxu0 %v2592
        %2606 = vmatprep.subr.mxu0 0.0
        %2607 = vmatpush1.msra.mxu0 %v2593
        %2608 = vmatprep.subr.mxu0 0.0
        %2609 = vmatpush1.msra.mxu0 %v2594
        %2610 = vmatprep.subr.mxu0 0.0
        %2611 = vmatpush1.msra.mxu0 0.0
        %2612 = vmatprep.subr.mxu0 0.0
        %2613 = vmatpush1.msra.mxu0 0.0
        %2614 = vmatprep.subr.mxu0 0.0
        %2615 = vmatpush1.msra.mxu0 0.0
        %2616 = vmatprep.subr.mxu0 0.0
        %2617 = vmatpush1.msra.mxu0 0.0
        %2618 = vmatprep.subr.mxu0 0.0
        %2619 = vmatpush1.msra.mxu0 0.0
        %2620 = vmatprep.subr.mxu0 0.0
        %2621 = vmatpush1.msra.mxu0 0.0
        %2622 = vmatprep.subr.mxu0 0.0
        %2623 = vmatpush1.msra.mxu0 0.0
        %2624 = vmatprep.subr.mxu0 0.0
        %2625 = vmatpush1.msra.mxu0 0.0
        %2626 = vmatprep.subr.mxu0 0.0
        %2627 = vmatpush1.msra.mxu0 0.0
        %2628 = vmatprep.subr.mxu0 0.0
        %2629 = vmatpush1.msra.mxu0 0.0
        %2630 = vmatprep.subr.mxu0 0.0
        %2631 = vmatpush1.msra.mxu0 0.0
        %2632 = vmatprep.subr.mxu0 0.0
        %2633 = vmatpush1.msra.mxu0 0.0
        %2634 = vmatprep.subr.mxu0 0.0
        %2635 = vmatpush1.msra.mxu0 0.0
        %2636 = vmatprep.subr.mxu0 0.0
        %2637 = vmatpush1.msra.mxu0 0.0
        %2638 = vmatprep.subr.mxu0 0.0
        %2639 = vmatpush1.msra.mxu0 0.0
        %2640 = vmatprep.subr.mxu0 0.0
        %2641 = vmatpush1.msra.mxu0 0.0
        %2642 = vmatprep.subr.mxu0 0.0
        %2643 = vmatpush1.msra.mxu0 0.0
        %2644 = vmatprep.subr.mxu0 0.0
        %2645 = vmatpush1.msra.mxu0 0.0
        %2646 = vmatprep.subr.mxu0 0.0
        %2647 = vmatpush1.msra.mxu0 0.0
        %2648 = vmatprep.subr.mxu0 0.0
        %2649 = vmatpush1.msra.mxu0 0.0
        %2650 = vmatprep.subr.mxu0 0.0
        %2651 = vmatpush1.msra.mxu0 0.0
        %2652 = vmatprep.subr.mxu0 0.0
        %2653 = vmatpush1.msra.mxu0 0.0
        %2654 = vmatprep.subr.mxu0 0.0
        %2655 = vmatpush1.msra.mxu0 0.0
        %2656 = vmatprep.subr.mxu0 0.0
        %2657 = vmatpush1.msra.mxu0 0.0
        %2658 = vmatprep.subr.mxu0 0.0
        %2659 = vmatpush1.msra.mxu0 0.0
        %2660 = vmatprep.subr.mxu0 0.0
        %2661 = vmatpush1.msra.mxu0 0.0
        %2662 = vmatprep.subr.mxu0 0.0
        %2663 = vmatpush1.msra.mxu0 0.0
        %2664 = vmatprep.subr.mxu0 0.0
        %2665 = vmatpush1.msra.mxu0 0.0
        %2666 = vmatprep.mubr.f32.mxu0 0.0
        %2667 = vmatmul.mubr.f32.gmra.mrb[0].mxu0 %v2597
        %v2668 = vpop.f32.mrb[0].mxu0
        %v2669 = vadd.f32 0.0, %v2668
        %v2670 = vpop.f32.mrb[0].mxu0
        %2671 = vmatprep.mubr.f32.mxu0 0.0
        %2672 = vmatmul.mubr.f32.gmra.mrb[0].mxu0 %v2600
        %v2673 = vpop.f32.mrb[0].mxu0
        %v2674 = vadd.f32 0.0, %v2673
        %v2675 = vpop.f32.mrb[0].mxu0
        %2676 = vdwg.mxu0
        %v2679 = vrot.slane %v2582, 7
        %v2680 = vrot.slane %v2583, 7
        %v2681 = vsel %vm2116, %v2679, %v2680
        %v2682 = vrot.slane %v2584, 7
        %v2683 = vsel %vm2116, %v2680, %v2682
        %v2684 = vsel %vm2595, %v2681, 0
        %v2686 = vsel %vm2595, %v2683, 0
        %2688 = vmatprep.subr.mxu0 0.0
        %2689 = vmatpush1.msra.mxu0 %v2585
        %2690 = vmatprep.subr.mxu0 0.0
        %2691 = vmatpush1.msra.mxu0 %v2586
        %2692 = vmatprep.subr.mxu0 0.0
        %2693 = vmatpush1.msra.mxu0 %v2587
        %2694 = vmatprep.subr.mxu0 0.0
        %2695 = vmatpush1.msra.mxu0 %v2588
        %2696 = vmatprep.subr.mxu0 0.0
        %2697 = vmatpush1.msra.mxu0 0.0
        %2698 = vmatprep.subr.mxu0 0.0
        %2699 = vmatpush1.msra.mxu0 0.0
        %2700 = vmatprep.subr.mxu0 0.0
        %2701 = vmatpush1.msra.mxu0 0.0
        %2702 = vmatprep.subr.mxu0 0.0
        %2703 = vmatpush1.msra.mxu0 0.0
        %2704 = vmatprep.subr.mxu0 0.0
        %2705 = vmatpush1.msra.mxu0 0.0
        %2706 = vmatprep.subr.mxu0 0.0
        %2707 = vmatpush1.msra.mxu0 0.0
        %2708 = vmatprep.subr.mxu0 0.0
        %2709 = vmatpush1.msra.mxu0 0.0
        %2710 = vmatprep.subr.mxu0 0.0
        %2711 = vmatpush1.msra.mxu0 0.0
        %2712 = vmatprep.subr.mxu0 0.0
        %2713 = vmatpush1.msra.mxu0 0.0
        %2714 = vmatprep.subr.mxu0 0.0
        %2715 = vmatpush1.msra.mxu0 0.0
        %2716 = vmatprep.subr.mxu0 0.0
        %2717 = vmatpush1.msra.mxu0 0.0
        %2718 = vmatprep.subr.mxu0 0.0
        %2719 = vmatpush1.msra.mxu0 0.0
        %2720 = vmatprep.subr.mxu0 0.0
        %2721 = vmatpush1.msra.mxu0 0.0
        %2722 = vmatprep.subr.mxu0 0.0
        %2723 = vmatpush1.msra.mxu0 0.0
        %2724 = vmatprep.subr.mxu0 0.0
        %2725 = vmatpush1.msra.mxu0 0.0
        %2726 = vmatprep.subr.mxu0 0.0
        %2727 = vmatpush1.msra.mxu0 0.0
        %2728 = vmatprep.subr.mxu0 0.0
        %2729 = vmatpush1.msra.mxu0 0.0
        %2730 = vmatprep.subr.mxu0 0.0
        %2731 = vmatpush1.msra.mxu0 0.0
        %2732 = vmatprep.subr.mxu0 0.0
        %2733 = vmatpush1.msra.mxu0 0.0
        %2734 = vmatprep.subr.mxu0 0.0
        %2735 = vmatpush1.msra.mxu0 0.0
        %2736 = vmatprep.subr.mxu0 0.0
        %2737 = vmatpush1.msra.mxu0 0.0
        %2738 = vmatprep.subr.mxu0 0.0
        %2739 = vmatpush1.msra.mxu0 0.0
        %2740 = vmatprep.subr.mxu0 0.0
        %2741 = vmatpush1.msra.mxu0 0.0
        %2742 = vmatprep.subr.mxu0 0.0
        %2743 = vmatpush1.msra.mxu0 0.0
        %2744 = vmatprep.subr.mxu0 0.0
        %2745 = vmatpush1.msra.mxu0 0.0
        %2746 = vmatprep.subr.mxu0 0.0
        %2747 = vmatpush1.msra.mxu0 0.0
        %2748 = vmatprep.subr.mxu0 0.0
        %2749 = vmatpush1.msra.mxu0 0.0
        %2750 = vmatprep.subr.mxu0 0.0
        %2751 = vmatpush1.msra.mxu0 0.0
        %2752 = vmatprep.mubr.f32.mxu0 0.0
        %2753 = vmatmul.mubr.f32.gmra.mrb[0].mxu0 %v2684
        %v2754 = vpop.f32.mrb[0].mxu0
        %v2755 = vadd.f32 %v2669, %v2754
        %v2756 = vpop.f32.mrb[0].mxu0
        %2757 = vmatprep.mubr.f32.mxu0 0.0
        %2758 = vmatmul.mubr.f32.gmra.mrb[0].mxu0 %v2686
        %v2759 = vpop.f32.mrb[0].mxu0
        %v2760 = vadd.f32 %v2674, %v2759
        %v2761 = vpop.f32.mrb[0].mxu0
        %2762 = vdwg.mxu0
        %v2763 = vld [vmem:[#allocation2 + $0x10] sm:$0xfe]
        %v2764 = vld [vmem:[#allocation2 + $0x20] sm:$0xff]
        %v2765 = vld [vmem:[#allocation2 + $0x30] sm:$0x1]
        %s2766 = scalar_lea.vmem %s37, 64
        %v2767 = vld [vmem:[%s2766] sm:$0xff]
        %v2768 = vld [vmem:[%s2766 + $0x8] sm:$0xff]
        %v2769 = vld [vmem:[%s2766 + $0x10] sm:$0xff]
        %v2770 = vld [vmem:[%s2766 + $0x18] sm:$0xff]
        %v2774 = vrot.slane %v2763, 1
        %v2775 = vrot.slane %v2764, 1
        %v2776 = vsel %vm2199, %v2774, %v2775
        %v2777 = vrot.slane %v2765, 1
        %v2778 = vsel %vm2199, %v2775, %v2777
        %v2779 = vsel %vm2595, %v2776, 0
        %v2781 = vsel %vm2595, %v2778, 0
        %2783 = vmatprep.subr.mxu0 0.0
        %2784 = vmatpush1.msra.mxu0 %v2767
        %2785 = vmatprep.subr.mxu0 0.0
        %2786 = vmatpush1.msra.mxu0 %v2768
        %2787 = vmatprep.subr.mxu0 0.0
        %2788 = vmatpush1.msra.mxu0 %v2769
        %2789 = vmatprep.subr.mxu0 0.0
        %2790 = vmatpush1.msra.mxu0 %v2770
        %2791 = vmatprep.subr.mxu0 0.0
        %2792 = vmatpush1.msra.mxu0 0.0
        %2793 = vmatprep.subr.mxu0 0.0
        %2794 = vmatpush1.msra.mxu0 0.0
        %2795 = vmatprep.subr.mxu0 0.0
        %2796 = vmatpush1.msra.mxu0 0.0
        %2797 = vmatprep.subr.mxu0 0.0
        %2798 = vmatpush1.msra.mxu0 0.0
        %2799 = vmatprep.subr.mxu0 0.0
        %2800 = vmatpush1.msra.mxu0 0.0
        %2801 = vmatprep.subr.mxu0 0.0
        %2802 = vmatpush1.msra.mxu0 0.0
        %2803 = vmatprep.subr.mxu0 0.0
        %2804 = vmatpush1.msra.mxu0 0.0
        %2805 = vmatprep.subr.mxu0 0.0
        %2806 = vmatpush1.msra.mxu0 0.0
        %2807 = vmatprep.subr.mxu0 0.0
        %2808 = vmatpush1.msra.mxu0 0.0
        %2809 = vmatprep.subr.mxu0 0.0
        %2810 = vmatpush1.msra.mxu0 0.0
        %2811 = vmatprep.subr.mxu0 0.0
        %2812 = vmatpush1.msra.mxu0 0.0
        %2813 = vmatprep.subr.mxu0 0.0
        %2814 = vmatpush1.msra.mxu0 0.0
        %2815 = vmatprep.subr.mxu0 0.0
        %2816 = vmatpush1.msra.mxu0 0.0
        %2817 = vmatprep.subr.mxu0 0.0
        %2818 = vmatpush1.msra.mxu0 0.0
        %2819 = vmatprep.subr.mxu0 0.0
        %2820 = vmatpush1.msra.mxu0 0.0
        %2821 = vmatprep.subr.mxu0 0.0
        %2822 = vmatpush1.msra.mxu0 0.0
        %2823 = vmatprep.subr.mxu0 0.0
        %2824 = vmatpush1.msra.mxu0 0.0
        %2825 = vmatprep.subr.mxu0 0.0
        %2826 = vmatpush1.msra.mxu0 0.0
        %2827 = vmatprep.subr.mxu0 0.0
        %2828 = vmatpush1.msra.mxu0 0.0
        %2829 = vmatprep.subr.mxu0 0.0
        %2830 = vmatpush1.msra.mxu0 0.0
        %2831 = vmatprep.subr.mxu0 0.0
        %2832 = vmatpush1.msra.mxu0 0.0
        %2833 = vmatprep.subr.mxu0 0.0
        %2834 = vmatpush1.msra.mxu0 0.0
        %2835 = vmatprep.subr.mxu0 0.0
        %2836 = vmatpush1.msra.mxu0 0.0
        %2837 = vmatprep.subr.mxu0 0.0
        %2838 = vmatpush1.msra.mxu0 0.0
        %2839 = vmatprep.subr.mxu0 0.0
        %2840 = vmatpush1.msra.mxu0 0.0
        %2841 = vmatprep.subr.mxu0 0.0
        %2842 = vmatpush1.msra.mxu0 0.0
        %2843 = vmatprep.subr.mxu0 0.0
        %2844 = vmatpush1.msra.mxu0 0.0
        %2845 = vmatprep.subr.mxu0 0.0
        %2846 = vmatpush1.msra.mxu0 0.0
        %2847 = vmatprep.mubr.f32.mxu0 0.0
        %2848 = vmatmul.mubr.f32.gmra.mrb[0].mxu0 %v2779
        %v2849 = vpop.f32.mrb[0].mxu0
        %v2850 = vadd.f32 0.0, %v2849
        %v2851 = vpop.f32.mrb[0].mxu0
        %2852 = vmatprep.mubr.f32.mxu0 0.0
        %2853 = vmatmul.mubr.f32.gmra.mrb[0].mxu0 %v2781
        %v2854 = vpop.f32.mrb[0].mxu0
        %v2855 = vadd.f32 0.0, %v2854
        %v2856 = vpop.f32.mrb[0].mxu0
        %2857 = vdwg.mxu0
        %v2858 = vadd.f32 %v2755, %v2850
        %v2859 = vadd.f32 %v2760, %v2855
        %v2860 = vld [vmem:[#allocation21] sm:$0xff]
        %v2861 = vld [vmem:[#allocation21 + $0x8] sm:$0xff]
        %v2862 = vmul.f32 %v2858, %v2860
        %v2863 = vmul.f32 %v2859, %v2861
        %v2864 = vld [vmem:[#allocation23] sm:$0xff]
        %v2865 = vld [vmem:[#allocation23 + $0x8] sm:$0xff]
        %v2866 = vadd.f32 %v2862, %v2864
        %v2867 = vadd.f32 %v2863, %v2865
        %vm2868 = vcmp.ge.f32.partialorder %v2866, 0.0
        %vm2869 = vcmp.ge.f32.partialorder %v2867, 0.0
        %v2870 = vmul.f32 %v2866, 0.2
        %v2871 = vmul.f32 %v2867, 0.2
        %v2872 = vsel %vm2868, %v2866, %v2870
        %v2873 = vsel %vm2869, %v2867, %v2871
        %v2874 = vld [vmem:[#allocation24] sm:$0xff]
        %v2875 = vld [vmem:[#allocation24 + $0x8] sm:$0xff]
        %v2877 = vsel %vm2031, %v2872, 0
        %v2880 = vsel %vm2031, %v2873, 0
        %2882 = vmatprep.subr.mxu0 0.0
        %2883 = vmatpush1.msra.mxu0 %v2874
        %2884 = vmatprep.subr.mxu0 0.0
        %2885 = vmatpush1.msra.mxu0 %v2875
        %2886 = vmatprep.subr.mxu0 0.0
        %2887 = vmatpush1.msra.mxu0 0.0
        %2888 = vmatprep.subr.mxu0 0.0
        %2889 = vmatpush1.msra.mxu0 0.0
        %2890 = vmatprep.subr.mxu0 0.0
        %2891 = vmatpush1.msra.mxu0 0.0
        %2892 = vmatprep.subr.mxu0 0.0
        %2893 = vmatpush1.msra.mxu0 0.0
        %2894 = vmatprep.subr.mxu0 0.0
        %2895 = vmatpush1.msra.mxu0 0.0
        %2896 = vmatprep.subr.mxu0 0.0
        %2897 = vmatpush1.msra.mxu0 0.0
        %2898 = vmatprep.subr.mxu0 0.0
        %2899 = vmatpush1.msra.mxu0 0.0
        %2900 = vmatprep.subr.mxu0 0.0
        %2901 = vmatpush1.msra.mxu0 0.0
        %2902 = vmatprep.subr.mxu0 0.0
        %2903 = vmatpush1.msra.mxu0 0.0
        %2904 = vmatprep.subr.mxu0 0.0
        %2905 = vmatpush1.msra.mxu0 0.0
        %2906 = vmatprep.subr.mxu0 0.0
        %2907 = vmatpush1.msra.mxu0 0.0
        %2908 = vmatprep.subr.mxu0 0.0
        %2909 = vmatpush1.msra.mxu0 0.0
        %2910 = vmatprep.subr.mxu0 0.0
        %2911 = vmatpush1.msra.mxu0 0.0
        %2912 = vmatprep.subr.mxu0 0.0
        %2913 = vmatpush1.msra.mxu0 0.0
        %2914 = vmatprep.subr.mxu0 0.0
        %2915 = vmatpush1.msra.mxu0 0.0
        %2916 = vmatprep.subr.mxu0 0.0
        %2917 = vmatpush1.msra.mxu0 0.0
        %2918 = vmatprep.subr.mxu0 0.0
        %2919 = vmatpush1.msra.mxu0 0.0
        %2920 = vmatprep.subr.mxu0 0.0
        %2921 = vmatpush1.msra.mxu0 0.0
        %2922 = vmatprep.subr.mxu0 0.0
        %2923 = vmatpush1.msra.mxu0 0.0
        %2924 = vmatprep.subr.mxu0 0.0
        %2925 = vmatpush1.msra.mxu0 0.0
        %2926 = vmatprep.subr.mxu0 0.0
        %2927 = vmatpush1.msra.mxu0 0.0
        %2928 = vmatprep.subr.mxu0 0.0
        %2929 = vmatpush1.msra.mxu0 0.0
        %2930 = vmatprep.subr.mxu0 0.0
        %2931 = vmatpush1.msra.mxu0 0.0
        %2932 = vmatprep.subr.mxu0 0.0
        %2933 = vmatpush1.msra.mxu0 0.0
        %2934 = vmatprep.subr.mxu0 0.0
        %2935 = vmatpush1.msra.mxu0 0.0
        %2936 = vmatprep.subr.mxu0 0.0
        %2937 = vmatpush1.msra.mxu0 0.0
        %2938 = vmatprep.subr.mxu0 0.0
        %2939 = vmatpush1.msra.mxu0 0.0
        %2940 = vmatprep.subr.mxu0 0.0
        %2941 = vmatpush1.msra.mxu0 0.0
        %2942 = vmatprep.subr.mxu0 0.0
        %2943 = vmatpush1.msra.mxu0 0.0
        %2944 = vmatprep.subr.mxu0 0.0
        %2945 = vmatpush1.msra.mxu0 0.0
        %2946 = vmatprep.mubr.f32.mxu0 0.0
        %2947 = vmatmul.mubr.f32.gmra.mrb[0].mxu0 %v2877
        %v2948 = vpop.f32.mrb[0].mxu0
        %v2949 = vadd.f32 0.0, %v2948
        %v2950 = vpop.f32.mrb[0].mxu0
        %2951 = vmatprep.mubr.f32.mxu0 0.0
        %2952 = vmatmul.mubr.f32.gmra.mrb[0].mxu0 %v2880
        %v2953 = vpop.f32.mrb[0].mxu0
        %v2954 = vadd.f32 0.0, %v2953
        %v2955 = vpop.f32.mrb[0].mxu0
        %2956 = vdwg.mxu0
        %v2957 = vld [vmem:[#allocation26] sm:$0xff]
        %v2958 = vld [vmem:[#allocation26 + $0x8] sm:$0xff]
        %v2959 = vmul.f32 %v2949, %v2957
        %v2960 = vmul.f32 %v2954, %v2958
        %v2961 = vld [vmem:[#allocation27] sm:$0xff]
        %v2962 = vld [vmem:[#allocation27 + $0x8] sm:$0xff]
        %v2963 = vadd.f32 %v2959, %v2961
        %v2964 = vadd.f32 %v2960, %v2962
        %vm2965 = vcmp.ge.f32.partialorder %v2963, 0.0
        %vm2966 = vcmp.ge.f32.partialorder %v2964, 0.0
        %v2967 = vmul.f32 %v2963, 0.2
        %v2968 = vmul.f32 %v2964, 0.2
        %v2969 = vsel %vm2965, %v2963, %v2967
        %v2970 = vsel %vm2966, %v2964, %v2968
        %2971 = vst.msk [vmem:[#allocation3] sm:$0xff] %vm2031, %v2969
        %2972 = vst.msk [vmem:[#allocation3 + $0x8] sm:$0xff] %vm2031, %v2970
        %2973 = vst.msk [vmem:[#allocation2 + $0x7] sm:$0x1] %vm2028, 0.0
        %2974 = vst.msk [vmem:[#allocation2 + $0x20] sm:$0x1] %vm2028, 0.0
        %v2975 = vld [vmem:[#allocation3] sm:$0x3]
        %vm2976 = vcmask 123904
        %v2977 = vsel %vm2976, %v2975, -inf
        %v2978 = vrot.slane %v2977, 4
        %v2979 = vmax.f32 %v2977, %v2978
        %v2980 = vrot.slane %v2979, 2
        %v2981 = vmax.f32 %v2979, %v2980
        %v2982 = vrot.slane %v2981, 1
        %v2983 = vmax.f32 %v2981, %v2982
        %2984 = vst.msk [vmem:[#allocation2 + $0x10] sm:$0x1] %vm2028, %v2983
        %v2985 = vld [vmem:[#allocation3 + $0x2] sm:$0x3]
        %v2986 = vsel %vm2976, %v2985, -inf
        %v2987 = vrot.slane %v2986, 4
        %v2988 = vmax.f32 %v2986, %v2987
        %v2989 = vrot.slane %v2988, 2
        %v2990 = vmax.f32 %v2988, %v2989
        %v2991 = vrot.slane %v2990, 1
        %v2992 = vmax.f32 %v2990, %v2991
        %2993 = vst.msk [vmem:[#allocation2 + $0x11] sm:$0x1] %vm2028, %v2992
        %v2994 = vld [vmem:[#allocation3 + $0x4] sm:$0x3]
        %v2995 = vsel %vm2976, %v2994, -inf
        %v2996 = vrot.slane %v2995, 4
        %v2997 = vmax.f32 %v2995, %v2996
        %v2998 = vrot.slane %v2997, 2
        %v2999 = vmax.f32 %v2997, %v2998
        %v3000 = vrot.slane %v2999, 1
        %v3001 = vmax.f32 %v2999, %v3000
        %3002 = vst.msk [vmem:[#allocation2 + $0x12] sm:$0x1] %vm2028, %v3001
        %v3003 = vld [vmem:[#allocation3 + $0x6] sm:$0x3]
        %v3004 = vsel %vm2976, %v3003, -inf
        %v3005 = vrot.slane %v3004, 4
        %v3006 = vmax.f32 %v3004, %v3005
        %v3007 = vrot.slane %v3006, 2
        %v3008 = vmax.f32 %v3006, %v3007
        %v3009 = vrot.slane %v3008, 1
        %v3010 = vmax.f32 %v3008, %v3009
        %3011 = vst.msk [vmem:[#allocation2 + $0x13] sm:$0x1] %vm2028, %v3010
        %v3012 = vld [vmem:[#allocation3 + $0x8] sm:$0x3]
        %v3013 = vsel %vm2976, %v3012, -inf
        %v3014 = vrot.slane %v3013, 4
        %v3015 = vmax.f32 %v3013, %v3014
        %v3016 = vrot.slane %v3015, 2
        %v3017 = vmax.f32 %v3015, %v3016
        %v3018 = vrot.slane %v3017, 1
        %v3019 = vmax.f32 %v3017, %v3018
        %3020 = vst.msk [vmem:[#allocation2 + $0x14] sm:$0x1] %vm2028, %v3019
        %v3021 = vld [vmem:[#allocation3 + $0xa] sm:$0x3]
        %v3022 = vsel %vm2976, %v3021, -inf
        %v3023 = vrot.slane %v3022, 4
        %v3024 = vmax.f32 %v3022, %v3023
        %v3025 = vrot.slane %v3024, 2
        %v3026 = vmax.f32 %v3024, %v3025
        %v3027 = vrot.slane %v3026, 1
        %v3028 = vmax.f32 %v3026, %v3027
        %3029 = vst.msk [vmem:[#allocation2 + $0x15] sm:$0x1] %vm2028, %v3028
        %v3030 = vld [vmem:[#allocation3 + $0xc] sm:$0x3]
        %v3031 = vsel %vm2976, %v3030, -inf
        %v3032 = vrot.slane %v3031, 4
        %v3033 = vmax.f32 %v3031, %v3032
        %v3034 = vrot.slane %v3033, 2
        %v3035 = vmax.f32 %v3033, %v3034
        %v3036 = vrot.slane %v3035, 1
        %v3037 = vmax.f32 %v3035, %v3036
        %3038 = vst.msk [vmem:[#allocation2 + $0x16] sm:$0x1] %vm2028, %v3037
        %v3039 = vld [vmem:[#allocation3 + $0xe] sm:$0x3]
        %v3040 = vsel %vm2976, %v3039, -inf
        %v3041 = vrot.slane %v3040, 4
        %v3042 = vmax.f32 %v3040, %v3041
        %v3043 = vrot.slane %v3042, 2
        %v3044 = vmax.f32 %v3042, %v3043
        %v3045 = vrot.slane %v3044, 1
        %v3046 = vmax.f32 %v3044, %v3045
        %3047 = vst.msk [vmem:[#allocation2 + $0x17] sm:$0x1] %vm2028, %v3046
        %vm3048 = vcmask 188544
        %3049 = vst.msk [vmem:[#allocation2 + $0x7] sm:$0x1] %vm3048, 0.0
        %3050 = vst.msk [vmem:[#allocation2 + $0x20] sm:$0x1] %vm3048, 0.0
        %3052 = vrot.lane.b32.xlu0 %v2364, 16
        %v3053 = vpop.permute.xlu0 %3052
        %vm3055 = vcmask 195712
        %3056 = vst.msk [vmem:[#allocation2 + $0x10] sm:$0xff] %vm3055, %v3053
        %v3057 = vld [vmem:[#allocation2] sm:$0x80]
        %v3058 = vld [vmem:[#allocation2 + $0x10] sm:$0x7f]
        %v3059 = vld [vmem:[#allocation29] sm:$0xff]
        %v3060 = vld [vmem:[#allocation29 + $0x8] sm:$0xff]
        %v3061 = vld [vmem:[#allocation29 + $0x10] sm:$0xff]
        %v3062 = vld [vmem:[#allocation2 + $0x10] sm:$0xff]
        %s3063 = scalar_lea.vmem [#allocation29], 24
        %v3064 = vld [vmem:[%s3063] sm:$0xff]
        %v3065 = vld [vmem:[%s3063 + $0x8] sm:$0xff]
        %v3066 = vld [vmem:[%s3063 + $0x10] sm:$0xff]
        %vm3067 = vcmask 195584
        %v3069 = vsel %vm3067, %v3062, 0
        %3071 = vmatprep.subr.mxu0 0.0
        %3072 = vmatpush1.msra.mxu0 %v3064
        %3073 = vmatprep.subr.mxu0 0.0
        %3074 = vmatpush1.msra.mxu0 %v3065
        %3075 = vmatprep.subr.mxu0 0.0
        %3076 = vmatpush1.msra.mxu0 %v3066
        %3077 = vmatprep.subr.mxu0 0.0
        %3078 = vmatpush1.msra.mxu0 0.0
        %3079 = vmatprep.subr.mxu0 0.0
        %3080 = vmatpush1.msra.mxu0 0.0
        %3081 = vmatprep.subr.mxu0 0.0
        %3082 = vmatpush1.msra.mxu0 0.0
        %3083 = vmatprep.subr.mxu0 0.0
        %3084 = vmatpush1.msra.mxu0 0.0
        %3085 = vmatprep.subr.mxu0 0.0
        %3086 = vmatpush1.msra.mxu0 0.0
        %3087 = vmatprep.subr.mxu0 0.0
        %3088 = vmatpush1.msra.mxu0 0.0
        %3089 = vmatprep.subr.mxu0 0.0
        %3090 = vmatpush1.msra.mxu0 0.0
        %3091 = vmatprep.subr.mxu0 0.0
        %3092 = vmatpush1.msra.mxu0 0.0
        %3093 = vmatprep.subr.mxu0 0.0
        %3094 = vmatpush1.msra.mxu0 0.0
        %3095 = vmatprep.subr.mxu0 0.0
        %3096 = vmatpush1.msra.mxu0 0.0
        %3097 = vmatprep.subr.mxu0 0.0
        %3098 = vmatpush1.msra.mxu0 0.0
        %3099 = vmatprep.subr.mxu0 0.0
        %3100 = vmatpush1.msra.mxu0 0.0
        %3101 = vmatprep.subr.mxu0 0.0
        %3102 = vmatpush1.msra.mxu0 0.0
        %3103 = vmatprep.subr.mxu0 0.0
        %3104 = vmatpush1.msra.mxu0 0.0
        %3105 = vmatprep.subr.mxu0 0.0
        %3106 = vmatpush1.msra.mxu0 0.0
        %3107 = vmatprep.subr.mxu0 0.0
        %3108 = vmatpush1.msra.mxu0 0.0
        %3109 = vmatprep.subr.mxu0 0.0
        %3110 = vmatpush1.msra.mxu0 0.0
        %3111 = vmatprep.subr.mxu0 0.0
        %3112 = vmatpush1.msra.mxu0 0.0
        %3113 = vmatprep.subr.mxu0 0.0
        %3114 = vmatpush1.msra.mxu0 0.0
        %3115 = vmatprep.subr.mxu0 0.0
        %3116 = vmatpush1.msra.mxu0 0.0
        %3117 = vmatprep.subr.mxu0 0.0
        %3118 = vmatpush1.msra.mxu0 0.0
        %3119 = vmatprep.subr.mxu0 0.0
        %3120 = vmatpush1.msra.mxu0 0.0
        %3121 = vmatprep.subr.mxu0 0.0
        %3122 = vmatpush1.msra.mxu0 0.0
        %3123 = vmatprep.subr.mxu0 0.0
        %3124 = vmatpush1.msra.mxu0 0.0
        %3125 = vmatprep.subr.mxu0 0.0
        %3126 = vmatpush1.msra.mxu0 0.0
        %3127 = vmatprep.subr.mxu0 0.0
        %3128 = vmatpush1.msra.mxu0 0.0
        %3129 = vmatprep.subr.mxu0 0.0
        %3130 = vmatpush1.msra.mxu0 0.0
        %3131 = vmatprep.subr.mxu0 0.0
        %3132 = vmatpush1.msra.mxu0 0.0
        %3133 = vmatprep.subr.mxu0 0.0
        %3134 = vmatpush1.msra.mxu0 0.0
        %3135 = vmatprep.mubr.f32.mxu0 0.0
        %3136 = vmatmul.mubr.f32.gmra.mrb[0].mxu0 %v3069
        %v3137 = vpop.f32.mrb[0].mxu0
        %v3138 = vadd.f32 0.0, %v3137
        %v3139 = vpop.f32.mrb[0].mxu0
        %3140 = vdwg.mxu0
        %v3143 = vrot.slane %v3057, 7
        %v3144 = vrot.slane %v3058, 7
        %v3145 = vsel %vm2116, %v3143, %v3144
        %v3146 = vsel %vm3067, %v3145, 0
        %3148 = vmatprep.subr.mxu0 0.0
        %3149 = vmatpush1.msra.mxu0 %v3059
        %3150 = vmatprep.subr.mxu0 0.0
        %3151 = vmatpush1.msra.mxu0 %v3060
        %3152 = vmatprep.subr.mxu0 0.0
        %3153 = vmatpush1.msra.mxu0 %v3061
        %3154 = vmatprep.subr.mxu0 0.0
        %3155 = vmatpush1.msra.mxu0 0.0
        %3156 = vmatprep.subr.mxu0 0.0
        %3157 = vmatpush1.msra.mxu0 0.0
        %3158 = vmatprep.subr.mxu0 0.0
        %3159 = vmatpush1.msra.mxu0 0.0
        %3160 = vmatprep.subr.mxu0 0.0
        %3161 = vmatpush1.msra.mxu0 0.0
        %3162 = vmatprep.subr.mxu0 0.0
        %3163 = vmatpush1.msra.mxu0 0.0
        %3164 = vmatprep.subr.mxu0 0.0
        %3165 = vmatpush1.msra.mxu0 0.0
        %3166 = vmatprep.subr.mxu0 0.0
        %3167 = vmatpush1.msra.mxu0 0.0
        %3168 = vmatprep.subr.mxu0 0.0
        %3169 = vmatpush1.msra.mxu0 0.0
        %3170 = vmatprep.subr.mxu0 0.0
        %3171 = vmatpush1.msra.mxu0 0.0
        %3172 = vmatprep.subr.mxu0 0.0
        %3173 = vmatpush1.msra.mxu0 0.0
        %3174 = vmatprep.subr.mxu0 0.0
        %3175 = vmatpush1.msra.mxu0 0.0
        %3176 = vmatprep.subr.mxu0 0.0
        %3177 = vmatpush1.msra.mxu0 0.0
        %3178 = vmatprep.subr.mxu0 0.0
        %3179 = vmatpush1.msra.mxu0 0.0
        %3180 = vmatprep.subr.mxu0 0.0
        %3181 = vmatpush1.msra.mxu0 0.0
        %3182 = vmatprep.subr.mxu0 0.0
        %3183 = vmatpush1.msra.mxu0 0.0
        %3184 = vmatprep.subr.mxu0 0.0
        %3185 = vmatpush1.msra.mxu0 0.0
        %3186 = vmatprep.subr.mxu0 0.0
        %3187 = vmatpush1.msra.mxu0 0.0
        %3188 = vmatprep.subr.mxu0 0.0
        %3189 = vmatpush1.msra.mxu0 0.0
        %3190 = vmatprep.subr.mxu0 0.0
        %3191 = vmatpush1.msra.mxu0 0.0
        %3192 = vmatprep.subr.mxu0 0.0
        %3193 = vmatpush1.msra.mxu0 0.0
        %3194 = vmatprep.subr.mxu0 0.0
        %3195 = vmatpush1.msra.mxu0 0.0
        %3196 = vmatprep.subr.mxu0 0.0
        %3197 = vmatpush1.msra.mxu0 0.0
        %3198 = vmatprep.subr.mxu0 0.0
        %3199 = vmatpush1.msra.mxu0 0.0
        %3200 = vmatprep.subr.mxu0 0.0
        %3201 = vmatpush1.msra.mxu0 0.0
        %3202 = vmatprep.subr.mxu0 0.0
        %3203 = vmatpush1.msra.mxu0 0.0
        %3204 = vmatprep.subr.mxu0 0.0
        %3205 = vmatpush1.msra.mxu0 0.0
        %3206 = vmatprep.subr.mxu0 0.0
        %3207 = vmatpush1.msra.mxu0 0.0
        %3208 = vmatprep.subr.mxu0 0.0
        %3209 = vmatpush1.msra.mxu0 0.0
        %3210 = vmatprep.subr.mxu0 0.0
        %3211 = vmatpush1.msra.mxu0 0.0
        %3212 = vmatprep.mubr.f32.mxu0 0.0
        %3213 = vmatmul.mubr.f32.gmra.mrb[0].mxu0 %v3146
        %v3214 = vpop.f32.mrb[0].mxu0
        %v3215 = vadd.f32 %v3138, %v3214
        %v3216 = vpop.f32.mrb[0].mxu0
        %3217 = vdwg.mxu0
        %v3218 = vld [vmem:[#allocation2 + $0x10] sm:$0xfe]
        %v3219 = vld [vmem:[#allocation2 + $0x20] sm:$0x1]
        %s3220 = scalar_lea.vmem [#allocation29], 48
        %v3221 = vld [vmem:[%s3220] sm:$0xff]
        %v3222 = vld [vmem:[%s3220 + $0x8] sm:$0xff]
        %v3223 = vld [vmem:[%s3220 + $0x10] sm:$0xff]
        %v3226 = vrot.slane %v3218, 1
        %v3227 = vrot.slane %v3219, 1
        %v3228 = vsel %vm2199, %v3226, %v3227
        %v3229 = vsel %vm3067, %v3228, 0
        %3231 = vmatprep.subr.mxu0 0.0
        %3232 = vmatpush1.msra.mxu0 %v3221
        %3233 = vmatprep.subr.mxu0 0.0
        %3234 = vmatpush1.msra.mxu0 %v3222
        %3235 = vmatprep.subr.mxu0 0.0
        %3236 = vmatpush1.msra.mxu0 %v3223
        %3237 = vmatprep.subr.mxu0 0.0
        %3238 = vmatpush1.msra.mxu0 0.0
        %3239 = vmatprep.subr.mxu0 0.0
        %3240 = vmatpush1.msra.mxu0 0.0
        %3241 = vmatprep.subr.mxu0 0.0
        %3242 = vmatpush1.msra.mxu0 0.0
        %3243 = vmatprep.subr.mxu0 0.0
        %3244 = vmatpush1.msra.mxu0 0.0
        %3245 = vmatprep.subr.mxu0 0.0
        %3246 = vmatpush1.msra.mxu0 0.0
        %3247 = vmatprep.subr.mxu0 0.0
        %3248 = vmatpush1.msra.mxu0 0.0
        %3249 = vmatprep.subr.mxu0 0.0
        %3250 = vmatpush1.msra.mxu0 0.0
        %3251 = vmatprep.subr.mxu0 0.0
        %3252 = vmatpush1.msra.mxu0 0.0
        %3253 = vmatprep.subr.mxu0 0.0
        %3254 = vmatpush1.msra.mxu0 0.0
        %3255 = vmatprep.subr.mxu0 0.0
        %3256 = vmatpush1.msra.mxu0 0.0
        %3257 = vmatprep.subr.mxu0 0.0
        %3258 = vmatpush1.msra.mxu0 0.0
        %3259 = vmatprep.subr.mxu0 0.0
        %3260 = vmatpush1.msra.mxu0 0.0
        %3261 = vmatprep.subr.mxu0 0.0
        %3262 = vmatpush1.msra.mxu0 0.0
        %3263 = vmatprep.subr.mxu0 0.0
        %3264 = vmatpush1.msra.mxu0 0.0
        %3265 = vmatprep.subr.mxu0 0.0
        %3266 = vmatpush1.msra.mxu0 0.0
        %3267 = vmatprep.subr.mxu0 0.0
        %3268 = vmatpush1.msra.mxu0 0.0
        %3269 = vmatprep.subr.mxu0 0.0
        %3270 = vmatpush1.msra.mxu0 0.0
        %3271 = vmatprep.subr.mxu0 0.0
        %3272 = vmatpush1.msra.mxu0 0.0
        %3273 = vmatprep.subr.mxu0 0.0
        %3274 = vmatpush1.msra.mxu0 0.0
        %3275 = vmatprep.subr.mxu0 0.0
        %3276 = vmatpush1.msra.mxu0 0.0
        %3277 = vmatprep.subr.mxu0 0.0
        %3278 = vmatpush1.msra.mxu0 0.0
        %3279 = vmatprep.subr.mxu0 0.0
        %3280 = vmatpush1.msra.mxu0 0.0
        %3281 = vmatprep.subr.mxu0 0.0
        %3282 = vmatpush1.msra.mxu0 0.0
        %3283 = vmatprep.subr.mxu0 0.0
        %3284 = vmatpush1.msra.mxu0 0.0
        %3285 = vmatprep.subr.mxu0 0.0
        %3286 = vmatpush1.msra.mxu0 0.0
        %3287 = vmatprep.subr.mxu0 0.0
        %3288 = vmatpush1.msra.mxu0 0.0
        %3289 = vmatprep.subr.mxu0 0.0
        %3290 = vmatpush1.msra.mxu0 0.0
        %3291 = vmatprep.subr.mxu0 0.0
        %3292 = vmatpush1.msra.mxu0 0.0
        %3293 = vmatprep.subr.mxu0 0.0
        %3294 = vmatpush1.msra.mxu0 0.0
        %3295 = vmatprep.mubr.f32.mxu0 0.0
        %3296 = vmatmul.mubr.f32.gmra.mrb[0].mxu0 %v3229
        %v3297 = vpop.f32.mrb[0].mxu0
        %v3298 = vadd.f32 0.0, %v3297
        %v3299 = vpop.f32.mrb[0].mxu0
        %3300 = vdwg.mxu0
        %v3301 = vadd.f32 %v3215, %v3298
        %v3302 = vld [vmem:[%s51] sm:$0xff]
        %v3303 = vmul.f32 %v3301, %v3302
        %v3304 = vld [vmem:[#allocation30] sm:$0xff]
        %v3305 = vadd.f32 %v3303, %v3304
        %vm3306 = vcmp.ge.f32.partialorder %v3305, 0.0
        %v3307 = vmul.f32 %v3305, 0.2
        %v3308 = vsel %vm3306, %v3305, %v3307
        %vm3309 = vcmask 516096
        %3310 = vst.msk [vmem:[#allocation2 + $0x7] sm:$0x1] %vm3309, 0.0
        %3311 = vst.msk [vmem:[#allocation2 + $0x20] sm:$0x1] %vm3309, 0.0
        %vm3312 = vcmask 523264
        %3313 = vst.msk [vmem:[#allocation2 + $0x10] sm:$0xff] %vm3312, %v3308
        %v3314 = vld [vmem:[#allocation2] sm:$0x80]
        %v3315 = vld [vmem:[#allocation2 + $0x10] sm:$0x7f]
        %v3316 = vld [vmem:[#allocation32] sm:$0xff]
        %v3317 = vld [vmem:[#allocation32 + $0x8] sm:$0xff]
        %v3318 = vld [vmem:[#allocation32 + $0x10] sm:$0xff]
        %v3319 = vld [vmem:[#allocation32 + $0x18] sm:$0xff]
        %v3320 = vld [vmem:[#allocation32 + $0x20] sm:$0xff]
        %v3321 = vld [vmem:[#allocation32 + $0x28] sm:$0xff]
        %v3322 = vld [vmem:[#allocation32 + $0x30] sm:$0xff]
        %v3323 = vld [vmem:[#allocation32 + $0x38] sm:$0xff]
        %v3324 = vld [vmem:[#allocation2 + $0x10] sm:$0xff]
        %s3325 = scalar_lea.vmem [#allocation32], 64
        %v3326 = vld [vmem:[%s3325] sm:$0xff]
        %v3327 = vld [vmem:[%s3325 + $0x8] sm:$0xff]
        %v3328 = vld [vmem:[%s3325 + $0x10] sm:$0xff]
        %v3329 = vld [vmem:[%s3325 + $0x18] sm:$0xff]
        %v3330 = vld [vmem:[%s3325 + $0x20] sm:$0xff]
        %v3331 = vld [vmem:[%s3325 + $0x28] sm:$0xff]
        %v3332 = vld [vmem:[%s3325 + $0x30] sm:$0xff]
        %v3333 = vld [vmem:[%s3325 + $0x38] sm:$0xff]
        %v3335 = vsel %vm3312, %v3324, 0
        %3337 = vmatprep.subr.mxu0 0.0
        %3338 = vmatpush1.msra.mxu0 %v3326
        %3339 = vmatprep.subr.mxu0 0.0
        %3340 = vmatpush1.msra.mxu0 %v3327
        %3341 = vmatprep.subr.mxu0 0.0
        %3342 = vmatpush1.msra.mxu0 %v3328
        %3343 = vmatprep.subr.mxu0 0.0
        %3344 = vmatpush1.msra.mxu0 %v3329
        %3345 = vmatprep.subr.mxu0 0.0
        %3346 = vmatpush1.msra.mxu0 %v3330
        %3347 = vmatprep.subr.mxu0 0.0
        %3348 = vmatpush1.msra.mxu0 %v3331
        %3349 = vmatprep.subr.mxu0 0.0
        %3350 = vmatpush1.msra.mxu0 %v3332
        %3351 = vmatprep.subr.mxu0 0.0
        %3352 = vmatpush1.msra.mxu0 %v3333
        %3353 = vmatprep.subr.mxu0 0.0
        %3354 = vmatpush1.msra.mxu0 0.0
        %3355 = vmatprep.subr.mxu0 0.0
        %3356 = vmatpush1.msra.mxu0 0.0
        %3357 = vmatprep.subr.mxu0 0.0
        %3358 = vmatpush1.msra.mxu0 0.0
        %3359 = vmatprep.subr.mxu0 0.0
        %3360 = vmatpush1.msra.mxu0 0.0
        %3361 = vmatprep.subr.mxu0 0.0
        %3362 = vmatpush1.msra.mxu0 0.0
        %3363 = vmatprep.subr.mxu0 0.0
        %3364 = vmatpush1.msra.mxu0 0.0
        %3365 = vmatprep.subr.mxu0 0.0
        %3366 = vmatpush1.msra.mxu0 0.0
        %3367 = vmatprep.subr.mxu0 0.0
        %3368 = vmatpush1.msra.mxu0 0.0
        %3369 = vmatprep.subr.mxu0 0.0
        %3370 = vmatpush1.msra.mxu0 0.0
        %3371 = vmatprep.subr.mxu0 0.0
        %3372 = vmatpush1.msra.mxu0 0.0
        %3373 = vmatprep.subr.mxu0 0.0
        %3374 = vmatpush1.msra.mxu0 0.0
        %3375 = vmatprep.subr.mxu0 0.0
        %3376 = vmatpush1.msra.mxu0 0.0
        %3377 = vmatprep.subr.mxu0 0.0
        %3378 = vmatpush1.msra.mxu0 0.0
        %3379 = vmatprep.subr.mxu0 0.0
        %3380 = vmatpush1.msra.mxu0 0.0
        %3381 = vmatprep.subr.mxu0 0.0
        %3382 = vmatpush1.msra.mxu0 0.0
        %3383 = vmatprep.subr.mxu0 0.0
        %3384 = vmatpush1.msra.mxu0 0.0
        %3385 = vmatprep.subr.mxu0 0.0
        %3386 = vmatpush1.msra.mxu0 0.0
        %3387 = vmatprep.subr.mxu0 0.0
        %3388 = vmatpush1.msra.mxu0 0.0
        %3389 = vmatprep.subr.mxu0 0.0
        %3390 = vmatpush1.msra.mxu0 0.0
        %3391 = vmatprep.subr.mxu0 0.0
        %3392 = vmatpush1.msra.mxu0 0.0
        %3393 = vmatprep.subr.mxu0 0.0
        %3394 = vmatpush1.msra.mxu0 0.0
        %3395 = vmatprep.subr.mxu0 0.0
        %3396 = vmatpush1.msra.mxu0 0.0
        %3397 = vmatprep.subr.mxu0 0.0
        %3398 = vmatpush1.msra.mxu0 0.0
        %3399 = vmatprep.subr.mxu0 0.0
        %3400 = vmatpush1.msra.mxu0 0.0
        %3401 = vmatprep.mubr.f32.mxu0 0.0
        %3402 = vmatmul.mubr.f32.gmra.mrb[0].mxu0 %v3335
        %v3403 = vpop.f32.mrb[0].mxu0
        %v3404 = vadd.f32 0.0, %v3403
        %v3405 = vpop.f32.mrb[0].mxu0
        %3406 = vdwg.mxu0
        %v3409 = vrot.slane %v3314, 7
        %v3410 = vrot.slane %v3315, 7
        %v3411 = vsel %vm2116, %v3409, %v3410
        %v3412 = vsel %vm3312, %v3411, 0
        %3414 = vmatprep.subr.mxu0 0.0
        %3415 = vmatpush1.msra.mxu0 %v3316
        %3416 = vmatprep.subr.mxu0 0.0
        %3417 = vmatpush1.msra.mxu0 %v3317
        %3418 = vmatprep.subr.mxu0 0.0
        %3419 = vmatpush1.msra.mxu0 %v3318
        %3420 = vmatprep.subr.mxu0 0.0
        %3421 = vmatpush1.msra.mxu0 %v3319
        %3422 = vmatprep.subr.mxu0 0.0
        %3423 = vmatpush1.msra.mxu0 %v3320
        %3424 = vmatprep.subr.mxu0 0.0
        %3425 = vmatpush1.msra.mxu0 %v3321
        %3426 = vmatprep.subr.mxu0 0.0
        %3427 = vmatpush1.msra.mxu0 %v3322
        %3428 = vmatprep.subr.mxu0 0.0
        %3429 = vmatpush1.msra.mxu0 %v3323
        %3430 = vmatprep.subr.mxu0 0.0
        %3431 = vmatpush1.msra.mxu0 0.0
        %3432 = vmatprep.subr.mxu0 0.0
        %3433 = vmatpush1.msra.mxu0 0.0
        %3434 = vmatprep.subr.mxu0 0.0
        %3435 = vmatpush1.msra.mxu0 0.0
        %3436 = vmatprep.subr.mxu0 0.0
        %3437 = vmatpush1.msra.mxu0 0.0
        %3438 = vmatprep.subr.mxu0 0.0
        %3439 = vmatpush1.msra.mxu0 0.0
        %3440 = vmatprep.subr.mxu0 0.0
        %3441 = vmatpush1.msra.mxu0 0.0
        %3442 = vmatprep.subr.mxu0 0.0
        %3443 = vmatpush1.msra.mxu0 0.0
        %3444 = vmatprep.subr.mxu0 0.0
        %3445 = vmatpush1.msra.mxu0 0.0
        %3446 = vmatprep.subr.mxu0 0.0
        %3447 = vmatpush1.msra.mxu0 0.0
        %3448 = vmatprep.subr.mxu0 0.0
        %3449 = vmatpush1.msra.mxu0 0.0
        %3450 = vmatprep.subr.mxu0 0.0
        %3451 = vmatpush1.msra.mxu0 0.0
        %3452 = vmatprep.subr.mxu0 0.0
        %3453 = vmatpush1.msra.mxu0 0.0
        %3454 = vmatprep.subr.mxu0 0.0
        %3455 = vmatpush1.msra.mxu0 0.0
        %3456 = vmatprep.subr.mxu0 0.0
        %3457 = vmatpush1.msra.mxu0 0.0
        %3458 = vmatprep.subr.mxu0 0.0
        %3459 = vmatpush1.msra.mxu0 0.0
        %3460 = vmatprep.subr.mxu0 0.0
        %3461 = vmatpush1.msra.mxu0 0.0
        %3462 = vmatprep.subr.mxu0 0.0
        %3463 = vmatpush1.msra.mxu0 0.0
        %3464 = vmatprep.subr.mxu0 0.0
        %3465 = vmatpush1.msra.mxu0 0.0
        %3466 = vmatprep.subr.mxu0 0.0
        %3467 = vmatpush1.msra.mxu0 0.0
        %3468 = vmatprep.subr.mxu0 0.0
        %3469 = vmatpush1.msra.mxu0 0.0
        %3470 = vmatprep.subr.mxu0 0.0
        %3471 = vmatpush1.msra.mxu0 0.0
        %3472 = vmatprep.subr.mxu0 0.0
        %3473 = vmatpush1.msra.mxu0 0.0
        %3474 = vmatprep.subr.mxu0 0.0
        %3475 = vmatpush1.msra.mxu0 0.0
        %3476 = vmatprep.subr.mxu0 0.0
        %3477 = vmatpush1.msra.mxu0 0.0
        %3478 = vmatprep.mubr.f32.mxu0 0.0
        %3479 = vmatmul.mubr.f32.gmra.mrb[0].mxu0 %v3412
        %v3480 = vpop.f32.mrb[0].mxu0
        %v3481 = vadd.f32 %v3404, %v3480
        %v3482 = vpop.f32.mrb[0].mxu0
        %3483 = vdwg.mxu0
        %v3484 = vld [vmem:[#allocation2 + $0x10] sm:$0xfe]
        %v3485 = vld [vmem:[#allocation2 + $0x20] sm:$0x1]
        %s3486 = scalar_lea.vmem [#allocation32], 128
        %v3487 = vld [vmem:[%s3486] sm:$0xff]
        %v3488 = vld [vmem:[%s3486 + $0x8] sm:$0xff]
        %v3489 = vld [vmem:[%s3486 + $0x10] sm:$0xff]
        %v3490 = vld [vmem:[%s3486 + $0x18] sm:$0xff]
        %v3491 = vld [vmem:[%s3486 + $0x20] sm:$0xff]
        %v3492 = vld [vmem:[%s3486 + $0x28] sm:$0xff]
        %v3493 = vld [vmem:[%s3486 + $0x30] sm:$0xff]
        %v3494 = vld [vmem:[%s3486 + $0x38] sm:$0xff]
        %v3497 = vrot.slane %v3484, 1
        %v3498 = vrot.slane %v3485, 1
        %v3499 = vsel %vm2199, %v3497, %v3498
        %v3500 = vsel %vm3312, %v3499, 0
        %3502 = vmatprep.subr.mxu0 0.0
        %3503 = vmatpush1.msra.mxu0 %v3487
        %3504 = vmatprep.subr.mxu0 0.0
        %3505 = vmatpush1.msra.mxu0 %v3488
        %3506 = vmatprep.subr.mxu0 0.0
        %3507 = vmatpush1.msra.mxu0 %v3489
        %3508 = vmatprep.subr.mxu0 0.0
        %3509 = vmatpush1.msra.mxu0 %v3490
        %3510 = vmatprep.subr.mxu0 0.0
        %3511 = vmatpush1.msra.mxu0 %v3491
        %3512 = vmatprep.subr.mxu0 0.0
        %3513 = vmatpush1.msra.mxu0 %v3492
        %3514 = vmatprep.subr.mxu0 0.0
        %3515 = vmatpush1.msra.mxu0 %v3493
        %3516 = vmatprep.subr.mxu0 0.0
        %3517 = vmatpush1.msra.mxu0 %v3494
        %3518 = vmatprep.subr.mxu0 0.0
        %3519 = vmatpush1.msra.mxu0 0.0
        %3520 = vmatprep.subr.mxu0 0.0
        %3521 = vmatpush1.msra.mxu0 0.0
        %3522 = vmatprep.subr.mxu0 0.0
        %3523 = vmatpush1.msra.mxu0 0.0
        %3524 = vmatprep.subr.mxu0 0.0
        %3525 = vmatpush1.msra.mxu0 0.0
        %3526 = vmatprep.subr.mxu0 0.0
        %3527 = vmatpush1.msra.mxu0 0.0
        %3528 = vmatprep.subr.mxu0 0.0
        %3529 = vmatpush1.msra.mxu0 0.0
        %3530 = vmatprep.subr.mxu0 0.0
        %3531 = vmatpush1.msra.mxu0 0.0
        %3532 = vmatprep.subr.mxu0 0.0
        %3533 = vmatpush1.msra.mxu0 0.0
        %3534 = vmatprep.subr.mxu0 0.0
        %3535 = vmatpush1.msra.mxu0 0.0
        %3536 = vmatprep.subr.mxu0 0.0
        %3537 = vmatpush1.msra.mxu0 0.0
        %3538 = vmatprep.subr.mxu0 0.0
        %3539 = vmatpush1.msra.mxu0 0.0
        %3540 = vmatprep.subr.mxu0 0.0
        %3541 = vmatpush1.msra.mxu0 0.0
        %3542 = vmatprep.subr.mxu0 0.0
        %3543 = vmatpush1.msra.mxu0 0.0
        %3544 = vmatprep.subr.mxu0 0.0
        %3545 = vmatpush1.msra.mxu0 0.0
        %3546 = vmatprep.subr.mxu0 0.0
        %3547 = vmatpush1.msra.mxu0 0.0
        %3548 = vmatprep.subr.mxu0 0.0
        %3549 = vmatpush1.msra.mxu0 0.0
        %3550 = vmatprep.subr.mxu0 0.0
        %3551 = vmatpush1.msra.mxu0 0.0
        %3552 = vmatprep.subr.mxu0 0.0
        %3553 = vmatpush1.msra.mxu0 0.0
        %3554 = vmatprep.subr.mxu0 0.0
        %3555 = vmatpush1.msra.mxu0 0.0
        %3556 = vmatprep.subr.mxu0 0.0
        %3557 = vmatpush1.msra.mxu0 0.0
        %3558 = vmatprep.subr.mxu0 0.0
        %3559 = vmatpush1.msra.mxu0 0.0
        %3560 = vmatprep.subr.mxu0 0.0
        %3561 = vmatpush1.msra.mxu0 0.0
        %3562 = vmatprep.subr.mxu0 0.0
        %3563 = vmatpush1.msra.mxu0 0.0
        %3564 = vmatprep.subr.mxu0 0.0
        %3565 = vmatpush1.msra.mxu0 0.0
        %3566 = vmatprep.mubr.f32.mxu0 0.0
        %3567 = vmatmul.mubr.f32.gmra.mrb[0].mxu0 %v3500
        %v3568 = vpop.f32.mrb[0].mxu0
        %v3569 = vadd.f32 0.0, %v3568
        %v3570 = vpop.f32.mrb[0].mxu0
        %3571 = vdwg.mxu0
        %v3572 = vadd.f32 %v3481, %v3569
        %v3573 = vld [vmem:[#allocation33] sm:$0xff]
        %v3574 = vmul.f32 %v3572, %v3573
        %v3575 = vld [vmem:[#allocation35] sm:$0xff]
        %v3576 = vadd.f32 %v3574, %v3575
        %vm3577 = vcmp.ge.f32.partialorder %v3576, 0.0
        %v3578 = vmul.f32 %v3576, 0.2
        %v3579 = vsel %vm3577, %v3576, %v3578
        %3580 = vst.msk [vmem:[#allocation3] sm:$0xff] %vm3312, %v3579
        %3581 = vst.msk [vmem:[#allocation2 + $0x7] sm:$0x1] %vm3309, 0.0
        %3582 = vst.msk [vmem:[#allocation2 + $0x14] sm:$0x1] %vm3309, 0.0
        %v3583 = vld [vmem:[#allocation3] sm:$0x3]
        %vm3584 = vcmask 517120
        %v3585 = vsel %vm3584, %v3583, -inf
        %v3586 = vrot.slane %v3585, 4
        %v3587 = vmax.f32 %v3585, %v3586
        %v3588 = vrot.slane %v3587, 2
        %v3589 = vmax.f32 %v3587, %v3588
        %v3590 = vrot.slane %v3589, 1
        %v3591 = vmax.f32 %v3589, %v3590
        %3592 = vst.msk [vmem:[#allocation2 + $0x10] sm:$0x1] %vm3309, %v3591
        %v3593 = vld [vmem:[#allocation3 + $0x2] sm:$0x3]
        %v3594 = vsel %vm3584, %v3593, -inf
        %v3595 = vrot.slane %v3594, 4
        %v3596 = vmax.f32 %v3594, %v3595
        %v3597 = vrot.slane %v3596, 2
        %v3598 = vmax.f32 %v3596, %v3597
        %v3599 = vrot.slane %v3598, 1
        %v3600 = vmax.f32 %v3598, %v3599
        %3601 = vst.msk [vmem:[#allocation2 + $0x11] sm:$0x1] %vm3309, %v3600
        %v3602 = vld [vmem:[#allocation3 + $0x4] sm:$0x3]
        %v3603 = vsel %vm3584, %v3602, -inf
        %v3604 = vrot.slane %v3603, 4
        %v3605 = vmax.f32 %v3603, %v3604
        %v3606 = vrot.slane %v3605, 2
        %v3607 = vmax.f32 %v3605, %v3606
        %v3608 = vrot.slane %v3607, 1
        %v3609 = vmax.f32 %v3607, %v3608
        %3610 = vst.msk [vmem:[#allocation2 + $0x12] sm:$0x1] %vm3309, %v3609
        %v3611 = vld [vmem:[#allocation3 + $0x6] sm:$0x3]
        %v3612 = vsel %vm3584, %v3611, -inf
        %v3613 = vrot.slane %v3612, 4
        %v3614 = vmax.f32 %v3612, %v3613
        %v3615 = vrot.slane %v3614, 2
        %v3616 = vmax.f32 %v3614, %v3615
        %v3617 = vrot.slane %v3616, 1
        %v3618 = vmax.f32 %v3616, %v3617
        %3619 = vst.msk [vmem:[#allocation2 + $0x13] sm:$0x1] %vm3309, %v3618
        %v3620 = vld [vmem:[#allocation2] sm:$0x80]
        %v3621 = vld [vmem:[#allocation2 + $0x10] sm:$0x7]
        %v3622 = vld [vmem:[#allocation36] sm:$0xff]
        %v3623 = vld [vmem:[#allocation36 + $0x8] sm:$0xff]
        %v3624 = vld [vmem:[#allocation36 + $0x10] sm:$0xff]
        %v3625 = vld [vmem:[#allocation36 + $0x18] sm:$0xff]
        %v3626 = vld [vmem:[#allocation36 + $0x20] sm:$0xff]
        %v3627 = vld [vmem:[#allocation36 + $0x28] sm:$0xff]
        %v3628 = vld [vmem:[#allocation36 + $0x30] sm:$0xff]
        %v3629 = vld [vmem:[#allocation36 + $0x38] sm:$0xff]
        %v3630 = vld [vmem:[#allocation2 + $0x10] sm:$0xf]
        %s3631 = scalar_lea.vmem [#allocation36], 64
        %v3632 = vld [vmem:[%s3631] sm:$0xff]
        %v3633 = vld [vmem:[%s3631 + $0x8] sm:$0xff]
        %v3634 = vld [vmem:[%s3631 + $0x10] sm:$0xff]
        %v3635 = vld [vmem:[%s3631 + $0x18] sm:$0xff]
        %v3636 = vld [vmem:[%s3631 + $0x20] sm:$0xff]
        %v3637 = vld [vmem:[%s3631 + $0x28] sm:$0xff]
        %v3638 = vld [vmem:[%s3631 + $0x30] sm:$0xff]
        %v3639 = vld [vmem:[%s3631 + $0x38] sm:$0xff]
        %v3641 = vsel %vm3312, %v3630, 0
        %3643 = vmatprep.subr.mxu0 0.0
        %3644 = vmatpush1.msra.mxu0 %v3632
        %3645 = vmatprep.subr.mxu0 0.0
        %3646 = vmatpush1.msra.mxu0 %v3633
        %3647 = vmatprep.subr.mxu0 0.0
        %3648 = vmatpush1.msra.mxu0 %v3634
        %3649 = vmatprep.subr.mxu0 0.0
        %3650 = vmatpush1.msra.mxu0 %v3635
        %3651 = vmatprep.subr.mxu0 0.0
        %3652 = vmatpush1.msra.mxu0 %v3636
        %3653 = vmatprep.subr.mxu0 0.0
        %3654 = vmatpush1.msra.mxu0 %v3637
        %3655 = vmatprep.subr.mxu0 0.0
        %3656 = vmatpush1.msra.mxu0 %v3638
        %3657 = vmatprep.subr.mxu0 0.0
        %3658 = vmatpush1.msra.mxu0 %v3639
        %3659 = vmatprep.subr.mxu0 0.0
        %3660 = vmatpush1.msra.mxu0 0.0
        %3661 = vmatprep.subr.mxu0 0.0
        %3662 = vmatpush1.msra.mxu0 0.0
        %3663 = vmatprep.subr.mxu0 0.0
        %3664 = vmatpush1.msra.mxu0 0.0
        %3665 = vmatprep.subr.mxu0 0.0
        %3666 = vmatpush1.msra.mxu0 0.0
        %3667 = vmatprep.subr.mxu0 0.0
        %3668 = vmatpush1.msra.mxu0 0.0
        %3669 = vmatprep.subr.mxu0 0.0
        %3670 = vmatpush1.msra.mxu0 0.0
        %3671 = vmatprep.subr.mxu0 0.0
        %3672 = vmatpush1.msra.mxu0 0.0
        %3673 = vmatprep.subr.mxu0 0.0
        %3674 = vmatpush1.msra.mxu0 0.0
        %3675 = vmatprep.subr.mxu0 0.0
        %3676 = vmatpush1.msra.mxu0 0.0
        %3677 = vmatprep.subr.mxu0 0.0
        %3678 = vmatpush1.msra.mxu0 0.0
        %3679 = vmatprep.subr.mxu0 0.0
        %3680 = vmatpush1.msra.mxu0 0.0
        %3681 = vmatprep.subr.mxu0 0.0
        %3682 = vmatpush1.msra.mxu0 0.0
        %3683 = vmatprep.subr.mxu0 0.0
        %3684 = vmatpush1.msra.mxu0 0.0
        %3685 = vmatprep.subr.mxu0 0.0
        %3686 = vmatpush1.msra.mxu0 0.0
        %3687 = vmatprep.subr.mxu0 0.0
        %3688 = vmatpush1.msra.mxu0 0.0
        %3689 = vmatprep.subr.mxu0 0.0
        %3690 = vmatpush1.msra.mxu0 0.0
        %3691 = vmatprep.subr.mxu0 0.0
        %3692 = vmatpush1.msra.mxu0 0.0
        %3693 = vmatprep.subr.mxu0 0.0
        %3694 = vmatpush1.msra.mxu0 0.0
        %3695 = vmatprep.subr.mxu0 0.0
        %3696 = vmatpush1.msra.mxu0 0.0
        %3697 = vmatprep.subr.mxu0 0.0
        %3698 = vmatpush1.msra.mxu0 0.0
        %3699 = vmatprep.subr.mxu0 0.0
        %3700 = vmatpush1.msra.mxu0 0.0
        %3701 = vmatprep.subr.mxu0 0.0
        %3702 = vmatpush1.msra.mxu0 0.0
        %3703 = vmatprep.subr.mxu0 0.0
        %3704 = vmatpush1.msra.mxu0 0.0
        %3705 = vmatprep.subr.mxu0 0.0
        %3706 = vmatpush1.msra.mxu0 0.0
        %3707 = vmatprep.mubr.f32.mxu0 0.0
        %3708 = vmatmul.mubr.f32.gmra.mrb[0].mxu0 %v3641
        %v3709 = vpop.f32.mrb[0].mxu0
        %v3710 = vadd.f32 0.0, %v3709
        %v3711 = vpop.f32.mrb[0].mxu0
        %3712 = vdwg.mxu0
        %v3715 = vrot.slane %v3620, 7
        %v3716 = vrot.slane %v3621, 7
        %v3717 = vsel %vm2116, %v3715, %v3716
        %v3718 = vsel %vm3312, %v3717, 0
        %3720 = vmatprep.subr.mxu0 0.0
        %3721 = vmatpush1.msra.mxu0 %v3622
        %3722 = vmatprep.subr.mxu0 0.0
        %3723 = vmatpush1.msra.mxu0 %v3623
        %3724 = vmatprep.subr.mxu0 0.0
        %3725 = vmatpush1.msra.mxu0 %v3624
        %3726 = vmatprep.subr.mxu0 0.0
        %3727 = vmatpush1.msra.mxu0 %v3625
        %3728 = vmatprep.subr.mxu0 0.0
        %3729 = vmatpush1.msra.mxu0 %v3626
        %3730 = vmatprep.subr.mxu0 0.0
        %3731 = vmatpush1.msra.mxu0 %v3627
        %3732 = vmatprep.subr.mxu0 0.0
        %3733 = vmatpush1.msra.mxu0 %v3628
        %3734 = vmatprep.subr.mxu0 0.0
        %3735 = vmatpush1.msra.mxu0 %v3629
        %3736 = vmatprep.subr.mxu0 0.0
        %3737 = vmatpush1.msra.mxu0 0.0
        %3738 = vmatprep.subr.mxu0 0.0
        %3739 = vmatpush1.msra.mxu0 0.0
        %3740 = vmatprep.subr.mxu0 0.0
        %3741 = vmatpush1.msra.mxu0 0.0
        %3742 = vmatprep.subr.mxu0 0.0
        %3743 = vmatpush1.msra.mxu0 0.0
        %3744 = vmatprep.subr.mxu0 0.0
        %3745 = vmatpush1.msra.mxu0 0.0
        %3746 = vmatprep.subr.mxu0 0.0
        %3747 = vmatpush1.msra.mxu0 0.0
        %3748 = vmatprep.subr.mxu0 0.0
        %3749 = vmatpush1.msra.mxu0 0.0
        %3750 = vmatprep.subr.mxu0 0.0
        %3751 = vmatpush1.msra.mxu0 0.0
        %3752 = vmatprep.subr.mxu0 0.0
        %3753 = vmatpush1.msra.mxu0 0.0
        %3754 = vmatprep.subr.mxu0 0.0
        %3755 = vmatpush1.msra.mxu0 0.0
        %3756 = vmatprep.subr.mxu0 0.0
        %3757 = vmatpush1.msra.mxu0 0.0
        %3758 = vmatprep.subr.mxu0 0.0
        %3759 = vmatpush1.msra.mxu0 0.0
        %3760 = vmatprep.subr.mxu0 0.0
        %3761 = vmatpush1.msra.mxu0 0.0
        %3762 = vmatprep.subr.mxu0 0.0
        %3763 = vmatpush1.msra.mxu0 0.0
        %3764 = vmatprep.subr.mxu0 0.0
        %3765 = vmatpush1.msra.mxu0 0.0
        %3766 = vmatprep.subr.mxu0 0.0
        %3767 = vmatpush1.msra.mxu0 0.0
        %3768 = vmatprep.subr.mxu0 0.0
        %3769 = vmatpush1.msra.mxu0 0.0
        %3770 = vmatprep.subr.mxu0 0.0
        %3771 = vmatpush1.msra.mxu0 0.0
        %3772 = vmatprep.subr.mxu0 0.0
        %3773 = vmatpush1.msra.mxu0 0.0
        %3774 = vmatprep.subr.mxu0 0.0
        %3775 = vmatpush1.msra.mxu0 0.0
        %3776 = vmatprep.subr.mxu0 0.0
        %3777 = vmatpush1.msra.mxu0 0.0
        %3778 = vmatprep.subr.mxu0 0.0
        %3779 = vmatpush1.msra.mxu0 0.0
        %3780 = vmatprep.subr.mxu0 0.0
        %3781 = vmatpush1.msra.mxu0 0.0
        %3782 = vmatprep.subr.mxu0 0.0
        %3783 = vmatpush1.msra.mxu0 0.0
        %3784 = vmatprep.mubr.f32.mxu0 0.0
        %3785 = vmatmul.mubr.f32.gmra.mrb[0].mxu0 %v3718
        %v3786 = vpop.f32.mrb[0].mxu0
        %v3787 = vadd.f32 %v3710, %v3786
        %v3788 = vpop.f32.mrb[0].mxu0
        %3789 = vdwg.mxu0
        %v3790 = vld [vmem:[#allocation2 + $0x10] sm:$0x1e]
        %s3791 = scalar_lea.vmem [#allocation36], 128
        %v3792 = vld [vmem:[%s3791] sm:$0xff]
        %v3793 = vld [vmem:[%s3791 + $0x8] sm:$0xff]
        %v3794 = vld [vmem:[%s3791 + $0x10] sm:$0xff]
        %v3795 = vld [vmem:[%s3791 + $0x18] sm:$0xff]
        %v3796 = vld [vmem:[%s3791 + $0x20] sm:$0xff]
        %v3797 = vld [vmem:[%s3791 + $0x28] sm:$0xff]
        %v3798 = vld [vmem:[%s3791 + $0x30] sm:$0xff]
        %v3799 = vld [vmem:[%s3791 + $0x38] sm:$0xff]
        %v3801 = vrot.slane %v3790, 1
        %v3802 = vsel %vm3312, %v3801, 0
        %3804 = vmatprep.subr.mxu0 0.0
        %3805 = vmatpush1.msra.mxu0 %v3792
        %3806 = vmatprep.subr.mxu0 0.0
        %3807 = vmatpush1.msra.mxu0 %v3793
        %3808 = vmatprep.subr.mxu0 0.0
        %3809 = vmatpush1.msra.mxu0 %v3794
        %3810 = vmatprep.subr.mxu0 0.0
        %3811 = vmatpush1.msra.mxu0 %v3795
        %3812 = vmatprep.subr.mxu0 0.0
        %3813 = vmatpush1.msra.mxu0 %v3796
        %3814 = vmatprep.subr.mxu0 0.0
        %3815 = vmatpush1.msra.mxu0 %v3797
        %3816 = vmatprep.subr.mxu0 0.0
        %3817 = vmatpush1.msra.mxu0 %v3798
        %3818 = vmatprep.subr.mxu0 0.0
        %3819 = vmatpush1.msra.mxu0 %v3799
        %3820 = vmatprep.subr.mxu0 0.0
        %3821 = vmatpush1.msra.mxu0 0.0
        %3822 = vmatprep.subr.mxu0 0.0
        %3823 = vmatpush1.msra.mxu0 0.0
        %3824 = vmatprep.subr.mxu0 0.0
        %3825 = vmatpush1.msra.mxu0 0.0
        %3826 = vmatprep.subr.mxu0 0.0
        %3827 = vmatpush1.msra.mxu0 0.0
        %3828 = vmatprep.subr.mxu0 0.0
        %3829 = vmatpush1.msra.mxu0 0.0
        %3830 = vmatprep.subr.mxu0 0.0
        %3831 = vmatpush1.msra.mxu0 0.0
        %3832 = vmatprep.subr.mxu0 0.0
        %3833 = vmatpush1.msra.mxu0 0.0
        %3834 = vmatprep.subr.mxu0 0.0
        %3835 = vmatpush1.msra.mxu0 0.0
        %3836 = vmatprep.subr.mxu0 0.0
        %3837 = vmatpush1.msra.mxu0 0.0
        %3838 = vmatprep.subr.mxu0 0.0
        %3839 = vmatpush1.msra.mxu0 0.0
        %3840 = vmatprep.subr.mxu0 0.0
        %3841 = vmatpush1.msra.mxu0 0.0
        %3842 = vmatprep.subr.mxu0 0.0
        %3843 = vmatpush1.msra.mxu0 0.0
        %3844 = vmatprep.subr.mxu0 0.0
        %3845 = vmatpush1.msra.mxu0 0.0
        %3846 = vmatprep.subr.mxu0 0.0
        %3847 = vmatpush1.msra.mxu0 0.0
        %3848 = vmatprep.subr.mxu0 0.0
        %3849 = vmatpush1.msra.mxu0 0.0
        %3850 = vmatprep.subr.mxu0 0.0
        %3851 = vmatpush1.msra.mxu0 0.0
        %3852 = vmatprep.subr.mxu0 0.0
        %3853 = vmatpush1.msra.mxu0 0.0
        %3854 = vmatprep.subr.mxu0 0.0
        %3855 = vmatpush1.msra.mxu0 0.0
        %3856 = vmatprep.subr.mxu0 0.0
        %3857 = vmatpush1.msra.mxu0 0.0
        %3858 = vmatprep.subr.mxu0 0.0
        %3859 = vmatpush1.msra.mxu0 0.0
        %3860 = vmatprep.subr.mxu0 0.0
        %3861 = vmatpush1.msra.mxu0 0.0
        %3862 = vmatprep.subr.mxu0 0.0
        %3863 = vmatpush1.msra.mxu0 0.0
        %3864 = vmatprep.subr.mxu0 0.0
        %3865 = vmatpush1.msra.mxu0 0.0
        %3866 = vmatprep.subr.mxu0 0.0
        %3867 = vmatpush1.msra.mxu0 0.0
        %3868 = vmatprep.mubr.f32.mxu0 0.0
        %3869 = vmatmul.mubr.f32.gmra.mrb[0].mxu0 %v3802
        %v3870 = vpop.f32.mrb[0].mxu0
        %v3871 = vadd.f32 0.0, %v3870
        %v3872 = vpop.f32.mrb[0].mxu0
        %3873 = vdwg.mxu0
        %v3874 = vadd.f32 %v3787, %v3871
        %v3875 = vld [vmem:[#allocation38] sm:$0xf]
        %v3876 = vmul.f32 %v3874, %v3875
        %v3877 = vld [vmem:[#allocation39] sm:$0xf]
        %v3878 = vadd.f32 %v3876, %v3877
        %vm3879 = vcmp.ge.f32.partialorder %v3878, 0.0
        %v3880 = vmul.f32 %v3878, 0.2
        %v3881 = vsel %vm3879, %v3878, %v3880
        %3882 = vst [vmem:[#allocation2 + $0x7] sm:$0x1] 0.0
        %3883 = vst [vmem:[#allocation2 + $0x14] sm:$0x1] 0.0
        %3884 = vst [vmem:[#allocation2 + $0x10] sm:$0xf] %v3881
        %v3885 = vld [vmem:[#allocation2] sm:$0x80]
        %v3886 = vld [vmem:[#allocation2 + $0x10] sm:$0x7]
        %v3887 = vld [vmem:[#allocation41] sm:$0xff]
        %v3888 = vld [vmem:[#allocation41 + $0x8] sm:$0xff]
        %v3889 = vld [vmem:[#allocation41 + $0x10] sm:$0xff]
        %v3890 = vld [vmem:[#allocation41 + $0x18] sm:$0xff]
        %v3891 = vld [vmem:[#allocation41 + $0x20] sm:$0xff]
        %v3892 = vld [vmem:[#allocation41 + $0x28] sm:$0xff]
        %v3893 = vld [vmem:[#allocation41 + $0x30] sm:$0xff]
        %v3894 = vld [vmem:[#allocation41 + $0x38] sm:$0xff]
        %v3895 = vld [vmem:[#allocation41 + $0x40] sm:$0xff]
        %v3896 = vld [vmem:[#allocation41 + $0x48] sm:$0xff]
        %v3897 = vld [vmem:[#allocation41 + $0x50] sm:$0xff]
        %v3898 = vld [vmem:[#allocation41 + $0x58] sm:$0xff]
        %v3899 = vld [vmem:[#allocation41 + $0x60] sm:$0xff]
        %v3900 = vld [vmem:[#allocation41 + $0x68] sm:$0xff]
        %v3901 = vld [vmem:[#allocation41 + $0x70] sm:$0xff]
        %v3902 = vld [vmem:[#allocation41 + $0x78] sm:$0xff]
        %v3903 = vld [vmem:[#allocation2 + $0x10] sm:$0xf]
        %s3904 = scalar_lea.vmem [#allocation41], 128
        %v3905 = vld [vmem:[%s3904] sm:$0xff]
        %v3906 = vld [vmem:[%s3904 + $0x8] sm:$0xff]
        %v3907 = vld [vmem:[%s3904 + $0x10] sm:$0xff]
        %v3908 = vld [vmem:[%s3904 + $0x18] sm:$0xff]
        %v3909 = vld [vmem:[%s3904 + $0x20] sm:$0xff]
        %v3910 = vld [vmem:[%s3904 + $0x28] sm:$0xff]
        %v3911 = vld [vmem:[%s3904 + $0x30] sm:$0xff]
        %v3912 = vld [vmem:[%s3904 + $0x38] sm:$0xff]
        %v3913 = vld [vmem:[%s3904 + $0x40] sm:$0xff]
        %v3914 = vld [vmem:[%s3904 + $0x48] sm:$0xff]
        %v3915 = vld [vmem:[%s3904 + $0x50] sm:$0xff]
        %v3916 = vld [vmem:[%s3904 + $0x58] sm:$0xff]
        %v3917 = vld [vmem:[%s3904 + $0x60] sm:$0xff]
        %v3918 = vld [vmem:[%s3904 + $0x68] sm:$0xff]
        %v3919 = vld [vmem:[%s3904 + $0x70] sm:$0xff]
        %v3920 = vld [vmem:[%s3904 + $0x78] sm:$0xff]
        %3921 = vmatprep.subr.mxu0 0.0
        %3922 = vmatpush1.msra.mxu0 %v3905
        %3923 = vmatprep.subr.mxu0 0.0
        %3924 = vmatpush1.msra.mxu0 %v3906
        %3925 = vmatprep.subr.mxu0 0.0
        %3926 = vmatpush1.msra.mxu0 %v3907
        %3927 = vmatprep.subr.mxu0 0.0
        %3928 = vmatpush1.msra.mxu0 %v3908
        %3929 = vmatprep.subr.mxu0 0.0
        %3930 = vmatpush1.msra.mxu0 %v3909
        %3931 = vmatprep.subr.mxu0 0.0
        %3932 = vmatpush1.msra.mxu0 %v3910
        %3933 = vmatprep.subr.mxu0 0.0
        %3934 = vmatpush1.msra.mxu0 %v3911
        %3935 = vmatprep.subr.mxu0 0.0
        %3936 = vmatpush1.msra.mxu0 %v3912
        %3937 = vmatprep.subr.mxu0 0.0
        %3938 = vmatpush1.msra.mxu0 %v3913
        %3939 = vmatprep.subr.mxu0 0.0
        %3940 = vmatpush1.msra.mxu0 %v3914
        %3941 = vmatprep.subr.mxu0 0.0
        %3942 = vmatpush1.msra.mxu0 %v3915
        %3943 = vmatprep.subr.mxu0 0.0
        %3944 = vmatpush1.msra.mxu0 %v3916
        %3945 = vmatprep.subr.mxu0 0.0
        %3946 = vmatpush1.msra.mxu0 %v3917
        %3947 = vmatprep.subr.mxu0 0.0
        %3948 = vmatpush1.msra.mxu0 %v3918
        %3949 = vmatprep.subr.mxu0 0.0
        %3950 = vmatpush1.msra.mxu0 %v3919
        %3951 = vmatprep.subr.mxu0 0.0
        %3952 = vmatpush1.msra.mxu0 %v3920
        %3953 = vmatprep.subr.mxu0 0.0
        %3954 = vmatpush1.msra.mxu0 0.0
        %3955 = vmatprep.subr.mxu0 0.0
        %3956 = vmatpush1.msra.mxu0 0.0
        %3957 = vmatprep.subr.mxu0 0.0
        %3958 = vmatpush1.msra.mxu0 0.0
        %3959 = vmatprep.subr.mxu0 0.0
        %3960 = vmatpush1.msra.mxu0 0.0
        %3961 = vmatprep.subr.mxu0 0.0
        %3962 = vmatpush1.msra.mxu0 0.0
        %3963 = vmatprep.subr.mxu0 0.0
        %3964 = vmatpush1.msra.mxu0 0.0
        %3965 = vmatprep.subr.mxu0 0.0
        %3966 = vmatpush1.msra.mxu0 0.0
        %3967 = vmatprep.subr.mxu0 0.0
        %3968 = vmatpush1.msra.mxu0 0.0
        %3969 = vmatprep.subr.mxu0 0.0
        %3970 = vmatpush1.msra.mxu0 0.0
        %3971 = vmatprep.subr.mxu0 0.0
        %3972 = vmatpush1.msra.mxu0 0.0
        %3973 = vmatprep.subr.mxu0 0.0
        %3974 = vmatpush1.msra.mxu0 0.0
        %3975 = vmatprep.subr.mxu0 0.0
        %3976 = vmatpush1.msra.mxu0 0.0
        %3977 = vmatprep.subr.mxu0 0.0
        %3978 = vmatpush1.msra.mxu0 0.0
        %3979 = vmatprep.subr.mxu0 0.0
        %3980 = vmatpush1.msra.mxu0 0.0
        %3981 = vmatprep.subr.mxu0 0.0
        %3982 = vmatpush1.msra.mxu0 0.0
        %3983 = vmatprep.subr.mxu0 0.0
        %3984 = vmatpush1.msra.mxu0 0.0
        %3985 = vmatprep.mubr.f32.mxu0 0.0
        %3986 = vmatmul.mubr.f32.gmra.mrb[0].mxu0 %v3903
        %v3987 = vpop.f32.mrb[0].mxu0
        %v3988 = vadd.f32 0.0, %v3987
        %v3989 = vpop.f32.mrb[0].mxu0
        %3990 = vdwg.mxu0
        %v3993 = vrot.slane %v3885, 7
        %v3994 = vrot.slane %v3886, 7
        %v3995 = vsel %vm2116, %v3993, %v3994
        %3997 = vmatprep.subr.mxu0 0.0
        %3998 = vmatpush1.msra.mxu0 %v3887
        %3999 = vmatprep.subr.mxu0 0.0
        %4000 = vmatpush1.msra.mxu0 %v3888
        %4001 = vmatprep.subr.mxu0 0.0
        %4002 = vmatpush1.msra.mxu0 %v3889
        %4003 = vmatprep.subr.mxu0 0.0
        %4004 = vmatpush1.msra.mxu0 %v3890
        %4005 = vmatprep.subr.mxu0 0.0
        %4006 = vmatpush1.msra.mxu0 %v3891
        %4007 = vmatprep.subr.mxu0 0.0
        %4008 = vmatpush1.msra.mxu0 %v3892
        %4009 = vmatprep.subr.mxu0 0.0
        %4010 = vmatpush1.msra.mxu0 %v3893
        %4011 = vmatprep.subr.mxu0 0.0
        %4012 = vmatpush1.msra.mxu0 %v3894
        %4013 = vmatprep.subr.mxu0 0.0
        %4014 = vmatpush1.msra.mxu0 %v3895
        %4015 = vmatprep.subr.mxu0 0.0
        %4016 = vmatpush1.msra.mxu0 %v3896
        %4017 = vmatprep.subr.mxu0 0.0
        %4018 = vmatpush1.msra.mxu0 %v3897
        %4019 = vmatprep.subr.mxu0 0.0
        %4020 = vmatpush1.msra.mxu0 %v3898
        %4021 = vmatprep.subr.mxu0 0.0
        %4022 = vmatpush1.msra.mxu0 %v3899
        %4023 = vmatprep.subr.mxu0 0.0
        %4024 = vmatpush1.msra.mxu0 %v3900
        %4025 = vmatprep.subr.mxu0 0.0
        %4026 = vmatpush1.msra.mxu0 %v3901
        %4027 = vmatprep.subr.mxu0 0.0
        %4028 = vmatpush1.msra.mxu0 %v3902
        %4029 = vmatprep.subr.mxu0 0.0
        %4030 = vmatpush1.msra.mxu0 0.0
        %4031 = vmatprep.subr.mxu0 0.0
        %4032 = vmatpush1.msra.mxu0 0.0
        %4033 = vmatprep.subr.mxu0 0.0
        %4034 = vmatpush1.msra.mxu0 0.0
        %4035 = vmatprep.subr.mxu0 0.0
        %4036 = vmatpush1.msra.mxu0 0.0
        %4037 = vmatprep.subr.mxu0 0.0
        %4038 = vmatpush1.msra.mxu0 0.0
        %4039 = vmatprep.subr.mxu0 0.0
        %4040 = vmatpush1.msra.mxu0 0.0
        %4041 = vmatprep.subr.mxu0 0.0
        %4042 = vmatpush1.msra.mxu0 0.0
        %4043 = vmatprep.subr.mxu0 0.0
        %4044 = vmatpush1.msra.mxu0 0.0
        %4045 = vmatprep.subr.mxu0 0.0
        %4046 = vmatpush1.msra.mxu0 0.0
        %4047 = vmatprep.subr.mxu0 0.0
        %4048 = vmatpush1.msra.mxu0 0.0
        %4049 = vmatprep.subr.mxu0 0.0
        %4050 = vmatpush1.msra.mxu0 0.0
        %4051 = vmatprep.subr.mxu0 0.0
        %4052 = vmatpush1.msra.mxu0 0.0
        %4053 = vmatprep.subr.mxu0 0.0
        %4054 = vmatpush1.msra.mxu0 0.0
        %4055 = vmatprep.subr.mxu0 0.0
        %4056 = vmatpush1.msra.mxu0 0.0
        %4057 = vmatprep.subr.mxu0 0.0
        %4058 = vmatpush1.msra.mxu0 0.0
        %4059 = vmatprep.subr.mxu0 0.0
        %4060 = vmatpush1.msra.mxu0 0.0
        %4061 = vmatprep.mubr.f32.mxu0 0.0
        %4062 = vmatmul.mubr.f32.gmra.mrb[0].mxu0 %v3995
        %v4063 = vpop.f32.mrb[0].mxu0
        %v4064 = vadd.f32 %v3988, %v4063
        %v4065 = vpop.f32.mrb[0].mxu0
        %4066 = vdwg.mxu0
        %v4067 = vld [vmem:[#allocation2 + $0x10] sm:$0x1e]
        %s4068 = scalar_lea.vmem [#allocation41], 256
        %v4069 = vld [vmem:[%s4068] sm:$0xff]
        %v4070 = vld [vmem:[%s4068 + $0x8] sm:$0xff]
        %v4071 = vld [vmem:[%s4068 + $0x10] sm:$0xff]
        %v4072 = vld [vmem:[%s4068 + $0x18] sm:$0xff]
        %v4073 = vld [vmem:[%s4068 + $0x20] sm:$0xff]
        %v4074 = vld [vmem:[%s4068 + $0x28] sm:$0xff]
        %v4075 = vld [vmem:[%s4068 + $0x30] sm:$0xff]
        %v4076 = vld [vmem:[%s4068 + $0x38] sm:$0xff]
        %v4077 = vld [vmem:[%s4068 + $0x40] sm:$0xff]
        %v4078 = vld [vmem:[%s4068 + $0x48] sm:$0xff]
        %v4079 = vld [vmem:[%s4068 + $0x50] sm:$0xff]
        %v4080 = vld [vmem:[%s4068 + $0x58] sm:$0xff]
        %v4081 = vld [vmem:[%s4068 + $0x60] sm:$0xff]
        %v4082 = vld [vmem:[%s4068 + $0x68] sm:$0xff]
        %v4083 = vld [vmem:[%s4068 + $0x70] sm:$0xff]
        %v4084 = vld [vmem:[%s4068 + $0x78] sm:$0xff]
        %v4086 = vrot.slane %v4067, 1
        %4088 = vmatprep.subr.mxu0 0.0
        %4089 = vmatpush1.msra.mxu0 %v4069
        %4090 = vmatprep.subr.mxu0 0.0
        %4091 = vmatpush1.msra.mxu0 %v4070
        %4092 = vmatprep.subr.mxu0 0.0
        %4093 = vmatpush1.msra.mxu0 %v4071
        %4094 = vmatprep.subr.mxu0 0.0
        %4095 = vmatpush1.msra.mxu0 %v4072
        %4096 = vmatprep.subr.mxu0 0.0
        %4097 = vmatpush1.msra.mxu0 %v4073
        %4098 = vmatprep.subr.mxu0 0.0
        %4099 = vmatpush1.msra.mxu0 %v4074
        %4100 = vmatprep.subr.mxu0 0.0
        %4101 = vmatpush1.msra.mxu0 %v4075
        %4102 = vmatprep.subr.mxu0 0.0
        %4103 = vmatpush1.msra.mxu0 %v4076
        %4104 = vmatprep.subr.mxu0 0.0
        %4105 = vmatpush1.msra.mxu0 %v4077
        %4106 = vmatprep.subr.mxu0 0.0
        %4107 = vmatpush1.msra.mxu0 %v4078
        %4108 = vmatprep.subr.mxu0 0.0
        %4109 = vmatpush1.msra.mxu0 %v4079
        %4110 = vmatprep.subr.mxu0 0.0
        %4111 = vmatpush1.msra.mxu0 %v4080
        %4112 = vmatprep.subr.mxu0 0.0
        %4113 = vmatpush1.msra.mxu0 %v4081
        %4114 = vmatprep.subr.mxu0 0.0
        %4115 = vmatpush1.msra.mxu0 %v4082
        %4116 = vmatprep.subr.mxu0 0.0
        %4117 = vmatpush1.msra.mxu0 %v4083
        %4118 = vmatprep.subr.mxu0 0.0
        %4119 = vmatpush1.msra.mxu0 %v4084
        %4120 = vmatprep.subr.mxu0 0.0
        %4121 = vmatpush1.msra.mxu0 0.0
        %4122 = vmatprep.subr.mxu0 0.0
        %4123 = vmatpush1.msra.mxu0 0.0
        %4124 = vmatprep.subr.mxu0 0.0
        %4125 = vmatpush1.msra.mxu0 0.0
        %4126 = vmatprep.subr.mxu0 0.0
        %4127 = vmatpush1.msra.mxu0 0.0
        %4128 = vmatprep.subr.mxu0 0.0
        %4129 = vmatpush1.msra.mxu0 0.0
        %4130 = vmatprep.subr.mxu0 0.0
        %4131 = vmatpush1.msra.mxu0 0.0
        %4132 = vmatprep.subr.mxu0 0.0
        %4133 = vmatpush1.msra.mxu0 0.0
        %4134 = vmatprep.subr.mxu0 0.0
        %4135 = vmatpush1.msra.mxu0 0.0
        %4136 = vmatprep.subr.mxu0 0.0
        %4137 = vmatpush1.msra.mxu0 0.0
        %4138 = vmatprep.subr.mxu0 0.0
        %4139 = vmatpush1.msra.mxu0 0.0
        %4140 = vmatprep.subr.mxu0 0.0
        %4141 = vmatpush1.msra.mxu0 0.0
        %4142 = vmatprep.subr.mxu0 0.0
        %4143 = vmatpush1.msra.mxu0 0.0
        %4144 = vmatprep.subr.mxu0 0.0
        %4145 = vmatpush1.msra.mxu0 0.0
        %4146 = vmatprep.subr.mxu0 0.0
        %4147 = vmatpush1.msra.mxu0 0.0
        %4148 = vmatprep.subr.mxu0 0.0
        %4149 = vmatpush1.msra.mxu0 0.0
        %4150 = vmatprep.subr.mxu0 0.0
        %4151 = vmatpush1.msra.mxu0 0.0
        %4152 = vmatprep.mubr.f32.mxu0 0.0
        %4153 = vmatmul.mubr.f32.gmra.mrb[0].mxu0 %v4086
        %v4154 = vpop.f32.mrb[0].mxu0
        %v4155 = vadd.f32 0.0, %v4154
        %v4156 = vpop.f32.mrb[0].mxu0
        %4157 = vdwg.mxu0
        %v4158 = vadd.f32 %v4064, %v4155
        %v4159 = vld [vmem:[%s69] sm:$0xf]
        %v4160 = vmul.f32 %v4158, %v4159
        %v4161 = vld [vmem:[%s71] sm:$0xf]
        %v4162 = vadd.f32 %v4160, %v4161
        %vm4163 = vcmp.ge.f32.partialorder %v4162, 0.0
        %v4164 = vmul.f32 %v4162, 0.2
        %v4165 = vsel %vm4163, %v4162, %v4164
        %4166 = vst [vmem:[#allocation3] sm:$0xf] %v4165
        %4167 = vst [vmem:[#allocation2 + $0x7] sm:$0x1] 0.0
        %4168 = vst [vmem:[#allocation2 + $0x12] sm:$0x1] 0.0
        %v4169 = vld [vmem:[#allocation3] sm:$0x3]
        %vm4170 = vcmask 1041408
        %v4171 = vsel %vm4170, %v4169, -inf
        %v4172 = vrot.slane %v4171, 4
        %v4173 = vmax.f32 %v4171, %v4172
        %v4174 = vrot.slane %v4173, 2
        %v4175 = vmax.f32 %v4173, %v4174
        %v4176 = vrot.slane %v4175, 1
        %v4177 = vmax.f32 %v4175, %v4176
        %4178 = vst [vmem:[#allocation2 + $0x10] sm:$0x1] %v4177
        %v4179 = vld [vmem:[#allocation3 + $0x2] sm:$0x3]
        %v4180 = vsel %vm4170, %v4179, -inf
        %v4181 = vrot.slane %v4180, 4
        %v4182 = vmax.f32 %v4180, %v4181
        %v4183 = vrot.slane %v4182, 2
        %v4184 = vmax.f32 %v4182, %v4183
        %v4185 = vrot.slane %v4184, 1
        %v4186 = vmax.f32 %v4184, %v4185
        %4187 = vst [vmem:[#allocation2 + $0x11] sm:$0x1] %v4186
        %v4188 = vld [vmem:[#allocation2] sm:$0x80]
        %v4189 = vld [vmem:[#allocation2 + $0x10] sm:$0x1]
        %v4190 = vld [vmem:[#allocation42] sm:$0xff]
        %v4191 = vld [vmem:[#allocation42 + $0x8] sm:$0xff]
        %v4192 = vld [vmem:[#allocation42 + $0x10] sm:$0xff]
        %v4193 = vld [vmem:[#allocation42 + $0x18] sm:$0xff]
        %v4194 = vld [vmem:[#allocation42 + $0x20] sm:$0xff]
        %v4195 = vld [vmem:[#allocation42 + $0x28] sm:$0xff]
        %v4196 = vld [vmem:[#allocation42 + $0x30] sm:$0xff]
        %v4197 = vld [vmem:[#allocation42 + $0x38] sm:$0xff]
        %v4198 = vld [vmem:[#allocation42 + $0x40] sm:$0xff]
        %v4199 = vld [vmem:[#allocation42 + $0x48] sm:$0xff]
        %v4200 = vld [vmem:[#allocation42 + $0x50] sm:$0xff]
        %v4201 = vld [vmem:[#allocation42 + $0x58] sm:$0xff]
        %v4202 = vld [vmem:[#allocation42 + $0x60] sm:$0xff]
        %v4203 = vld [vmem:[#allocation42 + $0x68] sm:$0xff]
        %v4204 = vld [vmem:[#allocation42 + $0x70] sm:$0xff]
        %v4205 = vld [vmem:[#allocation42 + $0x78] sm:$0xff]
        %v4206 = vld [vmem:[#allocation42 + $0x80] sm:$0xff]
        %v4207 = vld [vmem:[#allocation42 + $0x88] sm:$0xff]
        %v4208 = vld [vmem:[#allocation42 + $0x90] sm:$0xff]
        %v4209 = vld [vmem:[#allocation42 + $0x98] sm:$0xff]
        %v4210 = vld [vmem:[#allocation42 + $0xa0] sm:$0xff]
        %v4211 = vld [vmem:[#allocation42 + $0xa8] sm:$0xff]
        %v4212 = vld [vmem:[#allocation42 + $0xb0] sm:$0xff]
        %v4213 = vld [vmem:[#allocation42 + $0xb8] sm:$0xff]
        %v4214 = vld [vmem:[#allocation42 + $0xc0] sm:$0xff]
        %v4215 = vld [vmem:[#allocation42 + $0xc8] sm:$0xff]
        %v4216 = vld [vmem:[#allocation42 + $0xd0] sm:$0xff]
        %v4217 = vld [vmem:[#allocation42 + $0xd8] sm:$0xff]
        %v4218 = vld [vmem:[#allocation42 + $0xe0] sm:$0xff]
        %v4219 = vld [vmem:[#allocation42 + $0xe8] sm:$0xff]
        %v4220 = vld [vmem:[#allocation42 + $0xf0] sm:$0xff]
        %v4221 = vld [vmem:[#allocation42 + $0xf8] sm:$0xff]
        %v4222 = vld [vmem:[#allocation2 + $0x10] sm:$0x3]
        %s4223 = scalar_lea.vmem [#allocation42], 256
        %v4224 = vld [vmem:[%s4223] sm:$0xff]
        %v4225 = vld [vmem:[%s4223 + $0x8] sm:$0xff]
        %v4226 = vld [vmem:[%s4223 + $0x10] sm:$0xff]
        %v4227 = vld [vmem:[%s4223 + $0x18] sm:$0xff]
        %v4228 = vld [vmem:[%s4223 + $0x20] sm:$0xff]
        %v4229 = vld [vmem:[%s4223 + $0x28] sm:$0xff]
        %v4230 = vld [vmem:[%s4223 + $0x30] sm:$0xff]
        %v4231 = vld [vmem:[%s4223 + $0x38] sm:$0xff]
        %v4232 = vld [vmem:[%s4223 + $0x40] sm:$0xff]
        %v4233 = vld [vmem:[%s4223 + $0x48] sm:$0xff]
        %v4234 = vld [vmem:[%s4223 + $0x50] sm:$0xff]
        %v4235 = vld [vmem:[%s4223 + $0x58] sm:$0xff]
        %v4236 = vld [vmem:[%s4223 + $0x60] sm:$0xff]
        %v4237 = vld [vmem:[%s4223 + $0x68] sm:$0xff]
        %v4238 = vld [vmem:[%s4223 + $0x70] sm:$0xff]
        %v4239 = vld [vmem:[%s4223 + $0x78] sm:$0xff]
        %v4240 = vld [vmem:[%s4223 + $0x80] sm:$0xff]
        %v4241 = vld [vmem:[%s4223 + $0x88] sm:$0xff]
        %v4242 = vld [vmem:[%s4223 + $0x90] sm:$0xff]
        %v4243 = vld [vmem:[%s4223 + $0x98] sm:$0xff]
        %v4244 = vld [vmem:[%s4223 + $0xa0] sm:$0xff]
        %v4245 = vld [vmem:[%s4223 + $0xa8] sm:$0xff]
        %v4246 = vld [vmem:[%s4223 + $0xb0] sm:$0xff]
        %v4247 = vld [vmem:[%s4223 + $0xb8] sm:$0xff]
        %v4248 = vld [vmem:[%s4223 + $0xc0] sm:$0xff]
        %v4249 = vld [vmem:[%s4223 + $0xc8] sm:$0xff]
        %v4250 = vld [vmem:[%s4223 + $0xd0] sm:$0xff]
        %v4251 = vld [vmem:[%s4223 + $0xd8] sm:$0xff]
        %v4252 = vld [vmem:[%s4223 + $0xe0] sm:$0xff]
        %v4253 = vld [vmem:[%s4223 + $0xe8] sm:$0xff]
        %v4254 = vld [vmem:[%s4223 + $0xf0] sm:$0xff]
        %v4255 = vld [vmem:[%s4223 + $0xf8] sm:$0xff]
        %4256 = vmatprep.subr.mxu0 %v4225
        %4257 = vmatpush1.msra.mxu0 %v4224
        %4258 = vmatprep.subr.mxu0 %v4227
        %4259 = vmatpush1.msra.mxu0 %v4226
        %4260 = vmatprep.subr.mxu0 %v4229
        %4261 = vmatpush1.msra.mxu0 %v4228
        %4262 = vmatprep.subr.mxu0 %v4231
        %4263 = vmatpush1.msra.mxu0 %v4230
        %4264 = vmatprep.subr.mxu0 %v4233
        %4265 = vmatpush1.msra.mxu0 %v4232
        %4266 = vmatprep.subr.mxu0 %v4235
        %4267 = vmatpush1.msra.mxu0 %v4234
        %4268 = vmatprep.subr.mxu0 %v4237
        %4269 = vmatpush1.msra.mxu0 %v4236
        %4270 = vmatprep.subr.mxu0 %v4239
        %4271 = vmatpush1.msra.mxu0 %v4238
        %4272 = vmatprep.subr.mxu0 %v4241
        %4273 = vmatpush1.msra.mxu0 %v4240
        %4274 = vmatprep.subr.mxu0 %v4243
        %4275 = vmatpush1.msra.mxu0 %v4242
        %4276 = vmatprep.subr.mxu0 %v4245
        %4277 = vmatpush1.msra.mxu0 %v4244
        %4278 = vmatprep.subr.mxu0 %v4247
        %4279 = vmatpush1.msra.mxu0 %v4246
        %4280 = vmatprep.subr.mxu0 %v4249
        %4281 = vmatpush1.msra.mxu0 %v4248
        %4282 = vmatprep.subr.mxu0 %v4251
        %4283 = vmatpush1.msra.mxu0 %v4250
        %4284 = vmatprep.subr.mxu0 %v4253
        %4285 = vmatpush1.msra.mxu0 %v4252
        %4286 = vmatprep.subr.mxu0 %v4255
        %4287 = vmatpush1.msra.mxu0 %v4254
        %4288 = vmatprep.subr.mxu0 0.0
        %4289 = vmatpush1.msra.mxu0 0.0
        %4290 = vmatprep.subr.mxu0 0.0
        %4291 = vmatpush1.msra.mxu0 0.0
        %4292 = vmatprep.subr.mxu0 0.0
        %4293 = vmatpush1.msra.mxu0 0.0
        %4294 = vmatprep.subr.mxu0 0.0
        %4295 = vmatpush1.msra.mxu0 0.0
        %4296 = vmatprep.subr.mxu0 0.0
        %4297 = vmatpush1.msra.mxu0 0.0
        %4298 = vmatprep.subr.mxu0 0.0
        %4299 = vmatpush1.msra.mxu0 0.0
        %4300 = vmatprep.subr.mxu0 0.0
        %4301 = vmatpush1.msra.mxu0 0.0
        %4302 = vmatprep.subr.mxu0 0.0
        %4303 = vmatpush1.msra.mxu0 0.0
        %4304 = vmatprep.subr.mxu0 0.0
        %4305 = vmatpush1.msra.mxu0 0.0
        %4306 = vmatprep.subr.mxu0 0.0
        %4307 = vmatpush1.msra.mxu0 0.0
        %4308 = vmatprep.subr.mxu0 0.0
        %4309 = vmatpush1.msra.mxu0 0.0
        %4310 = vmatprep.subr.mxu0 0.0
        %4311 = vmatpush1.msra.mxu0 0.0
        %4312 = vmatprep.subr.mxu0 0.0
        %4313 = vmatpush1.msra.mxu0 0.0
        %4314 = vmatprep.subr.mxu0 0.0
        %4315 = vmatpush1.msra.mxu0 0.0
        %4316 = vmatprep.subr.mxu0 0.0
        %4317 = vmatpush1.msra.mxu0 0.0
        %4318 = vmatprep.subr.mxu0 0.0
        %4319 = vmatpush1.msra.mxu0 0.0
        %4320 = vmatprep.mubr.f32.mxu0 0.0
        %4321 = vmatmul.mubr.f32.gmra.mrb[0].mxu0 %v4222
        %v4322 = vpop.f32.mrb[0].mxu0
        %v4323 = vadd.f32 0.0, %v4322
        %v4324 = vpop.f32.mrb[0].mxu0
        %v4325 = vadd.f32 0.0, %v4324
        %4326 = vdwg.mxu0
        %v4329 = vrot.slane %v4188, 7
        %v4330 = vrot.slane %v4189, 7
        %v4331 = vsel %vm2116, %v4329, %v4330
        %4333 = vmatprep.subr.mxu0 %v4191
        %4334 = vmatpush1.msra.mxu0 %v4190
        %4335 = vmatprep.subr.mxu0 %v4193
        %4336 = vmatpush1.msra.mxu0 %v4192
        %4337 = vmatprep.subr.mxu0 %v4195
        %4338 = vmatpush1.msra.mxu0 %v4194
        %4339 = vmatprep.subr.mxu0 %v4197
        %4340 = vmatpush1.msra.mxu0 %v4196
        %4341 = vmatprep.subr.mxu0 %v4199
        %4342 = vmatpush1.msra.mxu0 %v4198
        %4343 = vmatprep.subr.mxu0 %v4201
        %4344 = vmatpush1.msra.mxu0 %v4200
        %4345 = vmatprep.subr.mxu0 %v4203
        %4346 = vmatpush1.msra.mxu0 %v4202
        %4347 = vmatprep.subr.mxu0 %v4205
        %4348 = vmatpush1.msra.mxu0 %v4204
        %4349 = vmatprep.subr.mxu0 %v4207
        %4350 = vmatpush1.msra.mxu0 %v4206
        %4351 = vmatprep.subr.mxu0 %v4209
        %4352 = vmatpush1.msra.mxu0 %v4208
        %4353 = vmatprep.subr.mxu0 %v4211
        %4354 = vmatpush1.msra.mxu0 %v4210
        %4355 = vmatprep.subr.mxu0 %v4213
        %4356 = vmatpush1.msra.mxu0 %v4212
        %4357 = vmatprep.subr.mxu0 %v4215
        %4358 = vmatpush1.msra.mxu0 %v4214
        %4359 = vmatprep.subr.mxu0 %v4217
        %4360 = vmatpush1.msra.mxu0 %v4216
        %4361 = vmatprep.subr.mxu0 %v4219
        %4362 = vmatpush1.msra.mxu0 %v4218
        %4363 = vmatprep.subr.mxu0 %v4221
        %4364 = vmatpush1.msra.mxu0 %v4220
        %4365 = vmatprep.subr.mxu0 0.0
        %4366 = vmatpush1.msra.mxu0 0.0
        %4367 = vmatprep.subr.mxu0 0.0
        %4368 = vmatpush1.msra.mxu0 0.0
        %4369 = vmatprep.subr.mxu0 0.0
        %4370 = vmatpush1.msra.mxu0 0.0
        %4371 = vmatprep.subr.mxu0 0.0
        %4372 = vmatpush1.msra.mxu0 0.0
        %4373 = vmatprep.subr.mxu0 0.0
        %4374 = vmatpush1.msra.mxu0 0.0
        %4375 = vmatprep.subr.mxu0 0.0
        %4376 = vmatpush1.msra.mxu0 0.0
        %4377 = vmatprep.subr.mxu0 0.0
        %4378 = vmatpush1.msra.mxu0 0.0
        %4379 = vmatprep.subr.mxu0 0.0
        %4380 = vmatpush1.msra.mxu0 0.0
        %4381 = vmatprep.subr.mxu0 0.0
        %4382 = vmatpush1.msra.mxu0 0.0
        %4383 = vmatprep.subr.mxu0 0.0
        %4384 = vmatpush1.msra.mxu0 0.0
        %4385 = vmatprep.subr.mxu0 0.0
        %4386 = vmatpush1.msra.mxu0 0.0
        %4387 = vmatprep.subr.mxu0 0.0
        %4388 = vmatpush1.msra.mxu0 0.0
        %4389 = vmatprep.subr.mxu0 0.0
        %4390 = vmatpush1.msra.mxu0 0.0
        %4391 = vmatprep.subr.mxu0 0.0
        %4392 = vmatpush1.msra.mxu0 0.0
        %4393 = vmatprep.subr.mxu0 0.0
        %4394 = vmatpush1.msra.mxu0 0.0
        %4395 = vmatprep.subr.mxu0 0.0
        %4396 = vmatpush1.msra.mxu0 0.0
        %4397 = vmatprep.mubr.f32.mxu0 0.0
        %4398 = vmatmul.mubr.f32.gmra.mrb[0].mxu0 %v4331
        %v4399 = vpop.f32.mrb[0].mxu0
        %v4400 = vadd.f32 %v4323, %v4399
        %v4401 = vpop.f32.mrb[0].mxu0
        %v4402 = vadd.f32 %v4325, %v4401
        %4403 = vdwg.mxu0
        %v4404 = vld [vmem:[#allocation2 + $0x10] sm:$0x6]
        %s4405 = scalar_lea.vmem [#allocation42], 512
        %v4406 = vld [vmem:[%s4405] sm:$0xff]
        %v4407 = vld [vmem:[%s4405 + $0x8] sm:$0xff]
        %v4408 = vld [vmem:[%s4405 + $0x10] sm:$0xff]
        %v4409 = vld [vmem:[%s4405 + $0x18] sm:$0xff]
        %v4410 = vld [vmem:[%s4405 + $0x20] sm:$0xff]
        %v4411 = vld [vmem:[%s4405 + $0x28] sm:$0xff]
        %v4412 = vld [vmem:[%s4405 + $0x30] sm:$0xff]
        %v4413 = vld [vmem:[%s4405 + $0x38] sm:$0xff]
        %v4414 = vld [vmem:[%s4405 + $0x40] sm:$0xff]
        %v4415 = vld [vmem:[%s4405 + $0x48] sm:$0xff]
        %v4416 = vld [vmem:[%s4405 + $0x50] sm:$0xff]
        %v4417 = vld [vmem:[%s4405 + $0x58] sm:$0xff]
        %v4418 = vld [vmem:[%s4405 + $0x60] sm:$0xff]
        %v4419 = vld [vmem:[%s4405 + $0x68] sm:$0xff]
        %v4420 = vld [vmem:[%s4405 + $0x70] sm:$0xff]
        %v4421 = vld [vmem:[%s4405 + $0x78] sm:$0xff]
        %v4422 = vld [vmem:[%s4405 + $0x80] sm:$0xff]
        %v4423 = vld [vmem:[%s4405 + $0x88] sm:$0xff]
        %v4424 = vld [vmem:[%s4405 + $0x90] sm:$0xff]
        %v4425 = vld [vmem:[%s4405 + $0x98] sm:$0xff]
        %v4426 = vld [vmem:[%s4405 + $0xa0] sm:$0xff]
        %v4427 = vld [vmem:[%s4405 + $0xa8] sm:$0xff]
        %v4428 = vld [vmem:[%s4405 + $0xb0] sm:$0xff]
        %v4429 = vld [vmem:[%s4405 + $0xb8] sm:$0xff]
        %v4430 = vld [vmem:[%s4405 + $0xc0] sm:$0xff]
        %v4431 = vld [vmem:[%s4405 + $0xc8] sm:$0xff]
        %v4432 = vld [vmem:[%s4405 + $0xd0] sm:$0xff]
        %v4433 = vld [vmem:[%s4405 + $0xd8] sm:$0xff]
        %v4434 = vld [vmem:[%s4405 + $0xe0] sm:$0xff]
        %v4435 = vld [vmem:[%s4405 + $0xe8] sm:$0xff]
        %v4436 = vld [vmem:[%s4405 + $0xf0] sm:$0xff]
        %v4437 = vld [vmem:[%s4405 + $0xf8] sm:$0xff]
        %v4439 = vrot.slane %v4404, 1
        %4441 = vmatprep.subr.mxu0 %v4407
        %4442 = vmatpush1.msra.mxu0 %v4406
        %4443 = vmatprep.subr.mxu0 %v4409
        %4444 = vmatpush1.msra.mxu0 %v4408
        %4445 = vmatprep.subr.mxu0 %v4411
        %4446 = vmatpush1.msra.mxu0 %v4410
        %4447 = vmatprep.subr.mxu0 %v4413
        %4448 = vmatpush1.msra.mxu0 %v4412
        %4449 = vmatprep.subr.mxu0 %v4415
        %4450 = vmatpush1.msra.mxu0 %v4414
        %4451 = vmatprep.subr.mxu0 %v4417
        %4452 = vmatpush1.msra.mxu0 %v4416
        %4453 = vmatprep.subr.mxu0 %v4419
        %4454 = vmatpush1.msra.mxu0 %v4418
        %4455 = vmatprep.subr.mxu0 %v4421
        %4456 = vmatpush1.msra.mxu0 %v4420
        %4457 = vmatprep.subr.mxu0 %v4423
        %4458 = vmatpush1.msra.mxu0 %v4422
        %4459 = vmatprep.subr.mxu0 %v4425
        %4460 = vmatpush1.msra.mxu0 %v4424
        %4461 = vmatprep.subr.mxu0 %v4427
        %4462 = vmatpush1.msra.mxu0 %v4426
        %4463 = vmatprep.subr.mxu0 %v4429
        %4464 = vmatpush1.msra.mxu0 %v4428
        %4465 = vmatprep.subr.mxu0 %v4431
        %4466 = vmatpush1.msra.mxu0 %v4430
        %4467 = vmatprep.subr.mxu0 %v4433
        %4468 = vmatpush1.msra.mxu0 %v4432
        %4469 = vmatprep.subr.mxu0 %v4435
        %4470 = vmatpush1.msra.mxu0 %v4434
        %4471 = vmatprep.subr.mxu0 %v4437
        %4472 = vmatpush1.msra.mxu0 %v4436
        %4473 = vmatprep.subr.mxu0 0.0
        %4474 = vmatpush1.msra.mxu0 0.0
        %4475 = vmatprep.subr.mxu0 0.0
        %4476 = vmatpush1.msra.mxu0 0.0
        %4477 = vmatprep.subr.mxu0 0.0
        %4478 = vmatpush1.msra.mxu0 0.0
        %4479 = vmatprep.subr.mxu0 0.0
        %4480 = vmatpush1.msra.mxu0 0.0
        %4481 = vmatprep.subr.mxu0 0.0
        %4482 = vmatpush1.msra.mxu0 0.0
        %4483 = vmatprep.subr.mxu0 0.0
        %4484 = vmatpush1.msra.mxu0 0.0
        %4485 = vmatprep.subr.mxu0 0.0
        %4486 = vmatpush1.msra.mxu0 0.0
        %4487 = vmatprep.subr.mxu0 0.0
        %4488 = vmatpush1.msra.mxu0 0.0
        %4489 = vmatprep.subr.mxu0 0.0
        %4490 = vmatpush1.msra.mxu0 0.0
        %4491 = vmatprep.subr.mxu0 0.0
        %4492 = vmatpush1.msra.mxu0 0.0
        %4493 = vmatprep.subr.mxu0 0.0
        %4494 = vmatpush1.msra.mxu0 0.0
        %4495 = vmatprep.subr.mxu0 0.0
        %4496 = vmatpush1.msra.mxu0 0.0
        %4497 = vmatprep.subr.mxu0 0.0
        %4498 = vmatpush1.msra.mxu0 0.0
        %4499 = vmatprep.subr.mxu0 0.0
        %4500 = vmatpush1.msra.mxu0 0.0
        %4501 = vmatprep.subr.mxu0 0.0
        %4502 = vmatpush1.msra.mxu0 0.0
        %4503 = vmatprep.subr.mxu0 0.0
        %4504 = vmatpush1.msra.mxu0 0.0
        %4505 = vmatprep.mubr.f32.mxu0 0.0
        %4506 = vmatmul.mubr.f32.gmra.mrb[0].mxu0 %v4439
        %v4507 = vpop.f32.mrb[0].mxu0
        %v4508 = vadd.f32 0.0, %v4507
        %v4509 = vpop.f32.mrb[0].mxu0
        %v4510 = vadd.f32 0.0, %v4509
        %4511 = vdwg.mxu0
        %v4512 = vadd.f32 %v4400, %v4508
        %v4513 = vadd.f32 %v4402, %v4510
        %v4514 = vld [vmem:[%s75] sm:$0xf]
        %v4517 = vunpack.c.l.s4 1983009808
        %v4518 = vunpack.c.0.s8 %v4517
        %v4519 = vlaneseq
        %v4520 = vshrl.u32 %v4519, 7
        %v4521 = vsub.s32 %v4518, %v4520
        %v4522 = vrot.slane %v4514, %v4521
        %v4523 = vcombine.high %v4522, %v4522
        %v4526 = vmul.f32 %v4512, %v4522
        %v4527 = vmul.f32 %v4513, %v4523
        %v4528 = vld [vmem:[%s77] sm:$0xf]
        %v4531 = vunpack.c.l.s4 1983009808
        %v4532 = vunpack.c.0.s8 %v4531
        %v4533 = vlaneseq
        %v4534 = vshrl.u32 %v4533, 7
        %v4535 = vsub.s32 %v4532, %v4534
        %v4536 = vrot.slane %v4528, %v4535
        %v4537 = vcombine.high %v4536, %v4536
        %v4540 = vadd.f32 %v4526, %v4536
        %v4541 = vadd.f32 %v4527, %v4537
        %vm4542 = vcmp.ge.f32.partialorder %v4540, 0.0
        %vm4543 = vcmp.ge.f32.partialorder %v4541, 0.0
        %v4544 = vmul.f32 %v4540, 0.2
        %v4545 = vmul.f32 %v4541, 0.2
        %v4546 = vsel %vm4542, %v4540, %v4544
        %v4547 = vsel %vm4543, %v4541, %v4545
        %v4548 = vlaneseq
        %vm4549 = vcmp.ge.s32.totalorder %v4548, 0
        %vm4550 = vcmp.lt.s32.totalorder %v4548, 256
        %vm4551 = vmand %vm4549, %vm4550
        %s4552 = scalar_lea.vmem [#allocation2], 7
        %4553 = vst.msk [vmem:[%s4552] ss:$8 sm:$0x3] %vm4551, 0.0
        %4554 = vst.msk [vmem:[%s4552] ss:$8 sm:$0x0] %vm4551, 0.0
        %s4555 = scalar_lea.vmem [#allocation2], 18
        %4556 = vst.msk [vmem:[%s4555] ss:$8 sm:$0x3] %vm4551, 0.0
        %4557 = vst.msk [vmem:[%s4555] ss:$8 sm:$0x0] %vm4551, 0.0
        %4558 = vst [vmem:[#allocation2 + $0x10] sm:$0x3] %v4546
        %4559 = vst [vmem:[#allocation2 + $0x18] sm:$0x3] %v4547
        %v4560 = vld [vmem:[#allocation2] sm:$0x80]
        %v4561 = vld [vmem:[#allocation2 + $0x8] sm:$0x80]
        %v4562 = vld [vmem:[#allocation2 + $0x10] sm:$0x1]
        %v4563 = vld [vmem:[#allocation2 + $0x18] sm:$0x1]
        %v4564 = vld [vmem:[%s79] sm:$0xff]
        %v4565 = vld [vmem:[%s79 + $0x8] sm:$0xff]
        %v4566 = vld [vmem:[%s79 + $0x10] sm:$0xff]
        %v4567 = vld [vmem:[%s79 + $0x18] sm:$0xff]
        %v4568 = vld [vmem:[%s79 + $0x20] sm:$0xff]
        %v4569 = vld [vmem:[%s79 + $0x28] sm:$0xff]
        %v4570 = vld [vmem:[%s79 + $0x30] sm:$0xff]
        %v4571 = vld [vmem:[%s79 + $0x38] sm:$0xff]
        %v4572 = vld [vmem:[%s79 + $0x40] sm:$0xff]
        %v4573 = vld [vmem:[%s79 + $0x48] sm:$0xff]
        %v4574 = vld [vmem:[%s79 + $0x50] sm:$0xff]
        %v4575 = vld [vmem:[%s79 + $0x58] sm:$0xff]
        %v4576 = vld [vmem:[%s79 + $0x60] sm:$0xff]
        %v4577 = vld [vmem:[%s79 + $0x68] sm:$0xff]
        %v4578 = vld [vmem:[%s79 + $0x70] sm:$0xff]
        %v4579 = vld [vmem:[%s79 + $0x78] sm:$0xff]
        %v4580 = vld [vmem:[%s79 + $0x80] sm:$0xff]
        %v4581 = vld [vmem:[%s79 + $0x88] sm:$0xff]
        %v4582 = vld [vmem:[%s79 + $0x90] sm:$0xff]
        %v4583 = vld [vmem:[%s79 + $0x98] sm:$0xff]
        %v4584 = vld [vmem:[%s79 + $0xa0] sm:$0xff]
        %v4585 = vld [vmem:[%s79 + $0xa8] sm:$0xff]
        %v4586 = vld [vmem:[%s79 + $0xb0] sm:$0xff]
        %v4587 = vld [vmem:[%s79 + $0xb8] sm:$0xff]
        %v4588 = vld [vmem:[%s79 + $0xc0] sm:$0xff]
        %v4589 = vld [vmem:[%s79 + $0xc8] sm:$0xff]
        %v4590 = vld [vmem:[%s79 + $0xd0] sm:$0xff]
        %v4591 = vld [vmem:[%s79 + $0xd8] sm:$0xff]
        %v4592 = vld [vmem:[%s79 + $0xe0] sm:$0xff]
        %v4593 = vld [vmem:[%s79 + $0xe8] sm:$0xff]
        %v4594 = vld [vmem:[%s79 + $0xf0] sm:$0xff]
        %v4595 = vld [vmem:[%s79 + $0xf8] sm:$0xff]
        %v4596 = vld [vmem:[%s79 + $0x100] sm:$0xff]
        %v4597 = vld [vmem:[%s79 + $0x108] sm:$0xff]
        %v4598 = vld [vmem:[%s79 + $0x110] sm:$0xff]
        %v4599 = vld [vmem:[%s79 + $0x118] sm:$0xff]
        %v4600 = vld [vmem:[%s79 + $0x120] sm:$0xff]
        %v4601 = vld [vmem:[%s79 + $0x128] sm:$0xff]
        %v4602 = vld [vmem:[%s79 + $0x130] sm:$0xff]
        %v4603 = vld [vmem:[%s79 + $0x138] sm:$0xff]
        %v4604 = vld [vmem:[%s79 + $0x140] sm:$0xff]
        %v4605 = vld [vmem:[%s79 + $0x148] sm:$0xff]
        %v4606 = vld [vmem:[%s79 + $0x150] sm:$0xff]
        %v4607 = vld [vmem:[%s79 + $0x158] sm:$0xff]
        %v4608 = vld [vmem:[%s79 + $0x160] sm:$0xff]
        %v4609 = vld [vmem:[%s79 + $0x168] sm:$0xff]
        %v4610 = vld [vmem:[%s79 + $0x170] sm:$0xff]
        %v4611 = vld [vmem:[%s79 + $0x178] sm:$0xff]
        %v4612 = vld [vmem:[%s79 + $0x180] sm:$0xff]
        %v4613 = vld [vmem:[%s79 + $0x188] sm:$0xff]
        %v4614 = vld [vmem:[%s79 + $0x190] sm:$0xff]
        %v4615 = vld [vmem:[%s79 + $0x198] sm:$0xff]
        %v4616 = vld [vmem:[%s79 + $0x1a0] sm:$0xff]
        %v4617 = vld [vmem:[%s79 + $0x1a8] sm:$0xff]
        %v4618 = vld [vmem:[%s79 + $0x1b0] sm:$0xff]
        %v4619 = vld [vmem:[%s79 + $0x1b8] sm:$0xff]
        %v4620 = vld [vmem:[%s79 + $0x1c0] sm:$0xff]
        %v4621 = vld [vmem:[%s79 + $0x1c8] sm:$0xff]
        %v4622 = vld [vmem:[%s79 + $0x1d0] sm:$0xff]
        %v4623 = vld [vmem:[%s79 + $0x1d8] sm:$0xff]
        %v4624 = vld [vmem:[%s79 + $0x1e0] sm:$0xff]
        %v4625 = vld [vmem:[%s79 + $0x1e8] sm:$0xff]
        %v4626 = vld [vmem:[%s79 + $0x1f0] sm:$0xff]
        %v4627 = vld [vmem:[%s79 + $0x1f8] sm:$0xff]
        %v4628 = vld [vmem:[#allocation2 + $0x10] sm:$0x3]
        %v4629 = vld [vmem:[#allocation2 + $0x18] sm:$0x3]
        %s4630 = scalar_lea.vmem %s79, 512
        %v4631 = vld [vmem:[%s4630] sm:$0xff]
        %v4632 = vld [vmem:[%s4630 + $0x8] sm:$0xff]
        %v4633 = vld [vmem:[%s4630 + $0x10] sm:$0xff]
        %v4634 = vld [vmem:[%s4630 + $0x18] sm:$0xff]
        %v4635 = vld [vmem:[%s4630 + $0x20] sm:$0xff]
        %v4636 = vld [vmem:[%s4630 + $0x28] sm:$0xff]
        %v4637 = vld [vmem:[%s4630 + $0x30] sm:$0xff]
        %v4638 = vld [vmem:[%s4630 + $0x38] sm:$0xff]
        %v4639 = vld [vmem:[%s4630 + $0x40] sm:$0xff]
        %v4640 = vld [vmem:[%s4630 + $0x48] sm:$0xff]
        %v4641 = vld [vmem:[%s4630 + $0x50] sm:$0xff]
        %v4642 = vld [vmem:[%s4630 + $0x58] sm:$0xff]
        %v4643 = vld [vmem:[%s4630 + $0x60] sm:$0xff]
        %v4644 = vld [vmem:[%s4630 + $0x68] sm:$0xff]
        %v4645 = vld [vmem:[%s4630 + $0x70] sm:$0xff]
        %v4646 = vld [vmem:[%s4630 + $0x78] sm:$0xff]
        %v4647 = vld [vmem:[%s4630 + $0x80] sm:$0xff]
        %v4648 = vld [vmem:[%s4630 + $0x88] sm:$0xff]
        %v4649 = vld [vmem:[%s4630 + $0x90] sm:$0xff]
        %v4650 = vld [vmem:[%s4630 + $0x98] sm:$0xff]
        %v4651 = vld [vmem:[%s4630 + $0xa0] sm:$0xff]
        %v4652 = vld [vmem:[%s4630 + $0xa8] sm:$0xff]
        %v4653 = vld [vmem:[%s4630 + $0xb0] sm:$0xff]
        %v4654 = vld [vmem:[%s4630 + $0xb8] sm:$0xff]
        %v4655 = vld [vmem:[%s4630 + $0xc0] sm:$0xff]
        %v4656 = vld [vmem:[%s4630 + $0xc8] sm:$0xff]
        %v4657 = vld [vmem:[%s4630 + $0xd0] sm:$0xff]
        %v4658 = vld [vmem:[%s4630 + $0xd8] sm:$0xff]
        %v4659 = vld [vmem:[%s4630 + $0xe0] sm:$0xff]
        %v4660 = vld [vmem:[%s4630 + $0xe8] sm:$0xff]
        %v4661 = vld [vmem:[%s4630 + $0xf0] sm:$0xff]
        %v4662 = vld [vmem:[%s4630 + $0xf8] sm:$0xff]
        %v4663 = vld [vmem:[%s4630 + $0x100] sm:$0xff]
        %v4664 = vld [vmem:[%s4630 + $0x108] sm:$0xff]
        %v4665 = vld [vmem:[%s4630 + $0x110] sm:$0xff]
        %v4666 = vld [vmem:[%s4630 + $0x118] sm:$0xff]
        %v4667 = vld [vmem:[%s4630 + $0x120] sm:$0xff]
        %v4668 = vld [vmem:[%s4630 + $0x128] sm:$0xff]
        %v4669 = vld [vmem:[%s4630 + $0x130] sm:$0xff]
        %v4670 = vld [vmem:[%s4630 + $0x138] sm:$0xff]
        %v4671 = vld [vmem:[%s4630 + $0x140] sm:$0xff]
        %v4672 = vld [vmem:[%s4630 + $0x148] sm:$0xff]
        %v4673 = vld [vmem:[%s4630 + $0x150] sm:$0xff]
        %v4674 = vld [vmem:[%s4630 + $0x158] sm:$0xff]
        %v4675 = vld [vmem:[%s4630 + $0x160] sm:$0xff]
        %v4676 = vld [vmem:[%s4630 + $0x168] sm:$0xff]
        %v4677 = vld [vmem:[%s4630 + $0x170] sm:$0xff]
        %v4678 = vld [vmem:[%s4630 + $0x178] sm:$0xff]
        %v4679 = vld [vmem:[%s4630 + $0x180] sm:$0xff]
        %v4680 = vld [vmem:[%s4630 + $0x188] sm:$0xff]
        %v4681 = vld [vmem:[%s4630 + $0x190] sm:$0xff]
        %v4682 = vld [vmem:[%s4630 + $0x198] sm:$0xff]
        %v4683 = vld [vmem:[%s4630 + $0x1a0] sm:$0xff]
        %v4684 = vld [vmem:[%s4630 + $0x1a8] sm:$0xff]
        %v4685 = vld [vmem:[%s4630 + $0x1b0] sm:$0xff]
        %v4686 = vld [vmem:[%s4630 + $0x1b8] sm:$0xff]
        %v4687 = vld [vmem:[%s4630 + $0x1c0] sm:$0xff]
        %v4688 = vld [vmem:[%s4630 + $0x1c8] sm:$0xff]
        %v4689 = vld [vmem:[%s4630 + $0x1d0] sm:$0xff]
        %v4690 = vld [vmem:[%s4630 + $0x1d8] sm:$0xff]
        %v4691 = vld [vmem:[%s4630 + $0x1e0] sm:$0xff]
        %v4692 = vld [vmem:[%s4630 + $0x1e8] sm:$0xff]
        %v4693 = vld [vmem:[%s4630 + $0x1f0] sm:$0xff]
        %v4694 = vld [vmem:[%s4630 + $0x1f8] sm:$0xff]
        %4695 = vmatprep.subr.mxu0 %v4632
        %4696 = vmatpush1.msra.mxu0 %v4631
        %4697 = vmatprep.subr.mxu0 %v4634
        %4698 = vmatpush1.msra.mxu0 %v4633
        %4699 = vmatprep.subr.mxu0 %v4636
        %4700 = vmatpush1.msra.mxu0 %v4635
        %4701 = vmatprep.subr.mxu0 %v4638
        %4702 = vmatpush1.msra.mxu0 %v4637
        %4703 = vmatprep.subr.mxu0 %v4640
        %4704 = vmatpush1.msra.mxu0 %v4639
        %4705 = vmatprep.subr.mxu0 %v4642
        %4706 = vmatpush1.msra.mxu0 %v4641
        %4707 = vmatprep.subr.mxu0 %v4644
        %4708 = vmatpush1.msra.mxu0 %v4643
        %4709 = vmatprep.subr.mxu0 %v4646
        %4710 = vmatpush1.msra.mxu0 %v4645
        %4711 = vmatprep.subr.mxu0 %v4648
        %4712 = vmatpush1.msra.mxu0 %v4647
        %4713 = vmatprep.subr.mxu0 %v4650
        %4714 = vmatpush1.msra.mxu0 %v4649
        %4715 = vmatprep.subr.mxu0 %v4652
        %4716 = vmatpush1.msra.mxu0 %v4651
        %4717 = vmatprep.subr.mxu0 %v4654
        %4718 = vmatpush1.msra.mxu0 %v4653
        %4719 = vmatprep.subr.mxu0 %v4656
        %4720 = vmatpush1.msra.mxu0 %v4655
        %4721 = vmatprep.subr.mxu0 %v4658
        %4722 = vmatpush1.msra.mxu0 %v4657
        %4723 = vmatprep.subr.mxu0 %v4660
        %4724 = vmatpush1.msra.mxu0 %v4659
        %4725 = vmatprep.subr.mxu0 %v4662
        %4726 = vmatpush1.msra.mxu0 %v4661
        %4727 = vmatprep.subr.mxu0 %v4664
        %4728 = vmatpush1.msra.mxu0 %v4663
        %4729 = vmatprep.subr.mxu0 %v4666
        %4730 = vmatpush1.msra.mxu0 %v4665
        %4731 = vmatprep.subr.mxu0 %v4668
        %4732 = vmatpush1.msra.mxu0 %v4667
        %4733 = vmatprep.subr.mxu0 %v4670
        %4734 = vmatpush1.msra.mxu0 %v4669
        %4735 = vmatprep.subr.mxu0 %v4672
        %4736 = vmatpush1.msra.mxu0 %v4671
        %4737 = vmatprep.subr.mxu0 %v4674
        %4738 = vmatpush1.msra.mxu0 %v4673
        %4739 = vmatprep.subr.mxu0 %v4676
        %4740 = vmatpush1.msra.mxu0 %v4675
        %4741 = vmatprep.subr.mxu0 %v4678
        %4742 = vmatpush1.msra.mxu0 %v4677
        %4743 = vmatprep.subr.mxu0 %v4680
        %4744 = vmatpush1.msra.mxu0 %v4679
        %4745 = vmatprep.subr.mxu0 %v4682
        %4746 = vmatpush1.msra.mxu0 %v4681
        %4747 = vmatprep.subr.mxu0 %v4684
        %4748 = vmatpush1.msra.mxu0 %v4683
        %4749 = vmatprep.subr.mxu0 %v4686
        %4750 = vmatpush1.msra.mxu0 %v4685
        %4751 = vmatprep.subr.mxu0 %v4688
        %4752 = vmatpush1.msra.mxu0 %v4687
        %4753 = vmatprep.subr.mxu0 %v4690
        %4754 = vmatpush1.msra.mxu0 %v4689
        %4755 = vmatprep.subr.mxu0 %v4692
        %4756 = vmatpush1.msra.mxu0 %v4691
        %4757 = vmatprep.subr.mxu0 %v4694
        %4758 = vmatpush1.msra.mxu0 %v4693
        %4759 = vmatprep.mubr.f32.mxu0 %v4629
        %4760 = vmatmul.mubr.f32.gmra.mrb[0].mxu0 %v4628
        %v4761 = vpop.f32.mrb[0].mxu0
        %v4762 = vadd.f32 0.0, %v4761
        %v4763 = vpop.f32.mrb[0].mxu0
        %v4764 = vadd.f32 0.0, %v4763
        %4765 = vdwg.mxu0
        %v4770 = vrot.slane %v4560, 7
        %v4771 = vrot.slane %v4562, 7
        %v4772 = vsel %vm2116, %v4770, %v4771
        %v4773 = vrot.slane %v4561, 7
        %v4774 = vrot.slane %v4563, 7
        %v4775 = vsel %vm2116, %v4773, %v4774
        %4778 = vmatprep.subr.mxu0 %v4565
        %4779 = vmatpush1.msra.mxu0 %v4564
        %4780 = vmatprep.subr.mxu0 %v4567
        %4781 = vmatpush1.msra.mxu0 %v4566
        %4782 = vmatprep.subr.mxu0 %v4569
        %4783 = vmatpush1.msra.mxu0 %v4568
        %4784 = vmatprep.subr.mxu0 %v4571
        %4785 = vmatpush1.msra.mxu0 %v4570
        %4786 = vmatprep.subr.mxu0 %v4573
        %4787 = vmatpush1.msra.mxu0 %v4572
        %4788 = vmatprep.subr.mxu0 %v4575
        %4789 = vmatpush1.msra.mxu0 %v4574
        %4790 = vmatprep.subr.mxu0 %v4577
        %4791 = vmatpush1.msra.mxu0 %v4576
        %4792 = vmatprep.subr.mxu0 %v4579
        %4793 = vmatpush1.msra.mxu0 %v4578
        %4794 = vmatprep.subr.mxu0 %v4581
        %4795 = vmatpush1.msra.mxu0 %v4580
        %4796 = vmatprep.subr.mxu0 %v4583
        %4797 = vmatpush1.msra.mxu0 %v4582
        %4798 = vmatprep.subr.mxu0 %v4585
        %4799 = vmatpush1.msra.mxu0 %v4584
        %4800 = vmatprep.subr.mxu0 %v4587
        %4801 = vmatpush1.msra.mxu0 %v4586
        %4802 = vmatprep.subr.mxu0 %v4589
        %4803 = vmatpush1.msra.mxu0 %v4588
        %4804 = vmatprep.subr.mxu0 %v4591
        %4805 = vmatpush1.msra.mxu0 %v4590
        %4806 = vmatprep.subr.mxu0 %v4593
        %4807 = vmatpush1.msra.mxu0 %v4592
        %4808 = vmatprep.subr.mxu0 %v4595
        %4809 = vmatpush1.msra.mxu0 %v4594
        %4810 = vmatprep.subr.mxu0 %v4597
        %4811 = vmatpush1.msra.mxu0 %v4596
        %4812 = vmatprep.subr.mxu0 %v4599
        %4813 = vmatpush1.msra.mxu0 %v4598
        %4814 = vmatprep.subr.mxu0 %v4601
        %4815 = vmatpush1.msra.mxu0 %v4600
        %4816 = vmatprep.subr.mxu0 %v4603
        %4817 = vmatpush1.msra.mxu0 %v4602
        %4818 = vmatprep.subr.mxu0 %v4605
        %4819 = vmatpush1.msra.mxu0 %v4604
        %4820 = vmatprep.subr.mxu0 %v4607
        %4821 = vmatpush1.msra.mxu0 %v4606
        %4822 = vmatprep.subr.mxu0 %v4609
        %4823 = vmatpush1.msra.mxu0 %v4608
        %4824 = vmatprep.subr.mxu0 %v4611
        %4825 = vmatpush1.msra.mxu0 %v4610
        %4826 = vmatprep.subr.mxu0 %v4613
        %4827 = vmatpush1.msra.mxu0 %v4612
        %4828 = vmatprep.subr.mxu0 %v4615
        %4829 = vmatpush1.msra.mxu0 %v4614
        %4830 = vmatprep.subr.mxu0 %v4617
        %4831 = vmatpush1.msra.mxu0 %v4616
        %4832 = vmatprep.subr.mxu0 %v4619
        %4833 = vmatpush1.msra.mxu0 %v4618
        %4834 = vmatprep.subr.mxu0 %v4621
        %4835 = vmatpush1.msra.mxu0 %v4620
        %4836 = vmatprep.subr.mxu0 %v4623
        %4837 = vmatpush1.msra.mxu0 %v4622
        %4838 = vmatprep.subr.mxu0 %v4625
        %4839 = vmatpush1.msra.mxu0 %v4624
        %4840 = vmatprep.subr.mxu0 %v4627
        %4841 = vmatpush1.msra.mxu0 %v4626
        %4842 = vmatprep.mubr.f32.mxu0 %v4775
        %4843 = vmatmul.mubr.f32.gmra.mrb[0].mxu0 %v4772
        %v4844 = vpop.f32.mrb[0].mxu0
        %v4845 = vadd.f32 %v4762, %v4844
        %v4846 = vpop.f32.mrb[0].mxu0
        %v4847 = vadd.f32 %v4764, %v4846
        %4848 = vdwg.mxu0
        %v4849 = vld [vmem:[#allocation2 + $0x10] sm:$0x6]
        %v4850 = vld [vmem:[#allocation2 + $0x18] sm:$0x6]
        %s4851 = scalar_lea.vmem %s79, 1024
        %v4852 = vld [vmem:[%s4851] sm:$0xff]
        %v4853 = vld [vmem:[%s4851 + $0x8] sm:$0xff]
        %v4854 = vld [vmem:[%s4851 + $0x10] sm:$0xff]
        %v4855 = vld [vmem:[%s4851 + $0x18] sm:$0xff]
        %v4856 = vld [vmem:[%s4851 + $0x20] sm:$0xff]
        %v4857 = vld [vmem:[%s4851 + $0x28] sm:$0xff]
        %v4858 = vld [vmem:[%s4851 + $0x30] sm:$0xff]
        %v4859 = vld [vmem:[%s4851 + $0x38] sm:$0xff]
        %v4860 = vld [vmem:[%s4851 + $0x40] sm:$0xff]
        %v4861 = vld [vmem:[%s4851 + $0x48] sm:$0xff]
        %v4862 = vld [vmem:[%s4851 + $0x50] sm:$0xff]
        %v4863 = vld [vmem:[%s4851 + $0x58] sm:$0xff]
        %v4864 = vld [vmem:[%s4851 + $0x60] sm:$0xff]
        %v4865 = vld [vmem:[%s4851 + $0x68] sm:$0xff]
        %v4866 = vld [vmem:[%s4851 + $0x70] sm:$0xff]
        %v4867 = vld [vmem:[%s4851 + $0x78] sm:$0xff]
        %v4868 = vld [vmem:[%s4851 + $0x80] sm:$0xff]
        %v4869 = vld [vmem:[%s4851 + $0x88] sm:$0xff]
        %v4870 = vld [vmem:[%s4851 + $0x90] sm:$0xff]
        %v4871 = vld [vmem:[%s4851 + $0x98] sm:$0xff]
        %v4872 = vld [vmem:[%s4851 + $0xa0] sm:$0xff]
        %v4873 = vld [vmem:[%s4851 + $0xa8] sm:$0xff]
        %v4874 = vld [vmem:[%s4851 + $0xb0] sm:$0xff]
        %v4875 = vld [vmem:[%s4851 + $0xb8] sm:$0xff]
        %v4876 = vld [vmem:[%s4851 + $0xc0] sm:$0xff]
        %v4877 = vld [vmem:[%s4851 + $0xc8] sm:$0xff]
        %v4878 = vld [vmem:[%s4851 + $0xd0] sm:$0xff]
        %v4879 = vld [vmem:[%s4851 + $0xd8] sm:$0xff]
        %v4880 = vld [vmem:[%s4851 + $0xe0] sm:$0xff]
        %v4881 = vld [vmem:[%s4851 + $0xe8] sm:$0xff]
        %v4882 = vld [vmem:[%s4851 + $0xf0] sm:$0xff]
        %v4883 = vld [vmem:[%s4851 + $0xf8] sm:$0xff]
        %v4884 = vld [vmem:[%s4851 + $0x100] sm:$0xff]
        %v4885 = vld [vmem:[%s4851 + $0x108] sm:$0xff]
        %v4886 = vld [vmem:[%s4851 + $0x110] sm:$0xff]
        %v4887 = vld [vmem:[%s4851 + $0x118] sm:$0xff]
        %v4888 = vld [vmem:[%s4851 + $0x120] sm:$0xff]
        %v4889 = vld [vmem:[%s4851 + $0x128] sm:$0xff]
        %v4890 = vld [vmem:[%s4851 + $0x130] sm:$0xff]
        %v4891 = vld [vmem:[%s4851 + $0x138] sm:$0xff]
        %v4892 = vld [vmem:[%s4851 + $0x140] sm:$0xff]
        %v4893 = vld [vmem:[%s4851 + $0x148] sm:$0xff]
        %v4894 = vld [vmem:[%s4851 + $0x150] sm:$0xff]
        %v4895 = vld [vmem:[%s4851 + $0x158] sm:$0xff]
        %v4896 = vld [vmem:[%s4851 + $0x160] sm:$0xff]
        %v4897 = vld [vmem:[%s4851 + $0x168] sm:$0xff]
        %v4898 = vld [vmem:[%s4851 + $0x170] sm:$0xff]
        %v4899 = vld [vmem:[%s4851 + $0x178] sm:$0xff]
        %v4900 = vld [vmem:[%s4851 + $0x180] sm:$0xff]
        %v4901 = vld [vmem:[%s4851 + $0x188] sm:$0xff]
        %v4902 = vld [vmem:[%s4851 + $0x190] sm:$0xff]
        %v4903 = vld [vmem:[%s4851 + $0x198] sm:$0xff]
        %v4904 = vld [vmem:[%s4851 + $0x1a0] sm:$0xff]
        %v4905 = vld [vmem:[%s4851 + $0x1a8] sm:$0xff]
        %v4906 = vld [vmem:[%s4851 + $0x1b0] sm:$0xff]
        %v4907 = vld [vmem:[%s4851 + $0x1b8] sm:$0xff]
        %v4908 = vld [vmem:[%s4851 + $0x1c0] sm:$0xff]
        %v4909 = vld [vmem:[%s4851 + $0x1c8] sm:$0xff]
        %v4910 = vld [vmem:[%s4851 + $0x1d0] sm:$0xff]
        %v4911 = vld [vmem:[%s4851 + $0x1d8] sm:$0xff]
        %v4912 = vld [vmem:[%s4851 + $0x1e0] sm:$0xff]
        %v4913 = vld [vmem:[%s4851 + $0x1e8] sm:$0xff]
        %v4914 = vld [vmem:[%s4851 + $0x1f0] sm:$0xff]
        %v4915 = vld [vmem:[%s4851 + $0x1f8] sm:$0xff]
        %v4918 = vrot.slane %v4849, 1
        %v4919 = vrot.slane %v4850, 1
        %4922 = vmatprep.subr.mxu0 %v4853
        %4923 = vmatpush1.msra.mxu0 %v4852
        %4924 = vmatprep.subr.mxu0 %v4855
        %4925 = vmatpush1.msra.mxu0 %v4854
        %4926 = vmatprep.subr.mxu0 %v4857
        %4927 = vmatpush1.msra.mxu0 %v4856
        %4928 = vmatprep.subr.mxu0 %v4859
        %4929 = vmatpush1.msra.mxu0 %v4858
        %4930 = vmatprep.subr.mxu0 %v4861
        %4931 = vmatpush1.msra.mxu0 %v4860
        %4932 = vmatprep.subr.mxu0 %v4863
        %4933 = vmatpush1.msra.mxu0 %v4862
        %4934 = vmatprep.subr.mxu0 %v4865
        %4935 = vmatpush1.msra.mxu0 %v4864
        %4936 = vmatprep.subr.mxu0 %v4867
        %4937 = vmatpush1.msra.mxu0 %v4866
        %4938 = vmatprep.subr.mxu0 %v4869
        %4939 = vmatpush1.msra.mxu0 %v4868
        %4940 = vmatprep.subr.mxu0 %v4871
        %4941 = vmatpush1.msra.mxu0 %v4870
        %4942 = vmatprep.subr.mxu0 %v4873
        %4943 = vmatpush1.msra.mxu0 %v4872
        %4944 = vmatprep.subr.mxu0 %v4875
        %4945 = vmatpush1.msra.mxu0 %v4874
        %4946 = vmatprep.subr.mxu0 %v4877
        %4947 = vmatpush1.msra.mxu0 %v4876
        %4948 = vmatprep.subr.mxu0 %v4879
        %4949 = vmatpush1.msra.mxu0 %v4878
        %4950 = vmatprep.subr.mxu0 %v4881
        %4951 = vmatpush1.msra.mxu0 %v4880
        %4952 = vmatprep.subr.mxu0 %v4883
        %4953 = vmatpush1.msra.mxu0 %v4882
        %4954 = vmatprep.subr.mxu0 %v4885
        %4955 = vmatpush1.msra.mxu0 %v4884
        %4956 = vmatprep.subr.mxu0 %v4887
        %4957 = vmatpush1.msra.mxu0 %v4886
        %4958 = vmatprep.subr.mxu0 %v4889
        %4959 = vmatpush1.msra.mxu0 %v4888
        %4960 = vmatprep.subr.mxu0 %v4891
        %4961 = vmatpush1.msra.mxu0 %v4890
        %4962 = vmatprep.subr.mxu0 %v4893
        %4963 = vmatpush1.msra.mxu0 %v4892
        %4964 = vmatprep.subr.mxu0 %v4895
        %4965 = vmatpush1.msra.mxu0 %v4894
        %4966 = vmatprep.subr.mxu0 %v4897
        %4967 = vmatpush1.msra.mxu0 %v4896
        %4968 = vmatprep.subr.mxu0 %v4899
        %4969 = vmatpush1.msra.mxu0 %v4898
        %4970 = vmatprep.subr.mxu0 %v4901
        %4971 = vmatpush1.msra.mxu0 %v4900
        %4972 = vmatprep.subr.mxu0 %v4903
        %4973 = vmatpush1.msra.mxu0 %v4902
        %4974 = vmatprep.subr.mxu0 %v4905
        %4975 = vmatpush1.msra.mxu0 %v4904
        %4976 = vmatprep.subr.mxu0 %v4907
        %4977 = vmatpush1.msra.mxu0 %v4906
        %4978 = vmatprep.subr.mxu0 %v4909
        %4979 = vmatpush1.msra.mxu0 %v4908
        %4980 = vmatprep.subr.mxu0 %v4911
        %4981 = vmatpush1.msra.mxu0 %v4910
        %4982 = vmatprep.subr.mxu0 %v4913
        %4983 = vmatpush1.msra.mxu0 %v4912
        %4984 = vmatprep.subr.mxu0 %v4915
        %4985 = vmatpush1.msra.mxu0 %v4914
        %4986 = vmatprep.mubr.f32.mxu0 %v4919
        %4987 = vmatmul.mubr.f32.gmra.mrb[0].mxu0 %v4918
        %v4988 = vpop.f32.mrb[0].mxu0
        %v4989 = vadd.f32 0.0, %v4988
        %v4990 = vpop.f32.mrb[0].mxu0
        %v4991 = vadd.f32 0.0, %v4990
        %4992 = vdwg.mxu0
        %v4993 = vadd.f32 %v4845, %v4989
        %v4994 = vadd.f32 %v4847, %v4991
        %v4995 = vld [vmem:[%s81] sm:$0xf]
        %v4998 = vunpack.c.l.s4 1983009808
        %v4999 = vunpack.c.0.s8 %v4998
        %v5000 = vlaneseq
        %v5001 = vshrl.u32 %v5000, 7
        %v5002 = vsub.s32 %v4999, %v5001
        %v5003 = vrot.slane %v4995, %v5002
        %v5004 = vcombine.high %v5003, %v5003
        %v5007 = vmul.f32 %v4993, %v5003
        %v5008 = vmul.f32 %v4994, %v5004
        %v5009 = vld [vmem:[%s83] sm:$0xf]
        %v5012 = vunpack.c.l.s4 1983009808
        %v5013 = vunpack.c.0.s8 %v5012
        %v5014 = vlaneseq
        %v5015 = vshrl.u32 %v5014, 7
        %v5016 = vsub.s32 %v5013, %v5015
        %v5017 = vrot.slane %v5009, %v5016
        %v5018 = vcombine.high %v5017, %v5017
        %v5021 = vadd.f32 %v5007, %v5017
        %v5022 = vadd.f32 %v5008, %v5018
        %vm5023 = vcmp.ge.f32.partialorder %v5021, 0.0
        %vm5024 = vcmp.ge.f32.partialorder %v5022, 0.0
        %v5025 = vmul.f32 %v5021, 0.2
        %v5026 = vmul.f32 %v5022, 0.2
        %v5027 = vsel %vm5023, %v5021, %v5025
        %v5028 = vsel %vm5024, %v5022, %v5026
        %v5029 = vsel %vm4170, %v5027, -inf
        %v5030 = vrot.slane %v5029, 4
        %v5031 = vmax.f32 %v5029, %v5030
        %v5032 = vrot.slane %v5031, 2
        %v5033 = vmax.f32 %v5031, %v5032
        %v5034 = vrot.slane %v5033, 1
        %v5035 = vmax.f32 %v5033, %v5034
        %v5036 = vsel %vm4170, %v5028, -inf
        %v5037 = vrot.slane %v5036, 4
        %v5038 = vmax.f32 %v5036, %v5037
        %v5039 = vrot.slane %v5038, 2
        %v5040 = vmax.f32 %v5038, %v5039
        %v5041 = vrot.slane %v5040, 1
        %v5042 = vmax.f32 %v5040, %v5041
        %v5043 = vld [vmem:[%s85] sm:$0xff]
        %v5044 = vld [vmem:[%s85 + $0x8] sm:$0xff]
        %v5045 = vld [vmem:[%s85 + $0x10] sm:$0xff]
        %v5046 = vld [vmem:[%s85 + $0x18] sm:$0xff]
        %v5047 = vld [vmem:[%s85 + $0x20] sm:$0xff]
        %v5048 = vld [vmem:[%s85 + $0x28] sm:$0xff]
        %v5049 = vld [vmem:[%s85 + $0x30] sm:$0xff]
        %v5050 = vld [vmem:[%s85 + $0x38] sm:$0xff]
        %v5051 = vld [vmem:[%s85 + $0x40] sm:$0xff]
        %v5052 = vld [vmem:[%s85 + $0x48] sm:$0xff]
        %v5053 = vld [vmem:[%s85 + $0x50] sm:$0xff]
        %v5054 = vld [vmem:[%s85 + $0x58] sm:$0xff]
        %v5055 = vld [vmem:[%s85 + $0x60] sm:$0xff]
        %v5056 = vld [vmem:[%s85 + $0x68] sm:$0xff]
        %v5057 = vld [vmem:[%s85 + $0x70] sm:$0xff]
        %v5058 = vld [vmem:[%s85 + $0x78] sm:$0xff]
        %v5059 = vld [vmem:[%s85 + $0x80] sm:$0xff]
        %v5060 = vld [vmem:[%s85 + $0x88] sm:$0xff]
        %v5061 = vld [vmem:[%s85 + $0x90] sm:$0xff]
        %v5062 = vld [vmem:[%s85 + $0x98] sm:$0xff]
        %v5063 = vld [vmem:[%s85 + $0xa0] sm:$0xff]
        %v5064 = vld [vmem:[%s85 + $0xa8] sm:$0xff]
        %v5065 = vld [vmem:[%s85 + $0xb0] sm:$0xff]
        %v5066 = vld [vmem:[%s85 + $0xb8] sm:$0xff]
        %v5067 = vld [vmem:[%s85 + $0xc0] sm:$0xff]
        %v5068 = vld [vmem:[%s85 + $0xc8] sm:$0xff]
        %v5069 = vld [vmem:[%s85 + $0xd0] sm:$0xff]
        %v5070 = vld [vmem:[%s85 + $0xd8] sm:$0xff]
        %v5071 = vld [vmem:[%s85 + $0xe0] sm:$0xff]
        %v5072 = vld [vmem:[%s85 + $0xe8] sm:$0xff]
        %v5073 = vld [vmem:[%s85 + $0xf0] sm:$0xff]
        %v5074 = vld [vmem:[%s85 + $0xf8] sm:$0xff]
        %v5075 = vld [vmem:[%s87] sm:$0x1]
        %5076 = vmatprep.subr.mxu0 0.0
        %5077 = vmatpush1.msra.mxu0 %v5043
        %5078 = vmatprep.subr.mxu0 0.0
        %5079 = vmatpush1.msra.mxu0 %v5044
        %5080 = vmatprep.subr.mxu0 0.0
        %5081 = vmatpush1.msra.mxu0 %v5045
        %5082 = vmatprep.subr.mxu0 0.0
        %5083 = vmatpush1.msra.mxu0 %v5046
        %5084 = vmatprep.subr.mxu0 0.0
        %5085 = vmatpush1.msra.mxu0 %v5047
        %5086 = vmatprep.subr.mxu0 0.0
        %5087 = vmatpush1.msra.mxu0 %v5048
        %5088 = vmatprep.subr.mxu0 0.0
        %5089 = vmatpush1.msra.mxu0 %v5049
        %5090 = vmatprep.subr.mxu0 0.0
        %5091 = vmatpush1.msra.mxu0 %v5050
        %5092 = vmatprep.subr.mxu0 0.0
        %5093 = vmatpush1.msra.mxu0 %v5051
        %5094 = vmatprep.subr.mxu0 0.0
        %5095 = vmatpush1.msra.mxu0 %v5052
        %5096 = vmatprep.subr.mxu0 0.0
        %5097 = vmatpush1.msra.mxu0 %v5053
        %5098 = vmatprep.subr.mxu0 0.0
        %5099 = vmatpush1.msra.mxu0 %v5054
        %5100 = vmatprep.subr.mxu0 0.0
        %5101 = vmatpush1.msra.mxu0 %v5055
        %5102 = vmatprep.subr.mxu0 0.0
        %5103 = vmatpush1.msra.mxu0 %v5056
        %5104 = vmatprep.subr.mxu0 0.0
        %5105 = vmatpush1.msra.mxu0 %v5057
        %5106 = vmatprep.subr.mxu0 0.0
        %5107 = vmatpush1.msra.mxu0 %v5058
        %5108 = vmatprep.subr.mxu0 0.0
        %5109 = vmatpush1.msra.mxu0 %v5059
        %5110 = vmatprep.subr.mxu0 0.0
        %5111 = vmatpush1.msra.mxu0 %v5060
        %5112 = vmatprep.subr.mxu0 0.0
        %5113 = vmatpush1.msra.mxu0 %v5061
        %5114 = vmatprep.subr.mxu0 0.0
        %5115 = vmatpush1.msra.mxu0 %v5062
        %5116 = vmatprep.subr.mxu0 0.0
        %5117 = vmatpush1.msra.mxu0 %v5063
        %5118 = vmatprep.subr.mxu0 0.0
        %5119 = vmatpush1.msra.mxu0 %v5064
        %5120 = vmatprep.subr.mxu0 0.0
        %5121 = vmatpush1.msra.mxu0 %v5065
        %5122 = vmatprep.subr.mxu0 0.0
        %5123 = vmatpush1.msra.mxu0 %v5066
        %5124 = vmatprep.subr.mxu0 0.0
        %5125 = vmatpush1.msra.mxu0 %v5067
        %5126 = vmatprep.subr.mxu0 0.0
        %5127 = vmatpush1.msra.mxu0 %v5068
        %5128 = vmatprep.subr.mxu0 0.0
        %5129 = vmatpush1.msra.mxu0 %v5069
        %5130 = vmatprep.subr.mxu0 0.0
        %5131 = vmatpush1.msra.mxu0 %v5070
        %5132 = vmatprep.subr.mxu0 0.0
        %5133 = vmatpush1.msra.mxu0 %v5071
        %5134 = vmatprep.subr.mxu0 0.0
        %5135 = vmatpush1.msra.mxu0 %v5072
        %5136 = vmatprep.subr.mxu0 0.0
        %5137 = vmatpush1.msra.mxu0 %v5073
        %5138 = vmatprep.subr.mxu0 0.0
        %5139 = vmatpush1.msra.mxu0 %v5074
        %5140 = vmatprep.mubr.f32.mxu0 %v5042
        %5141 = vmatmul.mubr.f32.gmra.mrb[0].mxu0 %v5035
        %v5142 = vpop.f32.mrb[0].mxu0
        %v5143 = vadd.f32 %v5075, %v5142
        %v5144 = vpop.f32.mrb[0].mxu0
        %5145 = vdwg.mxu0
        %v5146 = vld [vmem:[%s89] sm:$0x1]
        %v5147 = vmul.f32 %v5143, %v5146
        %v5148 = vld [vmem:[%s91] sm:$0x1]
        %v5149 = vadd.f32 %v5147, %v5148
        %vm5150 = vcmp.ge.f32.partialorder %v5149, 0.0
        %v5151 = vmul.f32 %v5149, 0.2
        %v5152 = vsel %vm5150, %v5149, %v5151
        %v5153 = vld [vmem:[%s93] sm:$0xff]
        %v5154 = vld [vmem:[%s93 + $0x8] sm:$0xff]
        %v5155 = vld [vmem:[%s93 + $0x10] sm:$0xff]
        %v5156 = vld [vmem:[%s93 + $0x18] sm:$0xff]
        %v5157 = vld [vmem:[%s93 + $0x20] sm:$0xff]
        %v5158 = vld [vmem:[%s93 + $0x28] sm:$0xff]
        %v5159 = vld [vmem:[%s93 + $0x30] sm:$0xff]
        %v5160 = vld [vmem:[%s93 + $0x38] sm:$0xff]
        %v5161 = vld [vmem:[%s93 + $0x40] sm:$0xff]
        %v5162 = vld [vmem:[%s93 + $0x48] sm:$0xff]
        %v5163 = vld [vmem:[%s93 + $0x50] sm:$0xff]
        %v5164 = vld [vmem:[%s93 + $0x58] sm:$0xff]
        %v5165 = vld [vmem:[%s93 + $0x60] sm:$0xff]
        %v5166 = vld [vmem:[%s93 + $0x68] sm:$0xff]
        %v5167 = vld [vmem:[%s93 + $0x70] sm:$0xff]
        %v5168 = vld [vmem:[%s93 + $0x78] sm:$0xff]
        %v5169 = vld [vmem:[%s95] sm:$0x1]
        %5170 = vmatprep.subr.mxu0 0.0
        %5171 = vmatpush1.msra.mxu0 %v5153
        %5172 = vmatprep.subr.mxu0 0.0
        %5173 = vmatpush1.msra.mxu0 %v5154
        %5174 = vmatprep.subr.mxu0 0.0
        %5175 = vmatpush1.msra.mxu0 %v5155
        %5176 = vmatprep.subr.mxu0 0.0
        %5177 = vmatpush1.msra.mxu0 %v5156
        %5178 = vmatprep.subr.mxu0 0.0
        %5179 = vmatpush1.msra.mxu0 %v5157
        %5180 = vmatprep.subr.mxu0 0.0
        %5181 = vmatpush1.msra.mxu0 %v5158
        %5182 = vmatprep.subr.mxu0 0.0
        %5183 = vmatpush1.msra.mxu0 %v5159
        %5184 = vmatprep.subr.mxu0 0.0
        %5185 = vmatpush1.msra.mxu0 %v5160
        %5186 = vmatprep.subr.mxu0 0.0
        %5187 = vmatpush1.msra.mxu0 %v5161
        %5188 = vmatprep.subr.mxu0 0.0
        %5189 = vmatpush1.msra.mxu0 %v5162
        %5190 = vmatprep.subr.mxu0 0.0
        %5191 = vmatpush1.msra.mxu0 %v5163
        %5192 = vmatprep.subr.mxu0 0.0
        %5193 = vmatpush1.msra.mxu0 %v5164
        %5194 = vmatprep.subr.mxu0 0.0
        %5195 = vmatpush1.msra.mxu0 %v5165
        %5196 = vmatprep.subr.mxu0 0.0
        %5197 = vmatpush1.msra.mxu0 %v5166
        %5198 = vmatprep.subr.mxu0 0.0
        %5199 = vmatpush1.msra.mxu0 %v5167
        %5200 = vmatprep.subr.mxu0 0.0
        %5201 = vmatpush1.msra.mxu0 %v5168
        %5202 = vmatprep.subr.mxu0 0.0
        %5203 = vmatpush1.msra.mxu0 0.0
        %5204 = vmatprep.subr.mxu0 0.0
        %5205 = vmatpush1.msra.mxu0 0.0
        %5206 = vmatprep.subr.mxu0 0.0
        %5207 = vmatpush1.msra.mxu0 0.0
        %5208 = vmatprep.subr.mxu0 0.0
        %5209 = vmatpush1.msra.mxu0 0.0
        %5210 = vmatprep.subr.mxu0 0.0
        %5211 = vmatpush1.msra.mxu0 0.0
        %5212 = vmatprep.subr.mxu0 0.0
        %5213 = vmatpush1.msra.mxu0 0.0
        %5214 = vmatprep.subr.mxu0 0.0
        %5215 = vmatpush1.msra.mxu0 0.0
        %5216 = vmatprep.subr.mxu0 0.0
        %5217 = vmatpush1.msra.mxu0 0.0
        %5218 = vmatprep.subr.mxu0 0.0
        %5219 = vmatpush1.msra.mxu0 0.0
        %5220 = vmatprep.subr.mxu0 0.0
        %5221 = vmatpush1.msra.mxu0 0.0
        %5222 = vmatprep.subr.mxu0 0.0
        %5223 = vmatpush1.msra.mxu0 0.0
        %5224 = vmatprep.subr.mxu0 0.0
        %5225 = vmatpush1.msra.mxu0 0.0
        %5226 = vmatprep.subr.mxu0 0.0
        %5227 = vmatpush1.msra.mxu0 0.0
        %5228 = vmatprep.subr.mxu0 0.0
        %5229 = vmatpush1.msra.mxu0 0.0
        %5230 = vmatprep.subr.mxu0 0.0
        %5231 = vmatpush1.msra.mxu0 0.0
        %5232 = vmatprep.subr.mxu0 0.0
        %5233 = vmatpush1.msra.mxu0 0.0
        %5234 = vmatprep.mubr.f32.mxu0 0.0
        %5235 = vmatmul.mubr.f32.gmra.mrb[0].mxu0 %v5152
        %v5236 = vpop.f32.mrb[0].mxu0
        %v5237 = vadd.f32 %v5169, %v5236
        %v5238 = vpop.f32.mrb[0].mxu0
        %5239 = vdwg.mxu0
        %v5240 = vld [vmem:[%s97] sm:$0x1]
        %v5241 = vmul.f32 %v5237, %v5240
        %v5242 = vld [vmem:[%s99] sm:$0x1]
        %v5243 = vadd.f32 %v5241, %v5242
        %vm5244 = vcmp.ge.f32.partialorder %v5243, 0.0
        %v5245 = vmul.f32 %v5243, 0.2
        %v5246 = vsel %vm5244, %v5243, %v5245
        %v5247 = vld [vmem:[%s101] sm:$0xff]
        %v5248 = vld [vmem:[%s101 + $0x8] sm:$0xff]
        %v5249 = vld [vmem:[%s101 + $0x10] sm:$0xff]
        %v5250 = vld [vmem:[%s101 + $0x18] sm:$0xff]
        %v5251 = vld [vmem:[%s101 + $0x20] sm:$0xff]
        %v5252 = vld [vmem:[%s101 + $0x28] sm:$0xff]
        %v5253 = vld [vmem:[%s101 + $0x30] sm:$0xff]
        %v5254 = vld [vmem:[%s101 + $0x38] sm:$0xff]
        %v5255 = vld [vmem:[%s101 + $0x40] sm:$0xff]
        %v5256 = vld [vmem:[%s101 + $0x48] sm:$0xff]
        %v5257 = vld [vmem:[%s101 + $0x50] sm:$0xff]
        %v5258 = vld [vmem:[%s101 + $0x58] sm:$0xff]
        %v5259 = vld [vmem:[%s101 + $0x60] sm:$0xff]
        %v5260 = vld [vmem:[%s101 + $0x68] sm:$0xff]
        %v5261 = vld [vmem:[%s101 + $0x70] sm:$0xff]
        %v5262 = vld [vmem:[%s101 + $0x78] sm:$0xff]
        %v5263 = vld [vmem:[%s103] sm:$0x1]
        %5264 = vmatprep.subr.mxu0 0.0
        %5265 = vmatpush1.msra.mxu0 %v5247
        %5266 = vmatprep.subr.mxu0 0.0
        %5267 = vmatpush1.msra.mxu0 %v5248
        %5268 = vmatprep.subr.mxu0 0.0
        %5269 = vmatpush1.msra.mxu0 %v5249
        %5270 = vmatprep.subr.mxu0 0.0
        %5271 = vmatpush1.msra.mxu0 %v5250
        %5272 = vmatprep.subr.mxu0 0.0
        %5273 = vmatpush1.msra.mxu0 %v5251
        %5274 = vmatprep.subr.mxu0 0.0
        %5275 = vmatpush1.msra.mxu0 %v5252
        %5276 = vmatprep.subr.mxu0 0.0
        %5277 = vmatpush1.msra.mxu0 %v5253
        %5278 = vmatprep.subr.mxu0 0.0
        %5279 = vmatpush1.msra.mxu0 %v5254
        %5280 = vmatprep.subr.mxu0 0.0
        %5281 = vmatpush1.msra.mxu0 %v5255
        %5282 = vmatprep.subr.mxu0 0.0
        %5283 = vmatpush1.msra.mxu0 %v5256
        %5284 = vmatprep.subr.mxu0 0.0
        %5285 = vmatpush1.msra.mxu0 %v5257
        %5286 = vmatprep.subr.mxu0 0.0
        %5287 = vmatpush1.msra.mxu0 %v5258
        %5288 = vmatprep.subr.mxu0 0.0
        %5289 = vmatpush1.msra.mxu0 %v5259
        %5290 = vmatprep.subr.mxu0 0.0
        %5291 = vmatpush1.msra.mxu0 %v5260
        %5292 = vmatprep.subr.mxu0 0.0
        %5293 = vmatpush1.msra.mxu0 %v5261
        %5294 = vmatprep.subr.mxu0 0.0
        %5295 = vmatpush1.msra.mxu0 %v5262
        %5296 = vmatprep.subr.mxu0 0.0
        %5297 = vmatpush1.msra.mxu0 0.0
        %5298 = vmatprep.subr.mxu0 0.0
        %5299 = vmatpush1.msra.mxu0 0.0
        %5300 = vmatprep.subr.mxu0 0.0
        %5301 = vmatpush1.msra.mxu0 0.0
        %5302 = vmatprep.subr.mxu0 0.0
        %5303 = vmatpush1.msra.mxu0 0.0
        %5304 = vmatprep.subr.mxu0 0.0
        %5305 = vmatpush1.msra.mxu0 0.0
        %5306 = vmatprep.subr.mxu0 0.0
        %5307 = vmatpush1.msra.mxu0 0.0
        %5308 = vmatprep.subr.mxu0 0.0
        %5309 = vmatpush1.msra.mxu0 0.0
        %5310 = vmatprep.subr.mxu0 0.0
        %5311 = vmatpush1.msra.mxu0 0.0
        %5312 = vmatprep.subr.mxu0 0.0
        %5313 = vmatpush1.msra.mxu0 0.0
        %5314 = vmatprep.subr.mxu0 0.0
        %5315 = vmatpush1.msra.mxu0 0.0
        %5316 = vmatprep.subr.mxu0 0.0
        %5317 = vmatpush1.msra.mxu0 0.0
        %5318 = vmatprep.subr.mxu0 0.0
        %5319 = vmatpush1.msra.mxu0 0.0
        %5320 = vmatprep.subr.mxu0 0.0
        %5321 = vmatpush1.msra.mxu0 0.0
        %5322 = vmatprep.subr.mxu0 0.0
        %5323 = vmatpush1.msra.mxu0 0.0
        %5324 = vmatprep.subr.mxu0 0.0
        %5325 = vmatpush1.msra.mxu0 0.0
        %5326 = vmatprep.subr.mxu0 0.0
        %5327 = vmatpush1.msra.mxu0 0.0
        %5328 = vmatprep.mubr.f32.mxu0 0.0
        %5329 = vmatmul.mubr.f32.gmra.mrb[0].mxu0 %v5246
        %v5330 = vpop.f32.mrb[0].mxu0
        %v5331 = vadd.f32 %v5263, %v5330
        %v5332 = vpop.f32.mrb[0].mxu0
        %5333 = vdwg.mxu0
        %vm5334 = vcmask 57344
        %5335 = vst.msk [vmem:[%s1935] sm:$0x1] %vm5334, %v5331
        %s5336 = scalar_lea.vmem %s85, 256
        %v5337 = vld [vmem:[%s5336] sm:$0xff]
        %v5338 = vld [vmem:[%s5336 + $0x8] sm:$0xff]
        %v5339 = vld [vmem:[%s5336 + $0x10] sm:$0xff]
        %v5340 = vld [vmem:[%s5336 + $0x18] sm:$0xff]
        %v5341 = vld [vmem:[%s5336 + $0x20] sm:$0xff]
        %v5342 = vld [vmem:[%s5336 + $0x28] sm:$0xff]
        %v5343 = vld [vmem:[%s5336 + $0x30] sm:$0xff]
        %v5344 = vld [vmem:[%s5336 + $0x38] sm:$0xff]
        %v5345 = vld [vmem:[%s5336 + $0x40] sm:$0xff]
        %v5346 = vld [vmem:[%s5336 + $0x48] sm:$0xff]
        %v5347 = vld [vmem:[%s5336 + $0x50] sm:$0xff]
        %v5348 = vld [vmem:[%s5336 + $0x58] sm:$0xff]
        %v5349 = vld [vmem:[%s5336 + $0x60] sm:$0xff]
        %v5350 = vld [vmem:[%s5336 + $0x68] sm:$0xff]
        %v5351 = vld [vmem:[%s5336 + $0x70] sm:$0xff]
        %v5352 = vld [vmem:[%s5336 + $0x78] sm:$0xff]
        %v5353 = vld [vmem:[%s5336 + $0x80] sm:$0xff]
        %v5354 = vld [vmem:[%s5336 + $0x88] sm:$0xff]
        %v5355 = vld [vmem:[%s5336 + $0x90] sm:$0xff]
        %v5356 = vld [vmem:[%s5336 + $0x98] sm:$0xff]
        %v5357 = vld [vmem:[%s5336 + $0xa0] sm:$0xff]
        %v5358 = vld [vmem:[%s5336 + $0xa8] sm:$0xff]
        %v5359 = vld [vmem:[%s5336 + $0xb0] sm:$0xff]
        %v5360 = vld [vmem:[%s5336 + $0xb8] sm:$0xff]
        %v5361 = vld [vmem:[%s5336 + $0xc0] sm:$0xff]
        %v5362 = vld [vmem:[%s5336 + $0xc8] sm:$0xff]
        %v5363 = vld [vmem:[%s5336 + $0xd0] sm:$0xff]
        %v5364 = vld [vmem:[%s5336 + $0xd8] sm:$0xff]
        %v5365 = vld [vmem:[%s5336 + $0xe0] sm:$0xff]
        %v5366 = vld [vmem:[%s5336 + $0xe8] sm:$0xff]
        %v5367 = vld [vmem:[%s5336 + $0xf0] sm:$0xff]
        %v5368 = vld [vmem:[%s5336 + $0xf8] sm:$0xff]
        %s5369 = scalar_lea.vmem %s87, 1
        %v5370 = vld [vmem:[%s5369] sm:$0x1]
        %5371 = vmatprep.subr.mxu0 0.0
        %5372 = vmatpush1.msra.mxu0 %v5337
        %5373 = vmatprep.subr.mxu0 0.0
        %5374 = vmatpush1.msra.mxu0 %v5338
        %5375 = vmatprep.subr.mxu0 0.0
        %5376 = vmatpush1.msra.mxu0 %v5339
        %5377 = vmatprep.subr.mxu0 0.0
        %5378 = vmatpush1.msra.mxu0 %v5340
        %5379 = vmatprep.subr.mxu0 0.0
        %5380 = vmatpush1.msra.mxu0 %v5341
        %5381 = vmatprep.subr.mxu0 0.0
        %5382 = vmatpush1.msra.mxu0 %v5342
        %5383 = vmatprep.subr.mxu0 0.0
        %5384 = vmatpush1.msra.mxu0 %v5343
        %5385 = vmatprep.subr.mxu0 0.0
        %5386 = vmatpush1.msra.mxu0 %v5344
        %5387 = vmatprep.subr.mxu0 0.0
        %5388 = vmatpush1.msra.mxu0 %v5345
        %5389 = vmatprep.subr.mxu0 0.0
        %5390 = vmatpush1.msra.mxu0 %v5346
        %5391 = vmatprep.subr.mxu0 0.0
        %5392 = vmatpush1.msra.mxu0 %v5347
        %5393 = vmatprep.subr.mxu0 0.0
        %5394 = vmatpush1.msra.mxu0 %v5348
        %5395 = vmatprep.subr.mxu0 0.0
        %5396 = vmatpush1.msra.mxu0 %v5349
        %5397 = vmatprep.subr.mxu0 0.0
        %5398 = vmatpush1.msra.mxu0 %v5350
        %5399 = vmatprep.subr.mxu0 0.0
        %5400 = vmatpush1.msra.mxu0 %v5351
        %5401 = vmatprep.subr.mxu0 0.0
        %5402 = vmatpush1.msra.mxu0 %v5352
        %5403 = vmatprep.subr.mxu0 0.0
        %5404 = vmatpush1.msra.mxu0 %v5353
        %5405 = vmatprep.subr.mxu0 0.0
        %5406 = vmatpush1.msra.mxu0 %v5354
        %5407 = vmatprep.subr.mxu0 0.0
        %5408 = vmatpush1.msra.mxu0 %v5355
        %5409 = vmatprep.subr.mxu0 0.0
        %5410 = vmatpush1.msra.mxu0 %v5356
        %5411 = vmatprep.subr.mxu0 0.0
        %5412 = vmatpush1.msra.mxu0 %v5357
        %5413 = vmatprep.subr.mxu0 0.0
        %5414 = vmatpush1.msra.mxu0 %v5358
        %5415 = vmatprep.subr.mxu0 0.0
        %5416 = vmatpush1.msra.mxu0 %v5359
        %5417 = vmatprep.subr.mxu0 0.0
        %5418 = vmatpush1.msra.mxu0 %v5360
        %5419 = vmatprep.subr.mxu0 0.0
        %5420 = vmatpush1.msra.mxu0 %v5361
        %5421 = vmatprep.subr.mxu0 0.0
        %5422 = vmatpush1.msra.mxu0 %v5362
        %5423 = vmatprep.subr.mxu0 0.0
        %5424 = vmatpush1.msra.mxu0 %v5363
        %5425 = vmatprep.subr.mxu0 0.0
        %5426 = vmatpush1.msra.mxu0 %v5364
        %5427 = vmatprep.subr.mxu0 0.0
        %5428 = vmatpush1.msra.mxu0 %v5365
        %5429 = vmatprep.subr.mxu0 0.0
        %5430 = vmatpush1.msra.mxu0 %v5366
        %5431 = vmatprep.subr.mxu0 0.0
        %5432 = vmatpush1.msra.mxu0 %v5367
        %5433 = vmatprep.subr.mxu0 0.0
        %5434 = vmatpush1.msra.mxu0 %v5368
        %5435 = vmatprep.mubr.f32.mxu0 %v5042
        %5436 = vmatmul.mubr.f32.gmra.mrb[0].mxu0 %v5035
        %v5437 = vpop.f32.mrb[0].mxu0
        %v5438 = vadd.f32 %v5370, %v5437
        %v5439 = vpop.f32.mrb[0].mxu0
        %5440 = vdwg.mxu0
        %s5441 = scalar_lea.vmem %s89, 1
        %v5442 = vld [vmem:[%s5441] sm:$0x1]
        %v5443 = vmul.f32 %v5438, %v5442
        %s5444 = scalar_lea.vmem %s91, 1
        %v5445 = vld [vmem:[%s5444] sm:$0x1]
        %v5446 = vadd.f32 %v5443, %v5445
        %vm5447 = vcmp.ge.f32.partialorder %v5446, 0.0
        %v5448 = vmul.f32 %v5446, 0.2
        %v5449 = vsel %vm5447, %v5446, %v5448
        %s5450 = scalar_lea.vmem %s93, 128
        %v5451 = vld [vmem:[%s5450] sm:$0xff]
        %v5452 = vld [vmem:[%s5450 + $0x8] sm:$0xff]
        %v5453 = vld [vmem:[%s5450 + $0x10] sm:$0xff]
        %v5454 = vld [vmem:[%s5450 + $0x18] sm:$0xff]
        %v5455 = vld [vmem:[%s5450 + $0x20] sm:$0xff]
        %v5456 = vld [vmem:[%s5450 + $0x28] sm:$0xff]
        %v5457 = vld [vmem:[%s5450 + $0x30] sm:$0xff]
        %v5458 = vld [vmem:[%s5450 + $0x38] sm:$0xff]
        %v5459 = vld [vmem:[%s5450 + $0x40] sm:$0xff]
        %v5460 = vld [vmem:[%s5450 + $0x48] sm:$0xff]
        %v5461 = vld [vmem:[%s5450 + $0x50] sm:$0xff]
        %v5462 = vld [vmem:[%s5450 + $0x58] sm:$0xff]
        %v5463 = vld [vmem:[%s5450 + $0x60] sm:$0xff]
        %v5464 = vld [vmem:[%s5450 + $0x68] sm:$0xff]
        %v5465 = vld [vmem:[%s5450 + $0x70] sm:$0xff]
        %v5466 = vld [vmem:[%s5450 + $0x78] sm:$0xff]
        %s5467 = scalar_lea.vmem %s95, 1
        %v5468 = vld [vmem:[%s5467] sm:$0x1]
        %5469 = vmatprep.subr.mxu0 0.0
        %5470 = vmatpush1.msra.mxu0 %v5451
        %5471 = vmatprep.subr.mxu0 0.0
        %5472 = vmatpush1.msra.mxu0 %v5452
        %5473 = vmatprep.subr.mxu0 0.0
        %5474 = vmatpush1.msra.mxu0 %v5453
        %5475 = vmatprep.subr.mxu0 0.0
        %5476 = vmatpush1.msra.mxu0 %v5454
        %5477 = vmatprep.subr.mxu0 0.0
        %5478 = vmatpush1.msra.mxu0 %v5455
        %5479 = vmatprep.subr.mxu0 0.0
        %5480 = vmatpush1.msra.mxu0 %v5456
        %5481 = vmatprep.subr.mxu0 0.0
        %5482 = vmatpush1.msra.mxu0 %v5457
        %5483 = vmatprep.subr.mxu0 0.0
        %5484 = vmatpush1.msra.mxu0 %v5458
        %5485 = vmatprep.subr.mxu0 0.0
        %5486 = vmatpush1.msra.mxu0 %v5459
        %5487 = vmatprep.subr.mxu0 0.0
        %5488 = vmatpush1.msra.mxu0 %v5460
        %5489 = vmatprep.subr.mxu0 0.0
        %5490 = vmatpush1.msra.mxu0 %v5461
        %5491 = vmatprep.subr.mxu0 0.0
        %5492 = vmatpush1.msra.mxu0 %v5462
        %5493 = vmatprep.subr.mxu0 0.0
        %5494 = vmatpush1.msra.mxu0 %v5463
        %5495 = vmatprep.subr.mxu0 0.0
        %5496 = vmatpush1.msra.mxu0 %v5464
        %5497 = vmatprep.subr.mxu0 0.0
        %5498 = vmatpush1.msra.mxu0 %v5465
        %5499 = vmatprep.subr.mxu0 0.0
        %5500 = vmatpush1.msra.mxu0 %v5466
        %5501 = vmatprep.subr.mxu0 0.0
        %5502 = vmatpush1.msra.mxu0 0.0
        %5503 = vmatprep.subr.mxu0 0.0
        %5504 = vmatpush1.msra.mxu0 0.0
        %5505 = vmatprep.subr.mxu0 0.0
        %5506 = vmatpush1.msra.mxu0 0.0
        %5507 = vmatprep.subr.mxu0 0.0
        %5508 = vmatpush1.msra.mxu0 0.0
        %5509 = vmatprep.subr.mxu0 0.0
        %5510 = vmatpush1.msra.mxu0 0.0
        %5511 = vmatprep.subr.mxu0 0.0
        %5512 = vmatpush1.msra.mxu0 0.0
        %5513 = vmatprep.subr.mxu0 0.0
        %5514 = vmatpush1.msra.mxu0 0.0
        %5515 = vmatprep.subr.mxu0 0.0
        %5516 = vmatpush1.msra.mxu0 0.0
        %5517 = vmatprep.subr.mxu0 0.0
        %5518 = vmatpush1.msra.mxu0 0.0
        %5519 = vmatprep.subr.mxu0 0.0
        %5520 = vmatpush1.msra.mxu0 0.0
        %5521 = vmatprep.subr.mxu0 0.0
        %5522 = vmatpush1.msra.mxu0 0.0
        %5523 = vmatprep.subr.mxu0 0.0
        %5524 = vmatpush1.msra.mxu0 0.0
        %5525 = vmatprep.subr.mxu0 0.0
        %5526 = vmatpush1.msra.mxu0 0.0
        %5527 = vmatprep.subr.mxu0 0.0
        %5528 = vmatpush1.msra.mxu0 0.0
        %5529 = vmatprep.subr.mxu0 0.0
        %5530 = vmatpush1.msra.mxu0 0.0
        %5531 = vmatprep.subr.mxu0 0.0
        %5532 = vmatpush1.msra.mxu0 0.0
        %5533 = vmatprep.mubr.f32.mxu0 0.0
        %5534 = vmatmul.mubr.f32.gmra.mrb[0].mxu0 %v5449
        %v5535 = vpop.f32.mrb[0].mxu0
        %v5536 = vadd.f32 %v5468, %v5535
        %v5537 = vpop.f32.mrb[0].mxu0
        %5538 = vdwg.mxu0
        %s5539 = scalar_lea.vmem %s97, 1
        %v5540 = vld [vmem:[%s5539] sm:$0x1]
        %v5541 = vmul.f32 %v5536, %v5540
        %s5542 = scalar_lea.vmem %s99, 1
        %v5543 = vld [vmem:[%s5542] sm:$0x1]
        %v5544 = vadd.f32 %v5541, %v5543
        %vm5545 = vcmp.ge.f32.partialorder %v5544, 0.0
        %v5546 = vmul.f32 %v5544, 0.2
        %v5547 = vsel %vm5545, %v5544, %v5546
        %s5548 = scalar_lea.vmem %s101, 128
        %v5549 = vld [vmem:[%s5548] sm:$0xff]
        %v5550 = vld [vmem:[%s5548 + $0x8] sm:$0xff]
        %v5551 = vld [vmem:[%s5548 + $0x10] sm:$0xff]
        %v5552 = vld [vmem:[%s5548 + $0x18] sm:$0xff]
        %v5553 = vld [vmem:[%s5548 + $0x20] sm:$0xff]
        %v5554 = vld [vmem:[%s5548 + $0x28] sm:$0xff]
        %v5555 = vld [vmem:[%s5548 + $0x30] sm:$0xff]
        %v5556 = vld [vmem:[%s5548 + $0x38] sm:$0xff]
        %v5557 = vld [vmem:[%s5548 + $0x40] sm:$0xff]
        %v5558 = vld [vmem:[%s5548 + $0x48] sm:$0xff]
        %v5559 = vld [vmem:[%s5548 + $0x50] sm:$0xff]
        %v5560 = vld [vmem:[%s5548 + $0x58] sm:$0xff]
        %v5561 = vld [vmem:[%s5548 + $0x60] sm:$0xff]
        %v5562 = vld [vmem:[%s5548 + $0x68] sm:$0xff]
        %v5563 = vld [vmem:[%s5548 + $0x70] sm:$0xff]
        %v5564 = vld [vmem:[%s5548 + $0x78] sm:$0xff]
        %s5565 = scalar_lea.vmem %s103, 1
        %v5566 = vld [vmem:[%s5565] sm:$0x1]
        %5567 = vmatprep.subr.mxu0 0.0
        %5568 = vmatpush1.msra.mxu0 %v5549
        %5569 = vmatprep.subr.mxu0 0.0
        %5570 = vmatpush1.msra.mxu0 %v5550
        %5571 = vmatprep.subr.mxu0 0.0
        %5572 = vmatpush1.msra.mxu0 %v5551
        %5573 = vmatprep.subr.mxu0 0.0
        %5574 = vmatpush1.msra.mxu0 %v5552
        %5575 = vmatprep.subr.mxu0 0.0
        %5576 = vmatpush1.msra.mxu0 %v5553
        %5577 = vmatprep.subr.mxu0 0.0
        %5578 = vmatpush1.msra.mxu0 %v5554
        %5579 = vmatprep.subr.mxu0 0.0
        %5580 = vmatpush1.msra.mxu0 %v5555
        %5581 = vmatprep.subr.mxu0 0.0
        %5582 = vmatpush1.msra.mxu0 %v5556
        %5583 = vmatprep.subr.mxu0 0.0
        %5584 = vmatpush1.msra.mxu0 %v5557
        %5585 = vmatprep.subr.mxu0 0.0
        %5586 = vmatpush1.msra.mxu0 %v5558
        %5587 = vmatprep.subr.mxu0 0.0
        %5588 = vmatpush1.msra.mxu0 %v5559
        %5589 = vmatprep.subr.mxu0 0.0
        %5590 = vmatpush1.msra.mxu0 %v5560
        %5591 = vmatprep.subr.mxu0 0.0
        %5592 = vmatpush1.msra.mxu0 %v5561
        %5593 = vmatprep.subr.mxu0 0.0
        %5594 = vmatpush1.msra.mxu0 %v5562
        %5595 = vmatprep.subr.mxu0 0.0
        %5596 = vmatpush1.msra.mxu0 %v5563
        %5597 = vmatprep.subr.mxu0 0.0
        %5598 = vmatpush1.msra.mxu0 %v5564
        %5599 = vmatprep.subr.mxu0 0.0
        %5600 = vmatpush1.msra.mxu0 0.0
        %5601 = vmatprep.subr.mxu0 0.0
        %5602 = vmatpush1.msra.mxu0 0.0
        %5603 = vmatprep.subr.mxu0 0.0
        %5604 = vmatpush1.msra.mxu0 0.0
        %5605 = vmatprep.subr.mxu0 0.0
        %5606 = vmatpush1.msra.mxu0 0.0
        %5607 = vmatprep.subr.mxu0 0.0
        %5608 = vmatpush1.msra.mxu0 0.0
        %5609 = vmatprep.subr.mxu0 0.0
        %5610 = vmatpush1.msra.mxu0 0.0
        %5611 = vmatprep.subr.mxu0 0.0
        %5612 = vmatpush1.msra.mxu0 0.0
        %5613 = vmatprep.subr.mxu0 0.0
        %5614 = vmatpush1.msra.mxu0 0.0
        %5615 = vmatprep.subr.mxu0 0.0
        %5616 = vmatpush1.msra.mxu0 0.0
        %5617 = vmatprep.subr.mxu0 0.0
        %5618 = vmatpush1.msra.mxu0 0.0
        %5619 = vmatprep.subr.mxu0 0.0
        %5620 = vmatpush1.msra.mxu0 0.0
        %5621 = vmatprep.subr.mxu0 0.0
        %5622 = vmatpush1.msra.mxu0 0.0
        %5623 = vmatprep.subr.mxu0 0.0
        %5624 = vmatpush1.msra.mxu0 0.0
        %5625 = vmatprep.subr.mxu0 0.0
        %5626 = vmatpush1.msra.mxu0 0.0
        %5627 = vmatprep.subr.mxu0 0.0
        %5628 = vmatpush1.msra.mxu0 0.0
        %5629 = vmatprep.subr.mxu0 0.0
        %5630 = vmatpush1.msra.mxu0 0.0
        %5631 = vmatprep.mubr.f32.mxu0 0.0
        %5632 = vmatmul.mubr.f32.gmra.mrb[0].mxu0 %v5547
        %v5633 = vpop.f32.mrb[0].mxu0
        %v5634 = vadd.f32 %v5566, %v5633
        %v5635 = vpop.f32.mrb[0].mxu0
        %5636 = vdwg.mxu0
        %5637 = vst.msk [vmem:[%s1935 + $0x1] sm:$0x1] %vm5334, %v5634
        %s5638 = scalar_lea.vmem %s85, 512
        %v5639 = vld [vmem:[%s5638] sm:$0xff]
        %v5640 = vld [vmem:[%s5638 + $0x8] sm:$0xff]
        %v5641 = vld [vmem:[%s5638 + $0x10] sm:$0xff]
        %v5642 = vld [vmem:[%s5638 + $0x18] sm:$0xff]
        %v5643 = vld [vmem:[%s5638 + $0x20] sm:$0xff]
        %v5644 = vld [vmem:[%s5638 + $0x28] sm:$0xff]
        %v5645 = vld [vmem:[%s5638 + $0x30] sm:$0xff]
        %v5646 = vld [vmem:[%s5638 + $0x38] sm:$0xff]
        %v5647 = vld [vmem:[%s5638 + $0x40] sm:$0xff]
        %v5648 = vld [vmem:[%s5638 + $0x48] sm:$0xff]
        %v5649 = vld [vmem:[%s5638 + $0x50] sm:$0xff]
        %v5650 = vld [vmem:[%s5638 + $0x58] sm:$0xff]
        %v5651 = vld [vmem:[%s5638 + $0x60] sm:$0xff]
        %v5652 = vld [vmem:[%s5638 + $0x68] sm:$0xff]
        %v5653 = vld [vmem:[%s5638 + $0x70] sm:$0xff]
        %v5654 = vld [vmem:[%s5638 + $0x78] sm:$0xff]
        %v5655 = vld [vmem:[%s5638 + $0x80] sm:$0xff]
        %v5656 = vld [vmem:[%s5638 + $0x88] sm:$0xff]
        %v5657 = vld [vmem:[%s5638 + $0x90] sm:$0xff]
        %v5658 = vld [vmem:[%s5638 + $0x98] sm:$0xff]
        %v5659 = vld [vmem:[%s5638 + $0xa0] sm:$0xff]
        %v5660 = vld [vmem:[%s5638 + $0xa8] sm:$0xff]
        %v5661 = vld [vmem:[%s5638 + $0xb0] sm:$0xff]
        %v5662 = vld [vmem:[%s5638 + $0xb8] sm:$0xff]
        %v5663 = vld [vmem:[%s5638 + $0xc0] sm:$0xff]
        %v5664 = vld [vmem:[%s5638 + $0xc8] sm:$0xff]
        %v5665 = vld [vmem:[%s5638 + $0xd0] sm:$0xff]
        %v5666 = vld [vmem:[%s5638 + $0xd8] sm:$0xff]
        %v5667 = vld [vmem:[%s5638 + $0xe0] sm:$0xff]
        %v5668 = vld [vmem:[%s5638 + $0xe8] sm:$0xff]
        %v5669 = vld [vmem:[%s5638 + $0xf0] sm:$0xff]
        %v5670 = vld [vmem:[%s5638 + $0xf8] sm:$0xff]
        %s5671 = scalar_lea.vmem %s87, 2
        %v5672 = vld [vmem:[%s5671] sm:$0x1]
        %5673 = vmatprep.subr.mxu0 0.0
        %5674 = vmatpush1.msra.mxu0 %v5639
        %5675 = vmatprep.subr.mxu0 0.0
        %5676 = vmatpush1.msra.mxu0 %v5640
        %5677 = vmatprep.subr.mxu0 0.0
        %5678 = vmatpush1.msra.mxu0 %v5641
        %5679 = vmatprep.subr.mxu0 0.0
        %5680 = vmatpush1.msra.mxu0 %v5642
        %5681 = vmatprep.subr.mxu0 0.0
        %5682 = vmatpush1.msra.mxu0 %v5643
        %5683 = vmatprep.subr.mxu0 0.0
        %5684 = vmatpush1.msra.mxu0 %v5644
        %5685 = vmatprep.subr.mxu0 0.0
        %5686 = vmatpush1.msra.mxu0 %v5645
        %5687 = vmatprep.subr.mxu0 0.0
        %5688 = vmatpush1.msra.mxu0 %v5646
        %5689 = vmatprep.subr.mxu0 0.0
        %5690 = vmatpush1.msra.mxu0 %v5647
        %5691 = vmatprep.subr.mxu0 0.0
        %5692 = vmatpush1.msra.mxu0 %v5648
        %5693 = vmatprep.subr.mxu0 0.0
        %5694 = vmatpush1.msra.mxu0 %v5649
        %5695 = vmatprep.subr.mxu0 0.0
        %5696 = vmatpush1.msra.mxu0 %v5650
        %5697 = vmatprep.subr.mxu0 0.0
        %5698 = vmatpush1.msra.mxu0 %v5651
        %5699 = vmatprep.subr.mxu0 0.0
        %5700 = vmatpush1.msra.mxu0 %v5652
        %5701 = vmatprep.subr.mxu0 0.0
        %5702 = vmatpush1.msra.mxu0 %v5653
        %5703 = vmatprep.subr.mxu0 0.0
        %5704 = vmatpush1.msra.mxu0 %v5654
        %5705 = vmatprep.subr.mxu0 0.0
        %5706 = vmatpush1.msra.mxu0 %v5655
        %5707 = vmatprep.subr.mxu0 0.0
        %5708 = vmatpush1.msra.mxu0 %v5656
        %5709 = vmatprep.subr.mxu0 0.0
        %5710 = vmatpush1.msra.mxu0 %v5657
        %5711 = vmatprep.subr.mxu0 0.0
        %5712 = vmatpush1.msra.mxu0 %v5658
        %5713 = vmatprep.subr.mxu0 0.0
        %5714 = vmatpush1.msra.mxu0 %v5659
        %5715 = vmatprep.subr.mxu0 0.0
        %5716 = vmatpush1.msra.mxu0 %v5660
        %5717 = vmatprep.subr.mxu0 0.0
        %5718 = vmatpush1.msra.mxu0 %v5661
        %5719 = vmatprep.subr.mxu0 0.0
        %5720 = vmatpush1.msra.mxu0 %v5662
        %5721 = vmatprep.subr.mxu0 0.0
        %5722 = vmatpush1.msra.mxu0 %v5663
        %5723 = vmatprep.subr.mxu0 0.0
        %5724 = vmatpush1.msra.mxu0 %v5664
        %5725 = vmatprep.subr.mxu0 0.0
        %5726 = vmatpush1.msra.mxu0 %v5665
        %5727 = vmatprep.subr.mxu0 0.0
        %5728 = vmatpush1.msra.mxu0 %v5666
        %5729 = vmatprep.subr.mxu0 0.0
        %5730 = vmatpush1.msra.mxu0 %v5667
        %5731 = vmatprep.subr.mxu0 0.0
        %5732 = vmatpush1.msra.mxu0 %v5668
        %5733 = vmatprep.subr.mxu0 0.0
        %5734 = vmatpush1.msra.mxu0 %v5669
        %5735 = vmatprep.subr.mxu0 0.0
        %5736 = vmatpush1.msra.mxu0 %v5670
        %5737 = vmatprep.mubr.f32.mxu0 %v5042
        %5738 = vmatmul.mubr.f32.gmra.mrb[0].mxu0 %v5035
        %v5739 = vpop.f32.mrb[0].mxu0
        %v5740 = vadd.f32 %v5672, %v5739
        %v5741 = vpop.f32.mrb[0].mxu0
        %5742 = vdwg.mxu0
        %s5743 = scalar_lea.vmem %s89, 2
        %v5744 = vld [vmem:[%s5743] sm:$0x1]
        %v5745 = vmul.f32 %v5740, %v5744
        %s5746 = scalar_lea.vmem %s91, 2
        %v5747 = vld [vmem:[%s5746] sm:$0x1]
        %v5748 = vadd.f32 %v5745, %v5747
        %vm5749 = vcmp.ge.f32.partialorder %v5748, 0.0
        %v5750 = vmul.f32 %v5748, 0.2
        %v5751 = vsel %vm5749, %v5748, %v5750
        %s5752 = scalar_lea.vmem %s93, 256
        %v5753 = vld [vmem:[%s5752] sm:$0xff]
        %v5754 = vld [vmem:[%s5752 + $0x8] sm:$0xff]
        %v5755 = vld [vmem:[%s5752 + $0x10] sm:$0xff]
        %v5756 = vld [vmem:[%s5752 + $0x18] sm:$0xff]
        %v5757 = vld [vmem:[%s5752 + $0x20] sm:$0xff]
        %v5758 = vld [vmem:[%s5752 + $0x28] sm:$0xff]
        %v5759 = vld [vmem:[%s5752 + $0x30] sm:$0xff]
        %v5760 = vld [vmem:[%s5752 + $0x38] sm:$0xff]
        %v5761 = vld [vmem:[%s5752 + $0x40] sm:$0xff]
        %v5762 = vld [vmem:[%s5752 + $0x48] sm:$0xff]
        %v5763 = vld [vmem:[%s5752 + $0x50] sm:$0xff]
        %v5764 = vld [vmem:[%s5752 + $0x58] sm:$0xff]
        %v5765 = vld [vmem:[%s5752 + $0x60] sm:$0xff]
        %v5766 = vld [vmem:[%s5752 + $0x68] sm:$0xff]
        %v5767 = vld [vmem:[%s5752 + $0x70] sm:$0xff]
        %v5768 = vld [vmem:[%s5752 + $0x78] sm:$0xff]
        %s5769 = scalar_lea.vmem %s95, 2
        %v5770 = vld [vmem:[%s5769] sm:$0x1]
        %5771 = vmatprep.subr.mxu0 0.0
        %5772 = vmatpush1.msra.mxu0 %v5753
        %5773 = vmatprep.subr.mxu0 0.0
        %5774 = vmatpush1.msra.mxu0 %v5754
        %5775 = vmatprep.subr.mxu0 0.0
        %5776 = vmatpush1.msra.mxu0 %v5755
        %5777 = vmatprep.subr.mxu0 0.0
        %5778 = vmatpush1.msra.mxu0 %v5756
        %5779 = vmatprep.subr.mxu0 0.0
        %5780 = vmatpush1.msra.mxu0 %v5757
        %5781 = vmatprep.subr.mxu0 0.0
        %5782 = vmatpush1.msra.mxu0 %v5758
        %5783 = vmatprep.subr.mxu0 0.0
        %5784 = vmatpush1.msra.mxu0 %v5759
        %5785 = vmatprep.subr.mxu0 0.0
        %5786 = vmatpush1.msra.mxu0 %v5760
        %5787 = vmatprep.subr.mxu0 0.0
        %5788 = vmatpush1.msra.mxu0 %v5761
        %5789 = vmatprep.subr.mxu0 0.0
        %5790 = vmatpush1.msra.mxu0 %v5762
        %5791 = vmatprep.subr.mxu0 0.0
        %5792 = vmatpush1.msra.mxu0 %v5763
        %5793 = vmatprep.subr.mxu0 0.0
        %5794 = vmatpush1.msra.mxu0 %v5764
        %5795 = vmatprep.subr.mxu0 0.0
        %5796 = vmatpush1.msra.mxu0 %v5765
        %5797 = vmatprep.subr.mxu0 0.0
        %5798 = vmatpush1.msra.mxu0 %v5766
        %5799 = vmatprep.subr.mxu0 0.0
        %5800 = vmatpush1.msra.mxu0 %v5767
        %5801 = vmatprep.subr.mxu0 0.0
        %5802 = vmatpush1.msra.mxu0 %v5768
        %5803 = vmatprep.subr.mxu0 0.0
        %5804 = vmatpush1.msra.mxu0 0.0
        %5805 = vmatprep.subr.mxu0 0.0
        %5806 = vmatpush1.msra.mxu0 0.0
        %5807 = vmatprep.subr.mxu0 0.0
        %5808 = vmatpush1.msra.mxu0 0.0
        %5809 = vmatprep.subr.mxu0 0.0
        %5810 = vmatpush1.msra.mxu0 0.0
        %5811 = vmatprep.subr.mxu0 0.0
        %5812 = vmatpush1.msra.mxu0 0.0
        %5813 = vmatprep.subr.mxu0 0.0
        %5814 = vmatpush1.msra.mxu0 0.0
        %5815 = vmatprep.subr.mxu0 0.0
        %5816 = vmatpush1.msra.mxu0 0.0
        %5817 = vmatprep.subr.mxu0 0.0
        %5818 = vmatpush1.msra.mxu0 0.0
        %5819 = vmatprep.subr.mxu0 0.0
        %5820 = vmatpush1.msra.mxu0 0.0
        %5821 = vmatprep.subr.mxu0 0.0
        %5822 = vmatpush1.msra.mxu0 0.0
        %5823 = vmatprep.subr.mxu0 0.0
        %5824 = vmatpush1.msra.mxu0 0.0
        %5825 = vmatprep.subr.mxu0 0.0
        %5826 = vmatpush1.msra.mxu0 0.0
        %5827 = vmatprep.subr.mxu0 0.0
        %5828 = vmatpush1.msra.mxu0 0.0
        %5829 = vmatprep.subr.mxu0 0.0
        %5830 = vmatpush1.msra.mxu0 0.0
        %5831 = vmatprep.subr.mxu0 0.0
        %5832 = vmatpush1.msra.mxu0 0.0
        %5833 = vmatprep.subr.mxu0 0.0
        %5834 = vmatpush1.msra.mxu0 0.0
        %5835 = vmatprep.mubr.f32.mxu0 0.0
        %5836 = vmatmul.mubr.f32.gmra.mrb[0].mxu0 %v5751
        %v5837 = vpop.f32.mrb[0].mxu0
        %v5838 = vadd.f32 %v5770, %v5837
        %v5839 = vpop.f32.mrb[0].mxu0
        %5840 = vdwg.mxu0
        %s5841 = scalar_lea.vmem %s97, 2
        %v5842 = vld [vmem:[%s5841] sm:$0x1]
        %v5843 = vmul.f32 %v5838, %v5842
        %s5844 = scalar_lea.vmem %s99, 2
        %v5845 = vld [vmem:[%s5844] sm:$0x1]
        %v5846 = vadd.f32 %v5843, %v5845
        %vm5847 = vcmp.ge.f32.partialorder %v5846, 0.0
        %v5848 = vmul.f32 %v5846, 0.2
        %v5849 = vsel %vm5847, %v5846, %v5848
        %s5850 = scalar_lea.vmem %s101, 256
        %v5851 = vld [vmem:[%s5850] sm:$0xff]
        %v5852 = vld [vmem:[%s5850 + $0x8] sm:$0xff]
        %v5853 = vld [vmem:[%s5850 + $0x10] sm:$0xff]
        %v5854 = vld [vmem:[%s5850 + $0x18] sm:$0xff]
        %v5855 = vld [vmem:[%s5850 + $0x20] sm:$0xff]
        %v5856 = vld [vmem:[%s5850 + $0x28] sm:$0xff]
        %v5857 = vld [vmem:[%s5850 + $0x30] sm:$0xff]
        %v5858 = vld [vmem:[%s5850 + $0x38] sm:$0xff]
        %v5859 = vld [vmem:[%s5850 + $0x40] sm:$0xff]
        %v5860 = vld [vmem:[%s5850 + $0x48] sm:$0xff]
        %v5861 = vld [vmem:[%s5850 + $0x50] sm:$0xff]
        %v5862 = vld [vmem:[%s5850 + $0x58] sm:$0xff]
        %v5863 = vld [vmem:[%s5850 + $0x60] sm:$0xff]
        %v5864 = vld [vmem:[%s5850 + $0x68] sm:$0xff]
        %v5865 = vld [vmem:[%s5850 + $0x70] sm:$0xff]
        %v5866 = vld [vmem:[%s5850 + $0x78] sm:$0xff]
        %s5867 = scalar_lea.vmem %s103, 2
        %v5868 = vld [vmem:[%s5867] sm:$0x1]
        %5869 = vmatprep.subr.mxu0 0.0
        %5870 = vmatpush1.msra.mxu0 %v5851
        %5871 = vmatprep.subr.mxu0 0.0
        %5872 = vmatpush1.msra.mxu0 %v5852
        %5873 = vmatprep.subr.mxu0 0.0
        %5874 = vmatpush1.msra.mxu0 %v5853
        %5875 = vmatprep.subr.mxu0 0.0
        %5876 = vmatpush1.msra.mxu0 %v5854
        %5877 = vmatprep.subr.mxu0 0.0
        %5878 = vmatpush1.msra.mxu0 %v5855
        %5879 = vmatprep.subr.mxu0 0.0
        %5880 = vmatpush1.msra.mxu0 %v5856
        %5881 = vmatprep.subr.mxu0 0.0
        %5882 = vmatpush1.msra.mxu0 %v5857
        %5883 = vmatprep.subr.mxu0 0.0
        %5884 = vmatpush1.msra.mxu0 %v5858
        %5885 = vmatprep.subr.mxu0 0.0
        %5886 = vmatpush1.msra.mxu0 %v5859
        %5887 = vmatprep.subr.mxu0 0.0
        %5888 = vmatpush1.msra.mxu0 %v5860
        %5889 = vmatprep.subr.mxu0 0.0
        %5890 = vmatpush1.msra.mxu0 %v5861
        %5891 = vmatprep.subr.mxu0 0.0
        %5892 = vmatpush1.msra.mxu0 %v5862
        %5893 = vmatprep.subr.mxu0 0.0
        %5894 = vmatpush1.msra.mxu0 %v5863
        %5895 = vmatprep.subr.mxu0 0.0
        %5896 = vmatpush1.msra.mxu0 %v5864
        %5897 = vmatprep.subr.mxu0 0.0
        %5898 = vmatpush1.msra.mxu0 %v5865
        %5899 = vmatprep.subr.mxu0 0.0
        %5900 = vmatpush1.msra.mxu0 %v5866
        %5901 = vmatprep.subr.mxu0 0.0
        %5902 = vmatpush1.msra.mxu0 0.0
        %5903 = vmatprep.subr.mxu0 0.0
        %5904 = vmatpush1.msra.mxu0 0.0
        %5905 = vmatprep.subr.mxu0 0.0
        %5906 = vmatpush1.msra.mxu0 0.0
        %5907 = vmatprep.subr.mxu0 0.0
        %5908 = vmatpush1.msra.mxu0 0.0
        %5909 = vmatprep.subr.mxu0 0.0
        %5910 = vmatpush1.msra.mxu0 0.0
        %5911 = vmatprep.subr.mxu0 0.0
        %5912 = vmatpush1.msra.mxu0 0.0
        %5913 = vmatprep.subr.mxu0 0.0
        %5914 = vmatpush1.msra.mxu0 0.0
        %5915 = vmatprep.subr.mxu0 0.0
        %5916 = vmatpush1.msra.mxu0 0.0
        %5917 = vmatprep.subr.mxu0 0.0
        %5918 = vmatpush1.msra.mxu0 0.0
        %5919 = vmatprep.subr.mxu0 0.0
        %5920 = vmatpush1.msra.mxu0 0.0
        %5921 = vmatprep.subr.mxu0 0.0
        %5922 = vmatpush1.msra.mxu0 0.0
        %5923 = vmatprep.subr.mxu0 0.0
        %5924 = vmatpush1.msra.mxu0 0.0
        %5925 = vmatprep.subr.mxu0 0.0
        %5926 = vmatpush1.msra.mxu0 0.0
        %5927 = vmatprep.subr.mxu0 0.0
        %5928 = vmatpush1.msra.mxu0 0.0
        %5929 = vmatprep.subr.mxu0 0.0
        %5930 = vmatpush1.msra.mxu0 0.0
        %5931 = vmatprep.subr.mxu0 0.0
        %5932 = vmatpush1.msra.mxu0 0.0
        %5933 = vmatprep.mubr.f32.mxu0 0.0
        %5934 = vmatmul.mubr.f32.gmra.mrb[0].mxu0 %v5849
        %v5935 = vpop.f32.mrb[0].mxu0
        %v5936 = vadd.f32 %v5868, %v5935
        %v5937 = vpop.f32.mrb[0].mxu0
        %5938 = vdwg.mxu0
        %5939 = vst.msk [vmem:[%s1935 + $0x2] sm:$0x1] %vm5334, %v5936
        %s5940 = scalar_lea.vmem %s85, 768
        %v5941 = vld [vmem:[%s5940] sm:$0xff]
        %v5942 = vld [vmem:[%s5940 + $0x8] sm:$0xff]
        %v5943 = vld [vmem:[%s5940 + $0x10] sm:$0xff]
        %v5944 = vld [vmem:[%s5940 + $0x18] sm:$0xff]
        %v5945 = vld [vmem:[%s5940 + $0x20] sm:$0xff]
        %v5946 = vld [vmem:[%s5940 + $0x28] sm:$0xff]
        %v5947 = vld [vmem:[%s5940 + $0x30] sm:$0xff]
        %v5948 = vld [vmem:[%s5940 + $0x38] sm:$0xff]
        %v5949 = vld [vmem:[%s5940 + $0x40] sm:$0xff]
        %v5950 = vld [vmem:[%s5940 + $0x48] sm:$0xff]
        %v5951 = vld [vmem:[%s5940 + $0x50] sm:$0xff]
        %v5952 = vld [vmem:[%s5940 + $0x58] sm:$0xff]
        %v5953 = vld [vmem:[%s5940 + $0x60] sm:$0xff]
        %v5954 = vld [vmem:[%s5940 + $0x68] sm:$0xff]
        %v5955 = vld [vmem:[%s5940 + $0x70] sm:$0xff]
        %v5956 = vld [vmem:[%s5940 + $0x78] sm:$0xff]
        %v5957 = vld [vmem:[%s5940 + $0x80] sm:$0xff]
        %v5958 = vld [vmem:[%s5940 + $0x88] sm:$0xff]
        %v5959 = vld [vmem:[%s5940 + $0x90] sm:$0xff]
        %v5960 = vld [vmem:[%s5940 + $0x98] sm:$0xff]
        %v5961 = vld [vmem:[%s5940 + $0xa0] sm:$0xff]
        %v5962 = vld [vmem:[%s5940 + $0xa8] sm:$0xff]
        %v5963 = vld [vmem:[%s5940 + $0xb0] sm:$0xff]
        %v5964 = vld [vmem:[%s5940 + $0xb8] sm:$0xff]
        %v5965 = vld [vmem:[%s5940 + $0xc0] sm:$0xff]
        %v5966 = vld [vmem:[%s5940 + $0xc8] sm:$0xff]
        %v5967 = vld [vmem:[%s5940 + $0xd0] sm:$0xff]
        %v5968 = vld [vmem:[%s5940 + $0xd8] sm:$0xff]
        %v5969 = vld [vmem:[%s5940 + $0xe0] sm:$0xff]
        %v5970 = vld [vmem:[%s5940 + $0xe8] sm:$0xff]
        %v5971 = vld [vmem:[%s5940 + $0xf0] sm:$0xff]
        %v5972 = vld [vmem:[%s5940 + $0xf8] sm:$0xff]
        %s5973 = scalar_lea.vmem %s87, 3
        %v5974 = vld [vmem:[%s5973] sm:$0x1]
        %5975 = vmatprep.subr.mxu0 0.0
        %5976 = vmatpush1.msra.mxu0 %v5941
        %5977 = vmatprep.subr.mxu0 0.0
        %5978 = vmatpush1.msra.mxu0 %v5942
        %5979 = vmatprep.subr.mxu0 0.0
        %5980 = vmatpush1.msra.mxu0 %v5943
        %5981 = vmatprep.subr.mxu0 0.0
        %5982 = vmatpush1.msra.mxu0 %v5944
        %5983 = vmatprep.subr.mxu0 0.0
        %5984 = vmatpush1.msra.mxu0 %v5945
        %5985 = vmatprep.subr.mxu0 0.0
        %5986 = vmatpush1.msra.mxu0 %v5946
        %5987 = vmatprep.subr.mxu0 0.0
        %5988 = vmatpush1.msra.mxu0 %v5947
        %5989 = vmatprep.subr.mxu0 0.0
        %5990 = vmatpush1.msra.mxu0 %v5948
        %5991 = vmatprep.subr.mxu0 0.0
        %5992 = vmatpush1.msra.mxu0 %v5949
        %5993 = vmatprep.subr.mxu0 0.0
        %5994 = vmatpush1.msra.mxu0 %v5950
        %5995 = vmatprep.subr.mxu0 0.0
        %5996 = vmatpush1.msra.mxu0 %v5951
        %5997 = vmatprep.subr.mxu0 0.0
        %5998 = vmatpush1.msra.mxu0 %v5952
        %5999 = vmatprep.subr.mxu0 0.0
        %6000 = vmatpush1.msra.mxu0 %v5953
        %6001 = vmatprep.subr.mxu0 0.0
        %6002 = vmatpush1.msra.mxu0 %v5954
        %6003 = vmatprep.subr.mxu0 0.0
        %6004 = vmatpush1.msra.mxu0 %v5955
        %6005 = vmatprep.subr.mxu0 0.0
        %6006 = vmatpush1.msra.mxu0 %v5956
        %6007 = vmatprep.subr.mxu0 0.0
        %6008 = vmatpush1.msra.mxu0 %v5957
        %6009 = vmatprep.subr.mxu0 0.0
        %6010 = vmatpush1.msra.mxu0 %v5958
        %6011 = vmatprep.subr.mxu0 0.0
        %6012 = vmatpush1.msra.mxu0 %v5959
        %6013 = vmatprep.subr.mxu0 0.0
        %6014 = vmatpush1.msra.mxu0 %v5960
        %6015 = vmatprep.subr.mxu0 0.0
        %6016 = vmatpush1.msra.mxu0 %v5961
        %6017 = vmatprep.subr.mxu0 0.0
        %6018 = vmatpush1.msra.mxu0 %v5962
        %6019 = vmatprep.subr.mxu0 0.0
        %6020 = vmatpush1.msra.mxu0 %v5963
        %6021 = vmatprep.subr.mxu0 0.0
        %6022 = vmatpush1.msra.mxu0 %v5964
        %6023 = vmatprep.subr.mxu0 0.0
        %6024 = vmatpush1.msra.mxu0 %v5965
        %6025 = vmatprep.subr.mxu0 0.0
        %6026 = vmatpush1.msra.mxu0 %v5966
        %6027 = vmatprep.subr.mxu0 0.0
        %6028 = vmatpush1.msra.mxu0 %v5967
        %6029 = vmatprep.subr.mxu0 0.0
        %6030 = vmatpush1.msra.mxu0 %v5968
        %6031 = vmatprep.subr.mxu0 0.0
        %6032 = vmatpush1.msra.mxu0 %v5969
        %6033 = vmatprep.subr.mxu0 0.0
        %6034 = vmatpush1.msra.mxu0 %v5970
        %6035 = vmatprep.subr.mxu0 0.0
        %6036 = vmatpush1.msra.mxu0 %v5971
        %6037 = vmatprep.subr.mxu0 0.0
        %6038 = vmatpush1.msra.mxu0 %v5972
        %6039 = vmatprep.mubr.f32.mxu0 %v5042
        %6040 = vmatmul.mubr.f32.gmra.mrb[0].mxu0 %v5035
        %v6041 = vpop.f32.mrb[0].mxu0
        %v6042 = vadd.f32 %v5974, %v6041
        %v6043 = vpop.f32.mrb[0].mxu0
        %6044 = vdwg.mxu0
        %s6045 = scalar_lea.vmem %s89, 3
        %v6046 = vld [vmem:[%s6045] sm:$0x1]
        %v6047 = vmul.f32 %v6042, %v6046
        %s6048 = scalar_lea.vmem %s91, 3
        %v6049 = vld [vmem:[%s6048] sm:$0x1]
        %v6050 = vadd.f32 %v6047, %v6049
        %vm6051 = vcmp.ge.f32.partialorder %v6050, 0.0
        %v6052 = vmul.f32 %v6050, 0.2
        %v6053 = vsel %vm6051, %v6050, %v6052
        %s6054 = scalar_lea.vmem %s93, 384
        %v6055 = vld [vmem:[%s6054] sm:$0xff]
        %v6056 = vld [vmem:[%s6054 + $0x8] sm:$0xff]
        %v6057 = vld [vmem:[%s6054 + $0x10] sm:$0xff]
        %v6058 = vld [vmem:[%s6054 + $0x18] sm:$0xff]
        %v6059 = vld [vmem:[%s6054 + $0x20] sm:$0xff]
        %v6060 = vld [vmem:[%s6054 + $0x28] sm:$0xff]
        %v6061 = vld [vmem:[%s6054 + $0x30] sm:$0xff]
        %v6062 = vld [vmem:[%s6054 + $0x38] sm:$0xff]
        %v6063 = vld [vmem:[%s6054 + $0x40] sm:$0xff]
        %v6064 = vld [vmem:[%s6054 + $0x48] sm:$0xff]
        %v6065 = vld [vmem:[%s6054 + $0x50] sm:$0xff]
        %v6066 = vld [vmem:[%s6054 + $0x58] sm:$0xff]
        %v6067 = vld [vmem:[%s6054 + $0x60] sm:$0xff]
        %v6068 = vld [vmem:[%s6054 + $0x68] sm:$0xff]
        %v6069 = vld [vmem:[%s6054 + $0x70] sm:$0xff]
        %v6070 = vld [vmem:[%s6054 + $0x78] sm:$0xff]
        %s6071 = scalar_lea.vmem %s95, 3
        %v6072 = vld [vmem:[%s6071] sm:$0x1]
        %6073 = vmatprep.subr.mxu0 0.0
        %6074 = vmatpush1.msra.mxu0 %v6055
        %6075 = vmatprep.subr.mxu0 0.0
        %6076 = vmatpush1.msra.mxu0 %v6056
        %6077 = vmatprep.subr.mxu0 0.0
        %6078 = vmatpush1.msra.mxu0 %v6057
        %6079 = vmatprep.subr.mxu0 0.0
        %6080 = vmatpush1.msra.mxu0 %v6058
        %6081 = vmatprep.subr.mxu0 0.0
        %6082 = vmatpush1.msra.mxu0 %v6059
        %6083 = vmatprep.subr.mxu0 0.0
        %6084 = vmatpush1.msra.mxu0 %v6060
        %6085 = vmatprep.subr.mxu0 0.0
        %6086 = vmatpush1.msra.mxu0 %v6061
        %6087 = vmatprep.subr.mxu0 0.0
        %6088 = vmatpush1.msra.mxu0 %v6062
        %6089 = vmatprep.subr.mxu0 0.0
        %6090 = vmatpush1.msra.mxu0 %v6063
        %6091 = vmatprep.subr.mxu0 0.0
        %6092 = vmatpush1.msra.mxu0 %v6064
        %6093 = vmatprep.subr.mxu0 0.0
        %6094 = vmatpush1.msra.mxu0 %v6065
        %6095 = vmatprep.subr.mxu0 0.0
        %6096 = vmatpush1.msra.mxu0 %v6066
        %6097 = vmatprep.subr.mxu0 0.0
        %6098 = vmatpush1.msra.mxu0 %v6067
        %6099 = vmatprep.subr.mxu0 0.0
        %6100 = vmatpush1.msra.mxu0 %v6068
        %6101 = vmatprep.subr.mxu0 0.0
        %6102 = vmatpush1.msra.mxu0 %v6069
        %6103 = vmatprep.subr.mxu0 0.0
        %6104 = vmatpush1.msra.mxu0 %v6070
        %6105 = vmatprep.subr.mxu0 0.0
        %6106 = vmatpush1.msra.mxu0 0.0
        %6107 = vmatprep.subr.mxu0 0.0
        %6108 = vmatpush1.msra.mxu0 0.0
        %6109 = vmatprep.subr.mxu0 0.0
        %6110 = vmatpush1.msra.mxu0 0.0
        %6111 = vmatprep.subr.mxu0 0.0
        %6112 = vmatpush1.msra.mxu0 0.0
        %6113 = vmatprep.subr.mxu0 0.0
        %6114 = vmatpush1.msra.mxu0 0.0
        %6115 = vmatprep.subr.mxu0 0.0
        %6116 = vmatpush1.msra.mxu0 0.0
        %6117 = vmatprep.subr.mxu0 0.0
        %6118 = vmatpush1.msra.mxu0 0.0
        %6119 = vmatprep.subr.mxu0 0.0
        %6120 = vmatpush1.msra.mxu0 0.0
        %6121 = vmatprep.subr.mxu0 0.0
        %6122 = vmatpush1.msra.mxu0 0.0
        %6123 = vmatprep.subr.mxu0 0.0
        %6124 = vmatpush1.msra.mxu0 0.0
        %6125 = vmatprep.subr.mxu0 0.0
        %6126 = vmatpush1.msra.mxu0 0.0
        %6127 = vmatprep.subr.mxu0 0.0
        %6128 = vmatpush1.msra.mxu0 0.0
        %6129 = vmatprep.subr.mxu0 0.0
        %6130 = vmatpush1.msra.mxu0 0.0
        %6131 = vmatprep.subr.mxu0 0.0
        %6132 = vmatpush1.msra.mxu0 0.0
        %6133 = vmatprep.subr.mxu0 0.0
        %6134 = vmatpush1.msra.mxu0 0.0
        %6135 = vmatprep.subr.mxu0 0.0
        %6136 = vmatpush1.msra.mxu0 0.0
        %6137 = vmatprep.mubr.f32.mxu0 0.0
        %6138 = vmatmul.mubr.f32.gmra.mrb[0].mxu0 %v6053
        %v6139 = vpop.f32.mrb[0].mxu0
        %v6140 = vadd.f32 %v6072, %v6139
        %v6141 = vpop.f32.mrb[0].mxu0
        %6142 = vdwg.mxu0
        %s6143 = scalar_lea.vmem %s97, 3
        %v6144 = vld [vmem:[%s6143] sm:$0x1]
        %v6145 = vmul.f32 %v6140, %v6144
        %s6146 = scalar_lea.vmem %s99, 3
        %v6147 = vld [vmem:[%s6146] sm:$0x1]
        %v6148 = vadd.f32 %v6145, %v6147
        %vm6149 = vcmp.ge.f32.partialorder %v6148, 0.0
        %v6150 = vmul.f32 %v6148, 0.2
        %v6151 = vsel %vm6149, %v6148, %v6150
        %s6152 = scalar_lea.vmem %s101, 384
        %v6153 = vld [vmem:[%s6152] sm:$0xff]
        %v6154 = vld [vmem:[%s6152 + $0x8] sm:$0xff]
        %v6155 = vld [vmem:[%s6152 + $0x10] sm:$0xff]
        %v6156 = vld [vmem:[%s6152 + $0x18] sm:$0xff]
        %v6157 = vld [vmem:[%s6152 + $0x20] sm:$0xff]
        %v6158 = vld [vmem:[%s6152 + $0x28] sm:$0xff]
        %v6159 = vld [vmem:[%s6152 + $0x30] sm:$0xff]
        %v6160 = vld [vmem:[%s6152 + $0x38] sm:$0xff]
        %v6161 = vld [vmem:[%s6152 + $0x40] sm:$0xff]
        %v6162 = vld [vmem:[%s6152 + $0x48] sm:$0xff]
        %v6163 = vld [vmem:[%s6152 + $0x50] sm:$0xff]
        %v6164 = vld [vmem:[%s6152 + $0x58] sm:$0xff]
        %v6165 = vld [vmem:[%s6152 + $0x60] sm:$0xff]
        %v6166 = vld [vmem:[%s6152 + $0x68] sm:$0xff]
        %v6167 = vld [vmem:[%s6152 + $0x70] sm:$0xff]
        %v6168 = vld [vmem:[%s6152 + $0x78] sm:$0xff]
        %s6169 = scalar_lea.vmem %s103, 3
        %v6170 = vld [vmem:[%s6169] sm:$0x1]
        %6171 = vmatprep.subr.mxu0 0.0
        %6172 = vmatpush1.msra.mxu0 %v6153
        %6173 = vmatprep.subr.mxu0 0.0
        %6174 = vmatpush1.msra.mxu0 %v6154
        %6175 = vmatprep.subr.mxu0 0.0
        %6176 = vmatpush1.msra.mxu0 %v6155
        %6177 = vmatprep.subr.mxu0 0.0
        %6178 = vmatpush1.msra.mxu0 %v6156
        %6179 = vmatprep.subr.mxu0 0.0
        %6180 = vmatpush1.msra.mxu0 %v6157
        %6181 = vmatprep.subr.mxu0 0.0
        %6182 = vmatpush1.msra.mxu0 %v6158
        %6183 = vmatprep.subr.mxu0 0.0
        %6184 = vmatpush1.msra.mxu0 %v6159
        %6185 = vmatprep.subr.mxu0 0.0
        %6186 = vmatpush1.msra.mxu0 %v6160
        %6187 = vmatprep.subr.mxu0 0.0
        %6188 = vmatpush1.msra.mxu0 %v6161
        %6189 = vmatprep.subr.mxu0 0.0
        %6190 = vmatpush1.msra.mxu0 %v6162
        %6191 = vmatprep.subr.mxu0 0.0
        %6192 = vmatpush1.msra.mxu0 %v6163
        %6193 = vmatprep.subr.mxu0 0.0
        %6194 = vmatpush1.msra.mxu0 %v6164
        %6195 = vmatprep.subr.mxu0 0.0
        %6196 = vmatpush1.msra.mxu0 %v6165
        %6197 = vmatprep.subr.mxu0 0.0
        %6198 = vmatpush1.msra.mxu0 %v6166
        %6199 = vmatprep.subr.mxu0 0.0
        %6200 = vmatpush1.msra.mxu0 %v6167
        %6201 = vmatprep.subr.mxu0 0.0
        %6202 = vmatpush1.msra.mxu0 %v6168
        %6203 = vmatprep.subr.mxu0 0.0
        %6204 = vmatpush1.msra.mxu0 0.0
        %6205 = vmatprep.subr.mxu0 0.0
        %6206 = vmatpush1.msra.mxu0 0.0
        %6207 = vmatprep.subr.mxu0 0.0
        %6208 = vmatpush1.msra.mxu0 0.0
        %6209 = vmatprep.subr.mxu0 0.0
        %6210 = vmatpush1.msra.mxu0 0.0
        %6211 = vmatprep.subr.mxu0 0.0
        %6212 = vmatpush1.msra.mxu0 0.0
        %6213 = vmatprep.subr.mxu0 0.0
        %6214 = vmatpush1.msra.mxu0 0.0
        %6215 = vmatprep.subr.mxu0 0.0
        %6216 = vmatpush1.msra.mxu0 0.0
        %6217 = vmatprep.subr.mxu0 0.0
        %6218 = vmatpush1.msra.mxu0 0.0
        %6219 = vmatprep.subr.mxu0 0.0
        %6220 = vmatpush1.msra.mxu0 0.0
        %6221 = vmatprep.subr.mxu0 0.0
        %6222 = vmatpush1.msra.mxu0 0.0
        %6223 = vmatprep.subr.mxu0 0.0
        %6224 = vmatpush1.msra.mxu0 0.0
        %6225 = vmatprep.subr.mxu0 0.0
        %6226 = vmatpush1.msra.mxu0 0.0
        %6227 = vmatprep.subr.mxu0 0.0
        %6228 = vmatpush1.msra.mxu0 0.0
        %6229 = vmatprep.subr.mxu0 0.0
        %6230 = vmatpush1.msra.mxu0 0.0
        %6231 = vmatprep.subr.mxu0 0.0
        %6232 = vmatpush1.msra.mxu0 0.0
        %6233 = vmatprep.subr.mxu0 0.0
        %6234 = vmatpush1.msra.mxu0 0.0
        %6235 = vmatprep.mubr.f32.mxu0 0.0
        %6236 = vmatmul.mubr.f32.gmra.mrb[0].mxu0 %v6151
        %v6237 = vpop.f32.mrb[0].mxu0
        %v6238 = vadd.f32 %v6170, %v6237
        %v6239 = vpop.f32.mrb[0].mxu0
        %6240 = vdwg.mxu0
        %6241 = vst.msk [vmem:[%s1935 + $0x3] sm:$0x1] %vm5334, %v6238
        %p6242 = scmp.lt.s32.totalorder %s130, 1
        %s6243 = scalar_select %p6242, %s130, 1
        %s6244 = smul.addr %s6243, 4
        %s6245 = scalar_lea.vmem %s105, %s6244
        // Predicated region
        $region333: #{_lambda_.1} parent=227 // pred_check
          %p6246 = pneg %p1255
        $region334: #{_lambda_.1} parent=227 // pred_check_branch
          %6248 = sbr.rel (%p6246) target = $region336
        $region335: #{_lambda_.1} parent=227 // pred_region
          _
        $region336: #{_lambda_.1} parent=227 // pred_fallthru
          _
      $region228: #{_lambda_.1} parent=5 // pred_fallthru
        _
      %p6249 = scmp.le.s32.totalorder 2, %s125
      // Predicated region
      $region337: #{_lambda_.1} parent=5 // pred_check
        %p6250 = pneg %p6249
      $region338: #{_lambda_.1} parent=5 // pred_check_branch
        %6252 = sbr.rel (%p6250) target = $region340
      $region339: #{_lambda_.1} parent=5 // pred_region
        %s6253 = ssub.s32 %s125, 2
        // Predicated region
        $region341: #{_lambda_.1} parent=339 // pred_check
          %p6254 = pneg %p1261
        $region342: #{_lambda_.1} parent=339 // pred_check_branch
          %6256 = sbr.rel (%p6254) target = $region344
        $region343: #{_lambda_.1} parent=339 // pred_region
          %p6257 = scmp.lt.s32.totalorder %s131, 1
          %s6258 = scalar_select %p6257, %s131, 1
          %s6259 = smul.addr %s6258, 4
          %s6260 = scalar_lea.vmem %s105, %s6259
        $region344: #{_lambda_.1} parent=339 // pred_fallthru
          _
      $region340: #{_lambda_.1} parent=5 // pred_fallthru
        _
    $region6: #{_lambda_.1} parent=1 // loop_footer
      %s129 = sadd.s32 1, %s125
    $region7: #{_lambda_.1} parent=1 // loop_footer_branch
      %124 = sbr.rel target = $region3
    $region8: #{_lambda_.1} parent=1 // loop_exit
      _
    %6261 = vsyncpa [#allocation5], 1
    %s6262 = scalar_lea.sflag [#allocation5], 1
    %6263 = vsyncpa %s6262, 1
    %6264 = vsyncpa [#allocation7], 1
    %6265 = vsyncpa [#allocation10], 1
    %6266 = vsyncpa [#allocation13], 1
    %6267 = vsyncpa [#allocation16], 1
    %6268 = vsyncpa [#allocation19], 1
    %6269 = vsyncpa [#allocation22], 1
    %6270 = vsyncpa [#allocation25], 1
    %6271 = vsyncpa [#allocation28], 1
    %6272 = vsyncpa [#allocation31], 1
    %6273 = vsyncpa [#allocation34], 1
    %6274 = vsyncpa [#allocation37], 1
    %6275 = vsyncpa [#allocation40], 1
    %6276 = vsyncpa [#allocation43], 1

</llo_original>
